<compile_context>
chip_gen: v7x
topology: tpu7x:2x2x1
jax: 0.10.0
libtpu: 0.0.40
codegen_flags: <defaults>
</compile_context>

<pallas_src>
import functools

import jax
import jax.numpy as jnp
import numpy as np
from jax.experimental import pallas as pl
from jax.experimental.pallas import tpu as pltpu


# ----------------------------------------------------------------------------
# Fused GRU cell (PyTorch gate order r, z, n; gates packed along lanes)
# ----------------------------------------------------------------------------
def _gru_fused(x_bf16, h_f32, wih, whh, bih_b, bhh_b, hp):
    """x: (B,Hp) bf16, h: (B,Hp) f32, wih/whh: (Hp,3Hp) bf16, biases: (B,3Hp) f32."""
    gi = jnp.dot(x_bf16, wih, preferred_element_type=jnp.float32) + bih_b
    gh = jnp.dot(h_f32.astype(whh.dtype), whh, preferred_element_type=jnp.float32) + bhh_b
    r = jax.nn.sigmoid(gi[:, 0:hp] + gh[:, 0:hp])
    z = jax.nn.sigmoid(gi[:, hp:2 * hp] + gh[:, hp:2 * hp])
    n = jnp.tanh(gi[:, 2 * hp:3 * hp] + r * gh[:, 2 * hp:3 * hp])
    return (1.0 - z) * n + z * h_f32


# ----------------------------------------------------------------------------
# Pallas kernels (no grid: whole problem lives in VMEM, time loop is in-kernel)
# ----------------------------------------------------------------------------
def encoder_kernel(x_ref, wih_ref, whh_ref, b_ref, out_ref, hfin_ref):
    T, B, Hp = x_ref.shape
    wih = wih_ref[...]                                   # (Hp, 3Hp) bf16
    whh = whh_ref[...]                                   # (Hp, 3Hp) bf16
    bih = jnp.broadcast_to(b_ref[0], (B, 3 * Hp))        # hoisted bias broadcasts (f32)
    bhh = jnp.broadcast_to(b_ref[1], (B, 3 * Hp))

    def step(t, h):
        x = x_ref[t]                                     # (B, Hp) bf16
        h_new = _gru_fused(x, h, wih, whh, bih, bhh, Hp)
        out_ref[t] = h_new.astype(out_ref.dtype)
        return h_new

    h_last = jax.lax.fori_loop(0, T, step, jnp.zeros((B, Hp), jnp.float32),
                               unroll=True)
    hfin_ref[...] = h_last                               # written once, after the loop


def decoder_kernel(y_ref, enc_ref, h0_ref, wih_ref, whh_ref, b_ref,
                   wat_ref, bat_ref, wout_ref, bout_ref,
                   logp_ref, attn_ref, hfin_ref, *, v_actual):
    T, B, Hp = y_ref.shape
    Vp = wout_ref.shape[1]

    # Loop-invariant loads / broadcasts, hoisted out of the time loop.
    wih = wih_ref[...]
    whh = whh_ref[...]
    bih = jnp.broadcast_to(b_ref[0], (B, 3 * Hp))
    bhh = jnp.broadcast_to(b_ref[1], (B, 3 * Hp))
    wat_c = wat_ref[0]                                   # (Hp, Hp) bf16  (ctx half)
    wat_o = wat_ref[1]                                   # (Hp, Hp) bf16  (rnn-out half)
    bat = jnp.broadcast_to(bat_ref[...], (B, Hp))        # f32
    wout = wout_ref[...]                                 # (Hp, Vp) bf16
    bout = jnp.broadcast_to(bout_ref[...], (B, Vp))      # f32
    enc = enc_ref[...]                                   # (B, Tenc, Hp) bf16
    vmask = jax.lax.broadcasted_iota(jnp.int32, (B, Vp), 1) < v_actual
    neg_big = jnp.float32(-1e30)

    def step(t, h):
        y = y_ref[t]                                     # (B, Hp) bf16
        h_new = _gru_fused(y, h, wih, whh, bih, bhh, Hp)
        out_bf = h_new.astype(enc.dtype)                 # (B, Hp) bf16

        # dot-product attention on the MXU (flash-attention style batched einsums)
        s = jnp.einsum('bqd,bkd->bqk', out_bf[:, None, :], enc,
                       preferred_element_type=jnp.float32)[:, 0, :]      # (B, Tenc) f32
        m = jnp.max(s, axis=-1, keepdims=True)
        e = jnp.exp(s - m)
        attn = e * pl.reciprocal(jnp.sum(e, axis=-1, keepdims=True), approx=True)
        ctx = jnp.einsum('bqk,bkd->bqd', attn.astype(enc.dtype)[:, None, :], enc,
                         preferred_element_type=jnp.float32)[:, 0, :]    # (B, Hp) f32

        # combined = tanh(Linear([ctx; out]))  (concat split into two matmuls)
        comb = jnp.tanh(
            jnp.dot(ctx.astype(enc.dtype), wat_c, preferred_element_type=jnp.float32)
            + jnp.dot(out_bf, wat_o, preferred_element_type=jnp.float32)
            + bat)

        # output projection + masked log_softmax (padded vocab lanes -> -inf)
        logits = jnp.dot(comb.astype(enc.dtype), wout,
                         preferred_element_type=jnp.float32) + bout
        logits = jnp.where(vmask, logits, neg_big)
        lmax = jnp.max(logits, axis=-1, keepdims=True)
        lse = jnp.log(jnp.sum(jnp.exp(logits - lmax), axis=-1, keepdims=True)) + lmax

        logp_ref[t] = logits - lse
        attn_ref[t] = attn
        return h_new

    h_last = jax.lax.fori_loop(0, T, step, h0_ref[...], unroll=True)
    hfin_ref[...] = h_last


# ----------------------------------------------------------------------------
# Wrappers (pallas_call plumbing)
# ----------------------------------------------------------------------------
_VMEM_SPEC = pl.BlockSpec(memory_space=pltpu.MemorySpace.VMEM)


def run_encoder(x_tbh, wih_f, whh_f, b_f):
    T, B, Hp = x_tbh.shape
    return pl.pallas_call(
        encoder_kernel,
        out_shape=(jax.ShapeDtypeStruct((T, B, Hp), jnp.bfloat16),   # encoder outputs
                   jax.ShapeDtypeStruct((B, Hp), jnp.float32)),      # final hidden
        in_specs=[_VMEM_SPEC] * 4,
        out_specs=(_VMEM_SPEC, _VMEM_SPEC),
    )(x_tbh, wih_f, whh_f, b_f)


def run_decoder(y_tbh, enc_bth, h0, wih_f, whh_f, b_f, wat_p, bat_p, wout_p, bout_p,
                *, v_actual):
    T, B, Hp = y_tbh.shape
    _, Tenc, _ = enc_bth.shape
    Vp = wout_p.shape[1]
    # TODO(synk): at realistic vocab sizes, tile the (Hp, Vp) output projection over V
    # (online log_softmax) and add a "parallel" batch grid axis for v7x's second TensorCore.
    kernel = functools.partial(decoder_kernel, v_actual=v_actual)
    return pl.pallas_call(
        kernel,
        out_shape=(jax.ShapeDtypeStruct((T, B, Vp), jnp.float32),    # log-probs (padded V)
                   jax.ShapeDtypeStruct((T, B, Tenc), jnp.float32),  # attention weights
                   jax.ShapeDtypeStruct((B, Hp), jnp.float32)),      # final hidden
        in_specs=[_VMEM_SPEC] * 10,
        out_specs=(_VMEM_SPEC, _VMEM_SPEC, _VMEM_SPEC),
    )(y_tbh, enc_bth, h0, wih_f, whh_f, b_f, wat_p, bat_p, wout_p, bout_p)


# ----------------------------------------------------------------------------
# Parameter re-layout (fuse GRU gates, pad to 128 lanes, bf16 matmul weights)
# ----------------------------------------------------------------------------
def _round_up(n, m):
    return ((n + m - 1) // m) * m


def _fuse_gate_w(w3, hp):
    """(3, H_in, H_out) per-gate weights -> (Hp, 3*Hp) fused bf16, gates at lane g*Hp."""
    h_in, h_out = w3.shape[1], w3.shape[2]
    w = jnp.zeros((hp, 3 * hp), jnp.float32)
    for g in range(3):
        w = w.at[:h_in, g * hp:g * hp + h_out].set(w3[g])
    return w.astype(jnp.bfloat16)


def _fuse_gate_b(b3, hp):
    """(3, 1, H) per-gate biases -> (1, 3*Hp) fused f32."""
    h = b3.shape[2]
    b = jnp.zeros((1, 3 * hp), jnp.float32)
    for g in range(3):
        b = b.at[:, g * hp:g * hp + h].set(b3[g])
    return b


def _pad_2d(x, rows, cols, dtype):
    return jnp.pad(x, ((0, rows - x.shape[0]), (0, cols - x.shape[1]))).astype(dtype)


def _pad_cols(x, cols, dtype):
    return jnp.pad(x, ((0, 0), (0, cols - x.shape[1]))).astype(dtype)


# ----------------------------------------------------------------------------
# Seq2seq forward (teacher forcing, ratio = 1.0 -> deterministic)
# ----------------------------------------------------------------------------
@jax.jit
def seq2seq_forward(params, input_variable, target_variable):
    # TODO(synk): stochastic teacher-forcing / greedy EOS-length bookkeeping of the original
    # DecoderRNN is not reproduced; teacher forcing ratio is fixed at 1.0.
    H = params["enc_emb"].shape[1]
    V = params["w_out"].shape[1]
    Hp = _round_up(H, 128)
    Vp = _round_up(V, 128)

    # kernel-layout parameters
    enc_wih = _fuse_gate_w(params["enc_wih"], Hp)
    enc_whh = _fuse_gate_w(params["enc_whh"], Hp)
    enc_b = jnp.stack([_fuse_gate_b(params["enc_bih"], Hp),
                       _fuse_gate_b(params["enc_bhh"], Hp)])
    dec_wih = _fuse_gate_w(params["dec_wih"], Hp)
    dec_whh = _fuse_gate_w(params["dec_whh"], Hp)
    dec_b = jnp.stack([_fuse_gate_b(params["dec_bih"], Hp),
                       _fuse_gate_b(params["dec_bhh"], Hp)])
    w_attn = jnp.zeros((2, Hp, Hp), jnp.float32).at[:, :H, :H].set(
        params["w_attn"]).astype(jnp.bfloat16)
    b_attn = _pad_cols(params["b_attn"], Hp, jnp.float32)
    w_out = _pad_2d(params["w_out"], Hp, Vp, jnp.bfloat16)
    b_out = _pad_cols(params["b_out"], Vp, jnp.float32)
    enc_emb = _pad_cols(params["enc_emb"], Hp, jnp.bfloat16)
    dec_emb = _pad_cols(params["dec_emb"], Hp, jnp.bfloat16)

    # --- encoder (time-major activations) ---
    x_tbh = enc_emb[input_variable.T]                            # (Tenc, B, Hp) bf16
    enc_out_tbh, enc_hidden = run_encoder(x_tbh, enc_wih, enc_whh, enc_b)
    # TODO(synk): at realistic sizes emit batch-major encoder outputs from the kernel to avoid
    # this HBM round-trip transpose between the two pallas_calls.
    enc_bth = jnp.transpose(enc_out_tbh, (1, 0, 2))              # (B, Tenc, Hp) bf16

    # --- decoder (teacher forcing: inputs are target[:, :-1]) ---
    y_tbh = dec_emb[target_variable[:, :-1].T]                   # (Tdec, B, Hp) bf16
    logp_p, attn_tbt, dec_hidden_p = run_decoder(
        y_tbh, enc_bth, enc_hidden, dec_wih, dec_whh, dec_b,
        w_attn, b_attn, w_out, b_out, v_actual=V)

    decoder_outputs = logp_p[..., :V]                            # (Tdec, B, V) log-probs
    decoder_hidden = dec_hidden_p[:, :H][None]                   # (1, B, H)
    ret_dict = {
        "attention_score": attn_tbt,                             # (Tdec, B, Tenc)
        "sequence": jnp.argmax(decoder_outputs, axis=-1),        # (Tdec, B)
        "length": jnp.full((input_variable.shape[0],), decoder_outputs.shape[0], jnp.int32),
    }
    return decoder_outputs, decoder_hidden, ret_dict


# ----------------------------------------------------------------------------
# Pure-JAX reference (for correctness check)
# ----------------------------------------------------------------------------
def _ref_gru_cell(x, h, wih, whh, bih, bhh):
    r = jax.nn.sigmoid(x @ wih[0] + bih[0] + h @ whh[0] + bhh[0])
    z = jax.nn.sigmoid(x @ wih[1] + bih[1] + h @ whh[1] + bhh[1])
    n = jnp.tanh(x @ wih[2] + bih[2] + r * (h @ whh[2] + bhh[2]))
    return (1.0 - z) * n + z * h


def seq2seq_reference(params, input_variable, target_variable):
    B = input_variable.shape[0]
    H = params["enc_emb"].shape[1]
    enc_emb = params["enc_emb"][input_variable]
    h = jnp.zeros((B, H), jnp.float32)
    enc_outs = []
    for t in range(enc_emb.shape[1]):
        h = _ref_gru_cell(enc_emb[:, t], h, params["enc_wih"], params["enc_whh"],
                          params["enc_bih"], params["enc_bhh"])
        enc_outs.append(h)
    enc = jnp.stack(enc_outs, axis=1)                            # (B, Tenc, H)

    dec_emb = params["dec_emb"][target_variable[:, :-1]]
    logps, attns = [], []
    for t in range(dec_emb.shape[1]):
        h = _ref_gru_cell(dec_emb[:, t], h, params["dec_wih"], params["dec_whh"],
                          params["dec_bih"], params["dec_bhh"])
        scores = jnp.einsum("bh,bth->bt", h, enc)
        attn = jax.nn.softmax(scores, axis=-1)
        ctx = jnp.einsum("bt,bth->bh", attn, enc)
        comb = jnp.tanh(ctx @ params["w_attn"][0] + h @ params["w_attn"][1]
                        + params["b_attn"])
        logits = comb @ params["w_out"] + params["b_out"]
        logps.append(jax.nn.log_softmax(logits, axis=-1))
        attns.append(attn)
    return jnp.stack(logps, 0), h[None], jnp.stack(attns, 0)


# ----------------------------------------------------------------------------
if __name__ == "__main__":
    B, T_ENC, T_DEC, H, V = 2, 8, 8, 32, 64

    key = jax.random.PRNGKey(0)
    ks = jax.random.split(key, 16)
    s = 0.1
    params = {
        "enc_emb": s * jax.random.normal(ks[0], (V, H), jnp.float32),
        "enc_wih": s * jax.random.normal(ks[1], (3, H, H), jnp.float32),
        "enc_whh": s * jax.random.normal(ks[2], (3, H, H), jnp.float32),
        "enc_bih": s * jax.random.normal(ks[3], (3, 1, H), jnp.float32),
        "enc_bhh": s * jax.random.normal(ks[4], (3, 1, H), jnp.float32),
        "dec_emb": s * jax.random.normal(ks[5], (V, H), jnp.float32),
        "dec_wih": s * jax.random.normal(ks[6], (3, H, H), jnp.float32),
        "dec_whh": s * jax.random.normal(ks[7], (3, H, H), jnp.float32),
        "dec_bih": s * jax.random.normal(ks[8], (3, 1, H), jnp.float32),
        "dec_bhh": s * jax.random.normal(ks[9], (3, 1, H), jnp.float32),
        "w_attn": s * jax.random.normal(ks[10], (2, H, H), jnp.float32),
        "b_attn": s * jax.random.normal(ks[11], (1, H), jnp.float32),
        "w_out": s * jax.random.normal(ks[12], (H, V), jnp.float32),
        "b_out": s * jax.random.normal(ks[13], (1, V), jnp.float32),
    }

    input_variable = jax.random.randint(ks[14], (B, T_ENC), 0, V, jnp.int32)
    target_variable = jax.random.randint(ks[15], (B, T_DEC + 1), 0, V, jnp.int32)

    dec_outs, dec_hidden, ret = seq2seq_forward(params, input_variable, target_variable)
    jax.block_until_ready((dec_outs, dec_hidden, ret))

    ref_logp, ref_hidden, ref_attn = seq2seq_reference(params, input_variable, target_variable)
    np.testing.assert_allclose(np.asarray(dec_outs), np.asarray(ref_logp), atol=2e-2, rtol=2e-2)
    np.testing.assert_allclose(np.asarray(dec_hidden), np.asarray(ref_hidden), atol=2e-2, rtol=2e-2)
    np.testing.assert_allclose(np.asarray(ret["attention_score"]), np.asarray(ref_attn),
                               atol=2e-2, rtol=2e-2)

    assert dec_outs.shape == (T_DEC, B, V)
    assert dec_hidden.shape == (1, B, H)
    print("KERNEL_OK")
</pallas_src>

<mosaic_0001>
module attributes {stable_mosaic.version = 11 : i64} {
  func.func @encoder_kernel(%arg0: memref<8x2x128xbf16, #tpu.memory_space<vmem>>, %arg1: memref<128x384xbf16, #tpu.memory_space<vmem>>, %arg2: memref<128x384xbf16, #tpu.memory_space<vmem>>, %arg3: memref<2x1x384xf32, #tpu.memory_space<vmem>>, %arg4: memref<8x2x128xbf16, #tpu.memory_space<vmem>>, %arg5: memref<2x128xf32, #tpu.memory_space<vmem>>) attributes {dimension_semantics = [], scalar_prefetch = 0 : i64, scratch_operands = 0 : i64, tpu.core_type = #tpu.core_type<tc>} {
    %c0 = arith.constant 0 : index
    %c0_0 = arith.constant 0 : index
    %0 = vector.load %arg1[%c0, %c0_0] : memref<128x384xbf16, #tpu.memory_space<vmem>>, vector<128x384xbf16>
    %c0_1 = arith.constant 0 : index
    %c0_2 = arith.constant 0 : index
    %1 = vector.load %arg2[%c0_1, %c0_2] : memref<128x384xbf16, #tpu.memory_space<vmem>>, vector<128x384xbf16>
    %c0_3 = arith.constant 0 : index
    %c0_4 = arith.constant 0 : index
    %c0_5 = arith.constant 0 : index
    %2 = vector.load %arg3[%c0_3, %c0_4, %c0_5] : memref<2x1x384xf32, #tpu.memory_space<vmem>>, vector<1x1x384xf32>
    %3 = vector.shape_cast %2 : vector<1x1x384xf32> to vector<1x384xf32>
    %4 = vector.shape_cast %3 : vector<1x384xf32> to vector<1x384xf32>
    %5 = vector.broadcast %4 : vector<1x384xf32> to vector<2x384xf32>
    %c1 = arith.constant 1 : index
    %c0_6 = arith.constant 0 : index
    %c0_7 = arith.constant 0 : index
    %6 = vector.load %arg3[%c1, %c0_6, %c0_7] : memref<2x1x384xf32, #tpu.memory_space<vmem>>, vector<1x1x384xf32>
    %7 = vector.shape_cast %6 : vector<1x1x384xf32> to vector<1x384xf32>
    %8 = vector.shape_cast %7 : vector<1x384xf32> to vector<1x384xf32>
    %9 = vector.broadcast %8 : vector<1x384xf32> to vector<2x384xf32>
    %cst = arith.constant 0.000000e+00 : f32
    %10 = vector.broadcast %cst : f32 to vector<2x128xf32>
    %c0_i32 = arith.constant 0 : i32
    %11 = arith.index_cast %c0_i32 : i32 to index
    %c0_8 = arith.constant 0 : index
    %c0_9 = arith.constant 0 : index
    %12 = vector.load %arg0[%11, %c0_8, %c0_9] : memref<8x2x128xbf16, #tpu.memory_space<vmem>>, vector<1x2x128xbf16>
    %13 = vector.shape_cast %12 : vector<1x2x128xbf16> to vector<2x128xbf16>
    %cst_10 = arith.constant dense<0.000000e+00> : vector<2x384xf32>
    %14 = tpu.matmul %13, %0, %cst_10 {dimension_numbers = #tpu.dot_dimension_numbers<[1], [0], [0], [1], [0, 0, 1, 1], [], []>} : vector<2x128xbf16>, vector<128x384xbf16>, vector<2x384xf32> -> vector<2x384xf32>
    %15 = arith.addf %14, %5 : vector<2x384xf32>
    %16 = arith.truncf %10 : vector<2x128xf32> to vector<2x128xbf16>
    %cst_11 = arith.constant dense<0.000000e+00> : vector<2x384xf32>
    %17 = tpu.matmul %16, %1, %cst_11 {dimension_numbers = #tpu.dot_dimension_numbers<[1], [0], [0], [1], [0, 0, 1, 1], [], []>} : vector<2x128xbf16>, vector<128x384xbf16>, vector<2x384xf32> -> vector<2x384xf32>
    %18 = arith.addf %17, %9 : vector<2x384xf32>
    %19 = vector.extract_strided_slice %15 {offsets = [0, 0], sizes = [2, 128], strides = [1, 1]} : vector<2x384xf32> to vector<2x128xf32>
    %20 = vector.extract_strided_slice %18 {offsets = [0, 0], sizes = [2, 128], strides = [1, 1]} : vector<2x384xf32> to vector<2x128xf32>
    %21 = arith.addf %19, %20 : vector<2x128xf32>
    %22 = arith.negf %21 : vector<2x128xf32>
    %23 = math.exp %22 : vector<2x128xf32>
    %cst_12 = arith.constant 1.000000e+00 : f32
    %24 = vector.broadcast %cst_12 : f32 to vector<2x128xf32>
    %25 = arith.addf %24, %23 : vector<2x128xf32>
    %26 = arith.divf %24, %25 : vector<2x128xf32>
    %27 = vector.extract_strided_slice %15 {offsets = [0, 128], sizes = [2, 128], strides = [1, 1]} : vector<2x384xf32> to vector<2x128xf32>
    %28 = vector.extract_strided_slice %18 {offsets = [0, 128], sizes = [2, 128], strides = [1, 1]} : vector<2x384xf32> to vector<2x128xf32>
    %29 = arith.addf %27, %28 : vector<2x128xf32>
    %30 = arith.negf %29 : vector<2x128xf32>
    %31 = math.exp %30 : vector<2x128xf32>
    %cst_13 = arith.constant 1.000000e+00 : f32
    %32 = vector.broadcast %cst_13 : f32 to vector<2x128xf32>
    %33 = arith.addf %32, %31 : vector<2x128xf32>
    %34 = arith.divf %32, %33 : vector<2x128xf32>
    %35 = vector.extract_strided_slice %15 {offsets = [0, 256], sizes = [2, 128], strides = [1, 1]} : vector<2x384xf32> to vector<2x128xf32>
    %36 = vector.extract_strided_slice %18 {offsets = [0, 256], sizes = [2, 128], strides = [1, 1]} : vector<2x384xf32> to vector<2x128xf32>
    %37 = arith.mulf %26, %36 : vector<2x128xf32>
    %38 = arith.addf %35, %37 : vector<2x128xf32>
    %39 = math.tanh %38 : vector<2x128xf32>
    %cst_14 = arith.constant 1.000000e+00 : f32
    %40 = vector.broadcast %cst_14 : f32 to vector<2x128xf32>
    %41 = arith.subf %40, %34 : vector<2x128xf32>
    %42 = arith.mulf %41, %39 : vector<2x128xf32>
    %43 = arith.mulf %34, %10 : vector<2x128xf32>
    %44 = arith.addf %42, %43 : vector<2x128xf32>
    %45 = arith.truncf %44 : vector<2x128xf32> to vector<2x128xbf16>
    %46 = arith.index_cast %c0_i32 : i32 to index
    %c0_15 = arith.constant 0 : index
    %c0_16 = arith.constant 0 : index
    %47 = vector.load %arg4[%46, %c0_15, %c0_16] : memref<8x2x128xbf16, #tpu.memory_space<vmem>>, vector<1x2x128xbf16>
    %48 = vector.shape_cast %47 : vector<1x2x128xbf16> to vector<2x128xbf16>
    %49 = vector.shape_cast %45 : vector<2x128xbf16> to vector<1x2x128xbf16>
    tpu.vector_store %arg4[%46, %c0_15, %c0_16], %49 {strides = array<i32>} : memref<8x2x128xbf16, #tpu.memory_space<vmem>>, vector<1x2x128xbf16>,
    %c1_i32 = arith.constant 1 : i32
    %50 = arith.index_cast %c1_i32 : i32 to index
    %c0_17 = arith.constant 0 : index
    %c0_18 = arith.constant 0 : index
    %51 = vector.load %arg0[%50, %c0_17, %c0_18] : memref<8x2x128xbf16, #tpu.memory_space<vmem>>, vector<1x2x128xbf16>
    %52 = vector.shape_cast %51 : vector<1x2x128xbf16> to vector<2x128xbf16>
    %cst_19 = arith.constant dense<0.000000e+00> : vector<2x384xf32>
    %53 = tpu.matmul %52, %0, %cst_19 {dimension_numbers = #tpu.dot_dimension_numbers<[1], [0], [0], [1], [0, 0, 1, 1], [], []>} : vector<2x128xbf16>, vector<128x384xbf16>, vector<2x384xf32> -> vector<2x384xf32>
    %54 = arith.addf %53, %5 : vector<2x384xf32>
    %55 = arith.truncf %44 : vector<2x128xf32> to vector<2x128xbf16>
    %cst_20 = arith.constant dense<0.000000e+00> : vector<2x384xf32>
    %56 = tpu.matmul %55, %1, %cst_20 {dimension_numbers = #tpu.dot_dimension_numbers<[1], [0], [0], [1], [0, 0, 1, 1], [], []>} : vector<2x128xbf16>, vector<128x384xbf16>, vector<2x384xf32> -> vector<2x384xf32>
    %57 = arith.addf %56, %9 : vector<2x384xf32>
    %58 = vector.extract_strided_slice %54 {offsets = [0, 0], sizes = [2, 128], strides = [1, 1]} : vector<2x384xf32> to vector<2x128xf32>
    %59 = vector.extract_strided_slice %57 {offsets = [0, 0], sizes = [2, 128], strides = [1, 1]} : vector<2x384xf32> to vector<2x128xf32>
    %60 = arith.addf %58, %59 : vector<2x128xf32>
    %61 = arith.negf %60 : vector<2x128xf32>
    %62 = math.exp %61 : vector<2x128xf32>
    %cst_21 = arith.constant 1.000000e+00 : f32
    %63 = vector.broadcast %cst_21 : f32 to vector<2x128xf32>
    %64 = arith.addf %63, %62 : vector<2x128xf32>
    %65 = arith.divf %63, %64 : vector<2x128xf32>
    %66 = vector.extract_strided_slice %54 {offsets = [0, 128], sizes = [2, 128], strides = [1, 1]} : vector<2x384xf32> to vector<2x128xf32>
    %67 = vector.extract_strided_slice %57 {offsets = [0, 128], sizes = [2, 128], strides = [1, 1]} : vector<2x384xf32> to vector<2x128xf32>
    %68 = arith.addf %66, %67 : vector<2x128xf32>
    %69 = arith.negf %68 : vector<2x128xf32>
    %70 = math.exp %69 : vector<2x128xf32>
    %cst_22 = arith.constant 1.000000e+00 : f32
    %71 = vector.broadcast %cst_22 : f32 to vector<2x128xf32>
    %72 = arith.addf %71, %70 : vector<2x128xf32>
    %73 = arith.divf %71, %72 : vector<2x128xf32>
    %74 = vector.extract_strided_slice %54 {offsets = [0, 256], sizes = [2, 128], strides = [1, 1]} : vector<2x384xf32> to vector<2x128xf32>
    %75 = vector.extract_strided_slice %57 {offsets = [0, 256], sizes = [2, 128], strides = [1, 1]} : vector<2x384xf32> to vector<2x128xf32>
    %76 = arith.mulf %65, %75 : vector<2x128xf32>
    %77 = arith.addf %74, %76 : vector<2x128xf32>
    %78 = math.tanh %77 : vector<2x128xf32>
    %cst_23 = arith.constant 1.000000e+00 : f32
    %79 = vector.broadcast %cst_23 : f32 to vector<2x128xf32>
    %80 = arith.subf %79, %73 : vector<2x128xf32>
    %81 = arith.mulf %80, %78 : vector<2x128xf32>
    %82 = arith.mulf %73, %44 : vector<2x128xf32>
    %83 = arith.addf %81, %82 : vector<2x128xf32>
    %84 = arith.truncf %83 : vector<2x128xf32> to vector<2x128xbf16>
    %85 = arith.index_cast %c1_i32 : i32 to index
    %c0_24 = arith.constant 0 : index
    %c0_25 = arith.constant 0 : index
    %86 = vector.load %arg4[%85, %c0_24, %c0_25] : memref<8x2x128xbf16, #tpu.memory_space<vmem>>, vector<1x2x128xbf16>
    %87 = vector.shape_cast %86 : vector<1x2x128xbf16> to vector<2x128xbf16>
    %88 = vector.shape_cast %84 : vector<2x128xbf16> to vector<1x2x128xbf16>
    tpu.vector_store %arg4[%85, %c0_24, %c0_25], %88 {strides = array<i32>} : memref<8x2x128xbf16, #tpu.memory_space<vmem>>, vector<1x2x128xbf16>,
    %c2_i32 = arith.constant 2 : i32
    %89 = arith.index_cast %c2_i32 : i32 to index
    %c0_26 = arith.constant 0 : index
    %c0_27 = arith.constant 0 : index
    %90 = vector.load %arg0[%89, %c0_26, %c0_27] : memref<8x2x128xbf16, #tpu.memory_space<vmem>>, vector<1x2x128xbf16>
    %91 = vector.shape_cast %90 : vector<1x2x128xbf16> to vector<2x128xbf16>
    %cst_28 = arith.constant dense<0.000000e+00> : vector<2x384xf32>
    %92 = tpu.matmul %91, %0, %cst_28 {dimension_numbers = #tpu.dot_dimension_numbers<[1], [0], [0], [1], [0, 0, 1, 1], [], []>} : vector<2x128xbf16>, vector<128x384xbf16>, vector<2x384xf32> -> vector<2x384xf32>
    %93 = arith.addf %92, %5 : vector<2x384xf32>
    %94 = arith.truncf %83 : vector<2x128xf32> to vector<2x128xbf16>
    %cst_29 = arith.constant dense<0.000000e+00> : vector<2x384xf32>
    %95 = tpu.matmul %94, %1, %cst_29 {dimension_numbers = #tpu.dot_dimension_numbers<[1], [0], [0], [1], [0, 0, 1, 1], [], []>} : vector<2x128xbf16>, vector<128x384xbf16>, vector<2x384xf32> -> vector<2x384xf32>
    %96 = arith.addf %95, %9 : vector<2x384xf32>
    %97 = vector.extract_strided_slice %93 {offsets = [0, 0], sizes = [2, 128], strides = [1, 1]} : vector<2x384xf32> to vector<2x128xf32>
    %98 = vector.extract_strided_slice %96 {offsets = [0, 0], sizes = [2, 128], strides = [1, 1]} : vector<2x384xf32> to vector<2x128xf32>
    %99 = arith.addf %97, %98 : vector<2x128xf32>
    %100 = arith.negf %99 : vector<2x128xf32>
    %101 = math.exp %100 : vector<2x128xf32>
    %cst_30 = arith.constant 1.000000e+00 : f32
    %102 = vector.broadcast %cst_30 : f32 to vector<2x128xf32>
    %103 = arith.addf %102, %101 : vector<2x128xf32>
    %104 = arith.divf %102, %103 : vector<2x128xf32>
    %105 = vector.extract_strided_slice %93 {offsets = [0, 128], sizes = [2, 128], strides = [1, 1]} : vector<2x384xf32> to vector<2x128xf32>
    %106 = vector.extract_strided_slice %96 {offsets = [0, 128], sizes = [2, 128], strides = [1, 1]} : vector<2x384xf32> to vector<2x128xf32>
    %107 = arith.addf %105, %106 : vector<2x128xf32>
    %108 = arith.negf %107 : vector<2x128xf32>
    %109 = math.exp %108 : vector<2x128xf32>
    %cst_31 = arith.constant 1.000000e+00 : f32
    %110 = vector.broadcast %cst_31 : f32 to vector<2x128xf32>
    %111 = arith.addf %110, %109 : vector<2x128xf32>
    %112 = arith.divf %110, %111 : vector<2x128xf32>
    %113 = vector.extract_strided_slice %93 {offsets = [0, 256], sizes = [2, 128], strides = [1, 1]} : vector<2x384xf32> to vector<2x128xf32>
    %114 = vector.extract_strided_slice %96 {offsets = [0, 256], sizes = [2, 128], strides = [1, 1]} : vector<2x384xf32> to vector<2x128xf32>
    %115 = arith.mulf %104, %114 : vector<2x128xf32>
    %116 = arith.addf %113, %115 : vector<2x128xf32>
    %117 = math.tanh %116 : vector<2x128xf32>
    %cst_32 = arith.constant 1.000000e+00 : f32
    %118 = vector.broadcast %cst_32 : f32 to vector<2x128xf32>
    %119 = arith.subf %118, %112 : vector<2x128xf32>
    %120 = arith.mulf %119, %117 : vector<2x128xf32>
    %121 = arith.mulf %112, %83 : vector<2x128xf32>
    %122 = arith.addf %120, %121 : vector<2x128xf32>
    %123 = arith.truncf %122 : vector<2x128xf32> to vector<2x128xbf16>
    %124 = arith.index_cast %c2_i32 : i32 to index
    %c0_33 = arith.constant 0 : index
    %c0_34 = arith.constant 0 : index
    %125 = vector.load %arg4[%124, %c0_33, %c0_34] : memref<8x2x128xbf16, #tpu.memory_space<vmem>>, vector<1x2x128xbf16>
    %126 = vector.shape_cast %125 : vector<1x2x128xbf16> to vector<2x128xbf16>
    %127 = vector.shape_cast %123 : vector<2x128xbf16> to vector<1x2x128xbf16>
    tpu.vector_store %arg4[%124, %c0_33, %c0_34], %127 {strides = array<i32>} : memref<8x2x128xbf16, #tpu.memory_space<vmem>>, vector<1x2x128xbf16>,
    %c3_i32 = arith.constant 3 : i32
    %128 = arith.index_cast %c3_i32 : i32 to index
    %c0_35 = arith.constant 0 : index
    %c0_36 = arith.constant 0 : index
    %129 = vector.load %arg0[%128, %c0_35, %c0_36] : memref<8x2x128xbf16, #tpu.memory_space<vmem>>, vector<1x2x128xbf16>
    %130 = vector.shape_cast %129 : vector<1x2x128xbf16> to vector<2x128xbf16>
    %cst_37 = arith.constant dense<0.000000e+00> : vector<2x384xf32>
    %131 = tpu.matmul %130, %0, %cst_37 {dimension_numbers = #tpu.dot_dimension_numbers<[1], [0], [0], [1], [0, 0, 1, 1], [], []>} : vector<2x128xbf16>, vector<128x384xbf16>, vector<2x384xf32> -> vector<2x384xf32>
    %132 = arith.addf %131, %5 : vector<2x384xf32>
    %133 = arith.truncf %122 : vector<2x128xf32> to vector<2x128xbf16>
    %cst_38 = arith.constant dense<0.000000e+00> : vector<2x384xf32>
    %134 = tpu.matmul %133, %1, %cst_38 {dimension_numbers = #tpu.dot_dimension_numbers<[1], [0], [0], [1], [0, 0, 1, 1], [], []>} : vector<2x128xbf16>, vector<128x384xbf16>, vector<2x384xf32> -> vector<2x384xf32>
    %135 = arith.addf %134, %9 : vector<2x384xf32>
    %136 = vector.extract_strided_slice %132 {offsets = [0, 0], sizes = [2, 128], strides = [1, 1]} : vector<2x384xf32> to vector<2x128xf32>
    %137 = vector.extract_strided_slice %135 {offsets = [0, 0], sizes = [2, 128], strides = [1, 1]} : vector<2x384xf32> to vector<2x128xf32>
    %138 = arith.addf %136, %137 : vector<2x128xf32>
    %139 = arith.negf %138 : vector<2x128xf32>
    %140 = math.exp %139 : vector<2x128xf32>
    %cst_39 = arith.constant 1.000000e+00 : f32
    %141 = vector.broadcast %cst_39 : f32 to vector<2x128xf32>
    %142 = arith.addf %141, %140 : vector<2x128xf32>
    %143 = arith.divf %141, %142 : vector<2x128xf32>
    %144 = vector.extract_strided_slice %132 {offsets = [0, 128], sizes = [2, 128], strides = [1, 1]} : vector<2x384xf32> to vector<2x128xf32>
    %145 = vector.extract_strided_slice %135 {offsets = [0, 128], sizes = [2, 128], strides = [1, 1]} : vector<2x384xf32> to vector<2x128xf32>
    %146 = arith.addf %144, %145 : vector<2x128xf32>
    %147 = arith.negf %146 : vector<2x128xf32>
    %148 = math.exp %147 : vector<2x128xf32>
    %cst_40 = arith.constant 1.000000e+00 : f32
    %149 = vector.broadcast %cst_40 : f32 to vector<2x128xf32>
    %150 = arith.addf %149, %148 : vector<2x128xf32>
    %151 = arith.divf %149, %150 : vector<2x128xf32>
    %152 = vector.extract_strided_slice %132 {offsets = [0, 256], sizes = [2, 128], strides = [1, 1]} : vector<2x384xf32> to vector<2x128xf32>
    %153 = vector.extract_strided_slice %135 {offsets = [0, 256], sizes = [2, 128], strides = [1, 1]} : vector<2x384xf32> to vector<2x128xf32>
    %154 = arith.mulf %143, %153 : vector<2x128xf32>
    %155 = arith.addf %152, %154 : vector<2x128xf32>
    %156 = math.tanh %155 : vector<2x128xf32>
    %cst_41 = arith.constant 1.000000e+00 : f32
    %157 = vector.broadcast %cst_41 : f32 to vector<2x128xf32>
    %158 = arith.subf %157, %151 : vector<2x128xf32>
    %159 = arith.mulf %158, %156 : vector<2x128xf32>
    %160 = arith.mulf %151, %122 : vector<2x128xf32>
    %161 = arith.addf %159, %160 : vector<2x128xf32>
    %162 = arith.truncf %161 : vector<2x128xf32> to vector<2x128xbf16>
    %163 = arith.index_cast %c3_i32 : i32 to index
    %c0_42 = arith.constant 0 : index
    %c0_43 = arith.constant 0 : index
    %164 = vector.load %arg4[%163, %c0_42, %c0_43] : memref<8x2x128xbf16, #tpu.memory_space<vmem>>, vector<1x2x128xbf16>
    %165 = vector.shape_cast %164 : vector<1x2x128xbf16> to vector<2x128xbf16>
    %166 = vector.shape_cast %162 : vector<2x128xbf16> to vector<1x2x128xbf16>
    tpu.vector_store %arg4[%163, %c0_42, %c0_43], %166 {strides = array<i32>} : memref<8x2x128xbf16, #tpu.memory_space<vmem>>, vector<1x2x128xbf16>,
    %c4_i32 = arith.constant 4 : i32
    %167 = arith.index_cast %c4_i32 : i32 to index
    %c0_44 = arith.constant 0 : index
    %c0_45 = arith.constant 0 : index
    %168 = vector.load %arg0[%167, %c0_44, %c0_45] : memref<8x2x128xbf16, #tpu.memory_space<vmem>>, vector<1x2x128xbf16>
    %169 = vector.shape_cast %168 : vector<1x2x128xbf16> to vector<2x128xbf16>
    %cst_46 = arith.constant dense<0.000000e+00> : vector<2x384xf32>
    %170 = tpu.matmul %169, %0, %cst_46 {dimension_numbers = #tpu.dot_dimension_numbers<[1], [0], [0], [1], [0, 0, 1, 1], [], []>} : vector<2x128xbf16>, vector<128x384xbf16>, vector<2x384xf32> -> vector<2x384xf32>
    %171 = arith.addf %170, %5 : vector<2x384xf32>
    %172 = arith.truncf %161 : vector<2x128xf32> to vector<2x128xbf16>
    %cst_47 = arith.constant dense<0.000000e+00> : vector<2x384xf32>
    %173 = tpu.matmul %172, %1, %cst_47 {dimension_numbers = #tpu.dot_dimension_numbers<[1], [0], [0], [1], [0, 0, 1, 1], [], []>} : vector<2x128xbf16>, vector<128x384xbf16>, vector<2x384xf32> -> vector<2x384xf32>
    %174 = arith.addf %173, %9 : vector<2x384xf32>
    %175 = vector.extract_strided_slice %171 {offsets = [0, 0], sizes = [2, 128], strides = [1, 1]} : vector<2x384xf32> to vector<2x128xf32>
    %176 = vector.extract_strided_slice %174 {offsets = [0, 0], sizes = [2, 128], strides = [1, 1]} : vector<2x384xf32> to vector<2x128xf32>
    %177 = arith.addf %175, %176 : vector<2x128xf32>
    %178 = arith.negf %177 : vector<2x128xf32>
    %179 = math.exp %178 : vector<2x128xf32>
    %cst_48 = arith.constant 1.000000e+00 : f32
    %180 = vector.broadcast %cst_48 : f32 to vector<2x128xf32>
    %181 = arith.addf %180, %179 : vector<2x128xf32>
    %182 = arith.divf %180, %181 : vector<2x128xf32>
    %183 = vector.extract_strided_slice %171 {offsets = [0, 128], sizes = [2, 128], strides = [1, 1]} : vector<2x384xf32> to vector<2x128xf32>
    %184 = vector.extract_strided_slice %174 {offsets = [0, 128], sizes = [2, 128], strides = [1, 1]} : vector<2x384xf32> to vector<2x128xf32>
    %185 = arith.addf %183, %184 : vector<2x128xf32>
    %186 = arith.negf %185 : vector<2x128xf32>
    %187 = math.exp %186 : vector<2x128xf32>
    %cst_49 = arith.constant 1.000000e+00 : f32
    %188 = vector.broadcast %cst_49 : f32 to vector<2x128xf32>
    %189 = arith.addf %188, %187 : vector<2x128xf32>
    %190 = arith.divf %188, %189 : vector<2x128xf32>
    %191 = vector.extract_strided_slice %171 {offsets = [0, 256], sizes = [2, 128], strides = [1, 1]} : vector<2x384xf32> to vector<2x128xf32>
    %192 = vector.extract_strided_slice %174 {offsets = [0, 256], sizes = [2, 128], strides = [1, 1]} : vector<2x384xf32> to vector<2x128xf32>
    %193 = arith.mulf %182, %192 : vector<2x128xf32>
    %194 = arith.addf %191, %193 : vector<2x128xf32>
    %195 = math.tanh %194 : vector<2x128xf32>
    %cst_50 = arith.constant 1.000000e+00 : f32
    %196 = vector.broadcast %cst_50 : f32 to vector<2x128xf32>
    %197 = arith.subf %196, %190 : vector<2x128xf32>
    %198 = arith.mulf %197, %195 : vector<2x128xf32>
    %199 = arith.mulf %190, %161 : vector<2x128xf32>
    %200 = arith.addf %198, %199 : vector<2x128xf32>
    %201 = arith.truncf %200 : vector<2x128xf32> to vector<2x128xbf16>
    %202 = arith.index_cast %c4_i32 : i32 to index
    %c0_51 = arith.constant 0 : index
    %c0_52 = arith.constant 0 : index
    %203 = vector.load %arg4[%202, %c0_51, %c0_52] : memref<8x2x128xbf16, #tpu.memory_space<vmem>>, vector<1x2x128xbf16>
    %204 = vector.shape_cast %203 : vector<1x2x128xbf16> to vector<2x128xbf16>
    %205 = vector.shape_cast %201 : vector<2x128xbf16> to vector<1x2x128xbf16>
    tpu.vector_store %arg4[%202, %c0_51, %c0_52], %205 {strides = array<i32>} : memref<8x2x128xbf16, #tpu.memory_space<vmem>>, vector<1x2x128xbf16>,
    %c5_i32 = arith.constant 5 : i32
    %206 = arith.index_cast %c5_i32 : i32 to index
    %c0_53 = arith.constant 0 : index
    %c0_54 = arith.constant 0 : index
    %207 = vector.load %arg0[%206, %c0_53, %c0_54] : memref<8x2x128xbf16, #tpu.memory_space<vmem>>, vector<1x2x128xbf16>
    %208 = vector.shape_cast %207 : vector<1x2x128xbf16> to vector<2x128xbf16>
    %cst_55 = arith.constant dense<0.000000e+00> : vector<2x384xf32>
    %209 = tpu.matmul %208, %0, %cst_55 {dimension_numbers = #tpu.dot_dimension_numbers<[1], [0], [0], [1], [0, 0, 1, 1], [], []>} : vector<2x128xbf16>, vector<128x384xbf16>, vector<2x384xf32> -> vector<2x384xf32>
    %210 = arith.addf %209, %5 : vector<2x384xf32>
    %211 = arith.truncf %200 : vector<2x128xf32> to vector<2x128xbf16>
    %cst_56 = arith.constant dense<0.000000e+00> : vector<2x384xf32>
    %212 = tpu.matmul %211, %1, %cst_56 {dimension_numbers = #tpu.dot_dimension_numbers<[1], [0], [0], [1], [0, 0, 1, 1], [], []>} : vector<2x128xbf16>, vector<128x384xbf16>, vector<2x384xf32> -> vector<2x384xf32>
    %213 = arith.addf %212, %9 : vector<2x384xf32>
    %214 = vector.extract_strided_slice %210 {offsets = [0, 0], sizes = [2, 128], strides = [1, 1]} : vector<2x384xf32> to vector<2x128xf32>
    %215 = vector.extract_strided_slice %213 {offsets = [0, 0], sizes = [2, 128], strides = [1, 1]} : vector<2x384xf32> to vector<2x128xf32>
    %216 = arith.addf %214, %215 : vector<2x128xf32>
    %217 = arith.negf %216 : vector<2x128xf32>
    %218 = math.exp %217 : vector<2x128xf32>
    %cst_57 = arith.constant 1.000000e+00 : f32
    %219 = vector.broadcast %cst_57 : f32 to vector<2x128xf32>
    %220 = arith.addf %219, %218 : vector<2x128xf32>
    %221 = arith.divf %219, %220 : vector<2x128xf32>
    %222 = vector.extract_strided_slice %210 {offsets = [0, 128], sizes = [2, 128], strides = [1, 1]} : vector<2x384xf32> to vector<2x128xf32>
    %223 = vector.extract_strided_slice %213 {offsets = [0, 128], sizes = [2, 128], strides = [1, 1]} : vector<2x384xf32> to vector<2x128xf32>
    %224 = arith.addf %222, %223 : vector<2x128xf32>
    %225 = arith.negf %224 : vector<2x128xf32>
    %226 = math.exp %225 : vector<2x128xf32>
    %cst_58 = arith.constant 1.000000e+00 : f32
    %227 = vector.broadcast %cst_58 : f32 to vector<2x128xf32>
    %228 = arith.addf %227, %226 : vector<2x128xf32>
    %229 = arith.divf %227, %228 : vector<2x128xf32>
    %230 = vector.extract_strided_slice %210 {offsets = [0, 256], sizes = [2, 128], strides = [1, 1]} : vector<2x384xf32> to vector<2x128xf32>
    %231 = vector.extract_strided_slice %213 {offsets = [0, 256], sizes = [2, 128], strides = [1, 1]} : vector<2x384xf32> to vector<2x128xf32>
    %232 = arith.mulf %221, %231 : vector<2x128xf32>
    %233 = arith.addf %230, %232 : vector<2x128xf32>
    %234 = math.tanh %233 : vector<2x128xf32>
    %cst_59 = arith.constant 1.000000e+00 : f32
    %235 = vector.broadcast %cst_59 : f32 to vector<2x128xf32>
    %236 = arith.subf %235, %229 : vector<2x128xf32>
    %237 = arith.mulf %236, %234 : vector<2x128xf32>
    %238 = arith.mulf %229, %200 : vector<2x128xf32>
    %239 = arith.addf %237, %238 : vector<2x128xf32>
    %240 = arith.truncf %239 : vector<2x128xf32> to vector<2x128xbf16>
    %241 = arith.index_cast %c5_i32 : i32 to index
    %c0_60 = arith.constant 0 : index
    %c0_61 = arith.constant 0 : index
    %242 = vector.load %arg4[%241, %c0_60, %c0_61] : memref<8x2x128xbf16, #tpu.memory_space<vmem>>, vector<1x2x128xbf16>
    %243 = vector.shape_cast %242 : vector<1x2x128xbf16> to vector<2x128xbf16>
    %244 = vector.shape_cast %240 : vector<2x128xbf16> to vector<1x2x128xbf16>
    tpu.vector_store %arg4[%241, %c0_60, %c0_61], %244 {strides = array<i32>} : memref<8x2x128xbf16, #tpu.memory_space<vmem>>, vector<1x2x128xbf16>,
    %c6_i32 = arith.constant 6 : i32
    %245 = arith.index_cast %c6_i32 : i32 to index
    %c0_62 = arith.constant 0 : index
    %c0_63 = arith.constant 0 : index
    %246 = vector.load %arg0[%245, %c0_62, %c0_63] : memref<8x2x128xbf16, #tpu.memory_space<vmem>>, vector<1x2x128xbf16>
    %247 = vector.shape_cast %246 : vector<1x2x128xbf16> to vector<2x128xbf16>
    %cst_64 = arith.constant dense<0.000000e+00> : vector<2x384xf32>
    %248 = tpu.matmul %247, %0, %cst_64 {dimension_numbers = #tpu.dot_dimension_numbers<[1], [0], [0], [1], [0, 0, 1, 1], [], []>} : vector<2x128xbf16>, vector<128x384xbf16>, vector<2x384xf32> -> vector<2x384xf32>
    %249 = arith.addf %248, %5 : vector<2x384xf32>
    %250 = arith.truncf %239 : vector<2x128xf32> to vector<2x128xbf16>
    %cst_65 = arith.constant dense<0.000000e+00> : vector<2x384xf32>
    %251 = tpu.matmul %250, %1, %cst_65 {dimension_numbers = #tpu.dot_dimension_numbers<[1], [0], [0], [1], [0, 0, 1, 1], [], []>} : vector<2x128xbf16>, vector<128x384xbf16>, vector<2x384xf32> -> vector<2x384xf32>
    %252 = arith.addf %251, %9 : vector<2x384xf32>
    %253 = vector.extract_strided_slice %249 {offsets = [0, 0], sizes = [2, 128], strides = [1, 1]} : vector<2x384xf32> to vector<2x128xf32>
    %254 = vector.extract_strided_slice %252 {offsets = [0, 0], sizes = [2, 128], strides = [1, 1]} : vector<2x384xf32> to vector<2x128xf32>
    %255 = arith.addf %253, %254 : vector<2x128xf32>
    %256 = arith.negf %255 : vector<2x128xf32>
    %257 = math.exp %256 : vector<2x128xf32>
    %cst_66 = arith.constant 1.000000e+00 : f32
    %258 = vector.broadcast %cst_66 : f32 to vector<2x128xf32>
    %259 = arith.addf %258, %257 : vector<2x128xf32>
    %260 = arith.divf %258, %259 : vector<2x128xf32>
    %261 = vector.extract_strided_slice %249 {offsets = [0, 128], sizes = [2, 128], strides = [1, 1]} : vector<2x384xf32> to vector<2x128xf32>
    %262 = vector.extract_strided_slice %252 {offsets = [0, 128], sizes = [2, 128], strides = [1, 1]} : vector<2x384xf32> to vector<2x128xf32>
    %263 = arith.addf %261, %262 : vector<2x128xf32>
    %264 = arith.negf %263 : vector<2x128xf32>
    %265 = math.exp %264 : vector<2x128xf32>
    %cst_67 = arith.constant 1.000000e+00 : f32
    %266 = vector.broadcast %cst_67 : f32 to vector<2x128xf32>
    %267 = arith.addf %266, %265 : vector<2x128xf32>
    %268 = arith.divf %266, %267 : vector<2x128xf32>
    %269 = vector.extract_strided_slice %249 {offsets = [0, 256], sizes = [2, 128], strides = [1, 1]} : vector<2x384xf32> to vector<2x128xf32>
    %270 = vector.extract_strided_slice %252 {offsets = [0, 256], sizes = [2, 128], strides = [1, 1]} : vector<2x384xf32> to vector<2x128xf32>
    %271 = arith.mulf %260, %270 : vector<2x128xf32>
    %272 = arith.addf %269, %271 : vector<2x128xf32>
    %273 = math.tanh %272 : vector<2x128xf32>
    %cst_68 = arith.constant 1.000000e+00 : f32
    %274 = vector.broadcast %cst_68 : f32 to vector<2x128xf32>
    %275 = arith.subf %274, %268 : vector<2x128xf32>
    %276 = arith.mulf %275, %273 : vector<2x128xf32>
    %277 = arith.mulf %268, %239 : vector<2x128xf32>
    %278 = arith.addf %276, %277 : vector<2x128xf32>
    %279 = arith.truncf %278 : vector<2x128xf32> to vector<2x128xbf16>
    %280 = arith.index_cast %c6_i32 : i32 to index
    %c0_69 = arith.constant 0 : index
    %c0_70 = arith.constant 0 : index
    %281 = vector.load %arg4[%280, %c0_69, %c0_70] : memref<8x2x128xbf16, #tpu.memory_space<vmem>>, vector<1x2x128xbf16>
    %282 = vector.shape_cast %281 : vector<1x2x128xbf16> to vector<2x128xbf16>
    %283 = vector.shape_cast %279 : vector<2x128xbf16> to vector<1x2x128xbf16>
    tpu.vector_store %arg4[%280, %c0_69, %c0_70], %283 {strides = array<i32>} : memref<8x2x128xbf16, #tpu.memory_space<vmem>>, vector<1x2x128xbf16>,
    %c7_i32 = arith.constant 7 : i32
    %284 = arith.index_cast %c7_i32 : i32 to index
    %c0_71 = arith.constant 0 : index
    %c0_72 = arith.constant 0 : index
    %285 = vector.load %arg0[%284, %c0_71, %c0_72] : memref<8x2x128xbf16, #tpu.memory_space<vmem>>, vector<1x2x128xbf16>
    %286 = vector.shape_cast %285 : vector<1x2x128xbf16> to vector<2x128xbf16>
    %cst_73 = arith.constant dense<0.000000e+00> : vector<2x384xf32>
    %287 = tpu.matmul %286, %0, %cst_73 {dimension_numbers = #tpu.dot_dimension_numbers<[1], [0], [0], [1], [0, 0, 1, 1], [], []>} : vector<2x128xbf16>, vector<128x384xbf16>, vector<2x384xf32> -> vector<2x384xf32>
    %288 = arith.addf %287, %5 : vector<2x384xf32>
    %289 = arith.truncf %278 : vector<2x128xf32> to vector<2x128xbf16>
    %cst_74 = arith.constant dense<0.000000e+00> : vector<2x384xf32>
    %290 = tpu.matmul %289, %1, %cst_74 {dimension_numbers = #tpu.dot_dimension_numbers<[1], [0], [0], [1], [0, 0, 1, 1], [], []>} : vector<2x128xbf16>, vector<128x384xbf16>, vector<2x384xf32> -> vector<2x384xf32>
    %291 = arith.addf %290, %9 : vector<2x384xf32>
    %292 = vector.extract_strided_slice %288 {offsets = [0, 0], sizes = [2, 128], strides = [1, 1]} : vector<2x384xf32> to vector<2x128xf32>
    %293 = vector.extract_strided_slice %291 {offsets = [0, 0], sizes = [2, 128], strides = [1, 1]} : vector<2x384xf32> to vector<2x128xf32>
    %294 = arith.addf %292, %293 : vector<2x128xf32>
    %295 = arith.negf %294 : vector<2x128xf32>
    %296 = math.exp %295 : vector<2x128xf32>
    %cst_75 = arith.constant 1.000000e+00 : f32
    %297 = vector.broadcast %cst_75 : f32 to vector<2x128xf32>
    %298 = arith.addf %297, %296 : vector<2x128xf32>
    %299 = arith.divf %297, %298 : vector<2x128xf32>
    %300 = vector.extract_strided_slice %288 {offsets = [0, 128], sizes = [2, 128], strides = [1, 1]} : vector<2x384xf32> to vector<2x128xf32>
    %301 = vector.extract_strided_slice %291 {offsets = [0, 128], sizes = [2, 128], strides = [1, 1]} : vector<2x384xf32> to vector<2x128xf32>
    %302 = arith.addf %300, %301 : vector<2x128xf32>
    %303 = arith.negf %302 : vector<2x128xf32>
    %304 = math.exp %303 : vector<2x128xf32>
    %cst_76 = arith.constant 1.000000e+00 : f32
    %305 = vector.broadcast %cst_76 : f32 to vector<2x128xf32>
    %306 = arith.addf %305, %304 : vector<2x128xf32>
    %307 = arith.divf %305, %306 : vector<2x128xf32>
    %308 = vector.extract_strided_slice %288 {offsets = [0, 256], sizes = [2, 128], strides = [1, 1]} : vector<2x384xf32> to vector<2x128xf32>
    %309 = vector.extract_strided_slice %291 {offsets = [0, 256], sizes = [2, 128], strides = [1, 1]} : vector<2x384xf32> to vector<2x128xf32>
    %310 = arith.mulf %299, %309 : vector<2x128xf32>
    %311 = arith.addf %308, %310 : vector<2x128xf32>
    %312 = math.tanh %311 : vector<2x128xf32>
    %cst_77 = arith.constant 1.000000e+00 : f32
    %313 = vector.broadcast %cst_77 : f32 to vector<2x128xf32>
    %314 = arith.subf %313, %307 : vector<2x128xf32>
    %315 = arith.mulf %314, %312 : vector<2x128xf32>
    %316 = arith.mulf %307, %278 : vector<2x128xf32>
    %317 = arith.addf %315, %316 : vector<2x128xf32>
    %318 = arith.truncf %317 : vector<2x128xf32> to vector<2x128xbf16>
    %319 = arith.index_cast %c7_i32 : i32 to index
    %c0_78 = arith.constant 0 : index
    %c0_79 = arith.constant 0 : index
    %320 = vector.load %arg4[%319, %c0_78, %c0_79] : memref<8x2x128xbf16, #tpu.memory_space<vmem>>, vector<1x2x128xbf16>
    %321 = vector.shape_cast %320 : vector<1x2x128xbf16> to vector<2x128xbf16>
    %322 = vector.shape_cast %318 : vector<2x128xbf16> to vector<1x2x128xbf16>
    tpu.vector_store %arg4[%319, %c0_78, %c0_79], %322 {strides = array<i32>} : memref<8x2x128xbf16, #tpu.memory_space<vmem>>, vector<1x2x128xbf16>,
    %c8_i32 = arith.constant 8 : i32
    %c0_80 = arith.constant 0 : index
    %c0_81 = arith.constant 0 : index
    %323 = vector.load %arg5[%c0_80, %c0_81] : memref<2x128xf32, #tpu.memory_space<vmem>>, vector<2x128xf32>
    tpu.vector_store %arg5[%c0_80, %c0_81], %317 {strides = array<i32>} : memref<2x128xf32, #tpu.memory_space<vmem>>, vector<2x128xf32>,
    return
  }
}

module attributes {stable_mosaic.version = 11 : i64} {
  func.func @decoder_kernel(%arg0: memref<8x2x128xbf16, #tpu.memory_space<vmem>>, %arg1: memref<2x8x128xbf16, #tpu.memory_space<vmem>>, %arg2: memref<2x128xf32, #tpu.memory_space<vmem>>, %arg3: memref<128x384xbf16, #tpu.memory_space<vmem>>, %arg4: memref<128x384xbf16, #tpu.memory_space<vmem>>, %arg5: memref<2x1x384xf32, #tpu.memory_space<vmem>>, %arg6: memref<2x128x128xbf16, #tpu.memory_space<vmem>>, %arg7: memref<1x128xf32, #tpu.memory_space<vmem>>, %arg8: memref<128x128xbf16, #tpu.memory_space<vmem>>, %arg9: memref<1x128xf32, #tpu.memory_space<vmem>>, %arg10: memref<8x2x128xf32, #tpu.memory_space<vmem>>, %arg11: memref<8x2x8xf32, #tpu.memory_space<vmem>>, %arg12: memref<2x128xf32, #tpu.memory_space<vmem>>) attributes {dimension_semantics = [], scalar_prefetch = 0 : i64, scratch_operands = 0 : i64, tpu.core_type = #tpu.core_type<tc>} {
    %c0 = arith.constant 0 : index
    %c0_0 = arith.constant 0 : index
    %0 = vector.load %arg3[%c0, %c0_0] : memref<128x384xbf16, #tpu.memory_space<vmem>>, vector<128x384xbf16>
    %c0_1 = arith.constant 0 : index
    %c0_2 = arith.constant 0 : index
    %1 = vector.load %arg4[%c0_1, %c0_2] : memref<128x384xbf16, #tpu.memory_space<vmem>>, vector<128x384xbf16>
    %c0_3 = arith.constant 0 : index
    %c0_4 = arith.constant 0 : index
    %c0_5 = arith.constant 0 : index
    %2 = vector.load %arg5[%c0_3, %c0_4, %c0_5] : memref<2x1x384xf32, #tpu.memory_space<vmem>>, vector<1x1x384xf32>
    %3 = vector.shape_cast %2 : vector<1x1x384xf32> to vector<1x384xf32>
    %4 = vector.shape_cast %3 : vector<1x384xf32> to vector<1x384xf32>
    %5 = vector.broadcast %4 : vector<1x384xf32> to vector<2x384xf32>
    %c1 = arith.constant 1 : index
    %c0_6 = arith.constant 0 : index
    %c0_7 = arith.constant 0 : index
    %6 = vector.load %arg5[%c1, %c0_6, %c0_7] : memref<2x1x384xf32, #tpu.memory_space<vmem>>, vector<1x1x384xf32>
    %7 = vector.shape_cast %6 : vector<1x1x384xf32> to vector<1x384xf32>
    %8 = vector.shape_cast %7 : vector<1x384xf32> to vector<1x384xf32>
    %9 = vector.broadcast %8 : vector<1x384xf32> to vector<2x384xf32>
    %c0_8 = arith.constant 0 : index
    %c0_9 = arith.constant 0 : index
    %c0_10 = arith.constant 0 : index
    %10 = vector.load %arg6[%c0_8, %c0_9, %c0_10] : memref<2x128x128xbf16, #tpu.memory_space<vmem>>, vector<1x128x128xbf16>
    %11 = vector.shape_cast %10 : vector<1x128x128xbf16> to vector<128x128xbf16>
    %c1_11 = arith.constant 1 : index
    %c0_12 = arith.constant 0 : index
    %c0_13 = arith.constant 0 : index
    %12 = vector.load %arg6[%c1_11, %c0_12, %c0_13] : memref<2x128x128xbf16, #tpu.memory_space<vmem>>, vector<1x128x128xbf16>
    %13 = vector.shape_cast %12 : vector<1x128x128xbf16> to vector<128x128xbf16>
    %c0_14 = arith.constant 0 : index
    %c0_15 = arith.constant 0 : index
    %14 = vector.load %arg7[%c0_14, %c0_15] : memref<1x128xf32, #tpu.memory_space<vmem>>, vector<1x128xf32>
    %15 = vector.shape_cast %14 : vector<1x128xf32> to vector<1x128xf32>
    %16 = vector.broadcast %15 : vector<1x128xf32> to vector<2x128xf32>
    %c0_16 = arith.constant 0 : index
    %c0_17 = arith.constant 0 : index
    %17 = vector.load %arg8[%c0_16, %c0_17] : memref<128x128xbf16, #tpu.memory_space<vmem>>, vector<128x128xbf16>
    %c0_18 = arith.constant 0 : index
    %c0_19 = arith.constant 0 : index
    %18 = vector.load %arg9[%c0_18, %c0_19] : memref<1x128xf32, #tpu.memory_space<vmem>>, vector<1x128xf32>
    %19 = vector.shape_cast %18 : vector<1x128xf32> to vector<1x128xf32>
    %20 = vector.broadcast %19 : vector<1x128xf32> to vector<2x128xf32>
    %c0_20 = arith.constant 0 : index
    %c0_21 = arith.constant 0 : index
    %c0_22 = arith.constant 0 : index
    %21 = vector.load %arg1[%c0_20, %c0_21, %c0_22] : memref<2x8x128xbf16, #tpu.memory_space<vmem>>, vector<2x8x128xbf16>
    %22 = tpu.iota {dimensions = array<i32: 1>} : vector<2x128xi32>
    %c64_i32 = arith.constant 64 : i32
    %23 = vector.broadcast %c64_i32 : i32 to vector<2x128xi32>
    %24 = arith.cmpi slt, %22, %23 : vector<2x128xi32>
    %c0_23 = arith.constant 0 : index
    %c0_24 = arith.constant 0 : index
    %25 = vector.load %arg2[%c0_23, %c0_24] : memref<2x128xf32, #tpu.memory_space<vmem>>, vector<2x128xf32>
    %cst = arith.constant -1.000000e+30 : f32
    %c0_i32 = arith.constant 0 : i32
    %26 = arith.index_cast %c0_i32 : i32 to index
    %c0_25 = arith.constant 0 : index
    %c0_26 = arith.constant 0 : index
    %27 = vector.load %arg0[%26, %c0_25, %c0_26] : memref<8x2x128xbf16, #tpu.memory_space<vmem>>, vector<1x2x128xbf16>
    %28 = vector.shape_cast %27 : vector<1x2x128xbf16> to vector<2x128xbf16>
    %cst_27 = arith.constant dense<0.000000e+00> : vector<2x384xf32>
    %29 = tpu.matmul %28, %0, %cst_27 {dimension_numbers = #tpu.dot_dimension_numbers<[1], [0], [0], [1], [0, 0, 1, 1], [], []>} : vector<2x128xbf16>, vector<128x384xbf16>, vector<2x384xf32> -> vector<2x384xf32>
    %30 = arith.addf %29, %5 : vector<2x384xf32>
    %31 = arith.truncf %25 : vector<2x128xf32> to vector<2x128xbf16>
    %cst_28 = arith.constant dense<0.000000e+00> : vector<2x384xf32>
    %32 = tpu.matmul %31, %1, %cst_28 {dimension_numbers = #tpu.dot_dimension_numbers<[1], [0], [0], [1], [0, 0, 1, 1], [], []>} : vector<2x128xbf16>, vector<128x384xbf16>, vector<2x384xf32> -> vector<2x384xf32>
    %33 = arith.addf %32, %9 : vector<2x384xf32>
    %34 = vector.extract_strided_slice %30 {offsets = [0, 0], sizes = [2, 128], strides = [1, 1]} : vector<2x384xf32> to vector<2x128xf32>
    %35 = vector.extract_strided_slice %33 {offsets = [0, 0], sizes = [2, 128], strides = [1, 1]} : vector<2x384xf32> to vector<2x128xf32>
    %36 = arith.addf %34, %35 : vector<2x128xf32>
    %37 = arith.negf %36 : vector<2x128xf32>
    %38 = math.exp %37 : vector<2x128xf32>
    %cst_29 = arith.constant 1.000000e+00 : f32
    %39 = vector.broadcast %cst_29 : f32 to vector<2x128xf32>
    %40 = arith.addf %39, %38 : vector<2x128xf32>
    %41 = arith.divf %39, %40 : vector<2x128xf32>
    %42 = vector.extract_strided_slice %30 {offsets = [0, 128], sizes = [2, 128], strides = [1, 1]} : vector<2x384xf32> to vector<2x128xf32>
    %43 = vector.extract_strided_slice %33 {offsets = [0, 128], sizes = [2, 128], strides = [1, 1]} : vector<2x384xf32> to vector<2x128xf32>
    %44 = arith.addf %42, %43 : vector<2x128xf32>
    %45 = arith.negf %44 : vector<2x128xf32>
    %46 = math.exp %45 : vector<2x128xf32>
    %cst_30 = arith.constant 1.000000e+00 : f32
    %47 = vector.broadcast %cst_30 : f32 to vector<2x128xf32>
    %48 = arith.addf %47, %46 : vector<2x128xf32>
    %49 = arith.divf %47, %48 : vector<2x128xf32>
    %50 = vector.extract_strided_slice %30 {offsets = [0, 256], sizes = [2, 128], strides = [1, 1]} : vector<2x384xf32> to vector<2x128xf32>
    %51 = vector.extract_strided_slice %33 {offsets = [0, 256], sizes = [2, 128], strides = [1, 1]} : vector<2x384xf32> to vector<2x128xf32>
    %52 = arith.mulf %41, %51 : vector<2x128xf32>
    %53 = arith.addf %50, %52 : vector<2x128xf32>
    %54 = math.tanh %53 : vector<2x128xf32>
    %cst_31 = arith.constant 1.000000e+00 : f32
    %55 = vector.broadcast %cst_31 : f32 to vector<2x128xf32>
    %56 = arith.subf %55, %49 : vector<2x128xf32>
    %57 = arith.mulf %56, %54 : vector<2x128xf32>
    %58 = arith.mulf %49, %25 : vector<2x128xf32>
    %59 = arith.addf %57, %58 : vector<2x128xf32>
    %60 = arith.truncf %59 : vector<2x128xf32> to vector<2x128xbf16>
    %61 = vector.shape_cast %60 : vector<2x128xbf16> to vector<2x1x128xbf16>
    "tpu.trace_start"() <{level = 10 : i32, message = "bqd,bkd->bqk"}> : () -> ()
    %cst_32 = arith.constant dense<0.000000e+00> : vector<2x1x8xf32>
    %62 = tpu.matmul %61, %21, %cst_32 {dimension_numbers = #tpu.dot_dimension_numbers<[2], [2], [1], [1], [0, 0, 0, 1, 1, 1], [0], [0]>} : vector<2x1x128xbf16>, vector<2x8x128xbf16>, vector<2x1x8xf32> -> vector<2x1x8xf32>
    "tpu.trace_stop"() : () -> ()
    %63 = vector.shape_cast %62 : vector<2x1x8xf32> to vector<2x8xf32>
    %cst_33 = arith.constant dense<0xFF800000> : vector<2xf32>
    %64 = vector.multi_reduction <maximumf>, %63, %cst_33 [1] : vector<2x8xf32> to vector<2xf32>
    %65 = vector.shape_cast %64 : vector<2xf32> to vector<2x1xf32>
    %66 = vector.broadcast %65 : vector<2x1xf32> to vector<2x8xf32>
    %67 = arith.subf %63, %66 : vector<2x8xf32>
    %68 = math.exp %67 : vector<2x8xf32>
    %cst_34 = arith.constant dense<0.000000e+00> : vector<2xf32>
    %69 = vector.multi_reduction <add>, %68, %cst_34 [1] : vector<2x8xf32> to vector<2xf32>
    %70 = vector.shape_cast %69 : vector<2xf32> to vector<2x1xf32>
    %71 = tpu.reciprocal %70 {approx = true} : vector<2x1xf32> -> vector<2x1xf32>
    %72 = vector.broadcast %71 : vector<2x1xf32> to vector<2x8xf32>
    %73 = arith.mulf %68, %72 : vector<2x8xf32>
    %74 = arith.truncf %73 : vector<2x8xf32> to vector<2x8xbf16>
    %75 = vector.shape_cast %74 : vector<2x8xbf16> to vector<2x1x8xbf16>
    "tpu.trace_start"() <{level = 10 : i32, message = "bqk,bkd->bqd"}> : () -> ()
    %cst_35 = arith.constant dense<0.000000e+00> : vector<2x1x128xf32>
    %76 = tpu.matmul %75, %21, %cst_35 {dimension_numbers = #tpu.dot_dimension_numbers<[2], [1], [1], [2], [0, 0, 0, 1, 1, 2], [0], [0]>} : vector<2x1x8xbf16>, vector<2x8x128xbf16>, vector<2x1x128xf32> -> vector<2x1x128xf32>
    "tpu.trace_stop"() : () -> ()
    %77 = vector.shape_cast %76 : vector<2x1x128xf32> to vector<2x128xf32>
    %78 = arith.truncf %77 : vector<2x128xf32> to vector<2x128xbf16>
    %cst_36 = arith.constant dense<0.000000e+00> : vector<2x128xf32>
    %79 = tpu.matmul %78, %11, %cst_36 {dimension_numbers = #tpu.dot_dimension_numbers<[1], [0], [0], [1], [0, 0, 1, 1], [], []>} : vector<2x128xbf16>, vector<128x128xbf16>, vector<2x128xf32> -> vector<2x128xf32>
    %cst_37 = arith.constant dense<0.000000e+00> : vector<2x128xf32>
    %80 = tpu.matmul %60, %13, %cst_37 {dimension_numbers = #tpu.dot_dimension_numbers<[1], [0], [0], [1], [0, 0, 1, 1], [], []>} : vector<2x128xbf16>, vector<128x128xbf16>, vector<2x128xf32> -> vector<2x128xf32>
    %81 = arith.addf %79, %80 : vector<2x128xf32>
    %82 = arith.addf %81, %16 : vector<2x128xf32>
    %83 = math.tanh %82 : vector<2x128xf32>
    %84 = arith.truncf %83 : vector<2x128xf32> to vector<2x128xbf16>
    %cst_38 = arith.constant dense<0.000000e+00> : vector<2x128xf32>
    %85 = tpu.matmul %84, %17, %cst_38 {dimension_numbers = #tpu.dot_dimension_numbers<[1], [0], [0], [1], [0, 0, 1, 1], [], []>} : vector<2x128xbf16>, vector<128x128xbf16>, vector<2x128xf32> -> vector<2x128xf32>
    %86 = arith.addf %85, %20 : vector<2x128xf32>
    %87 = vector.broadcast %cst : f32 to vector<2x128xf32>
    %88 = arith.select %24, %86, %87 : vector<2x128xi1>, vector<2x128xf32>
    %cst_39 = arith.constant dense<0xFF800000> : vector<2xf32>
    %89 = vector.multi_reduction <maximumf>, %88, %cst_39 [1] : vector<2x128xf32> to vector<2xf32>
    %90 = vector.shape_cast %89 : vector<2xf32> to vector<2x1xf32>
    %91 = vector.broadcast %90 : vector<2x1xf32> to vector<2x128xf32>
    %92 = arith.subf %88, %91 : vector<2x128xf32>
    %93 = math.exp %92 : vector<2x128xf32>
    %cst_40 = arith.constant dense<0.000000e+00> : vector<2xf32>
    %94 = vector.multi_reduction <add>, %93, %cst_40 [1] : vector<2x128xf32> to vector<2xf32>
    %95 = vector.shape_cast %94 : vector<2xf32> to vector<2x1xf32>
    %96 = math.log %95 : vector<2x1xf32>
    %97 = arith.addf %96, %90 : vector<2x1xf32>
    %98 = vector.broadcast %97 : vector<2x1xf32> to vector<2x128xf32>
    %99 = arith.subf %88, %98 : vector<2x128xf32>
    %100 = arith.index_cast %c0_i32 : i32 to index
    %c0_41 = arith.constant 0 : index
    %c0_42 = arith.constant 0 : index
    %101 = vector.load %arg10[%100, %c0_41, %c0_42] : memref<8x2x128xf32, #tpu.memory_space<vmem>>, vector<1x2x128xf32>
    %102 = vector.shape_cast %101 : vector<1x2x128xf32> to vector<2x128xf32>
    %103 = vector.shape_cast %99 : vector<2x128xf32> to vector<1x2x128xf32>
    tpu.vector_store %arg10[%100, %c0_41, %c0_42], %103 {strides = array<i32>} : memref<8x2x128xf32, #tpu.memory_space<vmem>>, vector<1x2x128xf32>,
    %104 = arith.index_cast %c0_i32 : i32 to index
    %c0_43 = arith.constant 0 : index
    %c0_44 = arith.constant 0 : index
    %105 = vector.load %arg11[%104, %c0_43, %c0_44] : memref<8x2x8xf32, #tpu.memory_space<vmem>>, vector<1x2x8xf32>
    %106 = vector.shape_cast %105 : vector<1x2x8xf32> to vector<2x8xf32>
    %107 = vector.shape_cast %73 : vector<2x8xf32> to vector<1x2x8xf32>
    tpu.vector_store %arg11[%104, %c0_43, %c0_44], %107 {strides = array<i32>} : memref<8x2x8xf32, #tpu.memory_space<vmem>>, vector<1x2x8xf32>,
    %c1_i32 = arith.constant 1 : i32
    %108 = arith.index_cast %c1_i32 : i32 to index
    %c0_45 = arith.constant 0 : index
    %c0_46 = arith.constant 0 : index
    %109 = vector.load %arg0[%108, %c0_45, %c0_46] : memref<8x2x128xbf16, #tpu.memory_space<vmem>>, vector<1x2x128xbf16>
    %110 = vector.shape_cast %109 : vector<1x2x128xbf16> to vector<2x128xbf16>
    %cst_47 = arith.constant dense<0.000000e+00> : vector<2x384xf32>
    %111 = tpu.matmul %110, %0, %cst_47 {dimension_numbers = #tpu.dot_dimension_numbers<[1], [0], [0], [1], [0, 0, 1, 1], [], []>} : vector<2x128xbf16>, vector<128x384xbf16>, vector<2x384xf32> -> vector<2x384xf32>
    %112 = arith.addf %111, %5 : vector<2x384xf32>
    %113 = arith.truncf %59 : vector<2x128xf32> to vector<2x128xbf16>
    %cst_48 = arith.constant dense<0.000000e+00> : vector<2x384xf32>
    %114 = tpu.matmul %113, %1, %cst_48 {dimension_numbers = #tpu.dot_dimension_numbers<[1], [0], [0], [1], [0, 0, 1, 1], [], []>} : vector<2x128xbf16>, vector<128x384xbf16>, vector<2x384xf32> -> vector<2x384xf32>
    %115 = arith.addf %114, %9 : vector<2x384xf32>
    %116 = vector.extract_strided_slice %112 {offsets = [0, 0], sizes = [2, 128], strides = [1, 1]} : vector<2x384xf32> to vector<2x128xf32>
    %117 = vector.extract_strided_slice %115 {offsets = [0, 0], sizes = [2, 128], strides = [1, 1]} : vector<2x384xf32> to vector<2x128xf32>
    %118 = arith.addf %116, %117 : vector<2x128xf32>
    %119 = arith.negf %118 : vector<2x128xf32>
    %120 = math.exp %119 : vector<2x128xf32>
    %cst_49 = arith.constant 1.000000e+00 : f32
    %121 = vector.broadcast %cst_49 : f32 to vector<2x128xf32>
    %122 = arith.addf %121, %120 : vector<2x128xf32>
    %123 = arith.divf %121, %122 : vector<2x128xf32>
    %124 = vector.extract_strided_slice %112 {offsets = [0, 128], sizes = [2, 128], strides = [1, 1]} : vector<2x384xf32> to vector<2x128xf32>
    %125 = vector.extract_strided_slice %115 {offsets = [0, 128], sizes = [2, 128], strides = [1, 1]} : vector<2x384xf32> to vector<2x128xf32>
    %126 = arith.addf %124, %125 : vector<2x128xf32>
    %127 = arith.negf %126 : vector<2x128xf32>
    %128 = math.exp %127 : vector<2x128xf32>
    %cst_50 = arith.constant 1.000000e+00 : f32
    %129 = vector.broadcast %cst_50 : f32 to vector<2x128xf32>
    %130 = arith.addf %129, %128 : vector<2x128xf32>
    %131 = arith.divf %129, %130 : vector<2x128xf32>
    %132 = vector.extract_strided_slice %112 {offsets = [0, 256], sizes = [2, 128], strides = [1, 1]} : vector<2x384xf32> to vector<2x128xf32>
    %133 = vector.extract_strided_slice %115 {offsets = [0, 256], sizes = [2, 128], strides = [1, 1]} : vector<2x384xf32> to vector<2x128xf32>
    %134 = arith.mulf %123, %133 : vector<2x128xf32>
    %135 = arith.addf %132, %134 : vector<2x128xf32>
    %136 = math.tanh %135 : vector<2x128xf32>
    %cst_51 = arith.constant 1.000000e+00 : f32
    %137 = vector.broadcast %cst_51 : f32 to vector<2x128xf32>
    %138 = arith.subf %137, %131 : vector<2x128xf32>
    %139 = arith.mulf %138, %136 : vector<2x128xf32>
    %140 = arith.mulf %131, %59 : vector<2x128xf32>
    %141 = arith.addf %139, %140 : vector<2x128xf32>
    %142 = arith.truncf %141 : vector<2x128xf32> to vector<2x128xbf16>
    %143 = vector.shape_cast %142 : vector<2x128xbf16> to vector<2x1x128xbf16>
    "tpu.trace_start"() <{level = 10 : i32, message = "bqd,bkd->bqk"}> : () -> ()
    %cst_52 = arith.constant dense<0.000000e+00> : vector<2x1x8xf32>
    %144 = tpu.matmul %143, %21, %cst_52 {dimension_numbers = #tpu.dot_dimension_numbers<[2], [2], [1], [1], [0, 0, 0, 1, 1, 1], [0], [0]>} : vector<2x1x128xbf16>, vector<2x8x128xbf16>, vector<2x1x8xf32> -> vector<2x1x8xf32>
    "tpu.trace_stop"() : () -> ()
    %145 = vector.shape_cast %144 : vector<2x1x8xf32> to vector<2x8xf32>
    %cst_53 = arith.constant dense<0xFF800000> : vector<2xf32>
    %146 = vector.multi_reduction <maximumf>, %145, %cst_53 [1] : vector<2x8xf32> to vector<2xf32>
    %147 = vector.shape_cast %146 : vector<2xf32> to vector<2x1xf32>
    %148 = vector.broadcast %147 : vector<2x1xf32> to vector<2x8xf32>
    %149 = arith.subf %145, %148 : vector<2x8xf32>
    %150 = math.exp %149 : vector<2x8xf32>
    %cst_54 = arith.constant dense<0.000000e+00> : vector<2xf32>
    %151 = vector.multi_reduction <add>, %150, %cst_54 [1] : vector<2x8xf32> to vector<2xf32>
    %152 = vector.shape_cast %151 : vector<2xf32> to vector<2x1xf32>
    %153 = tpu.reciprocal %152 {approx = true} : vector<2x1xf32> -> vector<2x1xf32>
    %154 = vector.broadcast %153 : vector<2x1xf32> to vector<2x8xf32>
    %155 = arith.mulf %150, %154 : vector<2x8xf32>
    %156 = arith.truncf %155 : vector<2x8xf32> to vector<2x8xbf16>
    %157 = vector.shape_cast %156 : vector<2x8xbf16> to vector<2x1x8xbf16>
    "tpu.trace_start"() <{level = 10 : i32, message = "bqk,bkd->bqd"}> : () -> ()
    %cst_55 = arith.constant dense<0.000000e+00> : vector<2x1x128xf32>
    %158 = tpu.matmul %157, %21, %cst_55 {dimension_numbers = #tpu.dot_dimension_numbers<[2], [1], [1], [2], [0, 0, 0, 1, 1, 2], [0], [0]>} : vector<2x1x8xbf16>, vector<2x8x128xbf16>, vector<2x1x128xf32> -> vector<2x1x128xf32>
    "tpu.trace_stop"() : () -> ()
    %159 = vector.shape_cast %158 : vector<2x1x128xf32> to vector<2x128xf32>
    %160 = arith.truncf %159 : vector<2x128xf32> to vector<2x128xbf16>
    %cst_56 = arith.constant dense<0.000000e+00> : vector<2x128xf32>
    %161 = tpu.matmul %160, %11, %cst_56 {dimension_numbers = #tpu.dot_dimension_numbers<[1], [0], [0], [1], [0, 0, 1, 1], [], []>} : vector<2x128xbf16>, vector<128x128xbf16>, vector<2x128xf32> -> vector<2x128xf32>
    %cst_57 = arith.constant dense<0.000000e+00> : vector<2x128xf32>
    %162 = tpu.matmul %142, %13, %cst_57 {dimension_numbers = #tpu.dot_dimension_numbers<[1], [0], [0], [1], [0, 0, 1, 1], [], []>} : vector<2x128xbf16>, vector<128x128xbf16>, vector<2x128xf32> -> vector<2x128xf32>
    %163 = arith.addf %161, %162 : vector<2x128xf32>
    %164 = arith.addf %163, %16 : vector<2x128xf32>
    %165 = math.tanh %164 : vector<2x128xf32>
    %166 = arith.truncf %165 : vector<2x128xf32> to vector<2x128xbf16>
    %cst_58 = arith.constant dense<0.000000e+00> : vector<2x128xf32>
    %167 = tpu.matmul %166, %17, %cst_58 {dimension_numbers = #tpu.dot_dimension_numbers<[1], [0], [0], [1], [0, 0, 1, 1], [], []>} : vector<2x128xbf16>, vector<128x128xbf16>, vector<2x128xf32> -> vector<2x128xf32>
    %168 = arith.addf %167, %20 : vector<2x128xf32>
    %169 = vector.broadcast %cst : f32 to vector<2x128xf32>
    %170 = arith.select %24, %168, %169 : vector<2x128xi1>, vector<2x128xf32>
    %cst_59 = arith.constant dense<0xFF800000> : vector<2xf32>
    %171 = vector.multi_reduction <maximumf>, %170, %cst_59 [1] : vector<2x128xf32> to vector<2xf32>
    %172 = vector.shape_cast %171 : vector<2xf32> to vector<2x1xf32>
    %173 = vector.broadcast %172 : vector<2x1xf32> to vector<2x128xf32>
    %174 = arith.subf %170, %173 : vector<2x128xf32>
    %175 = math.exp %174 : vector<2x128xf32>
    %cst_60 = arith.constant dense<0.000000e+00> : vector<2xf32>
    %176 = vector.multi_reduction <add>, %175, %cst_60 [1] : vector<2x128xf32> to vector<2xf32>
    %177 = vector.shape_cast %176 : vector<2xf32> to vector<2x1xf32>
    %178 = math.log %177 : vector<2x1xf32>
    %179 = arith.addf %178, %172 : vector<2x1xf32>
    %180 = vector.broadcast %179 : vector<2x1xf32> to vector<2x128xf32>
    %181 = arith.subf %170, %180 : vector<2x128xf32>
    %182 = arith.index_cast %c1_i32 : i32 to index
    %c0_61 = arith.constant 0 : index
    %c0_62 = arith.constant 0 : index
    %183 = vector.load %arg10[%182, %c0_61, %c0_62] : memref<8x2x128xf32, #tpu.memory_space<vmem>>, vector<1x2x128xf32>
    %184 = vector.shape_cast %183 : vector<1x2x128xf32> to vector<2x128xf32>
    %185 = vector.shape_cast %181 : vector<2x128xf32> to vector<1x2x128xf32>
    tpu.vector_store %arg10[%182, %c0_61, %c0_62], %185 {strides = array<i32>} : memref<8x2x128xf32, #tpu.memory_space<vmem>>, vector<1x2x128xf32>,
    %186 = arith.index_cast %c1_i32 : i32 to index
    %c0_63 = arith.constant 0 : index
    %c0_64 = arith.constant 0 : index
    %187 = vector.load %arg11[%186, %c0_63, %c0_64] : memref<8x2x8xf32, #tpu.memory_space<vmem>>, vector<1x2x8xf32>
    %188 = vector.shape_cast %187 : vector<1x2x8xf32> to vector<2x8xf32>
    %189 = vector.shape_cast %155 : vector<2x8xf32> to vector<1x2x8xf32>
    tpu.vector_store %arg11[%186, %c0_63, %c0_64], %189 {strides = array<i32>} : memref<8x2x8xf32, #tpu.memory_space<vmem>>, vector<1x2x8xf32>,
    %c2_i32 = arith.constant 2 : i32
    %190 = arith.index_cast %c2_i32 : i32 to index
    %c0_65 = arith.constant 0 : index
    %c0_66 = arith.constant 0 : index
    %191 = vector.load %arg0[%190, %c0_65, %c0_66] : memref<8x2x128xbf16, #tpu.memory_space<vmem>>, vector<1x2x128xbf16>
    %192 = vector.shape_cast %191 : vector<1x2x128xbf16> to vector<2x128xbf16>
    %cst_67 = arith.constant dense<0.000000e+00> : vector<2x384xf32>
    %193 = tpu.matmul %192, %0, %cst_67 {dimension_numbers = #tpu.dot_dimension_numbers<[1], [0], [0], [1], [0, 0, 1, 1], [], []>} : vector<2x128xbf16>, vector<128x384xbf16>, vector<2x384xf32> -> vector<2x384xf32>
    %194 = arith.addf %193, %5 : vector<2x384xf32>
    %195 = arith.truncf %141 : vector<2x128xf32> to vector<2x128xbf16>
    %cst_68 = arith.constant dense<0.000000e+00> : vector<2x384xf32>
    %196 = tpu.matmul %195, %1, %cst_68 {dimension_numbers = #tpu.dot_dimension_numbers<[1], [0], [0], [1], [0, 0, 1, 1], [], []>} : vector<2x128xbf16>, vector<128x384xbf16>, vector<2x384xf32> -> vector<2x384xf32>
    %197 = arith.addf %196, %9 : vector<2x384xf32>
    %198 = vector.extract_strided_slice %194 {offsets = [0, 0], sizes = [2, 128], strides = [1, 1]} : vector<2x384xf32> to vector<2x128xf32>
    %199 = vector.extract_strided_slice %197 {offsets = [0, 0], sizes = [2, 128], strides = [1, 1]} : vector<2x384xf32> to vector<2x128xf32>
    %200 = arith.addf %198, %199 : vector<2x128xf32>
    %201 = arith.negf %200 : vector<2x128xf32>
    %202 = math.exp %201 : vector<2x128xf32>
    %cst_69 = arith.constant 1.000000e+00 : f32
    %203 = vector.broadcast %cst_69 : f32 to vector<2x128xf32>
    %204 = arith.addf %203, %202 : vector<2x128xf32>
    %205 = arith.divf %203, %204 : vector<2x128xf32>
    %206 = vector.extract_strided_slice %194 {offsets = [0, 128], sizes = [2, 128], strides = [1, 1]} : vector<2x384xf32> to vector<2x128xf32>
    %207 = vector.extract_strided_slice %197 {offsets = [0, 128], sizes = [2, 128], strides = [1, 1]} : vector<2x384xf32> to vector<2x128xf32>
    %208 = arith.addf %206, %207 : vector<2x128xf32>
    %209 = arith.negf %208 : vector<2x128xf32>
    %210 = math.exp %209 : vector<2x128xf32>
    %cst_70 = arith.constant 1.000000e+00 : f32
    %211 = vector.broadcast %cst_70 : f32 to vector<2x128xf32>
    %212 = arith.addf %211, %210 : vector<2x128xf32>
    %213 = arith.divf %211, %212 : vector<2x128xf32>
    %214 = vector.extract_strided_slice %194 {offsets = [0, 256], sizes = [2, 128], strides = [1, 1]} : vector<2x384xf32> to vector<2x128xf32>
    %215 = vector.extract_strided_slice %197 {offsets = [0, 256], sizes = [2, 128], strides = [1, 1]} : vector<2x384xf32> to vector<2x128xf32>
    %216 = arith.mulf %205, %215 : vector<2x128xf32>
    %217 = arith.addf %214, %216 : vector<2x128xf32>
    %218 = math.tanh %217 : vector<2x128xf32>
    %cst_71 = arith.constant 1.000000e+00 : f32
    %219 = vector.broadcast %cst_71 : f32 to vector<2x128xf32>
    %220 = arith.subf %219, %213 : vector<2x128xf32>
    %221 = arith.mulf %220, %218 : vector<2x128xf32>
    %222 = arith.mulf %213, %141 : vector<2x128xf32>
    %223 = arith.addf %221, %222 : vector<2x128xf32>
    %224 = arith.truncf %223 : vector<2x128xf32> to vector<2x128xbf16>
    %225 = vector.shape_cast %224 : vector<2x128xbf16> to vector<2x1x128xbf16>
    "tpu.trace_start"() <{level = 10 : i32, message = "bqd,bkd->bqk"}> : () -> ()
    %cst_72 = arith.constant dense<0.000000e+00> : vector<2x1x8xf32>
    %226 = tpu.matmul %225, %21, %cst_72 {dimension_numbers = #tpu.dot_dimension_numbers<[2], [2], [1], [1], [0, 0, 0, 1, 1, 1], [0], [0]>} : vector<2x1x128xbf16>, vector<2x8x128xbf16>, vector<2x1x8xf32> -> vector<2x1x8xf32>
    "tpu.trace_stop"() : () -> ()
    %227 = vector.shape_cast %226 : vector<2x1x8xf32> to vector<2x8xf32>
    %cst_73 = arith.constant dense<0xFF800000> : vector<2xf32>
    %228 = vector.multi_reduction <maximumf>, %227, %cst_73 [1] : vector<2x8xf32> to vector<2xf32>
    %229 = vector.shape_cast %228 : vector<2xf32> to vector<2x1xf32>
    %230 = vector.broadcast %229 : vector<2x1xf32> to vector<2x8xf32>
    %231 = arith.subf %227, %230 : vector<2x8xf32>
    %232 = math.exp %231 : vector<2x8xf32>
    %cst_74 = arith.constant dense<0.000000e+00> : vector<2xf32>
    %233 = vector.multi_reduction <add>, %232, %cst_74 [1] : vector<2x8xf32> to vector<2xf32>
    %234 = vector.shape_cast %233 : vector<2xf32> to vector<2x1xf32>
    %235 = tpu.reciprocal %234 {approx = true} : vector<2x1xf32> -> vector<2x1xf32>
    %236 = vector.broadcast %235 : vector<2x1xf32> to vector<2x8xf32>
    %237 = arith.mulf %232, %236 : vector<2x8xf32>
    %238 = arith.truncf %237 : vector<2x8xf32> to vector<2x8xbf16>
    %239 = vector.shape_cast %238 : vector<2x8xbf16> to vector<2x1x8xbf16>
    "tpu.trace_start"() <{level = 10 : i32, message = "bqk,bkd->bqd"}> : () -> ()
    %cst_75 = arith.constant dense<0.000000e+00> : vector<2x1x128xf32>
    %240 = tpu.matmul %239, %21, %cst_75 {dimension_numbers = #tpu.dot_dimension_numbers<[2], [1], [1], [2], [0, 0, 0, 1, 1, 2], [0], [0]>} : vector<2x1x8xbf16>, vector<2x8x128xbf16>, vector<2x1x128xf32> -> vector<2x1x128xf32>
    "tpu.trace_stop"() : () -> ()
    %241 = vector.shape_cast %240 : vector<2x1x128xf32> to vector<2x128xf32>
    %242 = arith.truncf %241 : vector<2x128xf32> to vector<2x128xbf16>
    %cst_76 = arith.constant dense<0.000000e+00> : vector<2x128xf32>
    %243 = tpu.matmul %242, %11, %cst_76 {dimension_numbers = #tpu.dot_dimension_numbers<[1], [0], [0], [1], [0, 0, 1, 1], [], []>} : vector<2x128xbf16>, vector<128x128xbf16>, vector<2x128xf32> -> vector<2x128xf32>
    %cst_77 = arith.constant dense<0.000000e+00> : vector<2x128xf32>
    %244 = tpu.matmul %224, %13, %cst_77 {dimension_numbers = #tpu.dot_dimension_numbers<[1], [0], [0], [1], [0, 0, 1, 1], [], []>} : vector<2x128xbf16>, vector<128x128xbf16>, vector<2x128xf32> -> vector<2x128xf32>
    %245 = arith.addf %243, %244 : vector<2x128xf32>
    %246 = arith.addf %245, %16 : vector<2x128xf32>
    %247 = math.tanh %246 : vector<2x128xf32>
    %248 = arith.truncf %247 : vector<2x128xf32> to vector<2x128xbf16>
    %cst_78 = arith.constant dense<0.000000e+00> : vector<2x128xf32>
    %249 = tpu.matmul %248, %17, %cst_78 {dimension_numbers = #tpu.dot_dimension_numbers<[1], [0], [0], [1], [0, 0, 1, 1], [], []>} : vector<2x128xbf16>, vector<128x128xbf16>, vector<2x128xf32> -> vector<2x128xf32>
    %250 = arith.addf %249, %20 : vector<2x128xf32>
    %251 = vector.broadcast %cst : f32 to vector<2x128xf32>
    %252 = arith.select %24, %250, %251 : vector<2x128xi1>, vector<2x128xf32>
    %cst_79 = arith.constant dense<0xFF800000> : vector<2xf32>
    %253 = vector.multi_reduction <maximumf>, %252, %cst_79 [1] : vector<2x128xf32> to vector<2xf32>
    %254 = vector.shape_cast %253 : vector<2xf32> to vector<2x1xf32>
    %255 = vector.broadcast %254 : vector<2x1xf32> to vector<2x128xf32>
    %256 = arith.subf %252, %255 : vector<2x128xf32>
    %257 = math.exp %256 : vector<2x128xf32>
    %cst_80 = arith.constant dense<0.000000e+00> : vector<2xf32>
    %258 = vector.multi_reduction <add>, %257, %cst_80 [1] : vector<2x128xf32> to vector<2xf32>
    %259 = vector.shape_cast %258 : vector<2xf32> to vector<2x1xf32>
    %260 = math.log %259 : vector<2x1xf32>
    %261 = arith.addf %260, %254 : vector<2x1xf32>
    %262 = vector.broadcast %261 : vector<2x1xf32> to vector<2x128xf32>
    %263 = arith.subf %252, %262 : vector<2x128xf32>
    %264 = arith.index_cast %c2_i32 : i32 to index
    %c0_81 = arith.constant 0 : index
    %c0_82 = arith.constant 0 : index
    %265 = vector.load %arg10[%264, %c0_81, %c0_82] : memref<8x2x128xf32, #tpu.memory_space<vmem>>, vector<1x2x128xf32>
    %266 = vector.shape_cast %265 : vector<1x2x128xf32> to vector<2x128xf32>
    %267 = vector.shape_cast %263 : vector<2x128xf32> to vector<1x2x128xf32>
    tpu.vector_store %arg10[%264, %c0_81, %c0_82], %267 {strides = array<i32>} : memref<8x2x128xf32, #tpu.memory_space<vmem>>, vector<1x2x128xf32>,
    %268 = arith.index_cast %c2_i32 : i32 to index
    %c0_83 = arith.constant 0 : index
    %c0_84 = arith.constant 0 : index
    %269 = vector.load %arg11[%268, %c0_83, %c0_84] : memref<8x2x8xf32, #tpu.memory_space<vmem>>, vector<1x2x8xf32>
    %270 = vector.shape_cast %269 : vector<1x2x8xf32> to vector<2x8xf32>
    %271 = vector.shape_cast %237 : vector<2x8xf32> to vector<1x2x8xf32>
    tpu.vector_store %arg11[%268, %c0_83, %c0_84], %271 {strides = array<i32>} : memref<8x2x8xf32, #tpu.memory_space<vmem>>, vector<1x2x8xf32>,
    %c3_i32 = arith.constant 3 : i32
    %272 = arith.index_cast %c3_i32 : i32 to index
    %c0_85 = arith.constant 0 : index
    %c0_86 = arith.constant 0 : index
    %273 = vector.load %arg0[%272, %c0_85, %c0_86] : memref<8x2x128xbf16, #tpu.memory_space<vmem>>, vector<1x2x128xbf16>
    %274 = vector.shape_cast %273 : vector<1x2x128xbf16> to vector<2x128xbf16>
    %cst_87 = arith.constant dense<0.000000e+00> : vector<2x384xf32>
    %275 = tpu.matmul %274, %0, %cst_87 {dimension_numbers = #tpu.dot_dimension_numbers<[1], [0], [0], [1], [0, 0, 1, 1], [], []>} : vector<2x128xbf16>, vector<128x384xbf16>, vector<2x384xf32> -> vector<2x384xf32>
    %276 = arith.addf %275, %5 : vector<2x384xf32>
    %277 = arith.truncf %223 : vector<2x128xf32> to vector<2x128xbf16>
    %cst_88 = arith.constant dense<0.000000e+00> : vector<2x384xf32>
    %278 = tpu.matmul %277, %1, %cst_88 {dimension_numbers = #tpu.dot_dimension_numbers<[1], [0], [0], [1], [0, 0, 1, 1], [], []>} : vector<2x128xbf16>, vector<128x384xbf16>, vector<2x384xf32> -> vector<2x384xf32>
    %279 = arith.addf %278, %9 : vector<2x384xf32>
    %280 = vector.extract_strided_slice %276 {offsets = [0, 0], sizes = [2, 128], strides = [1, 1]} : vector<2x384xf32> to vector<2x128xf32>
    %281 = vector.extract_strided_slice %279 {offsets = [0, 0], sizes = [2, 128], strides = [1, 1]} : vector<2x384xf32> to vector<2x128xf32>
    %282 = arith.addf %280, %281 : vector<2x128xf32>
    %283 = arith.negf %282 : vector<2x128xf32>
    %284 = math.exp %283 : vector<2x128xf32>
    %cst_89 = arith.constant 1.000000e+00 : f32
    %285 = vector.broadcast %cst_89 : f32 to vector<2x128xf32>
    %286 = arith.addf %285, %284 : vector<2x128xf32>
    %287 = arith.divf %285, %286 : vector<2x128xf32>
    %288 = vector.extract_strided_slice %276 {offsets = [0, 128], sizes = [2, 128], strides = [1, 1]} : vector<2x384xf32> to vector<2x128xf32>
    %289 = vector.extract_strided_slice %279 {offsets = [0, 128], sizes = [2, 128], strides = [1, 1]} : vector<2x384xf32> to vector<2x128xf32>
    %290 = arith.addf %288, %289 : vector<2x128xf32>
    %291 = arith.negf %290 : vector<2x128xf32>
    %292 = math.exp %291 : vector<2x128xf32>
    %cst_90 = arith.constant 1.000000e+00 : f32
    %293 = vector.broadcast %cst_90 : f32 to vector<2x128xf32>
    %294 = arith.addf %293, %292 : vector<2x128xf32>
    %295 = arith.divf %293, %294 : vector<2x128xf32>
    %296 = vector.extract_strided_slice %276 {offsets = [0, 256], sizes = [2, 128], strides = [1, 1]} : vector<2x384xf32> to vector<2x128xf32>
    %297 = vector.extract_strided_slice %279 {offsets = [0, 256], sizes = [2, 128], strides = [1, 1]} : vector<2x384xf32> to vector<2x128xf32>
    %298 = arith.mulf %287, %297 : vector<2x128xf32>
    %299 = arith.addf %296, %298 : vector<2x128xf32>
    %300 = math.tanh %299 : vector<2x128xf32>
    %cst_91 = arith.constant 1.000000e+00 : f32
    %301 = vector.broadcast %cst_91 : f32 to vector<2x128xf32>
    %302 = arith.subf %301, %295 : vector<2x128xf32>
    %303 = arith.mulf %302, %300 : vector<2x128xf32>
    %304 = arith.mulf %295, %223 : vector<2x128xf32>
    %305 = arith.addf %303, %304 : vector<2x128xf32>
    %306 = arith.truncf %305 : vector<2x128xf32> to vector<2x128xbf16>
    %307 = vector.shape_cast %306 : vector<2x128xbf16> to vector<2x1x128xbf16>
    "tpu.trace_start"() <{level = 10 : i32, message = "bqd,bkd->bqk"}> : () -> ()
    %cst_92 = arith.constant dense<0.000000e+00> : vector<2x1x8xf32>
    %308 = tpu.matmul %307, %21, %cst_92 {dimension_numbers = #tpu.dot_dimension_numbers<[2], [2], [1], [1], [0, 0, 0, 1, 1, 1], [0], [0]>} : vector<2x1x128xbf16>, vector<2x8x128xbf16>, vector<2x1x8xf32> -> vector<2x1x8xf32>
    "tpu.trace_stop"() : () -> ()
    %309 = vector.shape_cast %308 : vector<2x1x8xf32> to vector<2x8xf32>
    %cst_93 = arith.constant dense<0xFF800000> : vector<2xf32>
    %310 = vector.multi_reduction <maximumf>, %309, %cst_93 [1] : vector<2x8xf32> to vector<2xf32>
    %311 = vector.shape_cast %310 : vector<2xf32> to vector<2x1xf32>
    %312 = vector.broadcast %311 : vector<2x1xf32> to vector<2x8xf32>
    %313 = arith.subf %309, %312 : vector<2x8xf32>
    %314 = math.exp %313 : vector<2x8xf32>
    %cst_94 = arith.constant dense<0.000000e+00> : vector<2xf32>
    %315 = vector.multi_reduction <add>, %314, %cst_94 [1] : vector<2x8xf32> to vector<2xf32>
    %316 = vector.shape_cast %315 : vector<2xf32> to vector<2x1xf32>
    %317 = tpu.reciprocal %316 {approx = true} : vector<2x1xf32> -> vector<2x1xf32>
    %318 = vector.broadcast %317 : vector<2x1xf32> to vector<2x8xf32>
    %319 = arith.mulf %314, %318 : vector<2x8xf32>
    %320 = arith.truncf %319 : vector<2x8xf32> to vector<2x8xbf16>
    %321 = vector.shape_cast %320 : vector<2x8xbf16> to vector<2x1x8xbf16>
    "tpu.trace_start"() <{level = 10 : i32, message = "bqk,bkd->bqd"}> : () -> ()
    %cst_95 = arith.constant dense<0.000000e+00> : vector<2x1x128xf32>
    %322 = tpu.matmul %321, %21, %cst_95 {dimension_numbers = #tpu.dot_dimension_numbers<[2], [1], [1], [2], [0, 0, 0, 1, 1, 2], [0], [0]>} : vector<2x1x8xbf16>, vector<2x8x128xbf16>, vector<2x1x128xf32> -> vector<2x1x128xf32>
    "tpu.trace_stop"() : () -> ()
    %323 = vector.shape_cast %322 : vector<2x1x128xf32> to vector<2x128xf32>
    %324 = arith.truncf %323 : vector<2x128xf32> to vector<2x128xbf16>
    %cst_96 = arith.constant dense<0.000000e+00> : vector<2x128xf32>
    %325 = tpu.matmul %324, %11, %cst_96 {dimension_numbers = #tpu.dot_dimension_numbers<[1], [0], [0], [1], [0, 0, 1, 1], [], []>} : vector<2x128xbf16>, vector<128x128xbf16>, vector<2x128xf32> -> vector<2x128xf32>
    %cst_97 = arith.constant dense<0.000000e+00> : vector<2x128xf32>
    %326 = tpu.matmul %306, %13, %cst_97 {dimension_numbers = #tpu.dot_dimension_numbers<[1], [0], [0], [1], [0, 0, 1, 1], [], []>} : vector<2x128xbf16>, vector<128x128xbf16>, vector<2x128xf32> -> vector<2x128xf32>
    %327 = arith.addf %325, %326 : vector<2x128xf32>
    %328 = arith.addf %327, %16 : vector<2x128xf32>
    %329 = math.tanh %328 : vector<2x128xf32>
    %330 = arith.truncf %329 : vector<2x128xf32> to vector<2x128xbf16>
    %cst_98 = arith.constant dense<0.000000e+00> : vector<2x128xf32>
    %331 = tpu.matmul %330, %17, %cst_98 {dimension_numbers = #tpu.dot_dimension_numbers<[1], [0], [0], [1], [0, 0, 1, 1], [], []>} : vector<2x128xbf16>, vector<128x128xbf16>, vector<2x128xf32> -> vector<2x128xf32>
    %332 = arith.addf %331, %20 : vector<2x128xf32>
    %333 = vector.broadcast %cst : f32 to vector<2x128xf32>
    %334 = arith.select %24, %332, %333 : vector<2x128xi1>, vector<2x128xf32>
    %cst_99 = arith.constant dense<0xFF800000> : vector<2xf32>
    %335 = vector.multi_reduction <maximumf>, %334, %cst_99 [1] : vector<2x128xf32> to vector<2xf32>
    %336 = vector.shape_cast %335 : vector<2xf32> to vector<2x1xf32>
    %337 = vector.broadcast %336 : vector<2x1xf32> to vector<2x128xf32>
    %338 = arith.subf %334, %337 : vector<2x128xf32>
    %339 = math.exp %338 : vector<2x128xf32>
    %cst_100 = arith.constant dense<0.000000e+00> : vector<2xf32>
    %340 = vector.multi_reduction <add>, %339, %cst_100 [1] : vector<2x128xf32> to vector<2xf32>
    %341 = vector.shape_cast %340 : vector<2xf32> to vector<2x1xf32>
    %342 = math.log %341 : vector<2x1xf32>
    %343 = arith.addf %342, %336 : vector<2x1xf32>
    %344 = vector.broadcast %343 : vector<2x1xf32> to vector<2x128xf32>
    %345 = arith.subf %334, %344 : vector<2x128xf32>
    %346 = arith.index_cast %c3_i32 : i32 to index
    %c0_101 = arith.constant 0 : index
    %c0_102 = arith.constant 0 : index
    %347 = vector.load %arg10[%346, %c0_101, %c0_102] : memref<8x2x128xf32, #tpu.memory_space<vmem>>, vector<1x2x128xf32>
    %348 = vector.shape_cast %347 : vector<1x2x128xf32> to vector<2x128xf32>
    %349 = vector.shape_cast %345 : vector<2x128xf32> to vector<1x2x128xf32>
    tpu.vector_store %arg10[%346, %c0_101, %c0_102], %349 {strides = array<i32>} : memref<8x2x128xf32, #tpu.memory_space<vmem>>, vector<1x2x128xf32>,
    %350 = arith.index_cast %c3_i32 : i32 to index
    %c0_103 = arith.constant 0 : index
    %c0_104 = arith.constant 0 : index
    %351 = vector.load %arg11[%350, %c0_103, %c0_104] : memref<8x2x8xf32, #tpu.memory_space<vmem>>, vector<1x2x8xf32>
    %352 = vector.shape_cast %351 : vector<1x2x8xf32> to vector<2x8xf32>
    %353 = vector.shape_cast %319 : vector<2x8xf32> to vector<1x2x8xf32>
    tpu.vector_store %arg11[%350, %c0_103, %c0_104], %353 {strides = array<i32>} : memref<8x2x8xf32, #tpu.memory_space<vmem>>, vector<1x2x8xf32>,
    %c4_i32 = arith.constant 4 : i32
    %354 = arith.index_cast %c4_i32 : i32 to index
    %c0_105 = arith.constant 0 : index
    %c0_106 = arith.constant 0 : index
    %355 = vector.load %arg0[%354, %c0_105, %c0_106] : memref<8x2x128xbf16, #tpu.memory_space<vmem>>, vector<1x2x128xbf16>
    %356 = vector.shape_cast %355 : vector<1x2x128xbf16> to vector<2x128xbf16>
    %cst_107 = arith.constant dense<0.000000e+00> : vector<2x384xf32>
    %357 = tpu.matmul %356, %0, %cst_107 {dimension_numbers = #tpu.dot_dimension_numbers<[1], [0], [0], [1], [0, 0, 1, 1], [], []>} : vector<2x128xbf16>, vector<128x384xbf16>, vector<2x384xf32> -> vector<2x384xf32>
    %358 = arith.addf %357, %5 : vector<2x384xf32>
    %359 = arith.truncf %305 : vector<2x128xf32> to vector<2x128xbf16>
    %cst_108 = arith.constant dense<0.000000e+00> : vector<2x384xf32>
    %360 = tpu.matmul %359, %1, %cst_108 {dimension_numbers = #tpu.dot_dimension_numbers<[1], [0], [0], [1], [0, 0, 1, 1], [], []>} : vector<2x128xbf16>, vector<128x384xbf16>, vector<2x384xf32> -> vector<2x384xf32>
    %361 = arith.addf %360, %9 : vector<2x384xf32>
    %362 = vector.extract_strided_slice %358 {offsets = [0, 0], sizes = [2, 128], strides = [1, 1]} : vector<2x384xf32> to vector<2x128xf32>
    %363 = vector.extract_strided_slice %361 {offsets = [0, 0], sizes = [2, 128], strides = [1, 1]} : vector<2x384xf32> to vector<2x128xf32>
    %364 = arith.addf %362, %363 : vector<2x128xf32>
    %365 = arith.negf %364 : vector<2x128xf32>
    %366 = math.exp %365 : vector<2x128xf32>
    %cst_109 = arith.constant 1.000000e+00 : f32
    %367 = vector.broadcast %cst_109 : f32 to vector<2x128xf32>
    %368 = arith.addf %367, %366 : vector<2x128xf32>
    %369 = arith.divf %367, %368 : vector<2x128xf32>
    %370 = vector.extract_strided_slice %358 {offsets = [0, 128], sizes = [2, 128], strides = [1, 1]} : vector<2x384xf32> to vector<2x128xf32>
    %371 = vector.extract_strided_slice %361 {offsets = [0, 128], sizes = [2, 128], strides = [1, 1]} : vector<2x384xf32> to vector<2x128xf32>
    %372 = arith.addf %370, %371 : vector<2x128xf32>
    %373 = arith.negf %372 : vector<2x128xf32>
    %374 = math.exp %373 : vector<2x128xf32>
    %cst_110 = arith.constant 1.000000e+00 : f32
    %375 = vector.broadcast %cst_110 : f32 to vector<2x128xf32>
    %376 = arith.addf %375, %374 : vector<2x128xf32>
    %377 = arith.divf %375, %376 : vector<2x128xf32>
    %378 = vector.extract_strided_slice %358 {offsets = [0, 256], sizes = [2, 128], strides = [1, 1]} : vector<2x384xf32> to vector<2x128xf32>
    %379 = vector.extract_strided_slice %361 {offsets = [0, 256], sizes = [2, 128], strides = [1, 1]} : vector<2x384xf32> to vector<2x128xf32>
    %380 = arith.mulf %369, %379 : vector<2x128xf32>
    %381 = arith.addf %378, %380 : vector<2x128xf32>
    %382 = math.tanh %381 : vector<2x128xf32>
    %cst_111 = arith.constant 1.000000e+00 : f32
    %383 = vector.broadcast %cst_111 : f32 to vector<2x128xf32>
    %384 = arith.subf %383, %377 : vector<2x128xf32>
    %385 = arith.mulf %384, %382 : vector<2x128xf32>
    %386 = arith.mulf %377, %305 : vector<2x128xf32>
    %387 = arith.addf %385, %386 : vector<2x128xf32>
    %388 = arith.truncf %387 : vector<2x128xf32> to vector<2x128xbf16>
    %389 = vector.shape_cast %388 : vector<2x128xbf16> to vector<2x1x128xbf16>
    "tpu.trace_start"() <{level = 10 : i32, message = "bqd,bkd->bqk"}> : () -> ()
    %cst_112 = arith.constant dense<0.000000e+00> : vector<2x1x8xf32>
    %390 = tpu.matmul %389, %21, %cst_112 {dimension_numbers = #tpu.dot_dimension_numbers<[2], [2], [1], [1], [0, 0, 0, 1, 1, 1], [0], [0]>} : vector<2x1x128xbf16>, vector<2x8x128xbf16>, vector<2x1x8xf32> -> vector<2x1x8xf32>
    "tpu.trace_stop"() : () -> ()
    %391 = vector.shape_cast %390 : vector<2x1x8xf32> to vector<2x8xf32>
    %cst_113 = arith.constant dense<0xFF800000> : vector<2xf32>
    %392 = vector.multi_reduction <maximumf>, %391, %cst_113 [1] : vector<2x8xf32> to vector<2xf32>
    %393 = vector.shape_cast %392 : vector<2xf32> to vector<2x1xf32>
    %394 = vector.broadcast %393 : vector<2x1xf32> to vector<2x8xf32>
    %395 = arith.subf %391, %394 : vector<2x8xf32>
    %396 = math.exp %395 : vector<2x8xf32>
    %cst_114 = arith.constant dense<0.000000e+00> : vector<2xf32>
    %397 = vector.multi_reduction <add>, %396, %cst_114 [1] : vector<2x8xf32> to vector<2xf32>
    %398 = vector.shape_cast %397 : vector<2xf32> to vector<2x1xf32>
    %399 = tpu.reciprocal %398 {approx = true} : vector<2x1xf32> -> vector<2x1xf32>
    %400 = vector.broadcast %399 : vector<2x1xf32> to vector<2x8xf32>
    %401 = arith.mulf %396, %400 : vector<2x8xf32>
    %402 = arith.truncf %401 : vector<2x8xf32> to vector<2x8xbf16>
    %403 = vector.shape_cast %402 : vector<2x8xbf16> to vector<2x1x8xbf16>
    "tpu.trace_start"() <{level = 10 : i32, message = "bqk,bkd->bqd"}> : () -> ()
    %cst_115 = arith.constant dense<0.000000e+00> : vector<2x1x128xf32>
    %404 = tpu.matmul %403, %21, %cst_115 {dimension_numbers = #tpu.dot_dimension_numbers<[2], [1], [1], [2], [0, 0, 0, 1, 1, 2], [0], [0]>} : vector<2x1x8xbf16>, vector<2x8x128xbf16>, vector<2x1x128xf32> -> vector<2x1x128xf32>
    "tpu.trace_stop"() : () -> ()
    %405 = vector.shape_cast %404 : vector<2x1x128xf32> to vector<2x128xf32>
    %406 = arith.truncf %405 : vector<2x128xf32> to vector<2x128xbf16>
    %cst_116 = arith.constant dense<0.000000e+00> : vector<2x128xf32>
    %407 = tpu.matmul %406, %11, %cst_116 {dimension_numbers = #tpu.dot_dimension_numbers<[1], [0], [0], [1], [0, 0, 1, 1], [], []>} : vector<2x128xbf16>, vector<128x128xbf16>, vector<2x128xf32> -> vector<2x128xf32>
    %cst_117 = arith.constant dense<0.000000e+00> : vector<2x128xf32>
    %408 = tpu.matmul %388, %13, %cst_117 {dimension_numbers = #tpu.dot_dimension_numbers<[1], [0], [0], [1], [0, 0, 1, 1], [], []>} : vector<2x128xbf16>, vector<128x128xbf16>, vector<2x128xf32> -> vector<2x128xf32>
    %409 = arith.addf %407, %408 : vector<2x128xf32>
    %410 = arith.addf %409, %16 : vector<2x128xf32>
    %411 = math.tanh %410 : vector<2x128xf32>
    %412 = arith.truncf %411 : vector<2x128xf32> to vector<2x128xbf16>
    %cst_118 = arith.constant dense<0.000000e+00> : vector<2x128xf32>
    %413 = tpu.matmul %412, %17, %cst_118 {dimension_numbers = #tpu.dot_dimension_numbers<[1], [0], [0], [1], [0, 0, 1, 1], [], []>} : vector<2x128xbf16>, vector<128x128xbf16>, vector<2x128xf32> -> vector<2x128xf32>
    %414 = arith.addf %413, %20 : vector<2x128xf32>
    %415 = vector.broadcast %cst : f32 to vector<2x128xf32>
    %416 = arith.select %24, %414, %415 : vector<2x128xi1>, vector<2x128xf32>
    %cst_119 = arith.constant dense<0xFF800000> : vector<2xf32>
    %417 = vector.multi_reduction <maximumf>, %416, %cst_119 [1] : vector<2x128xf32> to vector<2xf32>
    %418 = vector.shape_cast %417 : vector<2xf32> to vector<2x1xf32>
    %419 = vector.broadcast %418 : vector<2x1xf32> to vector<2x128xf32>
    %420 = arith.subf %416, %419 : vector<2x128xf32>
    %421 = math.exp %420 : vector<2x128xf32>
    %cst_120 = arith.constant dense<0.000000e+00> : vector<2xf32>
    %422 = vector.multi_reduction <add>, %421, %cst_120 [1] : vector<2x128xf32> to vector<2xf32>
    %423 = vector.shape_cast %422 : vector<2xf32> to vector<2x1xf32>
    %424 = math.log %423 : vector<2x1xf32>
    %425 = arith.addf %424, %418 : vector<2x1xf32>
    %426 = vector.broadcast %425 : vector<2x1xf32> to vector<2x128xf32>
    %427 = arith.subf %416, %426 : vector<2x128xf32>
    %428 = arith.index_cast %c4_i32 : i32 to index
    %c0_121 = arith.constant 0 : index
    %c0_122 = arith.constant 0 : index
    %429 = vector.load %arg10[%428, %c0_121, %c0_122] : memref<8x2x128xf32, #tpu.memory_space<vmem>>, vector<1x2x128xf32>
    %430 = vector.shape_cast %429 : vector<1x2x128xf32> to vector<2x128xf32>
    %431 = vector.shape_cast %427 : vector<2x128xf32> to vector<1x2x128xf32>
    tpu.vector_store %arg10[%428, %c0_121, %c0_122], %431 {strides = array<i32>} : memref<8x2x128xf32, #tpu.memory_space<vmem>>, vector<1x2x128xf32>,
    %432 = arith.index_cast %c4_i32 : i32 to index
    %c0_123 = arith.constant 0 : index
    %c0_124 = arith.constant 0 : index
    %433 = vector.load %arg11[%432, %c0_123, %c0_124] : memref<8x2x8xf32, #tpu.memory_space<vmem>>, vector<1x2x8xf32>
    %434 = vector.shape_cast %433 : vector<1x2x8xf32> to vector<2x8xf32>
    %435 = vector.shape_cast %401 : vector<2x8xf32> to vector<1x2x8xf32>
    tpu.vector_store %arg11[%432, %c0_123, %c0_124], %435 {strides = array<i32>} : memref<8x2x8xf32, #tpu.memory_space<vmem>>, vector<1x2x8xf32>,
    %c5_i32 = arith.constant 5 : i32
    %436 = arith.index_cast %c5_i32 : i32 to index
    %c0_125 = arith.constant 0 : index
    %c0_126 = arith.constant 0 : index
    %437 = vector.load %arg0[%436, %c0_125, %c0_126] : memref<8x2x128xbf16, #tpu.memory_space<vmem>>, vector<1x2x128xbf16>
    %438 = vector.shape_cast %437 : vector<1x2x128xbf16> to vector<2x128xbf16>
    %cst_127 = arith.constant dense<0.000000e+00> : vector<2x384xf32>
    %439 = tpu.matmul %438, %0, %cst_127 {dimension_numbers = #tpu.dot_dimension_numbers<[1], [0], [0], [1], [0, 0, 1, 1], [], []>} : vector<2x128xbf16>, vector<128x384xbf16>, vector<2x384xf32> -> vector<2x384xf32>
    %440 = arith.addf %439, %5 : vector<2x384xf32>
    %441 = arith.truncf %387 : vector<2x128xf32> to vector<2x128xbf16>
    %cst_128 = arith.constant dense<0.000000e+00> : vector<2x384xf32>
    %442 = tpu.matmul %441, %1, %cst_128 {dimension_numbers = #tpu.dot_dimension_numbers<[1], [0], [0], [1], [0, 0, 1, 1], [], []>} : vector<2x128xbf16>, vector<128x384xbf16>, vector<2x384xf32> -> vector<2x384xf32>
    %443 = arith.addf %442, %9 : vector<2x384xf32>
    %444 = vector.extract_strided_slice %440 {offsets = [0, 0], sizes = [2, 128], strides = [1, 1]} : vector<2x384xf32> to vector<2x128xf32>
    %445 = vector.extract_strided_slice %443 {offsets = [0, 0], sizes = [2, 128], strides = [1, 1]} : vector<2x384xf32> to vector<2x128xf32>
    %446 = arith.addf %444, %445 : vector<2x128xf32>
    %447 = arith.negf %446 : vector<2x128xf32>
    %448 = math.exp %447 : vector<2x128xf32>
    %cst_129 = arith.constant 1.000000e+00 : f32
    %449 = vector.broadcast %cst_129 : f32 to vector<2x128xf32>
    %450 = arith.addf %449, %448 : vector<2x128xf32>
    %451 = arith.divf %449, %450 : vector<2x128xf32>
    %452 = vector.extract_strided_slice %440 {offsets = [0, 128], sizes = [2, 128], strides = [1, 1]} : vector<2x384xf32> to vector<2x128xf32>
    %453 = vector.extract_strided_slice %443 {offsets = [0, 128], sizes = [2, 128], strides = [1, 1]} : vector<2x384xf32> to vector<2x128xf32>
    %454 = arith.addf %452, %453 : vector<2x128xf32>
    %455 = arith.negf %454 : vector<2x128xf32>
    %456 = math.exp %455 : vector<2x128xf32>
    %cst_130 = arith.constant 1.000000e+00 : f32
    %457 = vector.broadcast %cst_130 : f32 to vector<2x128xf32>
    %458 = arith.addf %457, %456 : vector<2x128xf32>
    %459 = arith.divf %457, %458 : vector<2x128xf32>
    %460 = vector.extract_strided_slice %440 {offsets = [0, 256], sizes = [2, 128], strides = [1, 1]} : vector<2x384xf32> to vector<2x128xf32>
    %461 = vector.extract_strided_slice %443 {offsets = [0, 256], sizes = [2, 128], strides = [1, 1]} : vector<2x384xf32> to vector<2x128xf32>
    %462 = arith.mulf %451, %461 : vector<2x128xf32>
    %463 = arith.addf %460, %462 : vector<2x128xf32>
    %464 = math.tanh %463 : vector<2x128xf32>
    %cst_131 = arith.constant 1.000000e+00 : f32
    %465 = vector.broadcast %cst_131 : f32 to vector<2x128xf32>
    %466 = arith.subf %465, %459 : vector<2x128xf32>
    %467 = arith.mulf %466, %464 : vector<2x128xf32>
    %468 = arith.mulf %459, %387 : vector<2x128xf32>
    %469 = arith.addf %467, %468 : vector<2x128xf32>
    %470 = arith.truncf %469 : vector<2x128xf32> to vector<2x128xbf16>
    %471 = vector.shape_cast %470 : vector<2x128xbf16> to vector<2x1x128xbf16>
    "tpu.trace_start"() <{level = 10 : i32, message = "bqd,bkd->bqk"}> : () -> ()
    %cst_132 = arith.constant dense<0.000000e+00> : vector<2x1x8xf32>
    %472 = tpu.matmul %471, %21, %cst_132 {dimension_numbers = #tpu.dot_dimension_numbers<[2], [2], [1], [1], [0, 0, 0, 1, 1, 1], [0], [0]>} : vector<2x1x128xbf16>, vector<2x8x128xbf16>, vector<2x1x8xf32> -> vector<2x1x8xf32>
    "tpu.trace_stop"() : () -> ()
    %473 = vector.shape_cast %472 : vector<2x1x8xf32> to vector<2x8xf32>
    %cst_133 = arith.constant dense<0xFF800000> : vector<2xf32>
    %474 = vector.multi_reduction <maximumf>, %473, %cst_133 [1] : vector<2x8xf32> to vector<2xf32>
    %475 = vector.shape_cast %474 : vector<2xf32> to vector<2x1xf32>
    %476 = vector.broadcast %475 : vector<2x1xf32> to vector<2x8xf32>
    %477 = arith.subf %473, %476 : vector<2x8xf32>
    %478 = math.exp %477 : vector<2x8xf32>
    %cst_134 = arith.constant dense<0.000000e+00> : vector<2xf32>
    %479 = vector.multi_reduction <add>, %478, %cst_134 [1] : vector<2x8xf32> to vector<2xf32>
    %480 = vector.shape_cast %479 : vector<2xf32> to vector<2x1xf32>
    %481 = tpu.reciprocal %480 {approx = true} : vector<2x1xf32> -> vector<2x1xf32>
    %482 = vector.broadcast %481 : vector<2x1xf32> to vector<2x8xf32>
    %483 = arith.mulf %478, %482 : vector<2x8xf32>
    %484 = arith.truncf %483 : vector<2x8xf32> to vector<2x8xbf16>
    %485 = vector.shape_cast %484 : vector<2x8xbf16> to vector<2x1x8xbf16>
    "tpu.trace_start"() <{level = 10 : i32, message = "bqk,bkd->bqd"}> : () -> ()
    %cst_135 = arith.constant dense<0.000000e+00> : vector<2x1x128xf32>
    %486 = tpu.matmul %485, %21, %cst_135 {dimension_numbers = #tpu.dot_dimension_numbers<[2], [1], [1], [2], [0, 0, 0, 1, 1, 2], [0], [0]>} : vector<2x1x8xbf16>, vector<2x8x128xbf16>, vector<2x1x128xf32> -> vector<2x1x128xf32>
    "tpu.trace_stop"() : () -> ()
    %487 = vector.shape_cast %486 : vector<2x1x128xf32> to vector<2x128xf32>
    %488 = arith.truncf %487 : vector<2x128xf32> to vector<2x128xbf16>
    %cst_136 = arith.constant dense<0.000000e+00> : vector<2x128xf32>
    %489 = tpu.matmul %488, %11, %cst_136 {dimension_numbers = #tpu.dot_dimension_numbers<[1], [0], [0], [1], [0, 0, 1, 1], [], []>} : vector<2x128xbf16>, vector<128x128xbf16>, vector<2x128xf32> -> vector<2x128xf32>
    %cst_137 = arith.constant dense<0.000000e+00> : vector<2x128xf32>
    %490 = tpu.matmul %470, %13, %cst_137 {dimension_numbers = #tpu.dot_dimension_numbers<[1], [0], [0], [1], [0, 0, 1, 1], [], []>} : vector<2x128xbf16>, vector<128x128xbf16>, vector<2x128xf32> -> vector<2x128xf32>
    %491 = arith.addf %489, %490 : vector<2x128xf32>
    %492 = arith.addf %491, %16 : vector<2x128xf32>
    %493 = math.tanh %492 : vector<2x128xf32>
    %494 = arith.truncf %493 : vector<2x128xf32> to vector<2x128xbf16>
    %cst_138 = arith.constant dense<0.000000e+00> : vector<2x128xf32>
    %495 = tpu.matmul %494, %17, %cst_138 {dimension_numbers = #tpu.dot_dimension_numbers<[1], [0], [0], [1], [0, 0, 1, 1], [], []>} : vector<2x128xbf16>, vector<128x128xbf16>, vector<2x128xf32> -> vector<2x128xf32>
    %496 = arith.addf %495, %20 : vector<2x128xf32>
    %497 = vector.broadcast %cst : f32 to vector<2x128xf32>
    %498 = arith.select %24, %496, %497 : vector<2x128xi1>, vector<2x128xf32>
    %cst_139 = arith.constant dense<0xFF800000> : vector<2xf32>
    %499 = vector.multi_reduction <maximumf>, %498, %cst_139 [1] : vector<2x128xf32> to vector<2xf32>
    %500 = vector.shape_cast %499 : vector<2xf32> to vector<2x1xf32>
    %501 = vector.broadcast %500 : vector<2x1xf32> to vector<2x128xf32>
    %502 = arith.subf %498, %501 : vector<2x128xf32>
    %503 = math.exp %502 : vector<2x128xf32>
    %cst_140 = arith.constant dense<0.000000e+00> : vector<2xf32>
    %504 = vector.multi_reduction <add>, %503, %cst_140 [1] : vector<2x128xf32> to vector<2xf32>
    %505 = vector.shape_cast %504 : vector<2xf32> to vector<2x1xf32>
    %506 = math.log %505 : vector<2x1xf32>
    %507 = arith.addf %506, %500 : vector<2x1xf32>
    %508 = vector.broadcast %507 : vector<2x1xf32> to vector<2x128xf32>
    %509 = arith.subf %498, %508 : vector<2x128xf32>
    %510 = arith.index_cast %c5_i32 : i32 to index
    %c0_141 = arith.constant 0 : index
    %c0_142 = arith.constant 0 : index
    %511 = vector.load %arg10[%510, %c0_141, %c0_142] : memref<8x2x128xf32, #tpu.memory_space<vmem>>, vector<1x2x128xf32>
    %512 = vector.shape_cast %511 : vector<1x2x128xf32> to vector<2x128xf32>
    %513 = vector.shape_cast %509 : vector<2x128xf32> to vector<1x2x128xf32>
    tpu.vector_store %arg10[%510, %c0_141, %c0_142], %513 {strides = array<i32>} : memref<8x2x128xf32, #tpu.memory_space<vmem>>, vector<1x2x128xf32>,
    %514 = arith.index_cast %c5_i32 : i32 to index
    %c0_143 = arith.constant 0 : index
    %c0_144 = arith.constant 0 : index
    %515 = vector.load %arg11[%514, %c0_143, %c0_144] : memref<8x2x8xf32, #tpu.memory_space<vmem>>, vector<1x2x8xf32>
    %516 = vector.shape_cast %515 : vector<1x2x8xf32> to vector<2x8xf32>
    %517 = vector.shape_cast %483 : vector<2x8xf32> to vector<1x2x8xf32>
    tpu.vector_store %arg11[%514, %c0_143, %c0_144], %517 {strides = array<i32>} : memref<8x2x8xf32, #tpu.memory_space<vmem>>, vector<1x2x8xf32>,
    %c6_i32 = arith.constant 6 : i32
    %518 = arith.index_cast %c6_i32 : i32 to index
    %c0_145 = arith.constant 0 : index
    %c0_146 = arith.constant 0 : index
    %519 = vector.load %arg0[%518, %c0_145, %c0_146] : memref<8x2x128xbf16, #tpu.memory_space<vmem>>, vector<1x2x128xbf16>
    %520 = vector.shape_cast %519 : vector<1x2x128xbf16> to vector<2x128xbf16>
    %cst_147 = arith.constant dense<0.000000e+00> : vector<2x384xf32>
    %521 = tpu.matmul %520, %0, %cst_147 {dimension_numbers = #tpu.dot_dimension_numbers<[1], [0], [0], [1], [0, 0, 1, 1], [], []>} : vector<2x128xbf16>, vector<128x384xbf16>, vector<2x384xf32> -> vector<2x384xf32>
    %522 = arith.addf %521, %5 : vector<2x384xf32>
    %523 = arith.truncf %469 : vector<2x128xf32> to vector<2x128xbf16>
    %cst_148 = arith.constant dense<0.000000e+00> : vector<2x384xf32>
    %524 = tpu.matmul %523, %1, %cst_148 {dimension_numbers = #tpu.dot_dimension_numbers<[1], [0], [0], [1], [0, 0, 1, 1], [], []>} : vector<2x128xbf16>, vector<128x384xbf16>, vector<2x384xf32> -> vector<2x384xf32>
    %525 = arith.addf %524, %9 : vector<2x384xf32>
    %526 = vector.extract_strided_slice %522 {offsets = [0, 0], sizes = [2, 128], strides = [1, 1]} : vector<2x384xf32> to vector<2x128xf32>
    %527 = vector.extract_strided_slice %525 {offsets = [0, 0], sizes = [2, 128], strides = [1, 1]} : vector<2x384xf32> to vector<2x128xf32>
    %528 = arith.addf %526, %527 : vector<2x128xf32>
    %529 = arith.negf %528 : vector<2x128xf32>
    %530 = math.exp %529 : vector<2x128xf32>
    %cst_149 = arith.constant 1.000000e+00 : f32
    %531 = vector.broadcast %cst_149 : f32 to vector<2x128xf32>
    %532 = arith.addf %531, %530 : vector<2x128xf32>
    %533 = arith.divf %531, %532 : vector<2x128xf32>
    %534 = vector.extract_strided_slice %522 {offsets = [0, 128], sizes = [2, 128], strides = [1, 1]} : vector<2x384xf32> to vector<2x128xf32>
    %535 = vector.extract_strided_slice %525 {offsets = [0, 128], sizes = [2, 128], strides = [1, 1]} : vector<2x384xf32> to vector<2x128xf32>
    %536 = arith.addf %534, %535 : vector<2x128xf32>
    %537 = arith.negf %536 : vector<2x128xf32>
    %538 = math.exp %537 : vector<2x128xf32>
    %cst_150 = arith.constant 1.000000e+00 : f32
    %539 = vector.broadcast %cst_150 : f32 to vector<2x128xf32>
    %540 = arith.addf %539, %538 : vector<2x128xf32>
    %541 = arith.divf %539, %540 : vector<2x128xf32>
    %542 = vector.extract_strided_slice %522 {offsets = [0, 256], sizes = [2, 128], strides = [1, 1]} : vector<2x384xf32> to vector<2x128xf32>
    %543 = vector.extract_strided_slice %525 {offsets = [0, 256], sizes = [2, 128], strides = [1, 1]} : vector<2x384xf32> to vector<2x128xf32>
    %544 = arith.mulf %533, %543 : vector<2x128xf32>
    %545 = arith.addf %542, %544 : vector<2x128xf32>
    %546 = math.tanh %545 : vector<2x128xf32>
    %cst_151 = arith.constant 1.000000e+00 : f32
    %547 = vector.broadcast %cst_151 : f32 to vector<2x128xf32>
    %548 = arith.subf %547, %541 : vector<2x128xf32>
    %549 = arith.mulf %548, %546 : vector<2x128xf32>
    %550 = arith.mulf %541, %469 : vector<2x128xf32>
    %551 = arith.addf %549, %550 : vector<2x128xf32>
    %552 = arith.truncf %551 : vector<2x128xf32> to vector<2x128xbf16>
    %553 = vector.shape_cast %552 : vector<2x128xbf16> to vector<2x1x128xbf16>
    "tpu.trace_start"() <{level = 10 : i32, message = "bqd,bkd->bqk"}> : () -> ()
    %cst_152 = arith.constant dense<0.000000e+00> : vector<2x1x8xf32>
    %554 = tpu.matmul %553, %21, %cst_152 {dimension_numbers = #tpu.dot_dimension_numbers<[2], [2], [1], [1], [0, 0, 0, 1, 1, 1], [0], [0]>} : vector<2x1x128xbf16>, vector<2x8x128xbf16>, vector<2x1x8xf32> -> vector<2x1x8xf32>
    "tpu.trace_stop"() : () -> ()
    %555 = vector.shape_cast %554 : vector<2x1x8xf32> to vector<2x8xf32>
    %cst_153 = arith.constant dense<0xFF800000> : vector<2xf32>
    %556 = vector.multi_reduction <maximumf>, %555, %cst_153 [1] : vector<2x8xf32> to vector<2xf32>
    %557 = vector.shape_cast %556 : vector<2xf32> to vector<2x1xf32>
    %558 = vector.broadcast %557 : vector<2x1xf32> to vector<2x8xf32>
    %559 = arith.subf %555, %558 : vector<2x8xf32>
    %560 = math.exp %559 : vector<2x8xf32>
    %cst_154 = arith.constant dense<0.000000e+00> : vector<2xf32>
    %561 = vector.multi_reduction <add>, %560, %cst_154 [1] : vector<2x8xf32> to vector<2xf32>
    %562 = vector.shape_cast %561 : vector<2xf32> to vector<2x1xf32>
    %563 = tpu.reciprocal %562 {approx = true} : vector<2x1xf32> -> vector<2x1xf32>
    %564 = vector.broadcast %563 : vector<2x1xf32> to vector<2x8xf32>
    %565 = arith.mulf %560, %564 : vector<2x8xf32>
    %566 = arith.truncf %565 : vector<2x8xf32> to vector<2x8xbf16>
    %567 = vector.shape_cast %566 : vector<2x8xbf16> to vector<2x1x8xbf16>
    "tpu.trace_start"() <{level = 10 : i32, message = "bqk,bkd->bqd"}> : () -> ()
    %cst_155 = arith.constant dense<0.000000e+00> : vector<2x1x128xf32>
    %568 = tpu.matmul %567, %21, %cst_155 {dimension_numbers = #tpu.dot_dimension_numbers<[2], [1], [1], [2], [0, 0, 0, 1, 1, 2], [0], [0]>} : vector<2x1x8xbf16>, vector<2x8x128xbf16>, vector<2x1x128xf32> -> vector<2x1x128xf32>
    "tpu.trace_stop"() : () -> ()
    %569 = vector.shape_cast %568 : vector<2x1x128xf32> to vector<2x128xf32>
    %570 = arith.truncf %569 : vector<2x128xf32> to vector<2x128xbf16>
    %cst_156 = arith.constant dense<0.000000e+00> : vector<2x128xf32>
    %571 = tpu.matmul %570, %11, %cst_156 {dimension_numbers = #tpu.dot_dimension_numbers<[1], [0], [0], [1], [0, 0, 1, 1], [], []>} : vector<2x128xbf16>, vector<128x128xbf16>, vector<2x128xf32> -> vector<2x128xf32>
    %cst_157 = arith.constant dense<0.000000e+00> : vector<2x128xf32>
    %572 = tpu.matmul %552, %13, %cst_157 {dimension_numbers = #tpu.dot_dimension_numbers<[1], [0], [0], [1], [0, 0, 1, 1], [], []>} : vector<2x128xbf16>, vector<128x128xbf16>, vector<2x128xf32> -> vector<2x128xf32>
    %573 = arith.addf %571, %572 : vector<2x128xf32>
    %574 = arith.addf %573, %16 : vector<2x128xf32>
    %575 = math.tanh %574 : vector<2x128xf32>
    %576 = arith.truncf %575 : vector<2x128xf32> to vector<2x128xbf16>
    %cst_158 = arith.constant dense<0.000000e+00> : vector<2x128xf32>
    %577 = tpu.matmul %576, %17, %cst_158 {dimension_numbers = #tpu.dot_dimension_numbers<[1], [0], [0], [1], [0, 0, 1, 1], [], []>} : vector<2x128xbf16>, vector<128x128xbf16>, vector<2x128xf32> -> vector<2x128xf32>
    %578 = arith.addf %577, %20 : vector<2x128xf32>
    %579 = vector.broadcast %cst : f32 to vector<2x128xf32>
    %580 = arith.select %24, %578, %579 : vector<2x128xi1>, vector<2x128xf32>
    %cst_159 = arith.constant dense<0xFF800000> : vector<2xf32>
    %581 = vector.multi_reduction <maximumf>, %580, %cst_159 [1] : vector<2x128xf32> to vector<2xf32>
    %582 = vector.shape_cast %581 : vector<2xf32> to vector<2x1xf32>
    %583 = vector.broadcast %582 : vector<2x1xf32> to vector<2x128xf32>
    %584 = arith.subf %580, %583 : vector<2x128xf32>
    %585 = math.exp %584 : vector<2x128xf32>
    %cst_160 = arith.constant dense<0.000000e+00> : vector<2xf32>
    %586 = vector.multi_reduction <add>, %585, %cst_160 [1] : vector<2x128xf32> to vector<2xf32>
    %587 = vector.shape_cast %586 : vector<2xf32> to vector<2x1xf32>
    %588 = math.log %587 : vector<2x1xf32>
    %589 = arith.addf %588, %582 : vector<2x1xf32>
    %590 = vector.broadcast %589 : vector<2x1xf32> to vector<2x128xf32>
    %591 = arith.subf %580, %590 : vector<2x128xf32>
    %592 = arith.index_cast %c6_i32 : i32 to index
    %c0_161 = arith.constant 0 : index
    %c0_162 = arith.constant 0 : index
    %593 = vector.load %arg10[%592, %c0_161, %c0_162] : memref<8x2x128xf32, #tpu.memory_space<vmem>>, vector<1x2x128xf32>
    %594 = vector.shape_cast %593 : vector<1x2x128xf32> to vector<2x128xf32>
    %595 = vector.shape_cast %591 : vector<2x128xf32> to vector<1x2x128xf32>
    tpu.vector_store %arg10[%592, %c0_161, %c0_162], %595 {strides = array<i32>} : memref<8x2x128xf32, #tpu.memory_space<vmem>>, vector<1x2x128xf32>,
    %596 = arith.index_cast %c6_i32 : i32 to index
    %c0_163 = arith.constant 0 : index
    %c0_164 = arith.constant 0 : index
    %597 = vector.load %arg11[%596, %c0_163, %c0_164] : memref<8x2x8xf32, #tpu.memory_space<vmem>>, vector<1x2x8xf32>
    %598 = vector.shape_cast %597 : vector<1x2x8xf32> to vector<2x8xf32>
    %599 = vector.shape_cast %565 : vector<2x8xf32> to vector<1x2x8xf32>
    tpu.vector_store %arg11[%596, %c0_163, %c0_164], %599 {strides = array<i32>} : memref<8x2x8xf32, #tpu.memory_space<vmem>>, vector<1x2x8xf32>,
    %c7_i32 = arith.constant 7 : i32
    %600 = arith.index_cast %c7_i32 : i32 to index
    %c0_165 = arith.constant 0 : index
    %c0_166 = arith.constant 0 : index
    %601 = vector.load %arg0[%600, %c0_165, %c0_166] : memref<8x2x128xbf16, #tpu.memory_space<vmem>>, vector<1x2x128xbf16>
    %602 = vector.shape_cast %601 : vector<1x2x128xbf16> to vector<2x128xbf16>
    %cst_167 = arith.constant dense<0.000000e+00> : vector<2x384xf32>
    %603 = tpu.matmul %602, %0, %cst_167 {dimension_numbers = #tpu.dot_dimension_numbers<[1], [0], [0], [1], [0, 0, 1, 1], [], []>} : vector<2x128xbf16>, vector<128x384xbf16>, vector<2x384xf32> -> vector<2x384xf32>
    %604 = arith.addf %603, %5 : vector<2x384xf32>
    %605 = arith.truncf %551 : vector<2x128xf32> to vector<2x128xbf16>
    %cst_168 = arith.constant dense<0.000000e+00> : vector<2x384xf32>
    %606 = tpu.matmul %605, %1, %cst_168 {dimension_numbers = #tpu.dot_dimension_numbers<[1], [0], [0], [1], [0, 0, 1, 1], [], []>} : vector<2x128xbf16>, vector<128x384xbf16>, vector<2x384xf32> -> vector<2x384xf32>
    %607 = arith.addf %606, %9 : vector<2x384xf32>
    %608 = vector.extract_strided_slice %604 {offsets = [0, 0], sizes = [2, 128], strides = [1, 1]} : vector<2x384xf32> to vector<2x128xf32>
    %609 = vector.extract_strided_slice %607 {offsets = [0, 0], sizes = [2, 128], strides = [1, 1]} : vector<2x384xf32> to vector<2x128xf32>
    %610 = arith.addf %608, %609 : vector<2x128xf32>
    %611 = arith.negf %610 : vector<2x128xf32>
    %612 = math.exp %611 : vector<2x128xf32>
    %cst_169 = arith.constant 1.000000e+00 : f32
    %613 = vector.broadcast %cst_169 : f32 to vector<2x128xf32>
    %614 = arith.addf %613, %612 : vector<2x128xf32>
    %615 = arith.divf %613, %614 : vector<2x128xf32>
    %616 = vector.extract_strided_slice %604 {offsets = [0, 128], sizes = [2, 128], strides = [1, 1]} : vector<2x384xf32> to vector<2x128xf32>
    %617 = vector.extract_strided_slice %607 {offsets = [0, 128], sizes = [2, 128], strides = [1, 1]} : vector<2x384xf32> to vector<2x128xf32>
    %618 = arith.addf %616, %617 : vector<2x128xf32>
    %619 = arith.negf %618 : vector<2x128xf32>
    %620 = math.exp %619 : vector<2x128xf32>
    %cst_170 = arith.constant 1.000000e+00 : f32
    %621 = vector.broadcast %cst_170 : f32 to vector<2x128xf32>
    %622 = arith.addf %621, %620 : vector<2x128xf32>
    %623 = arith.divf %621, %622 : vector<2x128xf32>
    %624 = vector.extract_strided_slice %604 {offsets = [0, 256], sizes = [2, 128], strides = [1, 1]} : vector<2x384xf32> to vector<2x128xf32>
    %625 = vector.extract_strided_slice %607 {offsets = [0, 256], sizes = [2, 128], strides = [1, 1]} : vector<2x384xf32> to vector<2x128xf32>
    %626 = arith.mulf %615, %625 : vector<2x128xf32>
    %627 = arith.addf %624, %626 : vector<2x128xf32>
    %628 = math.tanh %627 : vector<2x128xf32>
    %cst_171 = arith.constant 1.000000e+00 : f32
    %629 = vector.broadcast %cst_171 : f32 to vector<2x128xf32>
    %630 = arith.subf %629, %623 : vector<2x128xf32>
    %631 = arith.mulf %630, %628 : vector<2x128xf32>
    %632 = arith.mulf %623, %551 : vector<2x128xf32>
    %633 = arith.addf %631, %632 : vector<2x128xf32>
    %634 = arith.truncf %633 : vector<2x128xf32> to vector<2x128xbf16>
    %635 = vector.shape_cast %634 : vector<2x128xbf16> to vector<2x1x128xbf16>
    "tpu.trace_start"() <{level = 10 : i32, message = "bqd,bkd->bqk"}> : () -> ()
    %cst_172 = arith.constant dense<0.000000e+00> : vector<2x1x8xf32>
    %636 = tpu.matmul %635, %21, %cst_172 {dimension_numbers = #tpu.dot_dimension_numbers<[2], [2], [1], [1], [0, 0, 0, 1, 1, 1], [0], [0]>} : vector<2x1x128xbf16>, vector<2x8x128xbf16>, vector<2x1x8xf32> -> vector<2x1x8xf32>
    "tpu.trace_stop"() : () -> ()
    %637 = vector.shape_cast %636 : vector<2x1x8xf32> to vector<2x8xf32>
    %cst_173 = arith.constant dense<0xFF800000> : vector<2xf32>
    %638 = vector.multi_reduction <maximumf>, %637, %cst_173 [1] : vector<2x8xf32> to vector<2xf32>
    %639 = vector.shape_cast %638 : vector<2xf32> to vector<2x1xf32>
    %640 = vector.broadcast %639 : vector<2x1xf32> to vector<2x8xf32>
    %641 = arith.subf %637, %640 : vector<2x8xf32>
    %642 = math.exp %641 : vector<2x8xf32>
    %cst_174 = arith.constant dense<0.000000e+00> : vector<2xf32>
    %643 = vector.multi_reduction <add>, %642, %cst_174 [1] : vector<2x8xf32> to vector<2xf32>
    %644 = vector.shape_cast %643 : vector<2xf32> to vector<2x1xf32>
    %645 = tpu.reciprocal %644 {approx = true} : vector<2x1xf32> -> vector<2x1xf32>
    %646 = vector.broadcast %645 : vector<2x1xf32> to vector<2x8xf32>
    %647 = arith.mulf %642, %646 : vector<2x8xf32>
    %648 = arith.truncf %647 : vector<2x8xf32> to vector<2x8xbf16>
    %649 = vector.shape_cast %648 : vector<2x8xbf16> to vector<2x1x8xbf16>
    "tpu.trace_start"() <{level = 10 : i32, message = "bqk,bkd->bqd"}> : () -> ()
    %cst_175 = arith.constant dense<0.000000e+00> : vector<2x1x128xf32>
    %650 = tpu.matmul %649, %21, %cst_175 {dimension_numbers = #tpu.dot_dimension_numbers<[2], [1], [1], [2], [0, 0, 0, 1, 1, 2], [0], [0]>} : vector<2x1x8xbf16>, vector<2x8x128xbf16>, vector<2x1x128xf32> -> vector<2x1x128xf32>
    "tpu.trace_stop"() : () -> ()
    %651 = vector.shape_cast %650 : vector<2x1x128xf32> to vector<2x128xf32>
    %652 = arith.truncf %651 : vector<2x128xf32> to vector<2x128xbf16>
    %cst_176 = arith.constant dense<0.000000e+00> : vector<2x128xf32>
    %653 = tpu.matmul %652, %11, %cst_176 {dimension_numbers = #tpu.dot_dimension_numbers<[1], [0], [0], [1], [0, 0, 1, 1], [], []>} : vector<2x128xbf16>, vector<128x128xbf16>, vector<2x128xf32> -> vector<2x128xf32>
    %cst_177 = arith.constant dense<0.000000e+00> : vector<2x128xf32>
    %654 = tpu.matmul %634, %13, %cst_177 {dimension_numbers = #tpu.dot_dimension_numbers<[1], [0], [0], [1], [0, 0, 1, 1], [], []>} : vector<2x128xbf16>, vector<128x128xbf16>, vector<2x128xf32> -> vector<2x128xf32>
    %655 = arith.addf %653, %654 : vector<2x128xf32>
    %656 = arith.addf %655, %16 : vector<2x128xf32>
    %657 = math.tanh %656 : vector<2x128xf32>
    %658 = arith.truncf %657 : vector<2x128xf32> to vector<2x128xbf16>
    %cst_178 = arith.constant dense<0.000000e+00> : vector<2x128xf32>
    %659 = tpu.matmul %658, %17, %cst_178 {dimension_numbers = #tpu.dot_dimension_numbers<[1], [0], [0], [1], [0, 0, 1, 1], [], []>} : vector<2x128xbf16>, vector<128x128xbf16>, vector<2x128xf32> -> vector<2x128xf32>
    %660 = arith.addf %659, %20 : vector<2x128xf32>
    %661 = vector.broadcast %cst : f32 to vector<2x128xf32>
    %662 = arith.select %24, %660, %661 : vector<2x128xi1>, vector<2x128xf32>
    %cst_179 = arith.constant dense<0xFF800000> : vector<2xf32>
    %663 = vector.multi_reduction <maximumf>, %662, %cst_179 [1] : vector<2x128xf32> to vector<2xf32>
    %664 = vector.shape_cast %663 : vector<2xf32> to vector<2x1xf32>
    %665 = vector.broadcast %664 : vector<2x1xf32> to vector<2x128xf32>
    %666 = arith.subf %662, %665 : vector<2x128xf32>
    %667 = math.exp %666 : vector<2x128xf32>
    %cst_180 = arith.constant dense<0.000000e+00> : vector<2xf32>
    %668 = vector.multi_reduction <add>, %667, %cst_180 [1] : vector<2x128xf32> to vector<2xf32>
    %669 = vector.shape_cast %668 : vector<2xf32> to vector<2x1xf32>
    %670 = math.log %669 : vector<2x1xf32>
    %671 = arith.addf %670, %664 : vector<2x1xf32>
    %672 = vector.broadcast %671 : vector<2x1xf32> to vector<2x128xf32>
    %673 = arith.subf %662, %672 : vector<2x128xf32>
    %674 = arith.index_cast %c7_i32 : i32 to index
    %c0_181 = arith.constant 0 : index
    %c0_182 = arith.constant 0 : index
    %675 = vector.load %arg10[%674, %c0_181, %c0_182] : memref<8x2x128xf32, #tpu.memory_space<vmem>>, vector<1x2x128xf32>
    %676 = vector.shape_cast %675 : vector<1x2x128xf32> to vector<2x128xf32>
    %677 = vector.shape_cast %673 : vector<2x128xf32> to vector<1x2x128xf32>
    tpu.vector_store %arg10[%674, %c0_181, %c0_182], %677 {strides = array<i32>} : memref<8x2x128xf32, #tpu.memory_space<vmem>>, vector<1x2x128xf32>,
    %678 = arith.index_cast %c7_i32 : i32 to index
    %c0_183 = arith.constant 0 : index
    %c0_184 = arith.constant 0 : index
    %679 = vector.load %arg11[%678, %c0_183, %c0_184] : memref<8x2x8xf32, #tpu.memory_space<vmem>>, vector<1x2x8xf32>
    %680 = vector.shape_cast %679 : vector<1x2x8xf32> to vector<2x8xf32>
    %681 = vector.shape_cast %647 : vector<2x8xf32> to vector<1x2x8xf32>
    tpu.vector_store %arg11[%678, %c0_183, %c0_184], %681 {strides = array<i32>} : memref<8x2x8xf32, #tpu.memory_space<vmem>>, vector<1x2x8xf32>,
    %c8_i32 = arith.constant 8 : i32
    %c0_185 = arith.constant 0 : index
    %c0_186 = arith.constant 0 : index
    %682 = vector.load %arg12[%c0_185, %c0_186] : memref<2x128xf32, #tpu.memory_space<vmem>>, vector<2x128xf32>
    tpu.vector_store %arg12[%c0_185, %c0_186], %633 {strides = array<i32>} : memref<2x128xf32, #tpu.memory_space<vmem>>, vector<2x128xf32>,
    return
  }
}

</mosaic_0001>

<llo_original>
// kernel: seq2seq_forward.2
$region0: #{seq2seq_forward.2}
  #allocation0 [shape = 'u32[]', space=smem, size = 0x4, offset = 0x4, fixed_abs, tag = 'smem constant byte address 0x4 - core index']
  #allocation1 [shape = 'u32[144,128]{1,0:T(1,128)}', space=vmem, size = 0x12000, scoped, tag = 'internal scratch']
  %s0 = inlined_call_operand.vmem [shape: bf16[8,2,128], index: 0, kind: input, shape index: {}]
  %s1 = inlined_call_operand.vmem [shape: bf16[128,384], index: 1, kind: input, shape index: {}]
  %s2 = inlined_call_operand.vmem [shape: bf16[128,384], index: 2, kind: input, shape index: {}]
  %s3 = inlined_call_operand.vmem [shape: f32[2,1,384], index: 3, kind: input, shape index: {}]
  %s4 = inlined_call_operand.vmem [shape: bf16[8,2,128], index: 4, kind: output, shape index: {0}]
  %s5 = inlined_call_operand.vmem [shape: f32[2,128], index: 5, kind: output, shape index: {1}]
  %6 = xla_tuple %s4, %s5
  %s7 = sld [smem:[#allocation0]]
  $region34: #{seq2seq_forward.2} parent=0
    _
  %s9 = ssub.s32 1, %s7
  %s10 = scalar_select 0, %s9, %s7
  // Predicated region
  $region2: #{seq2seq_forward.2} parent=0 // pred_check
    _
  $region3: #{seq2seq_forward.2} parent=0 // pred_check_branch
    %12 = sbr.rel (0) target = $region5
  $region4: #{seq2seq_forward.2} parent=0 // pred_region
    _
  $region5: #{seq2seq_forward.2} parent=0 // pred_fallthru
    _
  // Predicated region
  $region6: #{seq2seq_forward.2} parent=0 // pred_check
    _
  $region7: #{seq2seq_forward.2} parent=0 // pred_check_branch
    %14 = sbr.rel (0) target = $region9
  $region8: #{seq2seq_forward.2} parent=0 // pred_region
    _
  $region9: #{seq2seq_forward.2} parent=0 // pred_fallthru
    _
  // Predicated region
  $region10: #{seq2seq_forward.2} parent=0 // pred_check
    _
  $region11: #{seq2seq_forward.2} parent=0 // pred_check_branch
    %16 = sbr.rel (0) target = $region13
  $region12: #{seq2seq_forward.2} parent=0 // pred_region
    _
  $region13: #{seq2seq_forward.2} parent=0 // pred_fallthru
    _
  // Predicated region
  $region14: #{seq2seq_forward.2} parent=0 // pred_check
    _
  $region15: #{seq2seq_forward.2} parent=0 // pred_check_branch
    %18 = sbr.rel (0) target = $region17
  $region16: #{seq2seq_forward.2} parent=0 // pred_region
    _
  $region17: #{seq2seq_forward.2} parent=0 // pred_fallthru
    _
  %v20 = vld [vmem:[%s1] sm:$0xff]
  %v21 = vld [vmem:[%s1 + $0x8] sm:$0xf]
  %v22 = vld [vmem:[%s1 + $0xc] sm:$0xff]
  %v23 = vld [vmem:[%s1 + $0x14] sm:$0xf]
  %v24 = vld [vmem:[%s1 + $0x18] sm:$0xff]
  %v25 = vld [vmem:[%s1 + $0x20] sm:$0xf]
  %v26 = vld [vmem:[%s1 + $0x24] sm:$0xff]
  %v27 = vld [vmem:[%s1 + $0x2c] sm:$0xf]
  %v28 = vld [vmem:[%s1 + $0x30] sm:$0xff]
  %v29 = vld [vmem:[%s1 + $0x38] sm:$0xf]
  %v30 = vld [vmem:[%s1 + $0x3c] sm:$0xff]
  %v31 = vld [vmem:[%s1 + $0x44] sm:$0xf]
  %v32 = vld [vmem:[%s1 + $0x48] sm:$0xff]
  %v33 = vld [vmem:[%s1 + $0x50] sm:$0xf]
  %v34 = vld [vmem:[%s1 + $0x54] sm:$0xff]
  %v35 = vld [vmem:[%s1 + $0x5c] sm:$0xf]
  %v36 = vld [vmem:[%s1 + $0x60] sm:$0xff]
  %v37 = vld [vmem:[%s1 + $0x68] sm:$0xf]
  %v38 = vld [vmem:[%s1 + $0x6c] sm:$0xff]
  %v39 = vld [vmem:[%s1 + $0x74] sm:$0xf]
  %v40 = vld [vmem:[%s1 + $0x78] sm:$0xff]
  %v41 = vld [vmem:[%s1 + $0x80] sm:$0xf]
  %v42 = vld [vmem:[%s1 + $0x84] sm:$0xff]
  %v43 = vld [vmem:[%s1 + $0x8c] sm:$0xf]
  %v44 = vld [vmem:[%s1 + $0x90] sm:$0xff]
  %v45 = vld [vmem:[%s1 + $0x98] sm:$0xf]
  %v46 = vld [vmem:[%s1 + $0x9c] sm:$0xff]
  %v47 = vld [vmem:[%s1 + $0xa4] sm:$0xf]
  %v48 = vld [vmem:[%s1 + $0xa8] sm:$0xff]
  %v49 = vld [vmem:[%s1 + $0xb0] sm:$0xf]
  %v50 = vld [vmem:[%s1 + $0xb4] sm:$0xff]
  %v51 = vld [vmem:[%s1 + $0xbc] sm:$0xf]
  %v52 = vld [vmem:[%s2] sm:$0xff]
  %v53 = vld [vmem:[%s2 + $0x8] sm:$0xf]
  %v54 = vld [vmem:[%s2 + $0xc] sm:$0xff]
  %v55 = vld [vmem:[%s2 + $0x14] sm:$0xf]
  %v56 = vld [vmem:[%s2 + $0x18] sm:$0xff]
  %v57 = vld [vmem:[%s2 + $0x20] sm:$0xf]
  %v58 = vld [vmem:[%s2 + $0x24] sm:$0xff]
  %v59 = vld [vmem:[%s2 + $0x2c] sm:$0xf]
  %v60 = vld [vmem:[%s2 + $0x30] sm:$0xff]
  %v61 = vld [vmem:[%s2 + $0x38] sm:$0xf]
  %v62 = vld [vmem:[%s2 + $0x3c] sm:$0xff]
  %v63 = vld [vmem:[%s2 + $0x44] sm:$0xf]
  %v64 = vld [vmem:[%s2 + $0x48] sm:$0xff]
  %v65 = vld [vmem:[%s2 + $0x50] sm:$0xf]
  %v66 = vld [vmem:[%s2 + $0x54] sm:$0xff]
  %v67 = vld [vmem:[%s2 + $0x5c] sm:$0xf]
  %v68 = vld [vmem:[%s2 + $0x60] sm:$0xff]
  %v69 = vld [vmem:[%s2 + $0x68] sm:$0xf]
  %v70 = vld [vmem:[%s2 + $0x6c] sm:$0xff]
  %v71 = vld [vmem:[%s2 + $0x74] sm:$0xf]
  %v72 = vld [vmem:[%s2 + $0x78] sm:$0xff]
  %v73 = vld [vmem:[%s2 + $0x80] sm:$0xf]
  %v74 = vld [vmem:[%s2 + $0x84] sm:$0xff]
  %v75 = vld [vmem:[%s2 + $0x8c] sm:$0xf]
  %v76 = vld [vmem:[%s2 + $0x90] sm:$0xff]
  %v77 = vld [vmem:[%s2 + $0x98] sm:$0xf]
  %v78 = vld [vmem:[%s2 + $0x9c] sm:$0xff]
  %v79 = vld [vmem:[%s2 + $0xa4] sm:$0xf]
  %v80 = vld [vmem:[%s2 + $0xa8] sm:$0xff]
  %v81 = vld [vmem:[%s2 + $0xb0] sm:$0xf]
  %v82 = vld [vmem:[%s2 + $0xb4] sm:$0xff]
  %v83 = vld [vmem:[%s2 + $0xbc] sm:$0xf]
  %v84 = vld [vmem:[%s3] sm:$0x7]
  %v86 = vlaneseq
  %v87 = vshrl.u32 %v86, 7
  %v88 = vsub.s32 0, %v87
  %v89 = vrot.slane %v84, %v88
  %v90 = vlaneseq
  %v91 = vshrl.u32 %v90, 7
  %v92 = vsub.s32 1, %v91
  %v93 = vrot.slane %v84, %v92
  %v94 = vlaneseq
  %v95 = vshrl.u32 %v94, 7
  %v96 = vsub.s32 2, %v95
  %v97 = vrot.slane %v84, %v96
  %s101 = scalar_lea.vmem %s3, 3
  %v102 = vld [vmem:[%s101] sm:$0x7]
  %v104 = vlaneseq
  %v105 = vshrl.u32 %v104, 7
  %v106 = vsub.s32 0, %v105
  %v107 = vrot.slane %v102, %v106
  %v108 = vlaneseq
  %v109 = vshrl.u32 %v108, 7
  %v110 = vsub.s32 1, %v109
  %v111 = vrot.slane %v102, %v110
  %v112 = vlaneseq
  %v113 = vshrl.u32 %v112, 7
  %v114 = vsub.s32 2, %v113
  %v115 = vrot.slane %v102, %v114
  %v119 = vld [vmem:[%s0] sm:$0x1]
  %v152 = vunpack.c.l.b16 %v20
  %v153 = vunpack.c.h.b16 %v20
  %v154 = vunpack.c.l.b16 %v21
  %v155 = vunpack.c.l.b16 %v22
  %v156 = vunpack.c.h.b16 %v22
  %v157 = vunpack.c.l.b16 %v23
  %v158 = vunpack.c.l.b16 %v24
  %v159 = vunpack.c.h.b16 %v24
  %v160 = vunpack.c.l.b16 %v25
  %v161 = vunpack.c.l.b16 %v26
  %v162 = vunpack.c.h.b16 %v26
  %v163 = vunpack.c.l.b16 %v27
  %v164 = vunpack.c.l.b16 %v28
  %v165 = vunpack.c.h.b16 %v28
  %v166 = vunpack.c.l.b16 %v29
  %v167 = vunpack.c.l.b16 %v30
  %v168 = vunpack.c.h.b16 %v30
  %v169 = vunpack.c.l.b16 %v31
  %v170 = vunpack.c.l.b16 %v32
  %v171 = vunpack.c.h.b16 %v32
  %v172 = vunpack.c.l.b16 %v33
  %v173 = vunpack.c.l.b16 %v34
  %v174 = vunpack.c.h.b16 %v34
  %v175 = vunpack.c.l.b16 %v35
  %v176 = vunpack.c.l.b16 %v36
  %v177 = vunpack.c.h.b16 %v36
  %v178 = vunpack.c.l.b16 %v37
  %v179 = vunpack.c.l.b16 %v38
  %v180 = vunpack.c.h.b16 %v38
  %v181 = vunpack.c.l.b16 %v39
  %v182 = vunpack.c.l.b16 %v40
  %v183 = vunpack.c.h.b16 %v40
  %v184 = vunpack.c.l.b16 %v41
  %v185 = vunpack.c.l.b16 %v42
  %v186 = vunpack.c.h.b16 %v42
  %v187 = vunpack.c.l.b16 %v43
  %v188 = vunpack.c.l.b16 %v44
  %v189 = vunpack.c.h.b16 %v44
  %v190 = vunpack.c.l.b16 %v45
  %v191 = vunpack.c.l.b16 %v46
  %v192 = vunpack.c.h.b16 %v46
  %v193 = vunpack.c.l.b16 %v47
  %v194 = vunpack.c.l.b16 %v48
  %v195 = vunpack.c.h.b16 %v48
  %v196 = vunpack.c.l.b16 %v49
  %v197 = vunpack.c.l.b16 %v50
  %v198 = vunpack.c.h.b16 %v50
  %v199 = vunpack.c.l.b16 %v51
  %v200 = vpack.c.b16 %v155, %v152
  %v201 = vpack.c.b16 %v156, %v153
  %v202 = vpack.c.b16 %v157, %v154
  %v203 = vpack.c.b16 %v161, %v158
  %v204 = vpack.c.b16 %v162, %v159
  %v205 = vpack.c.b16 %v163, %v160
  %v206 = vpack.c.b16 %v167, %v164
  %v207 = vpack.c.b16 %v168, %v165
  %v208 = vpack.c.b16 %v169, %v166
  %v209 = vpack.c.b16 %v173, %v170
  %v210 = vpack.c.b16 %v174, %v171
  %v211 = vpack.c.b16 %v175, %v172
  %v212 = vpack.c.b16 %v179, %v176
  %v213 = vpack.c.b16 %v180, %v177
  %v214 = vpack.c.b16 %v181, %v178
  %v215 = vpack.c.b16 %v185, %v182
  %v216 = vpack.c.b16 %v186, %v183
  %v217 = vpack.c.b16 %v187, %v184
  %v218 = vpack.c.b16 %v191, %v188
  %v219 = vpack.c.b16 %v192, %v189
  %v220 = vpack.c.b16 %v193, %v190
  %v221 = vpack.c.b16 %v197, %v194
  %v222 = vpack.c.b16 %v198, %v195
  %v223 = vpack.c.b16 %v199, %v196
  %248 = vmatprep.subr.bf16.mxu0 %v201
  %249 = vmatpush1.bf16.msra.mxu0 %v200
  %250 = vmatprep.subr.bf16.mxu0 %v204
  %251 = vmatpush1.bf16.msra.mxu0 %v203
  %252 = vmatprep.subr.bf16.mxu0 %v207
  %253 = vmatpush1.bf16.msra.mxu0 %v206
  %254 = vmatprep.subr.bf16.mxu0 %v210
  %255 = vmatpush1.bf16.msra.mxu0 %v209
  %256 = vmatprep.subr.bf16.mxu0 %v213
  %257 = vmatpush1.bf16.msra.mxu0 %v212
  %258 = vmatprep.subr.bf16.mxu0 %v216
  %259 = vmatpush1.bf16.msra.mxu0 %v215
  %260 = vmatprep.subr.bf16.mxu0 %v219
  %261 = vmatpush1.bf16.msra.mxu0 %v218
  %262 = vmatprep.subr.bf16.mxu0 %v222
  %263 = vmatpush1.bf16.msra.mxu0 %v221
  %264 = vmatprep.subr.bf16.mxu0 0
  %265 = vmatpush1.bf16.msra.mxu0 0
  %266 = vmatprep.subr.bf16.mxu0 0
  %267 = vmatpush1.bf16.msra.mxu0 0
  %268 = vmatprep.subr.bf16.mxu0 0
  %269 = vmatpush1.bf16.msra.mxu0 0
  %270 = vmatprep.subr.bf16.mxu0 0
  %271 = vmatpush1.bf16.msra.mxu0 0
  %272 = vmatprep.subr.bf16.mxu0 0
  %273 = vmatpush1.bf16.msra.mxu0 0
  %274 = vmatprep.subr.bf16.mxu0 0
  %275 = vmatpush1.bf16.msra.mxu0 0
  %276 = vmatprep.subr.bf16.mxu0 0
  %277 = vmatpush1.bf16.msra.mxu0 0
  %278 = vmatprep.subr.bf16.mxu0 0
  %279 = vmatpush1.bf16.msra.mxu0 0
  %280 = vmatprep.mubr.bf16.mxu0 0
  %281 = vmatmul.mubr.bf16.gmra.mrb[0].mxu0 %v119
  %v282 = vpop.f32.mrb[0].mxu0
  %v283 = vadd.f32 %v89, %v282
  %v284 = vpop.f32.mrb[0].mxu0
  %v285 = vadd.f32 %v93, %v284
  %v286 = vpop.f32.mrb[0].mxu0
  %v287 = vpop.f32.mrb[0].mxu0
  %288 = vdwg.mxu0
  %289 = vmatprep.subr.bf16.mxu0 0
  %290 = vmatpush1.bf16.msra.mxu0 %v202
  %291 = vmatprep.subr.bf16.mxu0 0
  %292 = vmatpush1.bf16.msra.mxu0 %v205
  %293 = vmatprep.subr.bf16.mxu0 0
  %294 = vmatpush1.bf16.msra.mxu0 %v208
  %295 = vmatprep.subr.bf16.mxu0 0
  %296 = vmatpush1.bf16.msra.mxu0 %v211
  %297 = vmatprep.subr.bf16.mxu0 0
  %298 = vmatpush1.bf16.msra.mxu0 %v214
  %299 = vmatprep.subr.bf16.mxu0 0
  %300 = vmatpush1.bf16.msra.mxu0 %v217
  %301 = vmatprep.subr.bf16.mxu0 0
  %302 = vmatpush1.bf16.msra.mxu0 %v220
  %303 = vmatprep.subr.bf16.mxu0 0
  %304 = vmatpush1.bf16.msra.mxu0 %v223
  %305 = vmatprep.subr.bf16.mxu0 0
  %306 = vmatpush1.bf16.msra.mxu0 0
  %307 = vmatprep.subr.bf16.mxu0 0
  %308 = vmatpush1.bf16.msra.mxu0 0
  %309 = vmatprep.subr.bf16.mxu0 0
  %310 = vmatpush1.bf16.msra.mxu0 0
  %311 = vmatprep.subr.bf16.mxu0 0
  %312 = vmatpush1.bf16.msra.mxu0 0
  %313 = vmatprep.subr.bf16.mxu0 0
  %314 = vmatpush1.bf16.msra.mxu0 0
  %315 = vmatprep.subr.bf16.mxu0 0
  %316 = vmatpush1.bf16.msra.mxu0 0
  %317 = vmatprep.subr.bf16.mxu0 0
  %318 = vmatpush1.bf16.msra.mxu0 0
  %319 = vmatprep.subr.bf16.mxu0 0
  %320 = vmatpush1.bf16.msra.mxu0 0
  %321 = vmatprep.mubr.bf16.mxu0 0
  %322 = vmatmul.mubr.bf16.gmra.mrb[0].mxu0 %v119
  %v323 = vpop.f32.mrb[0].mxu0
  %v324 = vadd.f32 %v97, %v323
  %v325 = vpop.f32.mrb[0].mxu0
  %v326 = vpop.f32.mrb[0].mxu0
  %v327 = vpop.f32.mrb[0].mxu0
  %328 = vdwg.mxu0
  %v361 = vunpack.c.l.b16 %v52
  %v362 = vunpack.c.h.b16 %v52
  %v363 = vunpack.c.l.b16 %v53
  %v364 = vunpack.c.l.b16 %v54
  %v365 = vunpack.c.h.b16 %v54
  %v366 = vunpack.c.l.b16 %v55
  %v367 = vunpack.c.l.b16 %v56
  %v368 = vunpack.c.h.b16 %v56
  %v369 = vunpack.c.l.b16 %v57
  %v370 = vunpack.c.l.b16 %v58
  %v371 = vunpack.c.h.b16 %v58
  %v372 = vunpack.c.l.b16 %v59
  %v373 = vunpack.c.l.b16 %v60
  %v374 = vunpack.c.h.b16 %v60
  %v375 = vunpack.c.l.b16 %v61
  %v376 = vunpack.c.l.b16 %v62
  %v377 = vunpack.c.h.b16 %v62
  %v378 = vunpack.c.l.b16 %v63
  %v379 = vunpack.c.l.b16 %v64
  %v380 = vunpack.c.h.b16 %v64
  %v381 = vunpack.c.l.b16 %v65
  %v382 = vunpack.c.l.b16 %v66
  %v383 = vunpack.c.h.b16 %v66
  %v384 = vunpack.c.l.b16 %v67
  %v385 = vunpack.c.l.b16 %v68
  %v386 = vunpack.c.h.b16 %v68
  %v387 = vunpack.c.l.b16 %v69
  %v388 = vunpack.c.l.b16 %v70
  %v389 = vunpack.c.h.b16 %v70
  %v390 = vunpack.c.l.b16 %v71
  %v391 = vunpack.c.l.b16 %v72
  %v392 = vunpack.c.h.b16 %v72
  %v393 = vunpack.c.l.b16 %v73
  %v394 = vunpack.c.l.b16 %v74
  %v395 = vunpack.c.h.b16 %v74
  %v396 = vunpack.c.l.b16 %v75
  %v397 = vunpack.c.l.b16 %v76
  %v398 = vunpack.c.h.b16 %v76
  %v399 = vunpack.c.l.b16 %v77
  %v400 = vunpack.c.l.b16 %v78
  %v401 = vunpack.c.h.b16 %v78
  %v402 = vunpack.c.l.b16 %v79
  %v403 = vunpack.c.l.b16 %v80
  %v404 = vunpack.c.h.b16 %v80
  %v405 = vunpack.c.l.b16 %v81
  %v406 = vunpack.c.l.b16 %v82
  %v407 = vunpack.c.h.b16 %v82
  %v408 = vunpack.c.l.b16 %v83
  %v409 = vpack.c.b16 %v364, %v361
  %v410 = vpack.c.b16 %v365, %v362
  %v411 = vpack.c.b16 %v366, %v363
  %v412 = vpack.c.b16 %v370, %v367
  %v413 = vpack.c.b16 %v371, %v368
  %v414 = vpack.c.b16 %v372, %v369
  %v415 = vpack.c.b16 %v376, %v373
  %v416 = vpack.c.b16 %v377, %v374
  %v417 = vpack.c.b16 %v378, %v375
  %v418 = vpack.c.b16 %v382, %v379
  %v419 = vpack.c.b16 %v383, %v380
  %v420 = vpack.c.b16 %v384, %v381
  %v421 = vpack.c.b16 %v388, %v385
  %v422 = vpack.c.b16 %v389, %v386
  %v423 = vpack.c.b16 %v390, %v387
  %v424 = vpack.c.b16 %v394, %v391
  %v425 = vpack.c.b16 %v395, %v392
  %v426 = vpack.c.b16 %v396, %v393
  %v427 = vpack.c.b16 %v400, %v397
  %v428 = vpack.c.b16 %v401, %v398
  %v429 = vpack.c.b16 %v402, %v399
  %v430 = vpack.c.b16 %v406, %v403
  %v431 = vpack.c.b16 %v407, %v404
  %v432 = vpack.c.b16 %v408, %v405
  %457 = vmatprep.subr.bf16.mxu0 %v410
  %458 = vmatpush1.bf16.msra.mxu0 %v409
  %459 = vmatprep.subr.bf16.mxu0 %v413
  %460 = vmatpush1.bf16.msra.mxu0 %v412
  %461 = vmatprep.subr.bf16.mxu0 %v416
  %462 = vmatpush1.bf16.msra.mxu0 %v415
  %463 = vmatprep.subr.bf16.mxu0 %v419
  %464 = vmatpush1.bf16.msra.mxu0 %v418
  %465 = vmatprep.subr.bf16.mxu0 %v422
  %466 = vmatpush1.bf16.msra.mxu0 %v421
  %467 = vmatprep.subr.bf16.mxu0 %v425
  %468 = vmatpush1.bf16.msra.mxu0 %v424
  %469 = vmatprep.subr.bf16.mxu0 %v428
  %470 = vmatpush1.bf16.msra.mxu0 %v427
  %471 = vmatprep.subr.bf16.mxu0 %v431
  %472 = vmatpush1.bf16.msra.mxu0 %v430
  %473 = vmatprep.subr.bf16.mxu0 0
  %474 = vmatpush1.bf16.msra.mxu0 0
  %475 = vmatprep.subr.bf16.mxu0 0
  %476 = vmatpush1.bf16.msra.mxu0 0
  %477 = vmatprep.subr.bf16.mxu0 0
  %478 = vmatpush1.bf16.msra.mxu0 0
  %479 = vmatprep.subr.bf16.mxu0 0
  %480 = vmatpush1.bf16.msra.mxu0 0
  %481 = vmatprep.subr.bf16.mxu0 0
  %482 = vmatpush1.bf16.msra.mxu0 0
  %483 = vmatprep.subr.bf16.mxu0 0
  %484 = vmatpush1.bf16.msra.mxu0 0
  %485 = vmatprep.subr.bf16.mxu0 0
  %486 = vmatpush1.bf16.msra.mxu0 0
  %487 = vmatprep.subr.bf16.mxu0 0
  %488 = vmatpush1.bf16.msra.mxu0 0
  %489 = vmatprep.mubr.bf16.mxu0 0
  %490 = vmatmul.mubr.bf16.gmra.mrb[0].mxu0 0
  %v491 = vpop.f32.mrb[0].mxu0
  %v492 = vadd.f32 %v107, %v491
  %v493 = vpop.f32.mrb[0].mxu0
  %v494 = vadd.f32 %v111, %v493
  %v495 = vpop.f32.mrb[0].mxu0
  %v496 = vpop.f32.mrb[0].mxu0
  %497 = vdwg.mxu0
  %498 = vmatprep.subr.bf16.mxu0 0
  %499 = vmatpush1.bf16.msra.mxu0 %v411
  %500 = vmatprep.subr.bf16.mxu0 0
  %501 = vmatpush1.bf16.msra.mxu0 %v414
  %502 = vmatprep.subr.bf16.mxu0 0
  %503 = vmatpush1.bf16.msra.mxu0 %v417
  %504 = vmatprep.subr.bf16.mxu0 0
  %505 = vmatpush1.bf16.msra.mxu0 %v420
  %506 = vmatprep.subr.bf16.mxu0 0
  %507 = vmatpush1.bf16.msra.mxu0 %v423
  %508 = vmatprep.subr.bf16.mxu0 0
  %509 = vmatpush1.bf16.msra.mxu0 %v426
  %510 = vmatprep.subr.bf16.mxu0 0
  %511 = vmatpush1.bf16.msra.mxu0 %v429
  %512 = vmatprep.subr.bf16.mxu0 0
  %513 = vmatpush1.bf16.msra.mxu0 %v432
  %514 = vmatprep.subr.bf16.mxu0 0
  %515 = vmatpush1.bf16.msra.mxu0 0
  %516 = vmatprep.subr.bf16.mxu0 0
  %517 = vmatpush1.bf16.msra.mxu0 0
  %518 = vmatprep.subr.bf16.mxu0 0
  %519 = vmatpush1.bf16.msra.mxu0 0
  %520 = vmatprep.subr.bf16.mxu0 0
  %521 = vmatpush1.bf16.msra.mxu0 0
  %522 = vmatprep.subr.bf16.mxu0 0
  %523 = vmatpush1.bf16.msra.mxu0 0
  %524 = vmatprep.subr.bf16.mxu0 0
  %525 = vmatpush1.bf16.msra.mxu0 0
  %526 = vmatprep.subr.bf16.mxu0 0
  %527 = vmatpush1.bf16.msra.mxu0 0
  %528 = vmatprep.subr.bf16.mxu0 0
  %529 = vmatpush1.bf16.msra.mxu0 0
  %530 = vmatprep.mubr.bf16.mxu0 0
  %531 = vmatmul.mubr.bf16.gmra.mrb[0].mxu0 0
  %v532 = vpop.f32.mrb[0].mxu0
  %v533 = vadd.f32 %v115, %v532
  %v534 = vpop.f32.mrb[0].mxu0
  %v535 = vpop.f32.mrb[0].mxu0
  %v536 = vpop.f32.mrb[0].mxu0
  %537 = vdwg.mxu0
  %v538 = vadd.f32 %v283, %v492
  %v539 = vxor.u32 %v538, 2147483648
  %v540 = vmul.f32 %v539, 1.442695
  %v541 = vpow.pop %v540
  %v542 = vadd.f32 %v541, 1.0
  %v543 = vrcp.pop %v542
  %v544 = vmul.f32 1.0, %v543
  %v545 = vadd.f32 %v285, %v494
  %v546 = vxor.u32 %v545, 2147483648
  %v547 = vmul.f32 %v546, 1.442695
  %v548 = vpow.pop %v547
  %v549 = vadd.f32 %v548, 1.0
  %v550 = vrcp.pop %v549
  %v551 = vmul.f32 1.0, %v550
  %v552 = vmul.f32 %v544, %v533
  %v553 = vadd.f32 %v324, %v552
  %v554 = vtanh.pop %v553
  %v555 = vsub.f32 1.0, %v551
  %v556 = vmul.f32 %v555, %v554
  %v557 = vmul.f32 %v551, 0.0
  %v558 = vadd.f32 %v556, %v557
  %v559 = vpack.c.bf16 %v558, %v558
  %560 = vst [vmem:[%s4] sm:$0x1] %v559
  %s561 = scalar_lea.vmem %s0, 1
  %v562 = vld [vmem:[%s561] sm:$0x1]
  %563 = vmatprep.subr.bf16.mxu0 %v201
  %564 = vmatpush1.bf16.msra.mxu0 %v200
  %565 = vmatprep.subr.bf16.mxu0 %v204
  %566 = vmatpush1.bf16.msra.mxu0 %v203
  %567 = vmatprep.subr.bf16.mxu0 %v207
  %568 = vmatpush1.bf16.msra.mxu0 %v206
  %569 = vmatprep.subr.bf16.mxu0 %v210
  %570 = vmatpush1.bf16.msra.mxu0 %v209
  %571 = vmatprep.subr.bf16.mxu0 %v213
  %572 = vmatpush1.bf16.msra.mxu0 %v212
  %573 = vmatprep.subr.bf16.mxu0 %v216
  %574 = vmatpush1.bf16.msra.mxu0 %v215
  %575 = vmatprep.subr.bf16.mxu0 %v219
  %576 = vmatpush1.bf16.msra.mxu0 %v218
  %577 = vmatprep.subr.bf16.mxu0 %v222
  %578 = vmatpush1.bf16.msra.mxu0 %v221
  %579 = vmatprep.subr.bf16.mxu0 0
  %580 = vmatpush1.bf16.msra.mxu0 0
  %581 = vmatprep.subr.bf16.mxu0 0
  %582 = vmatpush1.bf16.msra.mxu0 0
  %583 = vmatprep.subr.bf16.mxu0 0
  %584 = vmatpush1.bf16.msra.mxu0 0
  %585 = vmatprep.subr.bf16.mxu0 0
  %586 = vmatpush1.bf16.msra.mxu0 0
  %587 = vmatprep.subr.bf16.mxu0 0
  %588 = vmatpush1.bf16.msra.mxu0 0
  %589 = vmatprep.subr.bf16.mxu0 0
  %590 = vmatpush1.bf16.msra.mxu0 0
  %591 = vmatprep.subr.bf16.mxu0 0
  %592 = vmatpush1.bf16.msra.mxu0 0
  %593 = vmatprep.subr.bf16.mxu0 0
  %594 = vmatpush1.bf16.msra.mxu0 0
  %595 = vmatprep.mubr.bf16.mxu0 0
  %596 = vmatmul.mubr.bf16.gmra.mrb[0].mxu0 %v562
  %v597 = vpop.f32.mrb[0].mxu0
  %v598 = vadd.f32 %v89, %v597
  %v599 = vpop.f32.mrb[0].mxu0
  %v600 = vadd.f32 %v93, %v599
  %v601 = vpop.f32.mrb[0].mxu0
  %v602 = vpop.f32.mrb[0].mxu0
  %603 = vdwg.mxu0
  %604 = vmatprep.subr.bf16.mxu0 0
  %605 = vmatpush1.bf16.msra.mxu0 %v202
  %606 = vmatprep.subr.bf16.mxu0 0
  %607 = vmatpush1.bf16.msra.mxu0 %v205
  %608 = vmatprep.subr.bf16.mxu0 0
  %609 = vmatpush1.bf16.msra.mxu0 %v208
  %610 = vmatprep.subr.bf16.mxu0 0
  %611 = vmatpush1.bf16.msra.mxu0 %v211
  %612 = vmatprep.subr.bf16.mxu0 0
  %613 = vmatpush1.bf16.msra.mxu0 %v214
  %614 = vmatprep.subr.bf16.mxu0 0
  %615 = vmatpush1.bf16.msra.mxu0 %v217
  %616 = vmatprep.subr.bf16.mxu0 0
  %617 = vmatpush1.bf16.msra.mxu0 %v220
  %618 = vmatprep.subr.bf16.mxu0 0
  %619 = vmatpush1.bf16.msra.mxu0 %v223
  %620 = vmatprep.subr.bf16.mxu0 0
  %621 = vmatpush1.bf16.msra.mxu0 0
  %622 = vmatprep.subr.bf16.mxu0 0
  %623 = vmatpush1.bf16.msra.mxu0 0
  %624 = vmatprep.subr.bf16.mxu0 0
  %625 = vmatpush1.bf16.msra.mxu0 0
  %626 = vmatprep.subr.bf16.mxu0 0
  %627 = vmatpush1.bf16.msra.mxu0 0
  %628 = vmatprep.subr.bf16.mxu0 0
  %629 = vmatpush1.bf16.msra.mxu0 0
  %630 = vmatprep.subr.bf16.mxu0 0
  %631 = vmatpush1.bf16.msra.mxu0 0
  %632 = vmatprep.subr.bf16.mxu0 0
  %633 = vmatpush1.bf16.msra.mxu0 0
  %634 = vmatprep.subr.bf16.mxu0 0
  %635 = vmatpush1.bf16.msra.mxu0 0
  %636 = vmatprep.mubr.bf16.mxu0 0
  %637 = vmatmul.mubr.bf16.gmra.mrb[0].mxu0 %v562
  %v638 = vpop.f32.mrb[0].mxu0
  %v639 = vadd.f32 %v97, %v638
  %v640 = vpop.f32.mrb[0].mxu0
  %v641 = vpop.f32.mrb[0].mxu0
  %v642 = vpop.f32.mrb[0].mxu0
  %643 = vdwg.mxu0
  %644 = vmatprep.subr.bf16.mxu0 %v410
  %645 = vmatpush1.bf16.msra.mxu0 %v409
  %646 = vmatprep.subr.bf16.mxu0 %v413
  %647 = vmatpush1.bf16.msra.mxu0 %v412
  %648 = vmatprep.subr.bf16.mxu0 %v416
  %649 = vmatpush1.bf16.msra.mxu0 %v415
  %650 = vmatprep.subr.bf16.mxu0 %v419
  %651 = vmatpush1.bf16.msra.mxu0 %v418
  %652 = vmatprep.subr.bf16.mxu0 %v422
  %653 = vmatpush1.bf16.msra.mxu0 %v421
  %654 = vmatprep.subr.bf16.mxu0 %v425
  %655 = vmatpush1.bf16.msra.mxu0 %v424
  %656 = vmatprep.subr.bf16.mxu0 %v428
  %657 = vmatpush1.bf16.msra.mxu0 %v427
  %658 = vmatprep.subr.bf16.mxu0 %v431
  %659 = vmatpush1.bf16.msra.mxu0 %v430
  %660 = vmatprep.subr.bf16.mxu0 0
  %661 = vmatpush1.bf16.msra.mxu0 0
  %662 = vmatprep.subr.bf16.mxu0 0
  %663 = vmatpush1.bf16.msra.mxu0 0
  %664 = vmatprep.subr.bf16.mxu0 0
  %665 = vmatpush1.bf16.msra.mxu0 0
  %666 = vmatprep.subr.bf16.mxu0 0
  %667 = vmatpush1.bf16.msra.mxu0 0
  %668 = vmatprep.subr.bf16.mxu0 0
  %669 = vmatpush1.bf16.msra.mxu0 0
  %670 = vmatprep.subr.bf16.mxu0 0
  %671 = vmatpush1.bf16.msra.mxu0 0
  %672 = vmatprep.subr.bf16.mxu0 0
  %673 = vmatpush1.bf16.msra.mxu0 0
  %674 = vmatprep.subr.bf16.mxu0 0
  %675 = vmatpush1.bf16.msra.mxu0 0
  %676 = vmatprep.mubr.bf16.mxu0 0
  %677 = vmatmul.mubr.bf16.gmra.mrb[0].mxu0 %v559
  %v678 = vpop.f32.mrb[0].mxu0
  %v679 = vadd.f32 %v107, %v678
  %v680 = vpop.f32.mrb[0].mxu0
  %v681 = vadd.f32 %v111, %v680
  %v682 = vpop.f32.mrb[0].mxu0
  %v683 = vpop.f32.mrb[0].mxu0
  %684 = vdwg.mxu0
  %685 = vmatprep.subr.bf16.mxu0 0
  %686 = vmatpush1.bf16.msra.mxu0 %v411
  %687 = vmatprep.subr.bf16.mxu0 0
  %688 = vmatpush1.bf16.msra.mxu0 %v414
  %689 = vmatprep.subr.bf16.mxu0 0
  %690 = vmatpush1.bf16.msra.mxu0 %v417
  %691 = vmatprep.subr.bf16.mxu0 0
  %692 = vmatpush1.bf16.msra.mxu0 %v420
  %693 = vmatprep.subr.bf16.mxu0 0
  %694 = vmatpush1.bf16.msra.mxu0 %v423
  %695 = vmatprep.subr.bf16.mxu0 0
  %696 = vmatpush1.bf16.msra.mxu0 %v426
  %697 = vmatprep.subr.bf16.mxu0 0
  %698 = vmatpush1.bf16.msra.mxu0 %v429
  %699 = vmatprep.subr.bf16.mxu0 0
  %700 = vmatpush1.bf16.msra.mxu0 %v432
  %701 = vmatprep.subr.bf16.mxu0 0
  %702 = vmatpush1.bf16.msra.mxu0 0
  %703 = vmatprep.subr.bf16.mxu0 0
  %704 = vmatpush1.bf16.msra.mxu0 0
  %705 = vmatprep.subr.bf16.mxu0 0
  %706 = vmatpush1.bf16.msra.mxu0 0
  %707 = vmatprep.subr.bf16.mxu0 0
  %708 = vmatpush1.bf16.msra.mxu0 0
  %709 = vmatprep.subr.bf16.mxu0 0
  %710 = vmatpush1.bf16.msra.mxu0 0
  %711 = vmatprep.subr.bf16.mxu0 0
  %712 = vmatpush1.bf16.msra.mxu0 0
  %713 = vmatprep.subr.bf16.mxu0 0
  %714 = vmatpush1.bf16.msra.mxu0 0
  %715 = vmatprep.subr.bf16.mxu0 0
  %716 = vmatpush1.bf16.msra.mxu0 0
  %717 = vmatprep.mubr.bf16.mxu0 0
  %718 = vmatmul.mubr.bf16.gmra.mrb[0].mxu0 %v559
  %v719 = vpop.f32.mrb[0].mxu0
  %v720 = vadd.f32 %v115, %v719
  %v721 = vpop.f32.mrb[0].mxu0
  %v722 = vpop.f32.mrb[0].mxu0
  %v723 = vpop.f32.mrb[0].mxu0
  %724 = vdwg.mxu0
  %v725 = vadd.f32 %v598, %v679
  %v726 = vxor.u32 %v725, 2147483648
  %v727 = vmul.f32 %v726, 1.442695
  %v728 = vpow.pop %v727
  %v729 = vadd.f32 %v728, 1.0
  %v730 = vrcp.pop %v729
  %v731 = vmul.f32 1.0, %v730
  %v732 = vadd.f32 %v600, %v681
  %v733 = vxor.u32 %v732, 2147483648
  %v734 = vmul.f32 %v733, 1.442695
  %v735 = vpow.pop %v734
  %v736 = vadd.f32 %v735, 1.0
  %v737 = vrcp.pop %v736
  %v738 = vmul.f32 1.0, %v737
  %v739 = vmul.f32 %v731, %v720
  %v740 = vadd.f32 %v639, %v739
  %v741 = vtanh.pop %v740
  %v742 = vsub.f32 1.0, %v738
  %v743 = vmul.f32 %v742, %v741
  %v744 = vmul.f32 %v738, %v558
  %v745 = vadd.f32 %v743, %v744
  %v746 = vpack.c.bf16 %v745, %v745
  %s747 = scalar_lea.vmem %s4, 1
  %748 = vst [vmem:[%s747] sm:$0x1] %v746
  %s749 = scalar_lea.vmem %s0, 2
  %v750 = vld [vmem:[%s749] sm:$0x1]
  %751 = vmatprep.subr.bf16.mxu0 %v201
  %752 = vmatpush1.bf16.msra.mxu0 %v200
  %753 = vmatprep.subr.bf16.mxu0 %v204
  %754 = vmatpush1.bf16.msra.mxu0 %v203
  %755 = vmatprep.subr.bf16.mxu0 %v207
  %756 = vmatpush1.bf16.msra.mxu0 %v206
  %757 = vmatprep.subr.bf16.mxu0 %v210
  %758 = vmatpush1.bf16.msra.mxu0 %v209
  %759 = vmatprep.subr.bf16.mxu0 %v213
  %760 = vmatpush1.bf16.msra.mxu0 %v212
  %761 = vmatprep.subr.bf16.mxu0 %v216
  %762 = vmatpush1.bf16.msra.mxu0 %v215
  %763 = vmatprep.subr.bf16.mxu0 %v219
  %764 = vmatpush1.bf16.msra.mxu0 %v218
  %765 = vmatprep.subr.bf16.mxu0 %v222
  %766 = vmatpush1.bf16.msra.mxu0 %v221
  %767 = vmatprep.subr.bf16.mxu0 0
  %768 = vmatpush1.bf16.msra.mxu0 0
  %769 = vmatprep.subr.bf16.mxu0 0
  %770 = vmatpush1.bf16.msra.mxu0 0
  %771 = vmatprep.subr.bf16.mxu0 0
  %772 = vmatpush1.bf16.msra.mxu0 0
  %773 = vmatprep.subr.bf16.mxu0 0
  %774 = vmatpush1.bf16.msra.mxu0 0
  %775 = vmatprep.subr.bf16.mxu0 0
  %776 = vmatpush1.bf16.msra.mxu0 0
  %777 = vmatprep.subr.bf16.mxu0 0
  %778 = vmatpush1.bf16.msra.mxu0 0
  %779 = vmatprep.subr.bf16.mxu0 0
  %780 = vmatpush1.bf16.msra.mxu0 0
  %781 = vmatprep.subr.bf16.mxu0 0
  %782 = vmatpush1.bf16.msra.mxu0 0
  %783 = vmatprep.mubr.bf16.mxu0 0
  %784 = vmatmul.mubr.bf16.gmra.mrb[0].mxu0 %v750
  %v785 = vpop.f32.mrb[0].mxu0
  %v786 = vadd.f32 %v89, %v785
  %v787 = vpop.f32.mrb[0].mxu0
  %v788 = vadd.f32 %v93, %v787
  %v789 = vpop.f32.mrb[0].mxu0
  %v790 = vpop.f32.mrb[0].mxu0
  %791 = vdwg.mxu0
  %792 = vmatprep.subr.bf16.mxu0 0
  %793 = vmatpush1.bf16.msra.mxu0 %v202
  %794 = vmatprep.subr.bf16.mxu0 0
  %795 = vmatpush1.bf16.msra.mxu0 %v205
  %796 = vmatprep.subr.bf16.mxu0 0
  %797 = vmatpush1.bf16.msra.mxu0 %v208
  %798 = vmatprep.subr.bf16.mxu0 0
  %799 = vmatpush1.bf16.msra.mxu0 %v211
  %800 = vmatprep.subr.bf16.mxu0 0
  %801 = vmatpush1.bf16.msra.mxu0 %v214
  %802 = vmatprep.subr.bf16.mxu0 0
  %803 = vmatpush1.bf16.msra.mxu0 %v217
  %804 = vmatprep.subr.bf16.mxu0 0
  %805 = vmatpush1.bf16.msra.mxu0 %v220
  %806 = vmatprep.subr.bf16.mxu0 0
  %807 = vmatpush1.bf16.msra.mxu0 %v223
  %808 = vmatprep.subr.bf16.mxu0 0
  %809 = vmatpush1.bf16.msra.mxu0 0
  %810 = vmatprep.subr.bf16.mxu0 0
  %811 = vmatpush1.bf16.msra.mxu0 0
  %812 = vmatprep.subr.bf16.mxu0 0
  %813 = vmatpush1.bf16.msra.mxu0 0
  %814 = vmatprep.subr.bf16.mxu0 0
  %815 = vmatpush1.bf16.msra.mxu0 0
  %816 = vmatprep.subr.bf16.mxu0 0
  %817 = vmatpush1.bf16.msra.mxu0 0
  %818 = vmatprep.subr.bf16.mxu0 0
  %819 = vmatpush1.bf16.msra.mxu0 0
  %820 = vmatprep.subr.bf16.mxu0 0
  %821 = vmatpush1.bf16.msra.mxu0 0
  %822 = vmatprep.subr.bf16.mxu0 0
  %823 = vmatpush1.bf16.msra.mxu0 0
  %824 = vmatprep.mubr.bf16.mxu0 0
  %825 = vmatmul.mubr.bf16.gmra.mrb[0].mxu0 %v750
  %v826 = vpop.f32.mrb[0].mxu0
  %v827 = vadd.f32 %v97, %v826
  %v828 = vpop.f32.mrb[0].mxu0
  %v829 = vpop.f32.mrb[0].mxu0
  %v830 = vpop.f32.mrb[0].mxu0
  %831 = vdwg.mxu0
  %832 = vmatprep.subr.bf16.mxu0 %v410
  %833 = vmatpush1.bf16.msra.mxu0 %v409
  %834 = vmatprep.subr.bf16.mxu0 %v413
  %835 = vmatpush1.bf16.msra.mxu0 %v412
  %836 = vmatprep.subr.bf16.mxu0 %v416
  %837 = vmatpush1.bf16.msra.mxu0 %v415
  %838 = vmatprep.subr.bf16.mxu0 %v419
  %839 = vmatpush1.bf16.msra.mxu0 %v418
  %840 = vmatprep.subr.bf16.mxu0 %v422
  %841 = vmatpush1.bf16.msra.mxu0 %v421
  %842 = vmatprep.subr.bf16.mxu0 %v425
  %843 = vmatpush1.bf16.msra.mxu0 %v424
  %844 = vmatprep.subr.bf16.mxu0 %v428
  %845 = vmatpush1.bf16.msra.mxu0 %v427
  %846 = vmatprep.subr.bf16.mxu0 %v431
  %847 = vmatpush1.bf16.msra.mxu0 %v430
  %848 = vmatprep.subr.bf16.mxu0 0
  %849 = vmatpush1.bf16.msra.mxu0 0
  %850 = vmatprep.subr.bf16.mxu0 0
  %851 = vmatpush1.bf16.msra.mxu0 0
  %852 = vmatprep.subr.bf16.mxu0 0
  %853 = vmatpush1.bf16.msra.mxu0 0
  %854 = vmatprep.subr.bf16.mxu0 0
  %855 = vmatpush1.bf16.msra.mxu0 0
  %856 = vmatprep.subr.bf16.mxu0 0
  %857 = vmatpush1.bf16.msra.mxu0 0
  %858 = vmatprep.subr.bf16.mxu0 0
  %859 = vmatpush1.bf16.msra.mxu0 0
  %860 = vmatprep.subr.bf16.mxu0 0
  %861 = vmatpush1.bf16.msra.mxu0 0
  %862 = vmatprep.subr.bf16.mxu0 0
  %863 = vmatpush1.bf16.msra.mxu0 0
  %864 = vmatprep.mubr.bf16.mxu0 0
  %865 = vmatmul.mubr.bf16.gmra.mrb[0].mxu0 %v746
  %v866 = vpop.f32.mrb[0].mxu0
  %v867 = vadd.f32 %v107, %v866
  %v868 = vpop.f32.mrb[0].mxu0
  %v869 = vadd.f32 %v111, %v868
  %v870 = vpop.f32.mrb[0].mxu0
  %v871 = vpop.f32.mrb[0].mxu0
  %872 = vdwg.mxu0
  %873 = vmatprep.subr.bf16.mxu0 0
  %874 = vmatpush1.bf16.msra.mxu0 %v411
  %875 = vmatprep.subr.bf16.mxu0 0
  %876 = vmatpush1.bf16.msra.mxu0 %v414
  %877 = vmatprep.subr.bf16.mxu0 0
  %878 = vmatpush1.bf16.msra.mxu0 %v417
  %879 = vmatprep.subr.bf16.mxu0 0
  %880 = vmatpush1.bf16.msra.mxu0 %v420
  %881 = vmatprep.subr.bf16.mxu0 0
  %882 = vmatpush1.bf16.msra.mxu0 %v423
  %883 = vmatprep.subr.bf16.mxu0 0
  %884 = vmatpush1.bf16.msra.mxu0 %v426
  %885 = vmatprep.subr.bf16.mxu0 0
  %886 = vmatpush1.bf16.msra.mxu0 %v429
  %887 = vmatprep.subr.bf16.mxu0 0
  %888 = vmatpush1.bf16.msra.mxu0 %v432
  %889 = vmatprep.subr.bf16.mxu0 0
  %890 = vmatpush1.bf16.msra.mxu0 0
  %891 = vmatprep.subr.bf16.mxu0 0
  %892 = vmatpush1.bf16.msra.mxu0 0
  %893 = vmatprep.subr.bf16.mxu0 0
  %894 = vmatpush1.bf16.msra.mxu0 0
  %895 = vmatprep.subr.bf16.mxu0 0
  %896 = vmatpush1.bf16.msra.mxu0 0
  %897 = vmatprep.subr.bf16.mxu0 0
  %898 = vmatpush1.bf16.msra.mxu0 0
  %899 = vmatprep.subr.bf16.mxu0 0
  %900 = vmatpush1.bf16.msra.mxu0 0
  %901 = vmatprep.subr.bf16.mxu0 0
  %902 = vmatpush1.bf16.msra.mxu0 0
  %903 = vmatprep.subr.bf16.mxu0 0
  %904 = vmatpush1.bf16.msra.mxu0 0
  %905 = vmatprep.mubr.bf16.mxu0 0
  %906 = vmatmul.mubr.bf16.gmra.mrb[0].mxu0 %v746
  %v907 = vpop.f32.mrb[0].mxu0
  %v908 = vadd.f32 %v115, %v907
  %v909 = vpop.f32.mrb[0].mxu0
  %v910 = vpop.f32.mrb[0].mxu0
  %v911 = vpop.f32.mrb[0].mxu0
  %912 = vdwg.mxu0
  %v913 = vadd.f32 %v786, %v867
  %v914 = vxor.u32 %v913, 2147483648
  %v915 = vmul.f32 %v914, 1.442695
  %v916 = vpow.pop %v915
  %v917 = vadd.f32 %v916, 1.0
  %v918 = vrcp.pop %v917
  %v919 = vmul.f32 1.0, %v918
  %v920 = vadd.f32 %v788, %v869
  %v921 = vxor.u32 %v920, 2147483648
  %v922 = vmul.f32 %v921, 1.442695
  %v923 = vpow.pop %v922
  %v924 = vadd.f32 %v923, 1.0
  %v925 = vrcp.pop %v924
  %v926 = vmul.f32 1.0, %v925
  %v927 = vmul.f32 %v919, %v908
  %v928 = vadd.f32 %v827, %v927
  %v929 = vtanh.pop %v928
  %v930 = vsub.f32 1.0, %v926
  %v931 = vmul.f32 %v930, %v929
  %v932 = vmul.f32 %v926, %v745
  %v933 = vadd.f32 %v931, %v932
  %v934 = vpack.c.bf16 %v933, %v933
  %s935 = scalar_lea.vmem %s4, 2
  %936 = vst [vmem:[%s935] sm:$0x1] %v934
  %s937 = scalar_lea.vmem %s0, 3
  %v938 = vld [vmem:[%s937] sm:$0x1]
  %939 = vmatprep.subr.bf16.mxu0 %v201
  %940 = vmatpush1.bf16.msra.mxu0 %v200
  %941 = vmatprep.subr.bf16.mxu0 %v204
  %942 = vmatpush1.bf16.msra.mxu0 %v203
  %943 = vmatprep.subr.bf16.mxu0 %v207
  %944 = vmatpush1.bf16.msra.mxu0 %v206
  %945 = vmatprep.subr.bf16.mxu0 %v210
  %946 = vmatpush1.bf16.msra.mxu0 %v209
  %947 = vmatprep.subr.bf16.mxu0 %v213
  %948 = vmatpush1.bf16.msra.mxu0 %v212
  %949 = vmatprep.subr.bf16.mxu0 %v216
  %950 = vmatpush1.bf16.msra.mxu0 %v215
  %951 = vmatprep.subr.bf16.mxu0 %v219
  %952 = vmatpush1.bf16.msra.mxu0 %v218
  %953 = vmatprep.subr.bf16.mxu0 %v222
  %954 = vmatpush1.bf16.msra.mxu0 %v221
  %955 = vmatprep.subr.bf16.mxu0 0
  %956 = vmatpush1.bf16.msra.mxu0 0
  %957 = vmatprep.subr.bf16.mxu0 0
  %958 = vmatpush1.bf16.msra.mxu0 0
  %959 = vmatprep.subr.bf16.mxu0 0
  %960 = vmatpush1.bf16.msra.mxu0 0
  %961 = vmatprep.subr.bf16.mxu0 0
  %962 = vmatpush1.bf16.msra.mxu0 0
  %963 = vmatprep.subr.bf16.mxu0 0
  %964 = vmatpush1.bf16.msra.mxu0 0
  %965 = vmatprep.subr.bf16.mxu0 0
  %966 = vmatpush1.bf16.msra.mxu0 0
  %967 = vmatprep.subr.bf16.mxu0 0
  %968 = vmatpush1.bf16.msra.mxu0 0
  %969 = vmatprep.subr.bf16.mxu0 0
  %970 = vmatpush1.bf16.msra.mxu0 0
  %971 = vmatprep.mubr.bf16.mxu0 0
  %972 = vmatmul.mubr.bf16.gmra.mrb[0].mxu0 %v938
  %v973 = vpop.f32.mrb[0].mxu0
  %v974 = vadd.f32 %v89, %v973
  %v975 = vpop.f32.mrb[0].mxu0
  %v976 = vadd.f32 %v93, %v975
  %v977 = vpop.f32.mrb[0].mxu0
  %v978 = vpop.f32.mrb[0].mxu0
  %979 = vdwg.mxu0
  %980 = vmatprep.subr.bf16.mxu0 0
  %981 = vmatpush1.bf16.msra.mxu0 %v202
  %982 = vmatprep.subr.bf16.mxu0 0
  %983 = vmatpush1.bf16.msra.mxu0 %v205
  %984 = vmatprep.subr.bf16.mxu0 0
  %985 = vmatpush1.bf16.msra.mxu0 %v208
  %986 = vmatprep.subr.bf16.mxu0 0
  %987 = vmatpush1.bf16.msra.mxu0 %v211
  %988 = vmatprep.subr.bf16.mxu0 0
  %989 = vmatpush1.bf16.msra.mxu0 %v214
  %990 = vmatprep.subr.bf16.mxu0 0
  %991 = vmatpush1.bf16.msra.mxu0 %v217
  %992 = vmatprep.subr.bf16.mxu0 0
  %993 = vmatpush1.bf16.msra.mxu0 %v220
  %994 = vmatprep.subr.bf16.mxu0 0
  %995 = vmatpush1.bf16.msra.mxu0 %v223
  %996 = vmatprep.subr.bf16.mxu0 0
  %997 = vmatpush1.bf16.msra.mxu0 0
  %998 = vmatprep.subr.bf16.mxu0 0
  %999 = vmatpush1.bf16.msra.mxu0 0
  %1000 = vmatprep.subr.bf16.mxu0 0
  %1001 = vmatpush1.bf16.msra.mxu0 0
  %1002 = vmatprep.subr.bf16.mxu0 0
  %1003 = vmatpush1.bf16.msra.mxu0 0
  %1004 = vmatprep.subr.bf16.mxu0 0
  %1005 = vmatpush1.bf16.msra.mxu0 0
  %1006 = vmatprep.subr.bf16.mxu0 0
  %1007 = vmatpush1.bf16.msra.mxu0 0
  %1008 = vmatprep.subr.bf16.mxu0 0
  %1009 = vmatpush1.bf16.msra.mxu0 0
  %1010 = vmatprep.subr.bf16.mxu0 0
  %1011 = vmatpush1.bf16.msra.mxu0 0
  %1012 = vmatprep.mubr.bf16.mxu0 0
  %1013 = vmatmul.mubr.bf16.gmra.mrb[0].mxu0 %v938
  %v1014 = vpop.f32.mrb[0].mxu0
  %v1015 = vadd.f32 %v97, %v1014
  %v1016 = vpop.f32.mrb[0].mxu0
  %v1017 = vpop.f32.mrb[0].mxu0
  %v1018 = vpop.f32.mrb[0].mxu0
  %1019 = vdwg.mxu0
  %1020 = vmatprep.subr.bf16.mxu0 %v410
  %1021 = vmatpush1.bf16.msra.mxu0 %v409
  %1022 = vmatprep.subr.bf16.mxu0 %v413
  %1023 = vmatpush1.bf16.msra.mxu0 %v412
  %1024 = vmatprep.subr.bf16.mxu0 %v416
  %1025 = vmatpush1.bf16.msra.mxu0 %v415
  %1026 = vmatprep.subr.bf16.mxu0 %v419
  %1027 = vmatpush1.bf16.msra.mxu0 %v418
  %1028 = vmatprep.subr.bf16.mxu0 %v422
  %1029 = vmatpush1.bf16.msra.mxu0 %v421
  %1030 = vmatprep.subr.bf16.mxu0 %v425
  %1031 = vmatpush1.bf16.msra.mxu0 %v424
  %1032 = vmatprep.subr.bf16.mxu0 %v428
  %1033 = vmatpush1.bf16.msra.mxu0 %v427
  %1034 = vmatprep.subr.bf16.mxu0 %v431
  %1035 = vmatpush1.bf16.msra.mxu0 %v430
  %1036 = vmatprep.subr.bf16.mxu0 0
  %1037 = vmatpush1.bf16.msra.mxu0 0
  %1038 = vmatprep.subr.bf16.mxu0 0
  %1039 = vmatpush1.bf16.msra.mxu0 0
  %1040 = vmatprep.subr.bf16.mxu0 0
  %1041 = vmatpush1.bf16.msra.mxu0 0
  %1042 = vmatprep.subr.bf16.mxu0 0
  %1043 = vmatpush1.bf16.msra.mxu0 0
  %1044 = vmatprep.subr.bf16.mxu0 0
  %1045 = vmatpush1.bf16.msra.mxu0 0
  %1046 = vmatprep.subr.bf16.mxu0 0
  %1047 = vmatpush1.bf16.msra.mxu0 0
  %1048 = vmatprep.subr.bf16.mxu0 0
  %1049 = vmatpush1.bf16.msra.mxu0 0
  %1050 = vmatprep.subr.bf16.mxu0 0
  %1051 = vmatpush1.bf16.msra.mxu0 0
  %1052 = vmatprep.mubr.bf16.mxu0 0
  %1053 = vmatmul.mubr.bf16.gmra.mrb[0].mxu0 %v934
  %v1054 = vpop.f32.mrb[0].mxu0
  %v1055 = vadd.f32 %v107, %v1054
  %v1056 = vpop.f32.mrb[0].mxu0
  %v1057 = vadd.f32 %v111, %v1056
  %v1058 = vpop.f32.mrb[0].mxu0
  %v1059 = vpop.f32.mrb[0].mxu0
  %1060 = vdwg.mxu0
  %1061 = vmatprep.subr.bf16.mxu0 0
  %1062 = vmatpush1.bf16.msra.mxu0 %v411
  %1063 = vmatprep.subr.bf16.mxu0 0
  %1064 = vmatpush1.bf16.msra.mxu0 %v414
  %1065 = vmatprep.subr.bf16.mxu0 0
  %1066 = vmatpush1.bf16.msra.mxu0 %v417
  %1067 = vmatprep.subr.bf16.mxu0 0
  %1068 = vmatpush1.bf16.msra.mxu0 %v420
  %1069 = vmatprep.subr.bf16.mxu0 0
  %1070 = vmatpush1.bf16.msra.mxu0 %v423
  %1071 = vmatprep.subr.bf16.mxu0 0
  %1072 = vmatpush1.bf16.msra.mxu0 %v426
  %1073 = vmatprep.subr.bf16.mxu0 0
  %1074 = vmatpush1.bf16.msra.mxu0 %v429
  %1075 = vmatprep.subr.bf16.mxu0 0
  %1076 = vmatpush1.bf16.msra.mxu0 %v432
  %1077 = vmatprep.subr.bf16.mxu0 0
  %1078 = vmatpush1.bf16.msra.mxu0 0
  %1079 = vmatprep.subr.bf16.mxu0 0
  %1080 = vmatpush1.bf16.msra.mxu0 0
  %1081 = vmatprep.subr.bf16.mxu0 0
  %1082 = vmatpush1.bf16.msra.mxu0 0
  %1083 = vmatprep.subr.bf16.mxu0 0
  %1084 = vmatpush1.bf16.msra.mxu0 0
  %1085 = vmatprep.subr.bf16.mxu0 0
  %1086 = vmatpush1.bf16.msra.mxu0 0
  %1087 = vmatprep.subr.bf16.mxu0 0
  %1088 = vmatpush1.bf16.msra.mxu0 0
  %1089 = vmatprep.subr.bf16.mxu0 0
  %1090 = vmatpush1.bf16.msra.mxu0 0
  %1091 = vmatprep.subr.bf16.mxu0 0
  %1092 = vmatpush1.bf16.msra.mxu0 0
  %1093 = vmatprep.mubr.bf16.mxu0 0
  %1094 = vmatmul.mubr.bf16.gmra.mrb[0].mxu0 %v934
  %v1095 = vpop.f32.mrb[0].mxu0
  %v1096 = vadd.f32 %v115, %v1095
  %v1097 = vpop.f32.mrb[0].mxu0
  %v1098 = vpop.f32.mrb[0].mxu0
  %v1099 = vpop.f32.mrb[0].mxu0
  %1100 = vdwg.mxu0
  %v1101 = vadd.f32 %v974, %v1055
  %v1102 = vxor.u32 %v1101, 2147483648
  %v1103 = vmul.f32 %v1102, 1.442695
  %v1104 = vpow.pop %v1103
  %v1105 = vadd.f32 %v1104, 1.0
  %v1106 = vrcp.pop %v1105
  %v1107 = vmul.f32 1.0, %v1106
  %v1108 = vadd.f32 %v976, %v1057
  %v1109 = vxor.u32 %v1108, 2147483648
  %v1110 = vmul.f32 %v1109, 1.442695
  %v1111 = vpow.pop %v1110
  %v1112 = vadd.f32 %v1111, 1.0
  %v1113 = vrcp.pop %v1112
  %v1114 = vmul.f32 1.0, %v1113
  %v1115 = vmul.f32 %v1107, %v1096
  %v1116 = vadd.f32 %v1015, %v1115
  %v1117 = vtanh.pop %v1116
  %v1118 = vsub.f32 1.0, %v1114
  %v1119 = vmul.f32 %v1118, %v1117
  %v1120 = vmul.f32 %v1114, %v933
  %v1121 = vadd.f32 %v1119, %v1120
  %v1122 = vpack.c.bf16 %v1121, %v1121
  %s1123 = scalar_lea.vmem %s4, 3
  %1124 = vst [vmem:[%s1123] sm:$0x1] %v1122
  %s1125 = scalar_lea.vmem %s0, 4
  %v1126 = vld [vmem:[%s1125] sm:$0x1]
  %1127 = vmatprep.subr.bf16.mxu0 %v201
  %1128 = vmatpush1.bf16.msra.mxu0 %v200
  %1129 = vmatprep.subr.bf16.mxu0 %v204
  %1130 = vmatpush1.bf16.msra.mxu0 %v203
  %1131 = vmatprep.subr.bf16.mxu0 %v207
  %1132 = vmatpush1.bf16.msra.mxu0 %v206
  %1133 = vmatprep.subr.bf16.mxu0 %v210
  %1134 = vmatpush1.bf16.msra.mxu0 %v209
  %1135 = vmatprep.subr.bf16.mxu0 %v213
  %1136 = vmatpush1.bf16.msra.mxu0 %v212
  %1137 = vmatprep.subr.bf16.mxu0 %v216
  %1138 = vmatpush1.bf16.msra.mxu0 %v215
  %1139 = vmatprep.subr.bf16.mxu0 %v219
  %1140 = vmatpush1.bf16.msra.mxu0 %v218
  %1141 = vmatprep.subr.bf16.mxu0 %v222
  %1142 = vmatpush1.bf16.msra.mxu0 %v221
  %1143 = vmatprep.subr.bf16.mxu0 0
  %1144 = vmatpush1.bf16.msra.mxu0 0
  %1145 = vmatprep.subr.bf16.mxu0 0
  %1146 = vmatpush1.bf16.msra.mxu0 0
  %1147 = vmatprep.subr.bf16.mxu0 0
  %1148 = vmatpush1.bf16.msra.mxu0 0
  %1149 = vmatprep.subr.bf16.mxu0 0
  %1150 = vmatpush1.bf16.msra.mxu0 0
  %1151 = vmatprep.subr.bf16.mxu0 0
  %1152 = vmatpush1.bf16.msra.mxu0 0
  %1153 = vmatprep.subr.bf16.mxu0 0
  %1154 = vmatpush1.bf16.msra.mxu0 0
  %1155 = vmatprep.subr.bf16.mxu0 0
  %1156 = vmatpush1.bf16.msra.mxu0 0
  %1157 = vmatprep.subr.bf16.mxu0 0
  %1158 = vmatpush1.bf16.msra.mxu0 0
  %1159 = vmatprep.mubr.bf16.mxu0 0
  %1160 = vmatmul.mubr.bf16.gmra.mrb[0].mxu0 %v1126
  %v1161 = vpop.f32.mrb[0].mxu0
  %v1162 = vadd.f32 %v89, %v1161
  %v1163 = vpop.f32.mrb[0].mxu0
  %v1164 = vadd.f32 %v93, %v1163
  %v1165 = vpop.f32.mrb[0].mxu0
  %v1166 = vpop.f32.mrb[0].mxu0
  %1167 = vdwg.mxu0
  %1168 = vmatprep.subr.bf16.mxu0 0
  %1169 = vmatpush1.bf16.msra.mxu0 %v202
  %1170 = vmatprep.subr.bf16.mxu0 0
  %1171 = vmatpush1.bf16.msra.mxu0 %v205
  %1172 = vmatprep.subr.bf16.mxu0 0
  %1173 = vmatpush1.bf16.msra.mxu0 %v208
  %1174 = vmatprep.subr.bf16.mxu0 0
  %1175 = vmatpush1.bf16.msra.mxu0 %v211
  %1176 = vmatprep.subr.bf16.mxu0 0
  %1177 = vmatpush1.bf16.msra.mxu0 %v214
  %1178 = vmatprep.subr.bf16.mxu0 0
  %1179 = vmatpush1.bf16.msra.mxu0 %v217
  %1180 = vmatprep.subr.bf16.mxu0 0
  %1181 = vmatpush1.bf16.msra.mxu0 %v220
  %1182 = vmatprep.subr.bf16.mxu0 0
  %1183 = vmatpush1.bf16.msra.mxu0 %v223
  %1184 = vmatprep.subr.bf16.mxu0 0
  %1185 = vmatpush1.bf16.msra.mxu0 0
  %1186 = vmatprep.subr.bf16.mxu0 0
  %1187 = vmatpush1.bf16.msra.mxu0 0
  %1188 = vmatprep.subr.bf16.mxu0 0
  %1189 = vmatpush1.bf16.msra.mxu0 0
  %1190 = vmatprep.subr.bf16.mxu0 0
  %1191 = vmatpush1.bf16.msra.mxu0 0
  %1192 = vmatprep.subr.bf16.mxu0 0
  %1193 = vmatpush1.bf16.msra.mxu0 0
  %1194 = vmatprep.subr.bf16.mxu0 0
  %1195 = vmatpush1.bf16.msra.mxu0 0
  %1196 = vmatprep.subr.bf16.mxu0 0
  %1197 = vmatpush1.bf16.msra.mxu0 0
  %1198 = vmatprep.subr.bf16.mxu0 0
  %1199 = vmatpush1.bf16.msra.mxu0 0
  %1200 = vmatprep.mubr.bf16.mxu0 0
  %1201 = vmatmul.mubr.bf16.gmra.mrb[0].mxu0 %v1126
  %v1202 = vpop.f32.mrb[0].mxu0
  %v1203 = vadd.f32 %v97, %v1202
  %v1204 = vpop.f32.mrb[0].mxu0
  %v1205 = vpop.f32.mrb[0].mxu0
  %v1206 = vpop.f32.mrb[0].mxu0
  %1207 = vdwg.mxu0
  %1208 = vmatprep.subr.bf16.mxu0 %v410
  %1209 = vmatpush1.bf16.msra.mxu0 %v409
  %1210 = vmatprep.subr.bf16.mxu0 %v413
  %1211 = vmatpush1.bf16.msra.mxu0 %v412
  %1212 = vmatprep.subr.bf16.mxu0 %v416
  %1213 = vmatpush1.bf16.msra.mxu0 %v415
  %1214 = vmatprep.subr.bf16.mxu0 %v419
  %1215 = vmatpush1.bf16.msra.mxu0 %v418
  %1216 = vmatprep.subr.bf16.mxu0 %v422
  %1217 = vmatpush1.bf16.msra.mxu0 %v421
  %1218 = vmatprep.subr.bf16.mxu0 %v425
  %1219 = vmatpush1.bf16.msra.mxu0 %v424
  %1220 = vmatprep.subr.bf16.mxu0 %v428
  %1221 = vmatpush1.bf16.msra.mxu0 %v427
  %1222 = vmatprep.subr.bf16.mxu0 %v431
  %1223 = vmatpush1.bf16.msra.mxu0 %v430
  %1224 = vmatprep.subr.bf16.mxu0 0
  %1225 = vmatpush1.bf16.msra.mxu0 0
  %1226 = vmatprep.subr.bf16.mxu0 0
  %1227 = vmatpush1.bf16.msra.mxu0 0
  %1228 = vmatprep.subr.bf16.mxu0 0
  %1229 = vmatpush1.bf16.msra.mxu0 0
  %1230 = vmatprep.subr.bf16.mxu0 0
  %1231 = vmatpush1.bf16.msra.mxu0 0
  %1232 = vmatprep.subr.bf16.mxu0 0
  %1233 = vmatpush1.bf16.msra.mxu0 0
  %1234 = vmatprep.subr.bf16.mxu0 0
  %1235 = vmatpush1.bf16.msra.mxu0 0
  %1236 = vmatprep.subr.bf16.mxu0 0
  %1237 = vmatpush1.bf16.msra.mxu0 0
  %1238 = vmatprep.subr.bf16.mxu0 0
  %1239 = vmatpush1.bf16.msra.mxu0 0
  %1240 = vmatprep.mubr.bf16.mxu0 0
  %1241 = vmatmul.mubr.bf16.gmra.mrb[0].mxu0 %v1122
  %v1242 = vpop.f32.mrb[0].mxu0
  %v1243 = vadd.f32 %v107, %v1242
  %v1244 = vpop.f32.mrb[0].mxu0
  %v1245 = vadd.f32 %v111, %v1244
  %v1246 = vpop.f32.mrb[0].mxu0
  %v1247 = vpop.f32.mrb[0].mxu0
  %1248 = vdwg.mxu0
  %1249 = vmatprep.subr.bf16.mxu0 0
  %1250 = vmatpush1.bf16.msra.mxu0 %v411
  %1251 = vmatprep.subr.bf16.mxu0 0
  %1252 = vmatpush1.bf16.msra.mxu0 %v414
  %1253 = vmatprep.subr.bf16.mxu0 0
  %1254 = vmatpush1.bf16.msra.mxu0 %v417
  %1255 = vmatprep.subr.bf16.mxu0 0
  %1256 = vmatpush1.bf16.msra.mxu0 %v420
  %1257 = vmatprep.subr.bf16.mxu0 0
  %1258 = vmatpush1.bf16.msra.mxu0 %v423
  %1259 = vmatprep.subr.bf16.mxu0 0
  %1260 = vmatpush1.bf16.msra.mxu0 %v426
  %1261 = vmatprep.subr.bf16.mxu0 0
  %1262 = vmatpush1.bf16.msra.mxu0 %v429
  %1263 = vmatprep.subr.bf16.mxu0 0
  %1264 = vmatpush1.bf16.msra.mxu0 %v432
  %1265 = vmatprep.subr.bf16.mxu0 0
  %1266 = vmatpush1.bf16.msra.mxu0 0
  %1267 = vmatprep.subr.bf16.mxu0 0
  %1268 = vmatpush1.bf16.msra.mxu0 0
  %1269 = vmatprep.subr.bf16.mxu0 0
  %1270 = vmatpush1.bf16.msra.mxu0 0
  %1271 = vmatprep.subr.bf16.mxu0 0
  %1272 = vmatpush1.bf16.msra.mxu0 0
  %1273 = vmatprep.subr.bf16.mxu0 0
  %1274 = vmatpush1.bf16.msra.mxu0 0
  %1275 = vmatprep.subr.bf16.mxu0 0
  %1276 = vmatpush1.bf16.msra.mxu0 0
  %1277 = vmatprep.subr.bf16.mxu0 0
  %1278 = vmatpush1.bf16.msra.mxu0 0
  %1279 = vmatprep.subr.bf16.mxu0 0
  %1280 = vmatpush1.bf16.msra.mxu0 0
  %1281 = vmatprep.mubr.bf16.mxu0 0
  %1282 = vmatmul.mubr.bf16.gmra.mrb[0].mxu0 %v1122
  %v1283 = vpop.f32.mrb[0].mxu0
  %v1284 = vadd.f32 %v115, %v1283
  %v1285 = vpop.f32.mrb[0].mxu0
  %v1286 = vpop.f32.mrb[0].mxu0
  %v1287 = vpop.f32.mrb[0].mxu0
  %1288 = vdwg.mxu0
  %v1289 = vadd.f32 %v1162, %v1243
  %v1290 = vxor.u32 %v1289, 2147483648
  %v1291 = vmul.f32 %v1290, 1.442695
  %v1292 = vpow.pop %v1291
  %v1293 = vadd.f32 %v1292, 1.0
  %v1294 = vrcp.pop %v1293
  %v1295 = vmul.f32 1.0, %v1294
  %v1296 = vadd.f32 %v1164, %v1245
  %v1297 = vxor.u32 %v1296, 2147483648
  %v1298 = vmul.f32 %v1297, 1.442695
  %v1299 = vpow.pop %v1298
  %v1300 = vadd.f32 %v1299, 1.0
  %v1301 = vrcp.pop %v1300
  %v1302 = vmul.f32 1.0, %v1301
  %v1303 = vmul.f32 %v1295, %v1284
  %v1304 = vadd.f32 %v1203, %v1303
  %v1305 = vtanh.pop %v1304
  %v1306 = vsub.f32 1.0, %v1302
  %v1307 = vmul.f32 %v1306, %v1305
  %v1308 = vmul.f32 %v1302, %v1121
  %v1309 = vadd.f32 %v1307, %v1308
  %v1310 = vpack.c.bf16 %v1309, %v1309
  %s1311 = scalar_lea.vmem %s4, 4
  %1312 = vst [vmem:[%s1311] sm:$0x1] %v1310
  %s1313 = scalar_lea.vmem %s0, 5
  %v1314 = vld [vmem:[%s1313] sm:$0x1]
  %1315 = vmatprep.subr.bf16.mxu0 %v201
  %1316 = vmatpush1.bf16.msra.mxu0 %v200
  %1317 = vmatprep.subr.bf16.mxu0 %v204
  %1318 = vmatpush1.bf16.msra.mxu0 %v203
  %1319 = vmatprep.subr.bf16.mxu0 %v207
  %1320 = vmatpush1.bf16.msra.mxu0 %v206
  %1321 = vmatprep.subr.bf16.mxu0 %v210
  %1322 = vmatpush1.bf16.msra.mxu0 %v209
  %1323 = vmatprep.subr.bf16.mxu0 %v213
  %1324 = vmatpush1.bf16.msra.mxu0 %v212
  %1325 = vmatprep.subr.bf16.mxu0 %v216
  %1326 = vmatpush1.bf16.msra.mxu0 %v215
  %1327 = vmatprep.subr.bf16.mxu0 %v219
  %1328 = vmatpush1.bf16.msra.mxu0 %v218
  %1329 = vmatprep.subr.bf16.mxu0 %v222
  %1330 = vmatpush1.bf16.msra.mxu0 %v221
  %1331 = vmatprep.subr.bf16.mxu0 0
  %1332 = vmatpush1.bf16.msra.mxu0 0
  %1333 = vmatprep.subr.bf16.mxu0 0
  %1334 = vmatpush1.bf16.msra.mxu0 0
  %1335 = vmatprep.subr.bf16.mxu0 0
  %1336 = vmatpush1.bf16.msra.mxu0 0
  %1337 = vmatprep.subr.bf16.mxu0 0
  %1338 = vmatpush1.bf16.msra.mxu0 0
  %1339 = vmatprep.subr.bf16.mxu0 0
  %1340 = vmatpush1.bf16.msra.mxu0 0
  %1341 = vmatprep.subr.bf16.mxu0 0
  %1342 = vmatpush1.bf16.msra.mxu0 0
  %1343 = vmatprep.subr.bf16.mxu0 0
  %1344 = vmatpush1.bf16.msra.mxu0 0
  %1345 = vmatprep.subr.bf16.mxu0 0
  %1346 = vmatpush1.bf16.msra.mxu0 0
  %1347 = vmatprep.mubr.bf16.mxu0 0
  %1348 = vmatmul.mubr.bf16.gmra.mrb[0].mxu0 %v1314
  %v1349 = vpop.f32.mrb[0].mxu0
  %v1350 = vadd.f32 %v89, %v1349
  %v1351 = vpop.f32.mrb[0].mxu0
  %v1352 = vadd.f32 %v93, %v1351
  %v1353 = vpop.f32.mrb[0].mxu0
  %v1354 = vpop.f32.mrb[0].mxu0
  %1355 = vdwg.mxu0
  %1356 = vmatprep.subr.bf16.mxu0 0
  %1357 = vmatpush1.bf16.msra.mxu0 %v202
  %1358 = vmatprep.subr.bf16.mxu0 0
  %1359 = vmatpush1.bf16.msra.mxu0 %v205
  %1360 = vmatprep.subr.bf16.mxu0 0
  %1361 = vmatpush1.bf16.msra.mxu0 %v208
  %1362 = vmatprep.subr.bf16.mxu0 0
  %1363 = vmatpush1.bf16.msra.mxu0 %v211
  %1364 = vmatprep.subr.bf16.mxu0 0
  %1365 = vmatpush1.bf16.msra.mxu0 %v214
  %1366 = vmatprep.subr.bf16.mxu0 0
  %1367 = vmatpush1.bf16.msra.mxu0 %v217
  %1368 = vmatprep.subr.bf16.mxu0 0
  %1369 = vmatpush1.bf16.msra.mxu0 %v220
  %1370 = vmatprep.subr.bf16.mxu0 0
  %1371 = vmatpush1.bf16.msra.mxu0 %v223
  %1372 = vmatprep.subr.bf16.mxu0 0
  %1373 = vmatpush1.bf16.msra.mxu0 0
  %1374 = vmatprep.subr.bf16.mxu0 0
  %1375 = vmatpush1.bf16.msra.mxu0 0
  %1376 = vmatprep.subr.bf16.mxu0 0
  %1377 = vmatpush1.bf16.msra.mxu0 0
  %1378 = vmatprep.subr.bf16.mxu0 0
  %1379 = vmatpush1.bf16.msra.mxu0 0
  %1380 = vmatprep.subr.bf16.mxu0 0
  %1381 = vmatpush1.bf16.msra.mxu0 0
  %1382 = vmatprep.subr.bf16.mxu0 0
  %1383 = vmatpush1.bf16.msra.mxu0 0
  %1384 = vmatprep.subr.bf16.mxu0 0
  %1385 = vmatpush1.bf16.msra.mxu0 0
  %1386 = vmatprep.subr.bf16.mxu0 0
  %1387 = vmatpush1.bf16.msra.mxu0 0
  %1388 = vmatprep.mubr.bf16.mxu0 0
  %1389 = vmatmul.mubr.bf16.gmra.mrb[0].mxu0 %v1314
  %v1390 = vpop.f32.mrb[0].mxu0
  %v1391 = vadd.f32 %v97, %v1390
  %v1392 = vpop.f32.mrb[0].mxu0
  %v1393 = vpop.f32.mrb[0].mxu0
  %v1394 = vpop.f32.mrb[0].mxu0
  %1395 = vdwg.mxu0
  %1396 = vmatprep.subr.bf16.mxu0 %v410
  %1397 = vmatpush1.bf16.msra.mxu0 %v409
  %1398 = vmatprep.subr.bf16.mxu0 %v413
  %1399 = vmatpush1.bf16.msra.mxu0 %v412
  %1400 = vmatprep.subr.bf16.mxu0 %v416
  %1401 = vmatpush1.bf16.msra.mxu0 %v415
  %1402 = vmatprep.subr.bf16.mxu0 %v419
  %1403 = vmatpush1.bf16.msra.mxu0 %v418
  %1404 = vmatprep.subr.bf16.mxu0 %v422
  %1405 = vmatpush1.bf16.msra.mxu0 %v421
  %1406 = vmatprep.subr.bf16.mxu0 %v425
  %1407 = vmatpush1.bf16.msra.mxu0 %v424
  %1408 = vmatprep.subr.bf16.mxu0 %v428
  %1409 = vmatpush1.bf16.msra.mxu0 %v427
  %1410 = vmatprep.subr.bf16.mxu0 %v431
  %1411 = vmatpush1.bf16.msra.mxu0 %v430
  %1412 = vmatprep.subr.bf16.mxu0 0
  %1413 = vmatpush1.bf16.msra.mxu0 0
  %1414 = vmatprep.subr.bf16.mxu0 0
  %1415 = vmatpush1.bf16.msra.mxu0 0
  %1416 = vmatprep.subr.bf16.mxu0 0
  %1417 = vmatpush1.bf16.msra.mxu0 0
  %1418 = vmatprep.subr.bf16.mxu0 0
  %1419 = vmatpush1.bf16.msra.mxu0 0
  %1420 = vmatprep.subr.bf16.mxu0 0
  %1421 = vmatpush1.bf16.msra.mxu0 0
  %1422 = vmatprep.subr.bf16.mxu0 0
  %1423 = vmatpush1.bf16.msra.mxu0 0
  %1424 = vmatprep.subr.bf16.mxu0 0
  %1425 = vmatpush1.bf16.msra.mxu0 0
  %1426 = vmatprep.subr.bf16.mxu0 0
  %1427 = vmatpush1.bf16.msra.mxu0 0
  %1428 = vmatprep.mubr.bf16.mxu0 0
  %1429 = vmatmul.mubr.bf16.gmra.mrb[0].mxu0 %v1310
  %v1430 = vpop.f32.mrb[0].mxu0
  %v1431 = vadd.f32 %v107, %v1430
  %v1432 = vpop.f32.mrb[0].mxu0
  %v1433 = vadd.f32 %v111, %v1432
  %v1434 = vpop.f32.mrb[0].mxu0
  %v1435 = vpop.f32.mrb[0].mxu0
  %1436 = vdwg.mxu0
  %1437 = vmatprep.subr.bf16.mxu0 0
  %1438 = vmatpush1.bf16.msra.mxu0 %v411
  %1439 = vmatprep.subr.bf16.mxu0 0
  %1440 = vmatpush1.bf16.msra.mxu0 %v414
  %1441 = vmatprep.subr.bf16.mxu0 0
  %1442 = vmatpush1.bf16.msra.mxu0 %v417
  %1443 = vmatprep.subr.bf16.mxu0 0
  %1444 = vmatpush1.bf16.msra.mxu0 %v420
  %1445 = vmatprep.subr.bf16.mxu0 0
  %1446 = vmatpush1.bf16.msra.mxu0 %v423
  %1447 = vmatprep.subr.bf16.mxu0 0
  %1448 = vmatpush1.bf16.msra.mxu0 %v426
  %1449 = vmatprep.subr.bf16.mxu0 0
  %1450 = vmatpush1.bf16.msra.mxu0 %v429
  %1451 = vmatprep.subr.bf16.mxu0 0
  %1452 = vmatpush1.bf16.msra.mxu0 %v432
  %1453 = vmatprep.subr.bf16.mxu0 0
  %1454 = vmatpush1.bf16.msra.mxu0 0
  %1455 = vmatprep.subr.bf16.mxu0 0
  %1456 = vmatpush1.bf16.msra.mxu0 0
  %1457 = vmatprep.subr.bf16.mxu0 0
  %1458 = vmatpush1.bf16.msra.mxu0 0
  %1459 = vmatprep.subr.bf16.mxu0 0
  %1460 = vmatpush1.bf16.msra.mxu0 0
  %1461 = vmatprep.subr.bf16.mxu0 0
  %1462 = vmatpush1.bf16.msra.mxu0 0
  %1463 = vmatprep.subr.bf16.mxu0 0
  %1464 = vmatpush1.bf16.msra.mxu0 0
  %1465 = vmatprep.subr.bf16.mxu0 0
  %1466 = vmatpush1.bf16.msra.mxu0 0
  %1467 = vmatprep.subr.bf16.mxu0 0
  %1468 = vmatpush1.bf16.msra.mxu0 0
  %1469 = vmatprep.mubr.bf16.mxu0 0
  %1470 = vmatmul.mubr.bf16.gmra.mrb[0].mxu0 %v1310
  %v1471 = vpop.f32.mrb[0].mxu0
  %v1472 = vadd.f32 %v115, %v1471
  %v1473 = vpop.f32.mrb[0].mxu0
  %v1474 = vpop.f32.mrb[0].mxu0
  %v1475 = vpop.f32.mrb[0].mxu0
  %1476 = vdwg.mxu0
  %v1477 = vadd.f32 %v1350, %v1431
  %v1478 = vxor.u32 %v1477, 2147483648
  %v1479 = vmul.f32 %v1478, 1.442695
  %v1480 = vpow.pop %v1479
  %v1481 = vadd.f32 %v1480, 1.0
  %v1482 = vrcp.pop %v1481
  %v1483 = vmul.f32 1.0, %v1482
  %v1484 = vadd.f32 %v1352, %v1433
  %v1485 = vxor.u32 %v1484, 2147483648
  %v1486 = vmul.f32 %v1485, 1.442695
  %v1487 = vpow.pop %v1486
  %v1488 = vadd.f32 %v1487, 1.0
  %v1489 = vrcp.pop %v1488
  %v1490 = vmul.f32 1.0, %v1489
  %v1491 = vmul.f32 %v1483, %v1472
  %v1492 = vadd.f32 %v1391, %v1491
  %v1493 = vtanh.pop %v1492
  %v1494 = vsub.f32 1.0, %v1490
  %v1495 = vmul.f32 %v1494, %v1493
  %v1496 = vmul.f32 %v1490, %v1309
  %v1497 = vadd.f32 %v1495, %v1496
  %v1498 = vpack.c.bf16 %v1497, %v1497
  %s1499 = scalar_lea.vmem %s4, 5
  %1500 = vst [vmem:[%s1499] sm:$0x1] %v1498
  %s1501 = scalar_lea.vmem %s0, 6
  %v1502 = vld [vmem:[%s1501] sm:$0x1]
  %1503 = vmatprep.subr.bf16.mxu0 %v201
  %1504 = vmatpush1.bf16.msra.mxu0 %v200
  %1505 = vmatprep.subr.bf16.mxu0 %v204
  %1506 = vmatpush1.bf16.msra.mxu0 %v203
  %1507 = vmatprep.subr.bf16.mxu0 %v207
  %1508 = vmatpush1.bf16.msra.mxu0 %v206
  %1509 = vmatprep.subr.bf16.mxu0 %v210
  %1510 = vmatpush1.bf16.msra.mxu0 %v209
  %1511 = vmatprep.subr.bf16.mxu0 %v213
  %1512 = vmatpush1.bf16.msra.mxu0 %v212
  %1513 = vmatprep.subr.bf16.mxu0 %v216
  %1514 = vmatpush1.bf16.msra.mxu0 %v215
  %1515 = vmatprep.subr.bf16.mxu0 %v219
  %1516 = vmatpush1.bf16.msra.mxu0 %v218
  %1517 = vmatprep.subr.bf16.mxu0 %v222
  %1518 = vmatpush1.bf16.msra.mxu0 %v221
  %1519 = vmatprep.subr.bf16.mxu0 0
  %1520 = vmatpush1.bf16.msra.mxu0 0
  %1521 = vmatprep.subr.bf16.mxu0 0
  %1522 = vmatpush1.bf16.msra.mxu0 0
  %1523 = vmatprep.subr.bf16.mxu0 0
  %1524 = vmatpush1.bf16.msra.mxu0 0
  %1525 = vmatprep.subr.bf16.mxu0 0
  %1526 = vmatpush1.bf16.msra.mxu0 0
  %1527 = vmatprep.subr.bf16.mxu0 0
  %1528 = vmatpush1.bf16.msra.mxu0 0
  %1529 = vmatprep.subr.bf16.mxu0 0
  %1530 = vmatpush1.bf16.msra.mxu0 0
  %1531 = vmatprep.subr.bf16.mxu0 0
  %1532 = vmatpush1.bf16.msra.mxu0 0
  %1533 = vmatprep.subr.bf16.mxu0 0
  %1534 = vmatpush1.bf16.msra.mxu0 0
  %1535 = vmatprep.mubr.bf16.mxu0 0
  %1536 = vmatmul.mubr.bf16.gmra.mrb[0].mxu0 %v1502
  %v1537 = vpop.f32.mrb[0].mxu0
  %v1538 = vadd.f32 %v89, %v1537
  %v1539 = vpop.f32.mrb[0].mxu0
  %v1540 = vadd.f32 %v93, %v1539
  %v1541 = vpop.f32.mrb[0].mxu0
  %v1542 = vpop.f32.mrb[0].mxu0
  %1543 = vdwg.mxu0
  %1544 = vmatprep.subr.bf16.mxu0 0
  %1545 = vmatpush1.bf16.msra.mxu0 %v202
  %1546 = vmatprep.subr.bf16.mxu0 0
  %1547 = vmatpush1.bf16.msra.mxu0 %v205
  %1548 = vmatprep.subr.bf16.mxu0 0
  %1549 = vmatpush1.bf16.msra.mxu0 %v208
  %1550 = vmatprep.subr.bf16.mxu0 0
  %1551 = vmatpush1.bf16.msra.mxu0 %v211
  %1552 = vmatprep.subr.bf16.mxu0 0
  %1553 = vmatpush1.bf16.msra.mxu0 %v214
  %1554 = vmatprep.subr.bf16.mxu0 0
  %1555 = vmatpush1.bf16.msra.mxu0 %v217
  %1556 = vmatprep.subr.bf16.mxu0 0
  %1557 = vmatpush1.bf16.msra.mxu0 %v220
  %1558 = vmatprep.subr.bf16.mxu0 0
  %1559 = vmatpush1.bf16.msra.mxu0 %v223
  %1560 = vmatprep.subr.bf16.mxu0 0
  %1561 = vmatpush1.bf16.msra.mxu0 0
  %1562 = vmatprep.subr.bf16.mxu0 0
  %1563 = vmatpush1.bf16.msra.mxu0 0
  %1564 = vmatprep.subr.bf16.mxu0 0
  %1565 = vmatpush1.bf16.msra.mxu0 0
  %1566 = vmatprep.subr.bf16.mxu0 0
  %1567 = vmatpush1.bf16.msra.mxu0 0
  %1568 = vmatprep.subr.bf16.mxu0 0
  %1569 = vmatpush1.bf16.msra.mxu0 0
  %1570 = vmatprep.subr.bf16.mxu0 0
  %1571 = vmatpush1.bf16.msra.mxu0 0
  %1572 = vmatprep.subr.bf16.mxu0 0
  %1573 = vmatpush1.bf16.msra.mxu0 0
  %1574 = vmatprep.subr.bf16.mxu0 0
  %1575 = vmatpush1.bf16.msra.mxu0 0
  %1576 = vmatprep.mubr.bf16.mxu0 0
  %1577 = vmatmul.mubr.bf16.gmra.mrb[0].mxu0 %v1502
  %v1578 = vpop.f32.mrb[0].mxu0
  %v1579 = vadd.f32 %v97, %v1578
  %v1580 = vpop.f32.mrb[0].mxu0
  %v1581 = vpop.f32.mrb[0].mxu0
  %v1582 = vpop.f32.mrb[0].mxu0
  %1583 = vdwg.mxu0
  %1584 = vmatprep.subr.bf16.mxu0 %v410
  %1585 = vmatpush1.bf16.msra.mxu0 %v409
  %1586 = vmatprep.subr.bf16.mxu0 %v413
  %1587 = vmatpush1.bf16.msra.mxu0 %v412
  %1588 = vmatprep.subr.bf16.mxu0 %v416
  %1589 = vmatpush1.bf16.msra.mxu0 %v415
  %1590 = vmatprep.subr.bf16.mxu0 %v419
  %1591 = vmatpush1.bf16.msra.mxu0 %v418
  %1592 = vmatprep.subr.bf16.mxu0 %v422
  %1593 = vmatpush1.bf16.msra.mxu0 %v421
  %1594 = vmatprep.subr.bf16.mxu0 %v425
  %1595 = vmatpush1.bf16.msra.mxu0 %v424
  %1596 = vmatprep.subr.bf16.mxu0 %v428
  %1597 = vmatpush1.bf16.msra.mxu0 %v427
  %1598 = vmatprep.subr.bf16.mxu0 %v431
  %1599 = vmatpush1.bf16.msra.mxu0 %v430
  %1600 = vmatprep.subr.bf16.mxu0 0
  %1601 = vmatpush1.bf16.msra.mxu0 0
  %1602 = vmatprep.subr.bf16.mxu0 0
  %1603 = vmatpush1.bf16.msra.mxu0 0
  %1604 = vmatprep.subr.bf16.mxu0 0
  %1605 = vmatpush1.bf16.msra.mxu0 0
  %1606 = vmatprep.subr.bf16.mxu0 0
  %1607 = vmatpush1.bf16.msra.mxu0 0
  %1608 = vmatprep.subr.bf16.mxu0 0
  %1609 = vmatpush1.bf16.msra.mxu0 0
  %1610 = vmatprep.subr.bf16.mxu0 0
  %1611 = vmatpush1.bf16.msra.mxu0 0
  %1612 = vmatprep.subr.bf16.mxu0 0
  %1613 = vmatpush1.bf16.msra.mxu0 0
  %1614 = vmatprep.subr.bf16.mxu0 0
  %1615 = vmatpush1.bf16.msra.mxu0 0
  %1616 = vmatprep.mubr.bf16.mxu0 0
  %1617 = vmatmul.mubr.bf16.gmra.mrb[0].mxu0 %v1498
  %v1618 = vpop.f32.mrb[0].mxu0
  %v1619 = vadd.f32 %v107, %v1618
  %v1620 = vpop.f32.mrb[0].mxu0
  %v1621 = vadd.f32 %v111, %v1620
  %v1622 = vpop.f32.mrb[0].mxu0
  %v1623 = vpop.f32.mrb[0].mxu0
  %1624 = vdwg.mxu0
  %1625 = vmatprep.subr.bf16.mxu0 0
  %1626 = vmatpush1.bf16.msra.mxu0 %v411
  %1627 = vmatprep.subr.bf16.mxu0 0
  %1628 = vmatpush1.bf16.msra.mxu0 %v414
  %1629 = vmatprep.subr.bf16.mxu0 0
  %1630 = vmatpush1.bf16.msra.mxu0 %v417
  %1631 = vmatprep.subr.bf16.mxu0 0
  %1632 = vmatpush1.bf16.msra.mxu0 %v420
  %1633 = vmatprep.subr.bf16.mxu0 0
  %1634 = vmatpush1.bf16.msra.mxu0 %v423
  %1635 = vmatprep.subr.bf16.mxu0 0
  %1636 = vmatpush1.bf16.msra.mxu0 %v426
  %1637 = vmatprep.subr.bf16.mxu0 0
  %1638 = vmatpush1.bf16.msra.mxu0 %v429
  %1639 = vmatprep.subr.bf16.mxu0 0
  %1640 = vmatpush1.bf16.msra.mxu0 %v432
  %1641 = vmatprep.subr.bf16.mxu0 0
  %1642 = vmatpush1.bf16.msra.mxu0 0
  %1643 = vmatprep.subr.bf16.mxu0 0
  %1644 = vmatpush1.bf16.msra.mxu0 0
  %1645 = vmatprep.subr.bf16.mxu0 0
  %1646 = vmatpush1.bf16.msra.mxu0 0
  %1647 = vmatprep.subr.bf16.mxu0 0
  %1648 = vmatpush1.bf16.msra.mxu0 0
  %1649 = vmatprep.subr.bf16.mxu0 0
  %1650 = vmatpush1.bf16.msra.mxu0 0
  %1651 = vmatprep.subr.bf16.mxu0 0
  %1652 = vmatpush1.bf16.msra.mxu0 0
  %1653 = vmatprep.subr.bf16.mxu0 0
  %1654 = vmatpush1.bf16.msra.mxu0 0
  %1655 = vmatprep.subr.bf16.mxu0 0
  %1656 = vmatpush1.bf16.msra.mxu0 0
  %1657 = vmatprep.mubr.bf16.mxu0 0
  %1658 = vmatmul.mubr.bf16.gmra.mrb[0].mxu0 %v1498
  %v1659 = vpop.f32.mrb[0].mxu0
  %v1660 = vadd.f32 %v115, %v1659
  %v1661 = vpop.f32.mrb[0].mxu0
  %v1662 = vpop.f32.mrb[0].mxu0
  %v1663 = vpop.f32.mrb[0].mxu0
  %1664 = vdwg.mxu0
  %v1665 = vadd.f32 %v1538, %v1619
  %v1666 = vxor.u32 %v1665, 2147483648
  %v1667 = vmul.f32 %v1666, 1.442695
  %v1668 = vpow.pop %v1667
  %v1669 = vadd.f32 %v1668, 1.0
  %v1670 = vrcp.pop %v1669
  %v1671 = vmul.f32 1.0, %v1670
  %v1672 = vadd.f32 %v1540, %v1621
  %v1673 = vxor.u32 %v1672, 2147483648
  %v1674 = vmul.f32 %v1673, 1.442695
  %v1675 = vpow.pop %v1674
  %v1676 = vadd.f32 %v1675, 1.0
  %v1677 = vrcp.pop %v1676
  %v1678 = vmul.f32 1.0, %v1677
  %v1679 = vmul.f32 %v1671, %v1660
  %v1680 = vadd.f32 %v1579, %v1679
  %v1681 = vtanh.pop %v1680
  %v1682 = vsub.f32 1.0, %v1678
  %v1683 = vmul.f32 %v1682, %v1681
  %v1684 = vmul.f32 %v1678, %v1497
  %v1685 = vadd.f32 %v1683, %v1684
  %v1686 = vpack.c.bf16 %v1685, %v1685
  %s1687 = scalar_lea.vmem %s4, 6
  %1688 = vst [vmem:[%s1687] sm:$0x1] %v1686
  %s1689 = scalar_lea.vmem %s0, 7
  %v1690 = vld [vmem:[%s1689] sm:$0x1]
  %1691 = vmatprep.subr.bf16.mxu0 %v201
  %1692 = vmatpush1.bf16.msra.mxu0 %v200
  %1693 = vmatprep.subr.bf16.mxu0 %v204
  %1694 = vmatpush1.bf16.msra.mxu0 %v203
  %1695 = vmatprep.subr.bf16.mxu0 %v207
  %1696 = vmatpush1.bf16.msra.mxu0 %v206
  %1697 = vmatprep.subr.bf16.mxu0 %v210
  %1698 = vmatpush1.bf16.msra.mxu0 %v209
  %1699 = vmatprep.subr.bf16.mxu0 %v213
  %1700 = vmatpush1.bf16.msra.mxu0 %v212
  %1701 = vmatprep.subr.bf16.mxu0 %v216
  %1702 = vmatpush1.bf16.msra.mxu0 %v215
  %1703 = vmatprep.subr.bf16.mxu0 %v219
  %1704 = vmatpush1.bf16.msra.mxu0 %v218
  %1705 = vmatprep.subr.bf16.mxu0 %v222
  %1706 = vmatpush1.bf16.msra.mxu0 %v221
  %1707 = vmatprep.subr.bf16.mxu0 0
  %1708 = vmatpush1.bf16.msra.mxu0 0
  %1709 = vmatprep.subr.bf16.mxu0 0
  %1710 = vmatpush1.bf16.msra.mxu0 0
  %1711 = vmatprep.subr.bf16.mxu0 0
  %1712 = vmatpush1.bf16.msra.mxu0 0
  %1713 = vmatprep.subr.bf16.mxu0 0
  %1714 = vmatpush1.bf16.msra.mxu0 0
  %1715 = vmatprep.subr.bf16.mxu0 0
  %1716 = vmatpush1.bf16.msra.mxu0 0
  %1717 = vmatprep.subr.bf16.mxu0 0
  %1718 = vmatpush1.bf16.msra.mxu0 0
  %1719 = vmatprep.subr.bf16.mxu0 0
  %1720 = vmatpush1.bf16.msra.mxu0 0
  %1721 = vmatprep.subr.bf16.mxu0 0
  %1722 = vmatpush1.bf16.msra.mxu0 0
  %1723 = vmatprep.mubr.bf16.mxu0 0
  %1724 = vmatmul.mubr.bf16.gmra.mrb[0].mxu0 %v1690
  %v1725 = vpop.f32.mrb[0].mxu0
  %v1726 = vadd.f32 %v89, %v1725
  %v1727 = vpop.f32.mrb[0].mxu0
  %v1728 = vadd.f32 %v93, %v1727
  %v1729 = vpop.f32.mrb[0].mxu0
  %v1730 = vpop.f32.mrb[0].mxu0
  %1731 = vdwg.mxu0
  %1732 = vmatprep.subr.bf16.mxu0 0
  %1733 = vmatpush1.bf16.msra.mxu0 %v202
  %1734 = vmatprep.subr.bf16.mxu0 0
  %1735 = vmatpush1.bf16.msra.mxu0 %v205
  %1736 = vmatprep.subr.bf16.mxu0 0
  %1737 = vmatpush1.bf16.msra.mxu0 %v208
  %1738 = vmatprep.subr.bf16.mxu0 0
  %1739 = vmatpush1.bf16.msra.mxu0 %v211
  %1740 = vmatprep.subr.bf16.mxu0 0
  %1741 = vmatpush1.bf16.msra.mxu0 %v214
  %1742 = vmatprep.subr.bf16.mxu0 0
  %1743 = vmatpush1.bf16.msra.mxu0 %v217
  %1744 = vmatprep.subr.bf16.mxu0 0
  %1745 = vmatpush1.bf16.msra.mxu0 %v220
  %1746 = vmatprep.subr.bf16.mxu0 0
  %1747 = vmatpush1.bf16.msra.mxu0 %v223
  %1748 = vmatprep.subr.bf16.mxu0 0
  %1749 = vmatpush1.bf16.msra.mxu0 0
  %1750 = vmatprep.subr.bf16.mxu0 0
  %1751 = vmatpush1.bf16.msra.mxu0 0
  %1752 = vmatprep.subr.bf16.mxu0 0
  %1753 = vmatpush1.bf16.msra.mxu0 0
  %1754 = vmatprep.subr.bf16.mxu0 0
  %1755 = vmatpush1.bf16.msra.mxu0 0
  %1756 = vmatprep.subr.bf16.mxu0 0
  %1757 = vmatpush1.bf16.msra.mxu0 0
  %1758 = vmatprep.subr.bf16.mxu0 0
  %1759 = vmatpush1.bf16.msra.mxu0 0
  %1760 = vmatprep.subr.bf16.mxu0 0
  %1761 = vmatpush1.bf16.msra.mxu0 0
  %1762 = vmatprep.subr.bf16.mxu0 0
  %1763 = vmatpush1.bf16.msra.mxu0 0
  %1764 = vmatprep.mubr.bf16.mxu0 0
  %1765 = vmatmul.mubr.bf16.gmra.mrb[0].mxu0 %v1690
  %v1766 = vpop.f32.mrb[0].mxu0
  %v1767 = vadd.f32 %v97, %v1766
  %v1768 = vpop.f32.mrb[0].mxu0
  %v1769 = vpop.f32.mrb[0].mxu0
  %v1770 = vpop.f32.mrb[0].mxu0
  %1771 = vdwg.mxu0
  %1772 = vmatprep.subr.bf16.mxu0 %v410
  %1773 = vmatpush1.bf16.msra.mxu0 %v409
  %1774 = vmatprep.subr.bf16.mxu0 %v413
  %1775 = vmatpush1.bf16.msra.mxu0 %v412
  %1776 = vmatprep.subr.bf16.mxu0 %v416
  %1777 = vmatpush1.bf16.msra.mxu0 %v415
  %1778 = vmatprep.subr.bf16.mxu0 %v419
  %1779 = vmatpush1.bf16.msra.mxu0 %v418
  %1780 = vmatprep.subr.bf16.mxu0 %v422
  %1781 = vmatpush1.bf16.msra.mxu0 %v421
  %1782 = vmatprep.subr.bf16.mxu0 %v425
  %1783 = vmatpush1.bf16.msra.mxu0 %v424
  %1784 = vmatprep.subr.bf16.mxu0 %v428
  %1785 = vmatpush1.bf16.msra.mxu0 %v427
  %1786 = vmatprep.subr.bf16.mxu0 %v431
  %1787 = vmatpush1.bf16.msra.mxu0 %v430
  %1788 = vmatprep.subr.bf16.mxu0 0
  %1789 = vmatpush1.bf16.msra.mxu0 0
  %1790 = vmatprep.subr.bf16.mxu0 0
  %1791 = vmatpush1.bf16.msra.mxu0 0
  %1792 = vmatprep.subr.bf16.mxu0 0
  %1793 = vmatpush1.bf16.msra.mxu0 0
  %1794 = vmatprep.subr.bf16.mxu0 0
  %1795 = vmatpush1.bf16.msra.mxu0 0
  %1796 = vmatprep.subr.bf16.mxu0 0
  %1797 = vmatpush1.bf16.msra.mxu0 0
  %1798 = vmatprep.subr.bf16.mxu0 0
  %1799 = vmatpush1.bf16.msra.mxu0 0
  %1800 = vmatprep.subr.bf16.mxu0 0
  %1801 = vmatpush1.bf16.msra.mxu0 0
  %1802 = vmatprep.subr.bf16.mxu0 0
  %1803 = vmatpush1.bf16.msra.mxu0 0
  %1804 = vmatprep.mubr.bf16.mxu0 0
  %1805 = vmatmul.mubr.bf16.gmra.mrb[0].mxu0 %v1686
  %v1806 = vpop.f32.mrb[0].mxu0
  %v1807 = vadd.f32 %v107, %v1806
  %v1808 = vpop.f32.mrb[0].mxu0
  %v1809 = vadd.f32 %v111, %v1808
  %v1810 = vpop.f32.mrb[0].mxu0
  %v1811 = vpop.f32.mrb[0].mxu0
  %1812 = vdwg.mxu0
  %1813 = vmatprep.subr.bf16.mxu0 0
  %1814 = vmatpush1.bf16.msra.mxu0 %v411
  %1815 = vmatprep.subr.bf16.mxu0 0
  %1816 = vmatpush1.bf16.msra.mxu0 %v414
  %1817 = vmatprep.subr.bf16.mxu0 0
  %1818 = vmatpush1.bf16.msra.mxu0 %v417
  %1819 = vmatprep.subr.bf16.mxu0 0
  %1820 = vmatpush1.bf16.msra.mxu0 %v420
  %1821 = vmatprep.subr.bf16.mxu0 0
  %1822 = vmatpush1.bf16.msra.mxu0 %v423
  %1823 = vmatprep.subr.bf16.mxu0 0
  %1824 = vmatpush1.bf16.msra.mxu0 %v426
  %1825 = vmatprep.subr.bf16.mxu0 0
  %1826 = vmatpush1.bf16.msra.mxu0 %v429
  %1827 = vmatprep.subr.bf16.mxu0 0
  %1828 = vmatpush1.bf16.msra.mxu0 %v432
  %1829 = vmatprep.subr.bf16.mxu0 0
  %1830 = vmatpush1.bf16.msra.mxu0 0
  %1831 = vmatprep.subr.bf16.mxu0 0
  %1832 = vmatpush1.bf16.msra.mxu0 0
  %1833 = vmatprep.subr.bf16.mxu0 0
  %1834 = vmatpush1.bf16.msra.mxu0 0
  %1835 = vmatprep.subr.bf16.mxu0 0
  %1836 = vmatpush1.bf16.msra.mxu0 0
  %1837 = vmatprep.subr.bf16.mxu0 0
  %1838 = vmatpush1.bf16.msra.mxu0 0
  %1839 = vmatprep.subr.bf16.mxu0 0
  %1840 = vmatpush1.bf16.msra.mxu0 0
  %1841 = vmatprep.subr.bf16.mxu0 0
  %1842 = vmatpush1.bf16.msra.mxu0 0
  %1843 = vmatprep.subr.bf16.mxu0 0
  %1844 = vmatpush1.bf16.msra.mxu0 0
  %1845 = vmatprep.mubr.bf16.mxu0 0
  %1846 = vmatmul.mubr.bf16.gmra.mrb[0].mxu0 %v1686
  %v1847 = vpop.f32.mrb[0].mxu0
  %v1848 = vadd.f32 %v115, %v1847
  %v1849 = vpop.f32.mrb[0].mxu0
  %v1850 = vpop.f32.mrb[0].mxu0
  %v1851 = vpop.f32.mrb[0].mxu0
  %1852 = vdwg.mxu0
  %v1853 = vadd.f32 %v1726, %v1807
  %v1854 = vxor.u32 %v1853, 2147483648
  %v1855 = vmul.f32 %v1854, 1.442695
  %v1856 = vpow.pop %v1855
  %v1857 = vadd.f32 %v1856, 1.0
  %v1858 = vrcp.pop %v1857
  %v1859 = vmul.f32 1.0, %v1858
  %v1860 = vadd.f32 %v1728, %v1809
  %v1861 = vxor.u32 %v1860, 2147483648
  %v1862 = vmul.f32 %v1861, 1.442695
  %v1863 = vpow.pop %v1862
  %v1864 = vadd.f32 %v1863, 1.0
  %v1865 = vrcp.pop %v1864
  %v1866 = vmul.f32 1.0, %v1865
  %v1867 = vmul.f32 %v1859, %v1848
  %v1868 = vadd.f32 %v1767, %v1867
  %v1869 = vtanh.pop %v1868
  %v1870 = vsub.f32 1.0, %v1866
  %v1871 = vmul.f32 %v1870, %v1869
  %v1872 = vmul.f32 %v1866, %v1685
  %v1873 = vadd.f32 %v1871, %v1872
  %v1874 = vpack.c.bf16 %v1873, %v1873
  %s1875 = scalar_lea.vmem %s4, 7
  %1876 = vst [vmem:[%s1875] sm:$0x1] %v1874
  %1877 = vst [vmem:[%s5] sm:$0x3] %v1873
  // Predicated region
  $region18: #{seq2seq_forward.2} parent=0 // pred_check
    _
  $region19: #{seq2seq_forward.2} parent=0 // pred_check_branch
    %1879 = sbr.rel (0) target = $region21
  $region20: #{seq2seq_forward.2} parent=0 // pred_region
    _
  $region21: #{seq2seq_forward.2} parent=0 // pred_fallthru
    _
  // Predicated region
  $region22: #{seq2seq_forward.2} parent=0 // pred_check
    _
  $region23: #{seq2seq_forward.2} parent=0 // pred_check_branch
    %1881 = sbr.rel (0) target = $region25
  $region24: #{seq2seq_forward.2} parent=0 // pred_region
    _
  $region25: #{seq2seq_forward.2} parent=0 // pred_fallthru
    _
  // Predicated region
  $region26: #{seq2seq_forward.2} parent=0 // pred_check
    _
  $region27: #{seq2seq_forward.2} parent=0 // pred_check_branch
    %1883 = sbr.rel (0) target = $region29
  $region28: #{seq2seq_forward.2} parent=0 // pred_region
    _
  $region29: #{seq2seq_forward.2} parent=0 // pred_fallthru
    _
  // Predicated region
  $region30: #{seq2seq_forward.2} parent=0 // pred_check
    _
  $region31: #{seq2seq_forward.2} parent=0 // pred_check_branch
    %1885 = sbr.rel (0) target = $region33
  $region32: #{seq2seq_forward.2} parent=0 // pred_region
    _
  $region33: #{seq2seq_forward.2} parent=0 // pred_fallthru
    _

// kernel: seq2seq_forward.3
$region0: #{seq2seq_forward.3}
  #allocation0 [shape = 'u32[]', space=smem, size = 0x4, offset = 0x4, fixed_abs, tag = 'smem constant byte address 0x4 - core index']
  #allocation1 [shape = 'u32[144,128]{1,0:T(1,128)}', space=vmem, size = 0x12000, scoped, tag = 'internal scratch']
  %s0 = inlined_call_operand.vmem [shape: bf16[8,2,128], index: 0, kind: input, shape index: {}]
  %s1 = inlined_call_operand.vmem [shape: bf16[2,8,128], index: 1, kind: input, shape index: {}]
  %s2 = inlined_call_operand.vmem [shape: f32[2,128], index: 2, kind: input, shape index: {}]
  %s3 = inlined_call_operand.vmem [shape: bf16[128,384], index: 3, kind: input, shape index: {}]
  %s4 = inlined_call_operand.vmem [shape: bf16[128,384], index: 4, kind: input, shape index: {}]
  %s5 = inlined_call_operand.vmem [shape: f32[2,1,384], index: 5, kind: input, shape index: {}]
  %s6 = inlined_call_operand.vmem [shape: bf16[2,128,128], index: 6, kind: input, shape index: {}]
  %s7 = inlined_call_operand.vmem [shape: f32[1,128], index: 7, kind: input, shape index: {}]
  %s8 = inlined_call_operand.vmem [shape: bf16[128,128], index: 8, kind: input, shape index: {}]
  %s9 = inlined_call_operand.vmem [shape: f32[1,128], index: 9, kind: input, shape index: {}]
  %s10 = inlined_call_operand.vmem [shape: f32[8,2,128], index: 10, kind: output, shape index: {0}]
  %s11 = inlined_call_operand.hbm [shape: f32[8,2,8], index: 11, kind: output, shape index: {1}]
  %s12 = inlined_call_operand.vmem [shape: f32[2,128], index: 12, kind: output, shape index: {2}]
  %13 = xla_tuple %s10, %s11, %s12
  %s14 = sld [smem:[#allocation0]]
  $region66: #{seq2seq_forward.3} parent=0
    _
  %s16 = ssub.s32 1, %s14
  %s17 = scalar_select 0, %s16, %s14
  $region1: #{seq2seq_forward.3} parent=0
    #allocation2 [shape = 'u8[8192]{0}', space=vmem, size = 0x2000, scoped, tag = 'output window, operand 1, single buffered']
    #allocation3 [shape = 's32[1]{0}', space=sflag, size = 0x4, scoped, tag = 'scoped memory for seq2seq_forward.3']
    %18 = vsyncpa [#allocation3], 0
    // Predicated region
    $region2: #{seq2seq_forward.3} parent=1 // pred_check
      _
    $region3: #{seq2seq_forward.3} parent=1 // pred_check_branch
      %20 = sbr.rel (0) target = $region5
    $region4: #{seq2seq_forward.3} parent=1 // pred_region
      _
    $region5: #{seq2seq_forward.3} parent=1 // pred_fallthru
      _
    // Predicated region
    $region6: #{seq2seq_forward.3} parent=1 // pred_check
      _
    $region7: #{seq2seq_forward.3} parent=1 // pred_check_branch
      %22 = sbr.rel (0) target = $region9
    $region8: #{seq2seq_forward.3} parent=1 // pred_region
      _
    $region9: #{seq2seq_forward.3} parent=1 // pred_fallthru
      _
    // Predicated region
    $region10: #{seq2seq_forward.3} parent=1 // pred_check
      _
    $region11: #{seq2seq_forward.3} parent=1 // pred_check_branch
      %24 = sbr.rel (0) target = $region13
    $region12: #{seq2seq_forward.3} parent=1 // pred_region
      _
    $region13: #{seq2seq_forward.3} parent=1 // pred_fallthru
      _
    // Predicated region
    $region14: #{seq2seq_forward.3} parent=1 // pred_check
      _
    $region15: #{seq2seq_forward.3} parent=1 // pred_check_branch
      %26 = sbr.rel (0) target = $region17
    $region16: #{seq2seq_forward.3} parent=1 // pred_region
      _
    $region17: #{seq2seq_forward.3} parent=1 // pred_fallthru
      _
    // Predicated region
    $region18: #{seq2seq_forward.3} parent=1 // pred_check
      _
    $region19: #{seq2seq_forward.3} parent=1 // pred_check_branch
      %28 = sbr.rel (0) target = $region21
    $region20: #{seq2seq_forward.3} parent=1 // pred_region
      _
    $region21: #{seq2seq_forward.3} parent=1 // pred_fallthru
      _
    // Predicated region
    $region22: #{seq2seq_forward.3} parent=1 // pred_check
      _
    $region23: #{seq2seq_forward.3} parent=1 // pred_check_branch
      %30 = sbr.rel (0) target = $region25
    $region24: #{seq2seq_forward.3} parent=1 // pred_region
      _
    $region25: #{seq2seq_forward.3} parent=1 // pred_fallthru
      _
    // Predicated region
    $region26: #{seq2seq_forward.3} parent=1 // pred_check
      _
    $region27: #{seq2seq_forward.3} parent=1 // pred_check_branch
      %32 = sbr.rel (0) target = $region29
    $region28: #{seq2seq_forward.3} parent=1 // pred_region
      _
    $region29: #{seq2seq_forward.3} parent=1 // pred_fallthru
      _
    // Predicated region
    $region30: #{seq2seq_forward.3} parent=1 // pred_check
      _
    $region31: #{seq2seq_forward.3} parent=1 // pred_check_branch
      %34 = sbr.rel (0) target = $region33
    $region32: #{seq2seq_forward.3} parent=1 // pred_region
      _
    $region33: #{seq2seq_forward.3} parent=1 // pred_fallthru
      _
    // Predicated region
    $region34: #{seq2seq_forward.3} parent=1 // pred_check
      _
    $region35: #{seq2seq_forward.3} parent=1 // pred_check_branch
      %36 = sbr.rel (0) target = $region37
    $region36: #{seq2seq_forward.3} parent=1 // pred_region
      _
    $region37: #{seq2seq_forward.3} parent=1 // pred_fallthru
      _
    // Predicated region
    $region38: #{seq2seq_forward.3} parent=1 // pred_check
      _
    $region39: #{seq2seq_forward.3} parent=1 // pred_check_branch
      %38 = sbr.rel (0) target = $region41
    $region40: #{seq2seq_forward.3} parent=1 // pred_region
      _
    $region41: #{seq2seq_forward.3} parent=1 // pred_fallthru
      _
    %v40 = vld [vmem:[%s3] sm:$0xff]
    %v41 = vld [vmem:[%s3 + $0x8] sm:$0xf]
    %v42 = vld [vmem:[%s3 + $0xc] sm:$0xff]
    %v43 = vld [vmem:[%s3 + $0x14] sm:$0xf]
    %v44 = vld [vmem:[%s3 + $0x18] sm:$0xff]
    %v45 = vld [vmem:[%s3 + $0x20] sm:$0xf]
    %v46 = vld [vmem:[%s3 + $0x24] sm:$0xff]
    %v47 = vld [vmem:[%s3 + $0x2c] sm:$0xf]
    %v48 = vld [vmem:[%s3 + $0x30] sm:$0xff]
    %v49 = vld [vmem:[%s3 + $0x38] sm:$0xf]
    %v50 = vld [vmem:[%s3 + $0x3c] sm:$0xff]
    %v51 = vld [vmem:[%s3 + $0x44] sm:$0xf]
    %v52 = vld [vmem:[%s3 + $0x48] sm:$0xff]
    %v53 = vld [vmem:[%s3 + $0x50] sm:$0xf]
    %v54 = vld [vmem:[%s3 + $0x54] sm:$0xff]
    %v55 = vld [vmem:[%s3 + $0x5c] sm:$0xf]
    %v56 = vld [vmem:[%s3 + $0x60] sm:$0xff]
    %v57 = vld [vmem:[%s3 + $0x68] sm:$0xf]
    %v58 = vld [vmem:[%s3 + $0x6c] sm:$0xff]
    %v59 = vld [vmem:[%s3 + $0x74] sm:$0xf]
    %v60 = vld [vmem:[%s3 + $0x78] sm:$0xff]
    %v61 = vld [vmem:[%s3 + $0x80] sm:$0xf]
    %v62 = vld [vmem:[%s3 + $0x84] sm:$0xff]
    %v63 = vld [vmem:[%s3 + $0x8c] sm:$0xf]
    %v64 = vld [vmem:[%s3 + $0x90] sm:$0xff]
    %v65 = vld [vmem:[%s3 + $0x98] sm:$0xf]
    %v66 = vld [vmem:[%s3 + $0x9c] sm:$0xff]
    %v67 = vld [vmem:[%s3 + $0xa4] sm:$0xf]
    %v68 = vld [vmem:[%s3 + $0xa8] sm:$0xff]
    %v69 = vld [vmem:[%s3 + $0xb0] sm:$0xf]
    %v70 = vld [vmem:[%s3 + $0xb4] sm:$0xff]
    %v71 = vld [vmem:[%s3 + $0xbc] sm:$0xf]
    %v72 = vld [vmem:[%s4] sm:$0xff]
    %v73 = vld [vmem:[%s4 + $0x8] sm:$0xf]
    %v74 = vld [vmem:[%s4 + $0xc] sm:$0xff]
    %v75 = vld [vmem:[%s4 + $0x14] sm:$0xf]
    %v76 = vld [vmem:[%s4 + $0x18] sm:$0xff]
    %v77 = vld [vmem:[%s4 + $0x20] sm:$0xf]
    %v78 = vld [vmem:[%s4 + $0x24] sm:$0xff]
    %v79 = vld [vmem:[%s4 + $0x2c] sm:$0xf]
    %v80 = vld [vmem:[%s4 + $0x30] sm:$0xff]
    %v81 = vld [vmem:[%s4 + $0x38] sm:$0xf]
    %v82 = vld [vmem:[%s4 + $0x3c] sm:$0xff]
    %v83 = vld [vmem:[%s4 + $0x44] sm:$0xf]
    %v84 = vld [vmem:[%s4 + $0x48] sm:$0xff]
    %v85 = vld [vmem:[%s4 + $0x50] sm:$0xf]
    %v86 = vld [vmem:[%s4 + $0x54] sm:$0xff]
    %v87 = vld [vmem:[%s4 + $0x5c] sm:$0xf]
    %v88 = vld [vmem:[%s4 + $0x60] sm:$0xff]
    %v89 = vld [vmem:[%s4 + $0x68] sm:$0xf]
    %v90 = vld [vmem:[%s4 + $0x6c] sm:$0xff]
    %v91 = vld [vmem:[%s4 + $0x74] sm:$0xf]
    %v92 = vld [vmem:[%s4 + $0x78] sm:$0xff]
    %v93 = vld [vmem:[%s4 + $0x80] sm:$0xf]
    %v94 = vld [vmem:[%s4 + $0x84] sm:$0xff]
    %v95 = vld [vmem:[%s4 + $0x8c] sm:$0xf]
    %v96 = vld [vmem:[%s4 + $0x90] sm:$0xff]
    %v97 = vld [vmem:[%s4 + $0x98] sm:$0xf]
    %v98 = vld [vmem:[%s4 + $0x9c] sm:$0xff]
    %v99 = vld [vmem:[%s4 + $0xa4] sm:$0xf]
    %v100 = vld [vmem:[%s4 + $0xa8] sm:$0xff]
    %v101 = vld [vmem:[%s4 + $0xb0] sm:$0xf]
    %v102 = vld [vmem:[%s4 + $0xb4] sm:$0xff]
    %v103 = vld [vmem:[%s4 + $0xbc] sm:$0xf]
    %v104 = vld [vmem:[%s5] sm:$0x7]
    %v106 = vlaneseq
    %v107 = vshrl.u32 %v106, 7
    %v108 = vsub.s32 0, %v107
    %v109 = vrot.slane %v104, %v108
    %v110 = vlaneseq
    %v111 = vshrl.u32 %v110, 7
    %v112 = vsub.s32 1, %v111
    %v113 = vrot.slane %v104, %v112
    %v114 = vlaneseq
    %v115 = vshrl.u32 %v114, 7
    %v116 = vsub.s32 2, %v115
    %v117 = vrot.slane %v104, %v116
    %s121 = scalar_lea.vmem %s5, 3
    %v122 = vld [vmem:[%s121] sm:$0x7]
    %v124 = vlaneseq
    %v125 = vshrl.u32 %v124, 7
    %v126 = vsub.s32 0, %v125
    %v127 = vrot.slane %v122, %v126
    %v128 = vlaneseq
    %v129 = vshrl.u32 %v128, 7
    %v130 = vsub.s32 1, %v129
    %v131 = vrot.slane %v122, %v130
    %v132 = vlaneseq
    %v133 = vshrl.u32 %v132, 7
    %v134 = vsub.s32 2, %v133
    %v135 = vrot.slane %v122, %v134
    %v139 = vld [vmem:[%s6] sm:$0xf]
    %v140 = vld [vmem:[%s6 + $0x4] sm:$0xf]
    %v141 = vld [vmem:[%s6 + $0x8] sm:$0xf]
    %v142 = vld [vmem:[%s6 + $0xc] sm:$0xf]
    %v143 = vld [vmem:[%s6 + $0x10] sm:$0xf]
    %v144 = vld [vmem:[%s6 + $0x14] sm:$0xf]
    %v145 = vld [vmem:[%s6 + $0x18] sm:$0xf]
    %v146 = vld [vmem:[%s6 + $0x1c] sm:$0xf]
    %v147 = vld [vmem:[%s6 + $0x20] sm:$0xf]
    %v148 = vld [vmem:[%s6 + $0x24] sm:$0xf]
    %v149 = vld [vmem:[%s6 + $0x28] sm:$0xf]
    %v150 = vld [vmem:[%s6 + $0x2c] sm:$0xf]
    %v151 = vld [vmem:[%s6 + $0x30] sm:$0xf]
    %v152 = vld [vmem:[%s6 + $0x34] sm:$0xf]
    %v153 = vld [vmem:[%s6 + $0x38] sm:$0xf]
    %v154 = vld [vmem:[%s6 + $0x3c] sm:$0xf]
    %s155 = scalar_lea.vmem %s6, 64
    %v156 = vld [vmem:[%s155] sm:$0xf]
    %v157 = vld [vmem:[%s155 + $0x4] sm:$0xf]
    %v158 = vld [vmem:[%s155 + $0x8] sm:$0xf]
    %v159 = vld [vmem:[%s155 + $0xc] sm:$0xf]
    %v160 = vld [vmem:[%s155 + $0x10] sm:$0xf]
    %v161 = vld [vmem:[%s155 + $0x14] sm:$0xf]
    %v162 = vld [vmem:[%s155 + $0x18] sm:$0xf]
    %v163 = vld [vmem:[%s155 + $0x1c] sm:$0xf]
    %v164 = vld [vmem:[%s155 + $0x20] sm:$0xf]
    %v165 = vld [vmem:[%s155 + $0x24] sm:$0xf]
    %v166 = vld [vmem:[%s155 + $0x28] sm:$0xf]
    %v167 = vld [vmem:[%s155 + $0x2c] sm:$0xf]
    %v168 = vld [vmem:[%s155 + $0x30] sm:$0xf]
    %v169 = vld [vmem:[%s155 + $0x34] sm:$0xf]
    %v170 = vld [vmem:[%s155 + $0x38] sm:$0xf]
    %v171 = vld [vmem:[%s155 + $0x3c] sm:$0xf]
    %v172 = vld [vmem:[%s7] sm:$0x1]
    %v174 = vlaneseq
    %v175 = vshrl.u32 %v174, 7
    %v176 = vsub.s32 0, %v175
    %v177 = vrot.slane %v172, %v176
    %v179 = vld [vmem:[%s8] sm:$0xf]
    %v180 = vld [vmem:[%s8 + $0x4] sm:$0xf]
    %v181 = vld [vmem:[%s8 + $0x8] sm:$0xf]
    %v182 = vld [vmem:[%s8 + $0xc] sm:$0xf]
    %v183 = vld [vmem:[%s8 + $0x10] sm:$0xf]
    %v184 = vld [vmem:[%s8 + $0x14] sm:$0xf]
    %v185 = vld [vmem:[%s8 + $0x18] sm:$0xf]
    %v186 = vld [vmem:[%s8 + $0x1c] sm:$0xf]
    %v187 = vld [vmem:[%s8 + $0x20] sm:$0xf]
    %v188 = vld [vmem:[%s8 + $0x24] sm:$0xf]
    %v189 = vld [vmem:[%s8 + $0x28] sm:$0xf]
    %v190 = vld [vmem:[%s8 + $0x2c] sm:$0xf]
    %v191 = vld [vmem:[%s8 + $0x30] sm:$0xf]
    %v192 = vld [vmem:[%s8 + $0x34] sm:$0xf]
    %v193 = vld [vmem:[%s8 + $0x38] sm:$0xf]
    %v194 = vld [vmem:[%s8 + $0x3c] sm:$0xf]
    %v195 = vld [vmem:[%s9] sm:$0x1]
    %v197 = vlaneseq
    %v198 = vshrl.u32 %v197, 7
    %v199 = vsub.s32 0, %v198
    %v200 = vrot.slane %v195, %v199
    %v202 = vld [vmem:[%s1] sm:$0xf]
    %v203 = vld [vmem:[%s1 + $0x4] sm:$0xf]
    %v204 = vlaneseq
    %v205 = vand.u32 %v204, 127
    %vm206 = vcmp.lt.s32.totalorder %v205, 64
    %v207 = vld [vmem:[%s2] sm:$0x3]
    %v208 = vld [vmem:[%s0] sm:$0x1]
    %v241 = vunpack.c.l.b16 %v40
    %v242 = vunpack.c.h.b16 %v40
    %v243 = vunpack.c.l.b16 %v41
    %v244 = vunpack.c.l.b16 %v42
    %v245 = vunpack.c.h.b16 %v42
    %v246 = vunpack.c.l.b16 %v43
    %v247 = vunpack.c.l.b16 %v44
    %v248 = vunpack.c.h.b16 %v44
    %v249 = vunpack.c.l.b16 %v45
    %v250 = vunpack.c.l.b16 %v46
    %v251 = vunpack.c.h.b16 %v46
    %v252 = vunpack.c.l.b16 %v47
    %v253 = vunpack.c.l.b16 %v48
    %v254 = vunpack.c.h.b16 %v48
    %v255 = vunpack.c.l.b16 %v49
    %v256 = vunpack.c.l.b16 %v50
    %v257 = vunpack.c.h.b16 %v50
    %v258 = vunpack.c.l.b16 %v51
    %v259 = vunpack.c.l.b16 %v52
    %v260 = vunpack.c.h.b16 %v52
    %v261 = vunpack.c.l.b16 %v53
    %v262 = vunpack.c.l.b16 %v54
    %v263 = vunpack.c.h.b16 %v54
    %v264 = vunpack.c.l.b16 %v55
    %v265 = vunpack.c.l.b16 %v56
    %v266 = vunpack.c.h.b16 %v56
    %v267 = vunpack.c.l.b16 %v57
    %v268 = vunpack.c.l.b16 %v58
    %v269 = vunpack.c.h.b16 %v58
    %v270 = vunpack.c.l.b16 %v59
    %v271 = vunpack.c.l.b16 %v60
    %v272 = vunpack.c.h.b16 %v60
    %v273 = vunpack.c.l.b16 %v61
    %v274 = vunpack.c.l.b16 %v62
    %v275 = vunpack.c.h.b16 %v62
    %v276 = vunpack.c.l.b16 %v63
    %v277 = vunpack.c.l.b16 %v64
    %v278 = vunpack.c.h.b16 %v64
    %v279 = vunpack.c.l.b16 %v65
    %v280 = vunpack.c.l.b16 %v66
    %v281 = vunpack.c.h.b16 %v66
    %v282 = vunpack.c.l.b16 %v67
    %v283 = vunpack.c.l.b16 %v68
    %v284 = vunpack.c.h.b16 %v68
    %v285 = vunpack.c.l.b16 %v69
    %v286 = vunpack.c.l.b16 %v70
    %v287 = vunpack.c.h.b16 %v70
    %v288 = vunpack.c.l.b16 %v71
    %v289 = vpack.c.b16 %v244, %v241
    %v290 = vpack.c.b16 %v245, %v242
    %v291 = vpack.c.b16 %v246, %v243
    %v292 = vpack.c.b16 %v250, %v247
    %v293 = vpack.c.b16 %v251, %v248
    %v294 = vpack.c.b16 %v252, %v249
    %v295 = vpack.c.b16 %v256, %v253
    %v296 = vpack.c.b16 %v257, %v254
    %v297 = vpack.c.b16 %v258, %v255
    %v298 = vpack.c.b16 %v262, %v259
    %v299 = vpack.c.b16 %v263, %v260
    %v300 = vpack.c.b16 %v264, %v261
    %v301 = vpack.c.b16 %v268, %v265
    %v302 = vpack.c.b16 %v269, %v266
    %v303 = vpack.c.b16 %v270, %v267
    %v304 = vpack.c.b16 %v274, %v271
    %v305 = vpack.c.b16 %v275, %v272
    %v306 = vpack.c.b16 %v276, %v273
    %v307 = vpack.c.b16 %v280, %v277
    %v308 = vpack.c.b16 %v281, %v278
    %v309 = vpack.c.b16 %v282, %v279
    %v310 = vpack.c.b16 %v286, %v283
    %v311 = vpack.c.b16 %v287, %v284
    %v312 = vpack.c.b16 %v288, %v285
    %337 = vmatprep.subr.bf16.mxu0 %v290
    %338 = vmatpush1.bf16.msra.mxu0 %v289
    %339 = vmatprep.subr.bf16.mxu0 %v293
    %340 = vmatpush1.bf16.msra.mxu0 %v292
    %341 = vmatprep.subr.bf16.mxu0 %v296
    %342 = vmatpush1.bf16.msra.mxu0 %v295
    %343 = vmatprep.subr.bf16.mxu0 %v299
    %344 = vmatpush1.bf16.msra.mxu0 %v298
    %345 = vmatprep.subr.bf16.mxu0 %v302
    %346 = vmatpush1.bf16.msra.mxu0 %v301
    %347 = vmatprep.subr.bf16.mxu0 %v305
    %348 = vmatpush1.bf16.msra.mxu0 %v304
    %349 = vmatprep.subr.bf16.mxu0 %v308
    %350 = vmatpush1.bf16.msra.mxu0 %v307
    %351 = vmatprep.subr.bf16.mxu0 %v311
    %352 = vmatpush1.bf16.msra.mxu0 %v310
    %353 = vmatprep.subr.bf16.mxu0 0
    %354 = vmatpush1.bf16.msra.mxu0 0
    %355 = vmatprep.subr.bf16.mxu0 0
    %356 = vmatpush1.bf16.msra.mxu0 0
    %357 = vmatprep.subr.bf16.mxu0 0
    %358 = vmatpush1.bf16.msra.mxu0 0
    %359 = vmatprep.subr.bf16.mxu0 0
    %360 = vmatpush1.bf16.msra.mxu0 0
    %361 = vmatprep.subr.bf16.mxu0 0
    %362 = vmatpush1.bf16.msra.mxu0 0
    %363 = vmatprep.subr.bf16.mxu0 0
    %364 = vmatpush1.bf16.msra.mxu0 0
    %365 = vmatprep.subr.bf16.mxu0 0
    %366 = vmatpush1.bf16.msra.mxu0 0
    %367 = vmatprep.subr.bf16.mxu0 0
    %368 = vmatpush1.bf16.msra.mxu0 0
    %369 = vmatprep.mubr.bf16.mxu0 0
    %370 = vmatmul.mubr.bf16.gmra.mrb[0].mxu0 %v208
    %v371 = vpop.f32.mrb[0].mxu0
    %v372 = vadd.f32 %v109, %v371
    %v373 = vpop.f32.mrb[0].mxu0
    %v374 = vadd.f32 %v113, %v373
    %v375 = vpop.f32.mrb[0].mxu0
    %v376 = vpop.f32.mrb[0].mxu0
    %377 = vdwg.mxu0
    %378 = vmatprep.subr.bf16.mxu0 0
    %379 = vmatpush1.bf16.msra.mxu0 %v291
    %380 = vmatprep.subr.bf16.mxu0 0
    %381 = vmatpush1.bf16.msra.mxu0 %v294
    %382 = vmatprep.subr.bf16.mxu0 0
    %383 = vmatpush1.bf16.msra.mxu0 %v297
    %384 = vmatprep.subr.bf16.mxu0 0
    %385 = vmatpush1.bf16.msra.mxu0 %v300
    %386 = vmatprep.subr.bf16.mxu0 0
    %387 = vmatpush1.bf16.msra.mxu0 %v303
    %388 = vmatprep.subr.bf16.mxu0 0
    %389 = vmatpush1.bf16.msra.mxu0 %v306
    %390 = vmatprep.subr.bf16.mxu0 0
    %391 = vmatpush1.bf16.msra.mxu0 %v309
    %392 = vmatprep.subr.bf16.mxu0 0
    %393 = vmatpush1.bf16.msra.mxu0 %v312
    %394 = vmatprep.subr.bf16.mxu0 0
    %395 = vmatpush1.bf16.msra.mxu0 0
    %396 = vmatprep.subr.bf16.mxu0 0
    %397 = vmatpush1.bf16.msra.mxu0 0
    %398 = vmatprep.subr.bf16.mxu0 0
    %399 = vmatpush1.bf16.msra.mxu0 0
    %400 = vmatprep.subr.bf16.mxu0 0
    %401 = vmatpush1.bf16.msra.mxu0 0
    %402 = vmatprep.subr.bf16.mxu0 0
    %403 = vmatpush1.bf16.msra.mxu0 0
    %404 = vmatprep.subr.bf16.mxu0 0
    %405 = vmatpush1.bf16.msra.mxu0 0
    %406 = vmatprep.subr.bf16.mxu0 0
    %407 = vmatpush1.bf16.msra.mxu0 0
    %408 = vmatprep.subr.bf16.mxu0 0
    %409 = vmatpush1.bf16.msra.mxu0 0
    %410 = vmatprep.mubr.bf16.mxu0 0
    %411 = vmatmul.mubr.bf16.gmra.mrb[0].mxu0 %v208
    %v412 = vpop.f32.mrb[0].mxu0
    %v413 = vadd.f32 %v117, %v412
    %v414 = vpop.f32.mrb[0].mxu0
    %v415 = vpop.f32.mrb[0].mxu0
    %v416 = vpop.f32.mrb[0].mxu0
    %417 = vdwg.mxu0
    %v418 = vpack.c.bf16 %v207, %v207
    %v451 = vunpack.c.l.b16 %v72
    %v452 = vunpack.c.h.b16 %v72
    %v453 = vunpack.c.l.b16 %v73
    %v454 = vunpack.c.l.b16 %v74
    %v455 = vunpack.c.h.b16 %v74
    %v456 = vunpack.c.l.b16 %v75
    %v457 = vunpack.c.l.b16 %v76
    %v458 = vunpack.c.h.b16 %v76
    %v459 = vunpack.c.l.b16 %v77
    %v460 = vunpack.c.l.b16 %v78
    %v461 = vunpack.c.h.b16 %v78
    %v462 = vunpack.c.l.b16 %v79
    %v463 = vunpack.c.l.b16 %v80
    %v464 = vunpack.c.h.b16 %v80
    %v465 = vunpack.c.l.b16 %v81
    %v466 = vunpack.c.l.b16 %v82
    %v467 = vunpack.c.h.b16 %v82
    %v468 = vunpack.c.l.b16 %v83
    %v469 = vunpack.c.l.b16 %v84
    %v470 = vunpack.c.h.b16 %v84
    %v471 = vunpack.c.l.b16 %v85
    %v472 = vunpack.c.l.b16 %v86
    %v473 = vunpack.c.h.b16 %v86
    %v474 = vunpack.c.l.b16 %v87
    %v475 = vunpack.c.l.b16 %v88
    %v476 = vunpack.c.h.b16 %v88
    %v477 = vunpack.c.l.b16 %v89
    %v478 = vunpack.c.l.b16 %v90
    %v479 = vunpack.c.h.b16 %v90
    %v480 = vunpack.c.l.b16 %v91
    %v481 = vunpack.c.l.b16 %v92
    %v482 = vunpack.c.h.b16 %v92
    %v483 = vunpack.c.l.b16 %v93
    %v484 = vunpack.c.l.b16 %v94
    %v485 = vunpack.c.h.b16 %v94
    %v486 = vunpack.c.l.b16 %v95
    %v487 = vunpack.c.l.b16 %v96
    %v488 = vunpack.c.h.b16 %v96
    %v489 = vunpack.c.l.b16 %v97
    %v490 = vunpack.c.l.b16 %v98
    %v491 = vunpack.c.h.b16 %v98
    %v492 = vunpack.c.l.b16 %v99
    %v493 = vunpack.c.l.b16 %v100
    %v494 = vunpack.c.h.b16 %v100
    %v495 = vunpack.c.l.b16 %v101
    %v496 = vunpack.c.l.b16 %v102
    %v497 = vunpack.c.h.b16 %v102
    %v498 = vunpack.c.l.b16 %v103
    %v499 = vpack.c.b16 %v454, %v451
    %v500 = vpack.c.b16 %v455, %v452
    %v501 = vpack.c.b16 %v456, %v453
    %v502 = vpack.c.b16 %v460, %v457
    %v503 = vpack.c.b16 %v461, %v458
    %v504 = vpack.c.b16 %v462, %v459
    %v505 = vpack.c.b16 %v466, %v463
    %v506 = vpack.c.b16 %v467, %v464
    %v507 = vpack.c.b16 %v468, %v465
    %v508 = vpack.c.b16 %v472, %v469
    %v509 = vpack.c.b16 %v473, %v470
    %v510 = vpack.c.b16 %v474, %v471
    %v511 = vpack.c.b16 %v478, %v475
    %v512 = vpack.c.b16 %v479, %v476
    %v513 = vpack.c.b16 %v480, %v477
    %v514 = vpack.c.b16 %v484, %v481
    %v515 = vpack.c.b16 %v485, %v482
    %v516 = vpack.c.b16 %v486, %v483
    %v517 = vpack.c.b16 %v490, %v487
    %v518 = vpack.c.b16 %v491, %v488
    %v519 = vpack.c.b16 %v492, %v489
    %v520 = vpack.c.b16 %v496, %v493
    %v521 = vpack.c.b16 %v497, %v494
    %v522 = vpack.c.b16 %v498, %v495
    %547 = vmatprep.subr.bf16.mxu0 %v500
    %548 = vmatpush1.bf16.msra.mxu0 %v499
    %549 = vmatprep.subr.bf16.mxu0 %v503
    %550 = vmatpush1.bf16.msra.mxu0 %v502
    %551 = vmatprep.subr.bf16.mxu0 %v506
    %552 = vmatpush1.bf16.msra.mxu0 %v505
    %553 = vmatprep.subr.bf16.mxu0 %v509
    %554 = vmatpush1.bf16.msra.mxu0 %v508
    %555 = vmatprep.subr.bf16.mxu0 %v512
    %556 = vmatpush1.bf16.msra.mxu0 %v511
    %557 = vmatprep.subr.bf16.mxu0 %v515
    %558 = vmatpush1.bf16.msra.mxu0 %v514
    %559 = vmatprep.subr.bf16.mxu0 %v518
    %560 = vmatpush1.bf16.msra.mxu0 %v517
    %561 = vmatprep.subr.bf16.mxu0 %v521
    %562 = vmatpush1.bf16.msra.mxu0 %v520
    %563 = vmatprep.subr.bf16.mxu0 0
    %564 = vmatpush1.bf16.msra.mxu0 0
    %565 = vmatprep.subr.bf16.mxu0 0
    %566 = vmatpush1.bf16.msra.mxu0 0
    %567 = vmatprep.subr.bf16.mxu0 0
    %568 = vmatpush1.bf16.msra.mxu0 0
    %569 = vmatprep.subr.bf16.mxu0 0
    %570 = vmatpush1.bf16.msra.mxu0 0
    %571 = vmatprep.subr.bf16.mxu0 0
    %572 = vmatpush1.bf16.msra.mxu0 0
    %573 = vmatprep.subr.bf16.mxu0 0
    %574 = vmatpush1.bf16.msra.mxu0 0
    %575 = vmatprep.subr.bf16.mxu0 0
    %576 = vmatpush1.bf16.msra.mxu0 0
    %577 = vmatprep.subr.bf16.mxu0 0
    %578 = vmatpush1.bf16.msra.mxu0 0
    %579 = vmatprep.mubr.bf16.mxu0 0
    %580 = vmatmul.mubr.bf16.gmra.mrb[0].mxu0 %v418
    %v581 = vpop.f32.mrb[0].mxu0
    %v582 = vadd.f32 %v127, %v581
    %v583 = vpop.f32.mrb[0].mxu0
    %v584 = vadd.f32 %v131, %v583
    %v585 = vpop.f32.mrb[0].mxu0
    %v586 = vpop.f32.mrb[0].mxu0
    %587 = vdwg.mxu0
    %588 = vmatprep.subr.bf16.mxu0 0
    %589 = vmatpush1.bf16.msra.mxu0 %v501
    %590 = vmatprep.subr.bf16.mxu0 0
    %591 = vmatpush1.bf16.msra.mxu0 %v504
    %592 = vmatprep.subr.bf16.mxu0 0
    %593 = vmatpush1.bf16.msra.mxu0 %v507
    %594 = vmatprep.subr.bf16.mxu0 0
    %595 = vmatpush1.bf16.msra.mxu0 %v510
    %596 = vmatprep.subr.bf16.mxu0 0
    %597 = vmatpush1.bf16.msra.mxu0 %v513
    %598 = vmatprep.subr.bf16.mxu0 0
    %599 = vmatpush1.bf16.msra.mxu0 %v516
    %600 = vmatprep.subr.bf16.mxu0 0
    %601 = vmatpush1.bf16.msra.mxu0 %v519
    %602 = vmatprep.subr.bf16.mxu0 0
    %603 = vmatpush1.bf16.msra.mxu0 %v522
    %604 = vmatprep.subr.bf16.mxu0 0
    %605 = vmatpush1.bf16.msra.mxu0 0
    %606 = vmatprep.subr.bf16.mxu0 0
    %607 = vmatpush1.bf16.msra.mxu0 0
    %608 = vmatprep.subr.bf16.mxu0 0
    %609 = vmatpush1.bf16.msra.mxu0 0
    %610 = vmatprep.subr.bf16.mxu0 0
    %611 = vmatpush1.bf16.msra.mxu0 0
    %612 = vmatprep.subr.bf16.mxu0 0
    %613 = vmatpush1.bf16.msra.mxu0 0
    %614 = vmatprep.subr.bf16.mxu0 0
    %615 = vmatpush1.bf16.msra.mxu0 0
    %616 = vmatprep.subr.bf16.mxu0 0
    %617 = vmatpush1.bf16.msra.mxu0 0
    %618 = vmatprep.subr.bf16.mxu0 0
    %619 = vmatpush1.bf16.msra.mxu0 0
    %620 = vmatprep.mubr.bf16.mxu0 0
    %621 = vmatmul.mubr.bf16.gmra.mrb[0].mxu0 %v418
    %v622 = vpop.f32.mrb[0].mxu0
    %v623 = vadd.f32 %v135, %v622
    %v624 = vpop.f32.mrb[0].mxu0
    %v625 = vpop.f32.mrb[0].mxu0
    %v626 = vpop.f32.mrb[0].mxu0
    %627 = vdwg.mxu0
    %v628 = vadd.f32 %v372, %v582
    %v629 = vxor.u32 %v628, 2147483648
    %v630 = vmul.f32 %v629, 1.442695
    %v631 = vpow.pop %v630
    %v632 = vadd.f32 %v631, 1.0
    %v633 = vrcp.pop %v632
    %v634 = vmul.f32 1.0, %v633
    %v635 = vadd.f32 %v374, %v584
    %v636 = vxor.u32 %v635, 2147483648
    %v637 = vmul.f32 %v636, 1.442695
    %v638 = vpow.pop %v637
    %v639 = vadd.f32 %v638, 1.0
    %v640 = vrcp.pop %v639
    %v641 = vmul.f32 1.0, %v640
    %v642 = vmul.f32 %v634, %v623
    %v643 = vadd.f32 %v413, %v642
    %v644 = vtanh.pop %v643
    %v645 = vsub.f32 1.0, %v641
    %v646 = vmul.f32 %v645, %v644
    %v647 = vmul.f32 %v641, %v207
    %v648 = vadd.f32 %v646, %v647
    %v649 = vpack.c.bf16 %v648, %v648
    %v652 = vunpack.c.l.s4 1966171168
    %v653 = vunpack.c.0.s8 %v652
    %v654 = vlaneseq
    %v655 = vshrl.u32 %v654, 7
    %v656 = vsub.s32 %v653, %v655
    %v657 = vrot.slane %v649, %v656
    %v659 = vunpack.c.l.s4 1966171168
    %v660 = vunpack.c.0.s8 %v659
    %v661 = vlaneseq
    %v662 = vshrl.u32 %v661, 7
    %v663 = vsub.s32 %v660, %v662
    %v664 = vrot.slane %v657, %v663
    %v665 = vunpack.i.l.s16 %v664
    %v666 = vunpack.i.h.s16 %v664
    %v667 = vpack.i.b16 %v665, %v665
    %v668 = vlaneseq
    %v669 = vshrl.u32 %v668, 7
    %v670 = vsub.s32 0, %v669
    %v671 = vrot.slane %v667, %v670
    %673 = vmatprep.subr.bf16.mxu0 0
    %674 = vmatpush1.bf16.xpose.msra.mxu0 %v202
    %675 = vmatprep.subr.bf16.mxu0 0
    %676 = vmatpush1.bf16.xpose.msra.mxu0 0
    %677 = vmatprep.subr.bf16.mxu0 0
    %678 = vmatpush1.bf16.xpose.msra.mxu0 0
    %679 = vmatprep.subr.bf16.mxu0 0
    %680 = vmatpush1.bf16.xpose.msra.mxu0 0
    %681 = vmatprep.subr.bf16.mxu0 0
    %682 = vmatpush1.bf16.xpose.msra.mxu0 0
    %683 = vmatprep.subr.bf16.mxu0 0
    %684 = vmatpush1.bf16.xpose.msra.mxu0 0
    %685 = vmatprep.subr.bf16.mxu0 0
    %686 = vmatpush1.bf16.xpose.msra.mxu0 0
    %687 = vmatprep.subr.bf16.mxu0 0
    %688 = vmatpush1.bf16.xpose.msra.mxu0 0
    %689 = vmatprep.subr.bf16.mxu0 0
    %690 = vmatpush1.bf16.xpose.msra.mxu0 0
    %691 = vmatprep.subr.bf16.mxu0 0
    %692 = vmatpush1.bf16.xpose.msra.mxu0 0
    %693 = vmatprep.subr.bf16.mxu0 0
    %694 = vmatpush1.bf16.xpose.msra.mxu0 0
    %695 = vmatprep.subr.bf16.mxu0 0
    %696 = vmatpush1.bf16.xpose.msra.mxu0 0
    %697 = vmatprep.subr.bf16.mxu0 0
    %698 = vmatpush1.bf16.xpose.msra.mxu0 0
    %699 = vmatprep.subr.bf16.mxu0 0
    %700 = vmatpush1.bf16.xpose.msra.mxu0 0
    %701 = vmatprep.subr.bf16.mxu0 0
    %702 = vmatpush1.bf16.xpose.msra.mxu0 0
    %703 = vmatprep.subr.bf16.mxu0 0
    %704 = vmatpush1.bf16.xpose.msra.mxu0 0
    %705 = vmatprep.mubr.bf16.mxu0 0
    %706 = vmatmul.mubr.bf16.gmra.mrb[0].mxu0 %v671
    %v707 = vpop.f32.mrb[0].mxu0
    %v708 = vadd.f32 0.0, %v707
    %v709 = vpop.f32.mrb[0].mxu0
    %v710 = vpop.f32.mrb[0].mxu0
    %v711 = vpop.f32.mrb[0].mxu0
    %712 = vdwg.mxu0
    %v713 = vpack.i.b16 %v666, %v666
    %v714 = vlaneseq
    %v715 = vshrl.u32 %v714, 7
    %v716 = vsub.s32 0, %v715
    %v717 = vrot.slane %v713, %v716
    %719 = vmatprep.subr.bf16.mxu0 0
    %720 = vmatpush1.bf16.xpose.msra.mxu0 %v203
    %721 = vmatprep.subr.bf16.mxu0 0
    %722 = vmatpush1.bf16.xpose.msra.mxu0 0
    %723 = vmatprep.subr.bf16.mxu0 0
    %724 = vmatpush1.bf16.xpose.msra.mxu0 0
    %725 = vmatprep.subr.bf16.mxu0 0
    %726 = vmatpush1.bf16.xpose.msra.mxu0 0
    %727 = vmatprep.subr.bf16.mxu0 0
    %728 = vmatpush1.bf16.xpose.msra.mxu0 0
    %729 = vmatprep.subr.bf16.mxu0 0
    %730 = vmatpush1.bf16.xpose.msra.mxu0 0
    %731 = vmatprep.subr.bf16.mxu0 0
    %732 = vmatpush1.bf16.xpose.msra.mxu0 0
    %733 = vmatprep.subr.bf16.mxu0 0
    %734 = vmatpush1.bf16.xpose.msra.mxu0 0
    %735 = vmatprep.subr.bf16.mxu0 0
    %736 = vmatpush1.bf16.xpose.msra.mxu0 0
    %737 = vmatprep.subr.bf16.mxu0 0
    %738 = vmatpush1.bf16.xpose.msra.mxu0 0
    %739 = vmatprep.subr.bf16.mxu0 0
    %740 = vmatpush1.bf16.xpose.msra.mxu0 0
    %741 = vmatprep.subr.bf16.mxu0 0
    %742 = vmatpush1.bf16.xpose.msra.mxu0 0
    %743 = vmatprep.subr.bf16.mxu0 0
    %744 = vmatpush1.bf16.xpose.msra.mxu0 0
    %745 = vmatprep.subr.bf16.mxu0 0
    %746 = vmatpush1.bf16.xpose.msra.mxu0 0
    %747 = vmatprep.subr.bf16.mxu0 0
    %748 = vmatpush1.bf16.xpose.msra.mxu0 0
    %749 = vmatprep.subr.bf16.mxu0 0
    %750 = vmatpush1.bf16.xpose.msra.mxu0 0
    %751 = vmatprep.mubr.bf16.mxu0 0
    %752 = vmatmul.mubr.bf16.gmra.mrb[0].mxu0 %v717
    %v753 = vpop.f32.mrb[0].mxu0
    %v754 = vadd.f32 0.0, %v753
    %v755 = vpop.f32.mrb[0].mxu0
    %v756 = vpop.f32.mrb[0].mxu0
    %v757 = vpop.f32.mrb[0].mxu0
    %758 = vdwg.mxu0
    %v761 = vrot.slane %v754, 7
    %vm762 = vcmask 1041409
    %v763 = vsel %vm762, %v761, %v708
    %vm765 = vcmask 58368
    %v766 = vsel %vm765, %v763, -inf
    %767 = vmax.xlane.f32.xlu0 %v766
    %v768 = vpop.xlane.xlu0 %767
    %v770 = vrot.slane %v768, 1
    %v773 = vsub.f32 %v708, %v768
    %v774 = vsub.f32 %v754, %v770
    %v775 = vmul.f32 %v773, 1.442695
    %v776 = vpow.pop %v775
    %v777 = vmul.f32 %v774, 1.442695
    %v778 = vpow.pop %v777
    %v781 = vrot.slane %v778, 7
    %v782 = vsel %vm762, %v781, %v776
    %v784 = vsel %vm765, %v782, 0.0
    %785 = vadd.xlane.f32.xlu0 %v784
    %v786 = vpop.xlane.xlu0 %785
    %v787 = vrcp.pop %v786
    %v789 = vrot.slane %v787, 1
    %v792 = vmul.f32 %v776, %v787
    %v793 = vmul.f32 %v778, %v789
    %v794 = vpack.c.bf16 %v792, %v792
    %v795 = vpack.c.bf16 %v793, %v793
    %vm796 = vcmask 64512
    %v798 = vsel %vm796, %v794, 0
    %vm800 = vcmask 1043456
    %v802 = vsel %vm800, %v202, 0
    %804 = vmatprep.subr.bf16.mxu0 0
    %805 = vmatpush1.bf16.msra.mxu0 %v802
    %806 = vmatprep.subr.bf16.mxu0 0
    %807 = vmatpush1.bf16.msra.mxu0 0
    %808 = vmatprep.subr.bf16.mxu0 0
    %809 = vmatpush1.bf16.msra.mxu0 0
    %810 = vmatprep.subr.bf16.mxu0 0
    %811 = vmatpush1.bf16.msra.mxu0 0
    %812 = vmatprep.subr.bf16.mxu0 0
    %813 = vmatpush1.bf16.msra.mxu0 0
    %814 = vmatprep.subr.bf16.mxu0 0
    %815 = vmatpush1.bf16.msra.mxu0 0
    %816 = vmatprep.subr.bf16.mxu0 0
    %817 = vmatpush1.bf16.msra.mxu0 0
    %818 = vmatprep.subr.bf16.mxu0 0
    %819 = vmatpush1.bf16.msra.mxu0 0
    %820 = vmatprep.subr.bf16.mxu0 0
    %821 = vmatpush1.bf16.msra.mxu0 0
    %822 = vmatprep.subr.bf16.mxu0 0
    %823 = vmatpush1.bf16.msra.mxu0 0
    %824 = vmatprep.subr.bf16.mxu0 0
    %825 = vmatpush1.bf16.msra.mxu0 0
    %826 = vmatprep.subr.bf16.mxu0 0
    %827 = vmatpush1.bf16.msra.mxu0 0
    %828 = vmatprep.subr.bf16.mxu0 0
    %829 = vmatpush1.bf16.msra.mxu0 0
    %830 = vmatprep.subr.bf16.mxu0 0
    %831 = vmatpush1.bf16.msra.mxu0 0
    %832 = vmatprep.subr.bf16.mxu0 0
    %833 = vmatpush1.bf16.msra.mxu0 0
    %834 = vmatprep.subr.bf16.mxu0 0
    %835 = vmatpush1.bf16.msra.mxu0 0
    %836 = vmatprep.mubr.bf16.mxu0 0
    %837 = vmatmul.mubr.bf16.gmra.mrb[0].mxu0 %v798
    %v838 = vpop.f32.mrb[0].mxu0
    %v839 = vadd.f32 0.0, %v838
    %v840 = vpop.f32.mrb[0].mxu0
    %v841 = vpop.f32.mrb[0].mxu0
    %v842 = vpop.f32.mrb[0].mxu0
    %843 = vdwg.mxu0
    %v845 = vsel %vm796, %v795, 0
    %v848 = vsel %vm800, %v203, 0
    %850 = vmatprep.subr.bf16.mxu0 0
    %851 = vmatpush1.bf16.msra.mxu0 %v848
    %852 = vmatprep.subr.bf16.mxu0 0
    %853 = vmatpush1.bf16.msra.mxu0 0
    %854 = vmatprep.subr.bf16.mxu0 0
    %855 = vmatpush1.bf16.msra.mxu0 0
    %856 = vmatprep.subr.bf16.mxu0 0
    %857 = vmatpush1.bf16.msra.mxu0 0
    %858 = vmatprep.subr.bf16.mxu0 0
    %859 = vmatpush1.bf16.msra.mxu0 0
    %860 = vmatprep.subr.bf16.mxu0 0
    %861 = vmatpush1.bf16.msra.mxu0 0
    %862 = vmatprep.subr.bf16.mxu0 0
    %863 = vmatpush1.bf16.msra.mxu0 0
    %864 = vmatprep.subr.bf16.mxu0 0
    %865 = vmatpush1.bf16.msra.mxu0 0
    %866 = vmatprep.subr.bf16.mxu0 0
    %867 = vmatpush1.bf16.msra.mxu0 0
    %868 = vmatprep.subr.bf16.mxu0 0
    %869 = vmatpush1.bf16.msra.mxu0 0
    %870 = vmatprep.subr.bf16.mxu0 0
    %871 = vmatpush1.bf16.msra.mxu0 0
    %872 = vmatprep.subr.bf16.mxu0 0
    %873 = vmatpush1.bf16.msra.mxu0 0
    %874 = vmatprep.subr.bf16.mxu0 0
    %875 = vmatpush1.bf16.msra.mxu0 0
    %876 = vmatprep.subr.bf16.mxu0 0
    %877 = vmatpush1.bf16.msra.mxu0 0
    %878 = vmatprep.subr.bf16.mxu0 0
    %879 = vmatpush1.bf16.msra.mxu0 0
    %880 = vmatprep.subr.bf16.mxu0 0
    %881 = vmatpush1.bf16.msra.mxu0 0
    %882 = vmatprep.mubr.bf16.mxu0 0
    %883 = vmatmul.mubr.bf16.gmra.mrb[0].mxu0 %v845
    %v884 = vpop.f32.mrb[0].mxu0
    %v885 = vadd.f32 0.0, %v884
    %v886 = vpop.f32.mrb[0].mxu0
    %v887 = vpop.f32.mrb[0].mxu0
    %v888 = vpop.f32.mrb[0].mxu0
    %889 = vdwg.mxu0
    %v890 = vpack.c.bf16 %v839, %v839
    %v891 = vpack.c.bf16 %v885, %v885
    %v908 = vunpack.c.l.b16 %v156
    %v909 = vunpack.c.l.b16 %v157
    %v910 = vunpack.c.l.b16 %v158
    %v911 = vunpack.c.l.b16 %v159
    %v912 = vunpack.c.l.b16 %v160
    %v913 = vunpack.c.l.b16 %v161
    %v914 = vunpack.c.l.b16 %v162
    %v915 = vunpack.c.l.b16 %v163
    %v916 = vunpack.c.l.b16 %v164
    %v917 = vunpack.c.l.b16 %v165
    %v918 = vunpack.c.l.b16 %v166
    %v919 = vunpack.c.l.b16 %v167
    %v920 = vunpack.c.l.b16 %v168
    %v921 = vunpack.c.l.b16 %v169
    %v922 = vunpack.c.l.b16 %v170
    %v923 = vunpack.c.l.b16 %v171
    %v924 = vpack.c.b16 %v909, %v908
    %v925 = vpack.c.b16 %v911, %v910
    %v926 = vpack.c.b16 %v913, %v912
    %v927 = vpack.c.b16 %v915, %v914
    %v928 = vpack.c.b16 %v917, %v916
    %v929 = vpack.c.b16 %v919, %v918
    %v930 = vpack.c.b16 %v921, %v920
    %v931 = vpack.c.b16 %v923, %v922
    %940 = vmatprep.subr.bf16.mxu0 0
    %941 = vmatpush1.bf16.msra.mxu0 %v924
    %942 = vmatprep.subr.bf16.mxu0 0
    %943 = vmatpush1.bf16.msra.mxu0 %v925
    %944 = vmatprep.subr.bf16.mxu0 0
    %945 = vmatpush1.bf16.msra.mxu0 %v926
    %946 = vmatprep.subr.bf16.mxu0 0
    %947 = vmatpush1.bf16.msra.mxu0 %v927
    %948 = vmatprep.subr.bf16.mxu0 0
    %949 = vmatpush1.bf16.msra.mxu0 %v928
    %950 = vmatprep.subr.bf16.mxu0 0
    %951 = vmatpush1.bf16.msra.mxu0 %v929
    %952 = vmatprep.subr.bf16.mxu0 0
    %953 = vmatpush1.bf16.msra.mxu0 %v930
    %954 = vmatprep.subr.bf16.mxu0 0
    %955 = vmatpush1.bf16.msra.mxu0 %v931
    %956 = vmatprep.subr.bf16.mxu0 0
    %957 = vmatpush1.bf16.msra.mxu0 0
    %958 = vmatprep.subr.bf16.mxu0 0
    %959 = vmatpush1.bf16.msra.mxu0 0
    %960 = vmatprep.subr.bf16.mxu0 0
    %961 = vmatpush1.bf16.msra.mxu0 0
    %962 = vmatprep.subr.bf16.mxu0 0
    %963 = vmatpush1.bf16.msra.mxu0 0
    %964 = vmatprep.subr.bf16.mxu0 0
    %965 = vmatpush1.bf16.msra.mxu0 0
    %966 = vmatprep.subr.bf16.mxu0 0
    %967 = vmatpush1.bf16.msra.mxu0 0
    %968 = vmatprep.subr.bf16.mxu0 0
    %969 = vmatpush1.bf16.msra.mxu0 0
    %970 = vmatprep.subr.bf16.mxu0 0
    %971 = vmatpush1.bf16.msra.mxu0 0
    %972 = vmatprep.mubr.bf16.mxu0 0
    %973 = vmatmul.mubr.bf16.gmra.mrb[0].mxu0 %v649
    %v974 = vpop.f32.mrb[0].mxu0
    %v975 = vadd.f32 0.0, %v974
    %v976 = vpop.f32.mrb[0].mxu0
    %v977 = vpop.f32.mrb[0].mxu0
    %v978 = vpop.f32.mrb[0].mxu0
    %979 = vdwg.mxu0
    %v982 = vunpack.c.l.b16 %v890
    %v983 = vunpack.c.l.b16 %v891
    %v984 = vrot.slane %v983, 7
    %v985 = vsel %vm762, %v984, %v982
    %v986 = vpack.c.b16 %v985, %v985
    %v1004 = vunpack.c.l.b16 %v139
    %v1005 = vunpack.c.l.b16 %v140
    %v1006 = vunpack.c.l.b16 %v141
    %v1007 = vunpack.c.l.b16 %v142
    %v1008 = vunpack.c.l.b16 %v143
    %v1009 = vunpack.c.l.b16 %v144
    %v1010 = vunpack.c.l.b16 %v145
    %v1011 = vunpack.c.l.b16 %v146
    %v1012 = vunpack.c.l.b16 %v147
    %v1013 = vunpack.c.l.b16 %v148
    %v1014 = vunpack.c.l.b16 %v149
    %v1015 = vunpack.c.l.b16 %v150
    %v1016 = vunpack.c.l.b16 %v151
    %v1017 = vunpack.c.l.b16 %v152
    %v1018 = vunpack.c.l.b16 %v153
    %v1019 = vunpack.c.l.b16 %v154
    %v1020 = vpack.c.b16 %v1005, %v1004
    %v1021 = vpack.c.b16 %v1007, %v1006
    %v1022 = vpack.c.b16 %v1009, %v1008
    %v1023 = vpack.c.b16 %v1011, %v1010
    %v1024 = vpack.c.b16 %v1013, %v1012
    %v1025 = vpack.c.b16 %v1015, %v1014
    %v1026 = vpack.c.b16 %v1017, %v1016
    %v1027 = vpack.c.b16 %v1019, %v1018
    %1036 = vmatprep.subr.bf16.mxu0 0
    %1037 = vmatpush1.bf16.msra.mxu0 %v1020
    %1038 = vmatprep.subr.bf16.mxu0 0
    %1039 = vmatpush1.bf16.msra.mxu0 %v1021
    %1040 = vmatprep.subr.bf16.mxu0 0
    %1041 = vmatpush1.bf16.msra.mxu0 %v1022
    %1042 = vmatprep.subr.bf16.mxu0 0
    %1043 = vmatpush1.bf16.msra.mxu0 %v1023
    %1044 = vmatprep.subr.bf16.mxu0 0
    %1045 = vmatpush1.bf16.msra.mxu0 %v1024
    %1046 = vmatprep.subr.bf16.mxu0 0
    %1047 = vmatpush1.bf16.msra.mxu0 %v1025
    %1048 = vmatprep.subr.bf16.mxu0 0
    %1049 = vmatpush1.bf16.msra.mxu0 %v1026
    %1050 = vmatprep.subr.bf16.mxu0 0
    %1051 = vmatpush1.bf16.msra.mxu0 %v1027
    %1052 = vmatprep.subr.bf16.mxu0 0
    %1053 = vmatpush1.bf16.msra.mxu0 0
    %1054 = vmatprep.subr.bf16.mxu0 0
    %1055 = vmatpush1.bf16.msra.mxu0 0
    %1056 = vmatprep.subr.bf16.mxu0 0
    %1057 = vmatpush1.bf16.msra.mxu0 0
    %1058 = vmatprep.subr.bf16.mxu0 0
    %1059 = vmatpush1.bf16.msra.mxu0 0
    %1060 = vmatprep.subr.bf16.mxu0 0
    %1061 = vmatpush1.bf16.msra.mxu0 0
    %1062 = vmatprep.subr.bf16.mxu0 0
    %1063 = vmatpush1.bf16.msra.mxu0 0
    %1064 = vmatprep.subr.bf16.mxu0 0
    %1065 = vmatpush1.bf16.msra.mxu0 0
    %1066 = vmatprep.subr.bf16.mxu0 0
    %1067 = vmatpush1.bf16.msra.mxu0 0
    %1068 = vmatprep.mubr.bf16.mxu0 0
    %1069 = vmatmul.mubr.bf16.gmra.mrb[0].mxu0 %v986
    %v1070 = vpop.f32.mrb[0].mxu0
    %v1071 = vadd.f32 %v975, %v1070
    %v1072 = vpop.f32.mrb[0].mxu0
    %v1073 = vpop.f32.mrb[0].mxu0
    %v1074 = vpop.f32.mrb[0].mxu0
    %1075 = vdwg.mxu0
    %v1076 = vadd.f32 %v1071, %v177
    %v1077 = vtanh.pop %v1076
    %v1078 = vpack.c.bf16 %v1077, %v1077
    %v1095 = vunpack.c.l.b16 %v179
    %v1096 = vunpack.c.l.b16 %v180
    %v1097 = vunpack.c.l.b16 %v181
    %v1098 = vunpack.c.l.b16 %v182
    %v1099 = vunpack.c.l.b16 %v183
    %v1100 = vunpack.c.l.b16 %v184
    %v1101 = vunpack.c.l.b16 %v185
    %v1102 = vunpack.c.l.b16 %v186
    %v1103 = vunpack.c.l.b16 %v187
    %v1104 = vunpack.c.l.b16 %v188
    %v1105 = vunpack.c.l.b16 %v189
    %v1106 = vunpack.c.l.b16 %v190
    %v1107 = vunpack.c.l.b16 %v191
    %v1108 = vunpack.c.l.b16 %v192
    %v1109 = vunpack.c.l.b16 %v193
    %v1110 = vunpack.c.l.b16 %v194
    %v1111 = vpack.c.b16 %v1096, %v1095
    %v1112 = vpack.c.b16 %v1098, %v1097
    %v1113 = vpack.c.b16 %v1100, %v1099
    %v1114 = vpack.c.b16 %v1102, %v1101
    %v1115 = vpack.c.b16 %v1104, %v1103
    %v1116 = vpack.c.b16 %v1106, %v1105
    %v1117 = vpack.c.b16 %v1108, %v1107
    %v1118 = vpack.c.b16 %v1110, %v1109
    %1127 = vmatprep.subr.bf16.mxu0 0
    %1128 = vmatpush1.bf16.msra.mxu0 %v1111
    %1129 = vmatprep.subr.bf16.mxu0 0
    %1130 = vmatpush1.bf16.msra.mxu0 %v1112
    %1131 = vmatprep.subr.bf16.mxu0 0
    %1132 = vmatpush1.bf16.msra.mxu0 %v1113
    %1133 = vmatprep.subr.bf16.mxu0 0
    %1134 = vmatpush1.bf16.msra.mxu0 %v1114
    %1135 = vmatprep.subr.bf16.mxu0 0
    %1136 = vmatpush1.bf16.msra.mxu0 %v1115
    %1137 = vmatprep.subr.bf16.mxu0 0
    %1138 = vmatpush1.bf16.msra.mxu0 %v1116
    %1139 = vmatprep.subr.bf16.mxu0 0
    %1140 = vmatpush1.bf16.msra.mxu0 %v1117
    %1141 = vmatprep.subr.bf16.mxu0 0
    %1142 = vmatpush1.bf16.msra.mxu0 %v1118
    %1143 = vmatprep.subr.bf16.mxu0 0
    %1144 = vmatpush1.bf16.msra.mxu0 0
    %1145 = vmatprep.subr.bf16.mxu0 0
    %1146 = vmatpush1.bf16.msra.mxu0 0
    %1147 = vmatprep.subr.bf16.mxu0 0
    %1148 = vmatpush1.bf16.msra.mxu0 0
    %1149 = vmatprep.subr.bf16.mxu0 0
    %1150 = vmatpush1.bf16.msra.mxu0 0
    %1151 = vmatprep.subr.bf16.mxu0 0
    %1152 = vmatpush1.bf16.msra.mxu0 0
    %1153 = vmatprep.subr.bf16.mxu0 0
    %1154 = vmatpush1.bf16.msra.mxu0 0
    %1155 = vmatprep.subr.bf16.mxu0 0
    %1156 = vmatpush1.bf16.msra.mxu0 0
    %1157 = vmatprep.subr.bf16.mxu0 0
    %1158 = vmatpush1.bf16.msra.mxu0 0
    %1159 = vmatprep.mubr.bf16.mxu0 0
    %1160 = vmatmul.mubr.bf16.gmra.mrb[0].mxu0 %v1078
    %v1161 = vpop.f32.mrb[0].mxu0
    %v1162 = vadd.f32 %v200, %v1161
    %v1163 = vpop.f32.mrb[0].mxu0
    %v1164 = vpop.f32.mrb[0].mxu0
    %v1165 = vpop.f32.mrb[0].mxu0
    %1166 = vdwg.mxu0
    %v1167 = vsel %vm206, %v1162, -1e+30
    %vm1168 = vcmask 1041408
    %v1169 = vsel %vm1168, %v1167, -inf
    %1170 = vmax.xlane.f32.xlu0 %v1169
    %v1171 = vpop.xlane.xlu0 %1170
    %v1172 = vsub.f32 %v1167, %v1171
    %v1173 = vmul.f32 %v1172, 1.442695
    %v1174 = vpow.pop %v1173
    %v1175 = vsel %vm1168, %v1174, 0.0
    %1176 = vadd.xlane.f32.xlu0 %v1175
    %v1177 = vpop.xlane.xlu0 %1176
    %v1178 = vlog2.pop %v1177
    %v1179 = vmul.f32 %v1178, 0.6931472
    %v1180 = vadd.f32 %v1179, %v1171
    %v1181 = vsub.f32 %v1167, %v1180
    %1182 = vst [vmem:[%s10] sm:$0x3] %v1181
    %v1185 = vrot.slane %v793, 7
    %v1186 = vsel %vm762, %v1185, %v792
    %1188 = vst.msk [vmem:[#allocation2] sm:$0x3] %vm765, %v1186
    %s1189 = scalar_lea.vmem %s0, 1
    %v1190 = vld [vmem:[%s1189] sm:$0x1]
    %1191 = vmatprep.subr.bf16.mxu0 %v290
    %1192 = vmatpush1.bf16.msra.mxu0 %v289
    %1193 = vmatprep.subr.bf16.mxu0 %v293
    %1194 = vmatpush1.bf16.msra.mxu0 %v292
    %1195 = vmatprep.subr.bf16.mxu0 %v296
    %1196 = vmatpush1.bf16.msra.mxu0 %v295
    %1197 = vmatprep.subr.bf16.mxu0 %v299
    %1198 = vmatpush1.bf16.msra.mxu0 %v298
    %1199 = vmatprep.subr.bf16.mxu0 %v302
    %1200 = vmatpush1.bf16.msra.mxu0 %v301
    %1201 = vmatprep.subr.bf16.mxu0 %v305
    %1202 = vmatpush1.bf16.msra.mxu0 %v304
    %1203 = vmatprep.subr.bf16.mxu0 %v308
    %1204 = vmatpush1.bf16.msra.mxu0 %v307
    %1205 = vmatprep.subr.bf16.mxu0 %v311
    %1206 = vmatpush1.bf16.msra.mxu0 %v310
    %1207 = vmatprep.subr.bf16.mxu0 0
    %1208 = vmatpush1.bf16.msra.mxu0 0
    %1209 = vmatprep.subr.bf16.mxu0 0
    %1210 = vmatpush1.bf16.msra.mxu0 0
    %1211 = vmatprep.subr.bf16.mxu0 0
    %1212 = vmatpush1.bf16.msra.mxu0 0
    %1213 = vmatprep.subr.bf16.mxu0 0
    %1214 = vmatpush1.bf16.msra.mxu0 0
    %1215 = vmatprep.subr.bf16.mxu0 0
    %1216 = vmatpush1.bf16.msra.mxu0 0
    %1217 = vmatprep.subr.bf16.mxu0 0
    %1218 = vmatpush1.bf16.msra.mxu0 0
    %1219 = vmatprep.subr.bf16.mxu0 0
    %1220 = vmatpush1.bf16.msra.mxu0 0
    %1221 = vmatprep.subr.bf16.mxu0 0
    %1222 = vmatpush1.bf16.msra.mxu0 0
    %1223 = vmatprep.mubr.bf16.mxu0 0
    %1224 = vmatmul.mubr.bf16.gmra.mrb[0].mxu0 %v1190
    %v1225 = vpop.f32.mrb[0].mxu0
    %v1226 = vadd.f32 %v109, %v1225
    %v1227 = vpop.f32.mrb[0].mxu0
    %v1228 = vadd.f32 %v113, %v1227
    %v1229 = vpop.f32.mrb[0].mxu0
    %v1230 = vpop.f32.mrb[0].mxu0
    %1231 = vdwg.mxu0
    %1232 = vmatprep.subr.bf16.mxu0 0
    %1233 = vmatpush1.bf16.msra.mxu0 %v291
    %1234 = vmatprep.subr.bf16.mxu0 0
    %1235 = vmatpush1.bf16.msra.mxu0 %v294
    %1236 = vmatprep.subr.bf16.mxu0 0
    %1237 = vmatpush1.bf16.msra.mxu0 %v297
    %1238 = vmatprep.subr.bf16.mxu0 0
    %1239 = vmatpush1.bf16.msra.mxu0 %v300
    %1240 = vmatprep.subr.bf16.mxu0 0
    %1241 = vmatpush1.bf16.msra.mxu0 %v303
    %1242 = vmatprep.subr.bf16.mxu0 0
    %1243 = vmatpush1.bf16.msra.mxu0 %v306
    %1244 = vmatprep.subr.bf16.mxu0 0
    %1245 = vmatpush1.bf16.msra.mxu0 %v309
    %1246 = vmatprep.subr.bf16.mxu0 0
    %1247 = vmatpush1.bf16.msra.mxu0 %v312
    %1248 = vmatprep.subr.bf16.mxu0 0
    %1249 = vmatpush1.bf16.msra.mxu0 0
    %1250 = vmatprep.subr.bf16.mxu0 0
    %1251 = vmatpush1.bf16.msra.mxu0 0
    %1252 = vmatprep.subr.bf16.mxu0 0
    %1253 = vmatpush1.bf16.msra.mxu0 0
    %1254 = vmatprep.subr.bf16.mxu0 0
    %1255 = vmatpush1.bf16.msra.mxu0 0
    %1256 = vmatprep.subr.bf16.mxu0 0
    %1257 = vmatpush1.bf16.msra.mxu0 0
    %1258 = vmatprep.subr.bf16.mxu0 0
    %1259 = vmatpush1.bf16.msra.mxu0 0
    %1260 = vmatprep.subr.bf16.mxu0 0
    %1261 = vmatpush1.bf16.msra.mxu0 0
    %1262 = vmatprep.subr.bf16.mxu0 0
    %1263 = vmatpush1.bf16.msra.mxu0 0
    %1264 = vmatprep.mubr.bf16.mxu0 0
    %1265 = vmatmul.mubr.bf16.gmra.mrb[0].mxu0 %v1190
    %v1266 = vpop.f32.mrb[0].mxu0
    %v1267 = vadd.f32 %v117, %v1266
    %v1268 = vpop.f32.mrb[0].mxu0
    %v1269 = vpop.f32.mrb[0].mxu0
    %v1270 = vpop.f32.mrb[0].mxu0
    %1271 = vdwg.mxu0
    %1272 = vmatprep.subr.bf16.mxu0 %v500
    %1273 = vmatpush1.bf16.msra.mxu0 %v499
    %1274 = vmatprep.subr.bf16.mxu0 %v503
    %1275 = vmatpush1.bf16.msra.mxu0 %v502
    %1276 = vmatprep.subr.bf16.mxu0 %v506
    %1277 = vmatpush1.bf16.msra.mxu0 %v505
    %1278 = vmatprep.subr.bf16.mxu0 %v509
    %1279 = vmatpush1.bf16.msra.mxu0 %v508
    %1280 = vmatprep.subr.bf16.mxu0 %v512
    %1281 = vmatpush1.bf16.msra.mxu0 %v511
    %1282 = vmatprep.subr.bf16.mxu0 %v515
    %1283 = vmatpush1.bf16.msra.mxu0 %v514
    %1284 = vmatprep.subr.bf16.mxu0 %v518
    %1285 = vmatpush1.bf16.msra.mxu0 %v517
    %1286 = vmatprep.subr.bf16.mxu0 %v521
    %1287 = vmatpush1.bf16.msra.mxu0 %v520
    %1288 = vmatprep.subr.bf16.mxu0 0
    %1289 = vmatpush1.bf16.msra.mxu0 0
    %1290 = vmatprep.subr.bf16.mxu0 0
    %1291 = vmatpush1.bf16.msra.mxu0 0
    %1292 = vmatprep.subr.bf16.mxu0 0
    %1293 = vmatpush1.bf16.msra.mxu0 0
    %1294 = vmatprep.subr.bf16.mxu0 0
    %1295 = vmatpush1.bf16.msra.mxu0 0
    %1296 = vmatprep.subr.bf16.mxu0 0
    %1297 = vmatpush1.bf16.msra.mxu0 0
    %1298 = vmatprep.subr.bf16.mxu0 0
    %1299 = vmatpush1.bf16.msra.mxu0 0
    %1300 = vmatprep.subr.bf16.mxu0 0
    %1301 = vmatpush1.bf16.msra.mxu0 0
    %1302 = vmatprep.subr.bf16.mxu0 0
    %1303 = vmatpush1.bf16.msra.mxu0 0
    %1304 = vmatprep.mubr.bf16.mxu0 0
    %1305 = vmatmul.mubr.bf16.gmra.mrb[0].mxu0 %v649
    %v1306 = vpop.f32.mrb[0].mxu0
    %v1307 = vadd.f32 %v127, %v1306
    %v1308 = vpop.f32.mrb[0].mxu0
    %v1309 = vadd.f32 %v131, %v1308
    %v1310 = vpop.f32.mrb[0].mxu0
    %v1311 = vpop.f32.mrb[0].mxu0
    %1312 = vdwg.mxu0
    %1313 = vmatprep.subr.bf16.mxu0 0
    %1314 = vmatpush1.bf16.msra.mxu0 %v501
    %1315 = vmatprep.subr.bf16.mxu0 0
    %1316 = vmatpush1.bf16.msra.mxu0 %v504
    %1317 = vmatprep.subr.bf16.mxu0 0
    %1318 = vmatpush1.bf16.msra.mxu0 %v507
    %1319 = vmatprep.subr.bf16.mxu0 0
    %1320 = vmatpush1.bf16.msra.mxu0 %v510
    %1321 = vmatprep.subr.bf16.mxu0 0
    %1322 = vmatpush1.bf16.msra.mxu0 %v513
    %1323 = vmatprep.subr.bf16.mxu0 0
    %1324 = vmatpush1.bf16.msra.mxu0 %v516
    %1325 = vmatprep.subr.bf16.mxu0 0
    %1326 = vmatpush1.bf16.msra.mxu0 %v519
    %1327 = vmatprep.subr.bf16.mxu0 0
    %1328 = vmatpush1.bf16.msra.mxu0 %v522
    %1329 = vmatprep.subr.bf16.mxu0 0
    %1330 = vmatpush1.bf16.msra.mxu0 0
    %1331 = vmatprep.subr.bf16.mxu0 0
    %1332 = vmatpush1.bf16.msra.mxu0 0
    %1333 = vmatprep.subr.bf16.mxu0 0
    %1334 = vmatpush1.bf16.msra.mxu0 0
    %1335 = vmatprep.subr.bf16.mxu0 0
    %1336 = vmatpush1.bf16.msra.mxu0 0
    %1337 = vmatprep.subr.bf16.mxu0 0
    %1338 = vmatpush1.bf16.msra.mxu0 0
    %1339 = vmatprep.subr.bf16.mxu0 0
    %1340 = vmatpush1.bf16.msra.mxu0 0
    %1341 = vmatprep.subr.bf16.mxu0 0
    %1342 = vmatpush1.bf16.msra.mxu0 0
    %1343 = vmatprep.subr.bf16.mxu0 0
    %1344 = vmatpush1.bf16.msra.mxu0 0
    %1345 = vmatprep.mubr.bf16.mxu0 0
    %1346 = vmatmul.mubr.bf16.gmra.mrb[0].mxu0 %v649
    %v1347 = vpop.f32.mrb[0].mxu0
    %v1348 = vadd.f32 %v135, %v1347
    %v1349 = vpop.f32.mrb[0].mxu0
    %v1350 = vpop.f32.mrb[0].mxu0
    %v1351 = vpop.f32.mrb[0].mxu0
    %1352 = vdwg.mxu0
    %v1353 = vadd.f32 %v1226, %v1307
    %v1354 = vxor.u32 %v1353, 2147483648
    %v1355 = vmul.f32 %v1354, 1.442695
    %v1356 = vpow.pop %v1355
    %v1357 = vadd.f32 %v1356, 1.0
    %v1358 = vrcp.pop %v1357
    %v1359 = vmul.f32 1.0, %v1358
    %v1360 = vadd.f32 %v1228, %v1309
    %v1361 = vxor.u32 %v1360, 2147483648
    %v1362 = vmul.f32 %v1361, 1.442695
    %v1363 = vpow.pop %v1362
    %v1364 = vadd.f32 %v1363, 1.0
    %v1365 = vrcp.pop %v1364
    %v1366 = vmul.f32 1.0, %v1365
    %v1367 = vmul.f32 %v1359, %v1348
    %v1368 = vadd.f32 %v1267, %v1367
    %v1369 = vtanh.pop %v1368
    %v1370 = vsub.f32 1.0, %v1366
    %v1371 = vmul.f32 %v1370, %v1369
    %v1372 = vmul.f32 %v1366, %v648
    %v1373 = vadd.f32 %v1371, %v1372
    %v1374 = vpack.c.bf16 %v1373, %v1373
    %v1377 = vunpack.c.l.s4 1966171168
    %v1378 = vunpack.c.0.s8 %v1377
    %v1379 = vlaneseq
    %v1380 = vshrl.u32 %v1379, 7
    %v1381 = vsub.s32 %v1378, %v1380
    %v1382 = vrot.slane %v1374, %v1381
    %v1384 = vunpack.c.l.s4 1966171168
    %v1385 = vunpack.c.0.s8 %v1384
    %v1386 = vlaneseq
    %v1387 = vshrl.u32 %v1386, 7
    %v1388 = vsub.s32 %v1385, %v1387
    %v1389 = vrot.slane %v1382, %v1388
    %v1390 = vunpack.i.l.s16 %v1389
    %v1391 = vunpack.i.h.s16 %v1389
    %v1392 = vpack.i.b16 %v1390, %v1390
    %v1393 = vlaneseq
    %v1394 = vshrl.u32 %v1393, 7
    %v1395 = vsub.s32 0, %v1394
    %v1396 = vrot.slane %v1392, %v1395
    %1398 = vmatprep.subr.bf16.mxu0 0
    %1399 = vmatpush1.bf16.xpose.msra.mxu0 %v202
    %1400 = vmatprep.subr.bf16.mxu0 0
    %1401 = vmatpush1.bf16.xpose.msra.mxu0 0
    %1402 = vmatprep.subr.bf16.mxu0 0
    %1403 = vmatpush1.bf16.xpose.msra.mxu0 0
    %1404 = vmatprep.subr.bf16.mxu0 0
    %1405 = vmatpush1.bf16.xpose.msra.mxu0 0
    %1406 = vmatprep.subr.bf16.mxu0 0
    %1407 = vmatpush1.bf16.xpose.msra.mxu0 0
    %1408 = vmatprep.subr.bf16.mxu0 0
    %1409 = vmatpush1.bf16.xpose.msra.mxu0 0
    %1410 = vmatprep.subr.bf16.mxu0 0
    %1411 = vmatpush1.bf16.xpose.msra.mxu0 0
    %1412 = vmatprep.subr.bf16.mxu0 0
    %1413 = vmatpush1.bf16.xpose.msra.mxu0 0
    %1414 = vmatprep.subr.bf16.mxu0 0
    %1415 = vmatpush1.bf16.xpose.msra.mxu0 0
    %1416 = vmatprep.subr.bf16.mxu0 0
    %1417 = vmatpush1.bf16.xpose.msra.mxu0 0
    %1418 = vmatprep.subr.bf16.mxu0 0
    %1419 = vmatpush1.bf16.xpose.msra.mxu0 0
    %1420 = vmatprep.subr.bf16.mxu0 0
    %1421 = vmatpush1.bf16.xpose.msra.mxu0 0
    %1422 = vmatprep.subr.bf16.mxu0 0
    %1423 = vmatpush1.bf16.xpose.msra.mxu0 0
    %1424 = vmatprep.subr.bf16.mxu0 0
    %1425 = vmatpush1.bf16.xpose.msra.mxu0 0
    %1426 = vmatprep.subr.bf16.mxu0 0
    %1427 = vmatpush1.bf16.xpose.msra.mxu0 0
    %1428 = vmatprep.subr.bf16.mxu0 0
    %1429 = vmatpush1.bf16.xpose.msra.mxu0 0
    %1430 = vmatprep.mubr.bf16.mxu0 0
    %1431 = vmatmul.mubr.bf16.gmra.mrb[0].mxu0 %v1396
    %v1432 = vpop.f32.mrb[0].mxu0
    %v1433 = vadd.f32 0.0, %v1432
    %v1434 = vpop.f32.mrb[0].mxu0
    %v1435 = vpop.f32.mrb[0].mxu0
    %v1436 = vpop.f32.mrb[0].mxu0
    %1437 = vdwg.mxu0
    %v1438 = vpack.i.b16 %v1391, %v1391
    %v1439 = vlaneseq
    %v1440 = vshrl.u32 %v1439, 7
    %v1441 = vsub.s32 0, %v1440
    %v1442 = vrot.slane %v1438, %v1441
    %1444 = vmatprep.subr.bf16.mxu0 0
    %1445 = vmatpush1.bf16.xpose.msra.mxu0 %v203
    %1446 = vmatprep.subr.bf16.mxu0 0
    %1447 = vmatpush1.bf16.xpose.msra.mxu0 0
    %1448 = vmatprep.subr.bf16.mxu0 0
    %1449 = vmatpush1.bf16.xpose.msra.mxu0 0
    %1450 = vmatprep.subr.bf16.mxu0 0
    %1451 = vmatpush1.bf16.xpose.msra.mxu0 0
    %1452 = vmatprep.subr.bf16.mxu0 0
    %1453 = vmatpush1.bf16.xpose.msra.mxu0 0
    %1454 = vmatprep.subr.bf16.mxu0 0
    %1455 = vmatpush1.bf16.xpose.msra.mxu0 0
    %1456 = vmatprep.subr.bf16.mxu0 0
    %1457 = vmatpush1.bf16.xpose.msra.mxu0 0
    %1458 = vmatprep.subr.bf16.mxu0 0
    %1459 = vmatpush1.bf16.xpose.msra.mxu0 0
    %1460 = vmatprep.subr.bf16.mxu0 0
    %1461 = vmatpush1.bf16.xpose.msra.mxu0 0
    %1462 = vmatprep.subr.bf16.mxu0 0
    %1463 = vmatpush1.bf16.xpose.msra.mxu0 0
    %1464 = vmatprep.subr.bf16.mxu0 0
    %1465 = vmatpush1.bf16.xpose.msra.mxu0 0
    %1466 = vmatprep.subr.bf16.mxu0 0
    %1467 = vmatpush1.bf16.xpose.msra.mxu0 0
    %1468 = vmatprep.subr.bf16.mxu0 0
    %1469 = vmatpush1.bf16.xpose.msra.mxu0 0
    %1470 = vmatprep.subr.bf16.mxu0 0
    %1471 = vmatpush1.bf16.xpose.msra.mxu0 0
    %1472 = vmatprep.subr.bf16.mxu0 0
    %1473 = vmatpush1.bf16.xpose.msra.mxu0 0
    %1474 = vmatprep.subr.bf16.mxu0 0
    %1475 = vmatpush1.bf16.xpose.msra.mxu0 0
    %1476 = vmatprep.mubr.bf16.mxu0 0
    %1477 = vmatmul.mubr.bf16.gmra.mrb[0].mxu0 %v1442
    %v1478 = vpop.f32.mrb[0].mxu0
    %v1479 = vadd.f32 0.0, %v1478
    %v1480 = vpop.f32.mrb[0].mxu0
    %v1481 = vpop.f32.mrb[0].mxu0
    %v1482 = vpop.f32.mrb[0].mxu0
    %1483 = vdwg.mxu0
    %v1486 = vrot.slane %v1479, 7
    %v1487 = vsel %vm762, %v1486, %v1433
    %v1489 = vsel %vm765, %v1487, -inf
    %1490 = vmax.xlane.f32.xlu0 %v1489
    %v1491 = vpop.xlane.xlu0 %1490
    %v1493 = vrot.slane %v1491, 1
    %v1496 = vsub.f32 %v1433, %v1491
    %v1497 = vsub.f32 %v1479, %v1493
    %v1498 = vmul.f32 %v1496, 1.442695
    %v1499 = vpow.pop %v1498
    %v1500 = vmul.f32 %v1497, 1.442695
    %v1501 = vpow.pop %v1500
    %v1504 = vrot.slane %v1501, 7
    %v1505 = vsel %vm762, %v1504, %v1499
    %v1507 = vsel %vm765, %v1505, 0.0
    %1508 = vadd.xlane.f32.xlu0 %v1507
    %v1509 = vpop.xlane.xlu0 %1508
    %v1510 = vrcp.pop %v1509
    %v1512 = vrot.slane %v1510, 1
    %v1515 = vmul.f32 %v1499, %v1510
    %v1516 = vmul.f32 %v1501, %v1512
    %v1517 = vpack.c.bf16 %v1515, %v1515
    %v1518 = vpack.c.bf16 %v1516, %v1516
    %v1520 = vsel %vm796, %v1517, 0
    %1522 = vmatprep.subr.bf16.mxu0 0
    %1523 = vmatpush1.bf16.msra.mxu0 %v802
    %1524 = vmatprep.subr.bf16.mxu0 0
    %1525 = vmatpush1.bf16.msra.mxu0 0
    %1526 = vmatprep.subr.bf16.mxu0 0
    %1527 = vmatpush1.bf16.msra.mxu0 0
    %1528 = vmatprep.subr.bf16.mxu0 0
    %1529 = vmatpush1.bf16.msra.mxu0 0
    %1530 = vmatprep.subr.bf16.mxu0 0
    %1531 = vmatpush1.bf16.msra.mxu0 0
    %1532 = vmatprep.subr.bf16.mxu0 0
    %1533 = vmatpush1.bf16.msra.mxu0 0
    %1534 = vmatprep.subr.bf16.mxu0 0
    %1535 = vmatpush1.bf16.msra.mxu0 0
    %1536 = vmatprep.subr.bf16.mxu0 0
    %1537 = vmatpush1.bf16.msra.mxu0 0
    %1538 = vmatprep.subr.bf16.mxu0 0
    %1539 = vmatpush1.bf16.msra.mxu0 0
    %1540 = vmatprep.subr.bf16.mxu0 0
    %1541 = vmatpush1.bf16.msra.mxu0 0
    %1542 = vmatprep.subr.bf16.mxu0 0
    %1543 = vmatpush1.bf16.msra.mxu0 0
    %1544 = vmatprep.subr.bf16.mxu0 0
    %1545 = vmatpush1.bf16.msra.mxu0 0
    %1546 = vmatprep.subr.bf16.mxu0 0
    %1547 = vmatpush1.bf16.msra.mxu0 0
    %1548 = vmatprep.subr.bf16.mxu0 0
    %1549 = vmatpush1.bf16.msra.mxu0 0
    %1550 = vmatprep.subr.bf16.mxu0 0
    %1551 = vmatpush1.bf16.msra.mxu0 0
    %1552 = vmatprep.subr.bf16.mxu0 0
    %1553 = vmatpush1.bf16.msra.mxu0 0
    %1554 = vmatprep.mubr.bf16.mxu0 0
    %1555 = vmatmul.mubr.bf16.gmra.mrb[0].mxu0 %v1520
    %v1556 = vpop.f32.mrb[0].mxu0
    %v1557 = vadd.f32 0.0, %v1556
    %v1558 = vpop.f32.mrb[0].mxu0
    %v1559 = vpop.f32.mrb[0].mxu0
    %v1560 = vpop.f32.mrb[0].mxu0
    %1561 = vdwg.mxu0
    %v1563 = vsel %vm796, %v1518, 0
    %1565 = vmatprep.subr.bf16.mxu0 0
    %1566 = vmatpush1.bf16.msra.mxu0 %v848
    %1567 = vmatprep.subr.bf16.mxu0 0
    %1568 = vmatpush1.bf16.msra.mxu0 0
    %1569 = vmatprep.subr.bf16.mxu0 0
    %1570 = vmatpush1.bf16.msra.mxu0 0
    %1571 = vmatprep.subr.bf16.mxu0 0
    %1572 = vmatpush1.bf16.msra.mxu0 0
    %1573 = vmatprep.subr.bf16.mxu0 0
    %1574 = vmatpush1.bf16.msra.mxu0 0
    %1575 = vmatprep.subr.bf16.mxu0 0
    %1576 = vmatpush1.bf16.msra.mxu0 0
    %1577 = vmatprep.subr.bf16.mxu0 0
    %1578 = vmatpush1.bf16.msra.mxu0 0
    %1579 = vmatprep.subr.bf16.mxu0 0
    %1580 = vmatpush1.bf16.msra.mxu0 0
    %1581 = vmatprep.subr.bf16.mxu0 0
    %1582 = vmatpush1.bf16.msra.mxu0 0
    %1583 = vmatprep.subr.bf16.mxu0 0
    %1584 = vmatpush1.bf16.msra.mxu0 0
    %1585 = vmatprep.subr.bf16.mxu0 0
    %1586 = vmatpush1.bf16.msra.mxu0 0
    %1587 = vmatprep.subr.bf16.mxu0 0
    %1588 = vmatpush1.bf16.msra.mxu0 0
    %1589 = vmatprep.subr.bf16.mxu0 0
    %1590 = vmatpush1.bf16.msra.mxu0 0
    %1591 = vmatprep.subr.bf16.mxu0 0
    %1592 = vmatpush1.bf16.msra.mxu0 0
    %1593 = vmatprep.subr.bf16.mxu0 0
    %1594 = vmatpush1.bf16.msra.mxu0 0
    %1595 = vmatprep.subr.bf16.mxu0 0
    %1596 = vmatpush1.bf16.msra.mxu0 0
    %1597 = vmatprep.mubr.bf16.mxu0 0
    %1598 = vmatmul.mubr.bf16.gmra.mrb[0].mxu0 %v1563
    %v1599 = vpop.f32.mrb[0].mxu0
    %v1600 = vadd.f32 0.0, %v1599
    %v1601 = vpop.f32.mrb[0].mxu0
    %v1602 = vpop.f32.mrb[0].mxu0
    %v1603 = vpop.f32.mrb[0].mxu0
    %1604 = vdwg.mxu0
    %v1605 = vpack.c.bf16 %v1557, %v1557
    %v1606 = vpack.c.bf16 %v1600, %v1600
    %1607 = vmatprep.subr.bf16.mxu0 0
    %1608 = vmatpush1.bf16.msra.mxu0 %v924
    %1609 = vmatprep.subr.bf16.mxu0 0
    %1610 = vmatpush1.bf16.msra.mxu0 %v925
    %1611 = vmatprep.subr.bf16.mxu0 0
    %1612 = vmatpush1.bf16.msra.mxu0 %v926
    %1613 = vmatprep.subr.bf16.mxu0 0
    %1614 = vmatpush1.bf16.msra.mxu0 %v927
    %1615 = vmatprep.subr.bf16.mxu0 0
    %1616 = vmatpush1.bf16.msra.mxu0 %v928
    %1617 = vmatprep.subr.bf16.mxu0 0
    %1618 = vmatpush1.bf16.msra.mxu0 %v929
    %1619 = vmatprep.subr.bf16.mxu0 0
    %1620 = vmatpush1.bf16.msra.mxu0 %v930
    %1621 = vmatprep.subr.bf16.mxu0 0
    %1622 = vmatpush1.bf16.msra.mxu0 %v931
    %1623 = vmatprep.subr.bf16.mxu0 0
    %1624 = vmatpush1.bf16.msra.mxu0 0
    %1625 = vmatprep.subr.bf16.mxu0 0
    %1626 = vmatpush1.bf16.msra.mxu0 0
    %1627 = vmatprep.subr.bf16.mxu0 0
    %1628 = vmatpush1.bf16.msra.mxu0 0
    %1629 = vmatprep.subr.bf16.mxu0 0
    %1630 = vmatpush1.bf16.msra.mxu0 0
    %1631 = vmatprep.subr.bf16.mxu0 0
    %1632 = vmatpush1.bf16.msra.mxu0 0
    %1633 = vmatprep.subr.bf16.mxu0 0
    %1634 = vmatpush1.bf16.msra.mxu0 0
    %1635 = vmatprep.subr.bf16.mxu0 0
    %1636 = vmatpush1.bf16.msra.mxu0 0
    %1637 = vmatprep.subr.bf16.mxu0 0
    %1638 = vmatpush1.bf16.msra.mxu0 0
    %1639 = vmatprep.mubr.bf16.mxu0 0
    %1640 = vmatmul.mubr.bf16.gmra.mrb[0].mxu0 %v1374
    %v1641 = vpop.f32.mrb[0].mxu0
    %v1642 = vadd.f32 0.0, %v1641
    %v1643 = vpop.f32.mrb[0].mxu0
    %v1644 = vpop.f32.mrb[0].mxu0
    %v1645 = vpop.f32.mrb[0].mxu0
    %1646 = vdwg.mxu0
    %v1649 = vunpack.c.l.b16 %v1605
    %v1650 = vunpack.c.l.b16 %v1606
    %v1651 = vrot.slane %v1650, 7
    %v1652 = vsel %vm762, %v1651, %v1649
    %v1653 = vpack.c.b16 %v1652, %v1652
    %1655 = vmatprep.subr.bf16.mxu0 0
    %1656 = vmatpush1.bf16.msra.mxu0 %v1020
    %1657 = vmatprep.subr.bf16.mxu0 0
    %1658 = vmatpush1.bf16.msra.mxu0 %v1021
    %1659 = vmatprep.subr.bf16.mxu0 0
    %1660 = vmatpush1.bf16.msra.mxu0 %v1022
    %1661 = vmatprep.subr.bf16.mxu0 0
    %1662 = vmatpush1.bf16.msra.mxu0 %v1023
    %1663 = vmatprep.subr.bf16.mxu0 0
    %1664 = vmatpush1.bf16.msra.mxu0 %v1024
    %1665 = vmatprep.subr.bf16.mxu0 0
    %1666 = vmatpush1.bf16.msra.mxu0 %v1025
    %1667 = vmatprep.subr.bf16.mxu0 0
    %1668 = vmatpush1.bf16.msra.mxu0 %v1026
    %1669 = vmatprep.subr.bf16.mxu0 0
    %1670 = vmatpush1.bf16.msra.mxu0 %v1027
    %1671 = vmatprep.subr.bf16.mxu0 0
    %1672 = vmatpush1.bf16.msra.mxu0 0
    %1673 = vmatprep.subr.bf16.mxu0 0
    %1674 = vmatpush1.bf16.msra.mxu0 0
    %1675 = vmatprep.subr.bf16.mxu0 0
    %1676 = vmatpush1.bf16.msra.mxu0 0
    %1677 = vmatprep.subr.bf16.mxu0 0
    %1678 = vmatpush1.bf16.msra.mxu0 0
    %1679 = vmatprep.subr.bf16.mxu0 0
    %1680 = vmatpush1.bf16.msra.mxu0 0
    %1681 = vmatprep.subr.bf16.mxu0 0
    %1682 = vmatpush1.bf16.msra.mxu0 0
    %1683 = vmatprep.subr.bf16.mxu0 0
    %1684 = vmatpush1.bf16.msra.mxu0 0
    %1685 = vmatprep.subr.bf16.mxu0 0
    %1686 = vmatpush1.bf16.msra.mxu0 0
    %1687 = vmatprep.mubr.bf16.mxu0 0
    %1688 = vmatmul.mubr.bf16.gmra.mrb[0].mxu0 %v1653
    %v1689 = vpop.f32.mrb[0].mxu0
    %v1690 = vadd.f32 %v1642, %v1689
    %v1691 = vpop.f32.mrb[0].mxu0
    %v1692 = vpop.f32.mrb[0].mxu0
    %v1693 = vpop.f32.mrb[0].mxu0
    %1694 = vdwg.mxu0
    %v1695 = vadd.f32 %v1690, %v177
    %v1696 = vtanh.pop %v1695
    %v1697 = vpack.c.bf16 %v1696, %v1696
    %1698 = vmatprep.subr.bf16.mxu0 0
    %1699 = vmatpush1.bf16.msra.mxu0 %v1111
    %1700 = vmatprep.subr.bf16.mxu0 0
    %1701 = vmatpush1.bf16.msra.mxu0 %v1112
    %1702 = vmatprep.subr.bf16.mxu0 0
    %1703 = vmatpush1.bf16.msra.mxu0 %v1113
    %1704 = vmatprep.subr.bf16.mxu0 0
    %1705 = vmatpush1.bf16.msra.mxu0 %v1114
    %1706 = vmatprep.subr.bf16.mxu0 0
    %1707 = vmatpush1.bf16.msra.mxu0 %v1115
    %1708 = vmatprep.subr.bf16.mxu0 0
    %1709 = vmatpush1.bf16.msra.mxu0 %v1116
    %1710 = vmatprep.subr.bf16.mxu0 0
    %1711 = vmatpush1.bf16.msra.mxu0 %v1117
    %1712 = vmatprep.subr.bf16.mxu0 0
    %1713 = vmatpush1.bf16.msra.mxu0 %v1118
    %1714 = vmatprep.subr.bf16.mxu0 0
    %1715 = vmatpush1.bf16.msra.mxu0 0
    %1716 = vmatprep.subr.bf16.mxu0 0
    %1717 = vmatpush1.bf16.msra.mxu0 0
    %1718 = vmatprep.subr.bf16.mxu0 0
    %1719 = vmatpush1.bf16.msra.mxu0 0
    %1720 = vmatprep.subr.bf16.mxu0 0
    %1721 = vmatpush1.bf16.msra.mxu0 0
    %1722 = vmatprep.subr.bf16.mxu0 0
    %1723 = vmatpush1.bf16.msra.mxu0 0
    %1724 = vmatprep.subr.bf16.mxu0 0
    %1725 = vmatpush1.bf16.msra.mxu0 0
    %1726 = vmatprep.subr.bf16.mxu0 0
    %1727 = vmatpush1.bf16.msra.mxu0 0
    %1728 = vmatprep.subr.bf16.mxu0 0
    %1729 = vmatpush1.bf16.msra.mxu0 0
    %1730 = vmatprep.mubr.bf16.mxu0 0
    %1731 = vmatmul.mubr.bf16.gmra.mrb[0].mxu0 %v1697
    %v1732 = vpop.f32.mrb[0].mxu0
    %v1733 = vadd.f32 %v200, %v1732
    %v1734 = vpop.f32.mrb[0].mxu0
    %v1735 = vpop.f32.mrb[0].mxu0
    %v1736 = vpop.f32.mrb[0].mxu0
    %1737 = vdwg.mxu0
    %v1738 = vsel %vm206, %v1733, -1e+30
    %v1739 = vsel %vm1168, %v1738, -inf
    %1740 = vmax.xlane.f32.xlu0 %v1739
    %v1741 = vpop.xlane.xlu0 %1740
    %v1742 = vsub.f32 %v1738, %v1741
    %v1743 = vmul.f32 %v1742, 1.442695
    %v1744 = vpow.pop %v1743
    %v1745 = vsel %vm1168, %v1744, 0.0
    %1746 = vadd.xlane.f32.xlu0 %v1745
    %v1747 = vpop.xlane.xlu0 %1746
    %v1748 = vlog2.pop %v1747
    %v1749 = vmul.f32 %v1748, 0.6931472
    %v1750 = vadd.f32 %v1749, %v1741
    %v1751 = vsub.f32 %v1738, %v1750
    %s1752 = scalar_lea.vmem %s10, 2
    %1753 = vst [vmem:[%s1752] sm:$0x3] %v1751
    %v1756 = vrot.slane %v1516, 7
    %v1757 = vsel %vm762, %v1756, %v1515
    %s1759 = scalar_lea.vmem [#allocation2], 2
    %1760 = vst.msk [vmem:[%s1759] sm:$0x3] %vm765, %v1757
    %s1761 = scalar_lea.vmem %s0, 2
    %v1762 = vld [vmem:[%s1761] sm:$0x1]
    %1763 = vmatprep.subr.bf16.mxu0 %v290
    %1764 = vmatpush1.bf16.msra.mxu0 %v289
    %1765 = vmatprep.subr.bf16.mxu0 %v293
    %1766 = vmatpush1.bf16.msra.mxu0 %v292
    %1767 = vmatprep.subr.bf16.mxu0 %v296
    %1768 = vmatpush1.bf16.msra.mxu0 %v295
    %1769 = vmatprep.subr.bf16.mxu0 %v299
    %1770 = vmatpush1.bf16.msra.mxu0 %v298
    %1771 = vmatprep.subr.bf16.mxu0 %v302
    %1772 = vmatpush1.bf16.msra.mxu0 %v301
    %1773 = vmatprep.subr.bf16.mxu0 %v305
    %1774 = vmatpush1.bf16.msra.mxu0 %v304
    %1775 = vmatprep.subr.bf16.mxu0 %v308
    %1776 = vmatpush1.bf16.msra.mxu0 %v307
    %1777 = vmatprep.subr.bf16.mxu0 %v311
    %1778 = vmatpush1.bf16.msra.mxu0 %v310
    %1779 = vmatprep.subr.bf16.mxu0 0
    %1780 = vmatpush1.bf16.msra.mxu0 0
    %1781 = vmatprep.subr.bf16.mxu0 0
    %1782 = vmatpush1.bf16.msra.mxu0 0
    %1783 = vmatprep.subr.bf16.mxu0 0
    %1784 = vmatpush1.bf16.msra.mxu0 0
    %1785 = vmatprep.subr.bf16.mxu0 0
    %1786 = vmatpush1.bf16.msra.mxu0 0
    %1787 = vmatprep.subr.bf16.mxu0 0
    %1788 = vmatpush1.bf16.msra.mxu0 0
    %1789 = vmatprep.subr.bf16.mxu0 0
    %1790 = vmatpush1.bf16.msra.mxu0 0
    %1791 = vmatprep.subr.bf16.mxu0 0
    %1792 = vmatpush1.bf16.msra.mxu0 0
    %1793 = vmatprep.subr.bf16.mxu0 0
    %1794 = vmatpush1.bf16.msra.mxu0 0
    %1795 = vmatprep.mubr.bf16.mxu0 0
    %1796 = vmatmul.mubr.bf16.gmra.mrb[0].mxu0 %v1762
    %v1797 = vpop.f32.mrb[0].mxu0
    %v1798 = vadd.f32 %v109, %v1797
    %v1799 = vpop.f32.mrb[0].mxu0
    %v1800 = vadd.f32 %v113, %v1799
    %v1801 = vpop.f32.mrb[0].mxu0
    %v1802 = vpop.f32.mrb[0].mxu0
    %1803 = vdwg.mxu0
    %1804 = vmatprep.subr.bf16.mxu0 0
    %1805 = vmatpush1.bf16.msra.mxu0 %v291
    %1806 = vmatprep.subr.bf16.mxu0 0
    %1807 = vmatpush1.bf16.msra.mxu0 %v294
    %1808 = vmatprep.subr.bf16.mxu0 0
    %1809 = vmatpush1.bf16.msra.mxu0 %v297
    %1810 = vmatprep.subr.bf16.mxu0 0
    %1811 = vmatpush1.bf16.msra.mxu0 %v300
    %1812 = vmatprep.subr.bf16.mxu0 0
    %1813 = vmatpush1.bf16.msra.mxu0 %v303
    %1814 = vmatprep.subr.bf16.mxu0 0
    %1815 = vmatpush1.bf16.msra.mxu0 %v306
    %1816 = vmatprep.subr.bf16.mxu0 0
    %1817 = vmatpush1.bf16.msra.mxu0 %v309
    %1818 = vmatprep.subr.bf16.mxu0 0
    %1819 = vmatpush1.bf16.msra.mxu0 %v312
    %1820 = vmatprep.subr.bf16.mxu0 0
    %1821 = vmatpush1.bf16.msra.mxu0 0
    %1822 = vmatprep.subr.bf16.mxu0 0
    %1823 = vmatpush1.bf16.msra.mxu0 0
    %1824 = vmatprep.subr.bf16.mxu0 0
    %1825 = vmatpush1.bf16.msra.mxu0 0
    %1826 = vmatprep.subr.bf16.mxu0 0
    %1827 = vmatpush1.bf16.msra.mxu0 0
    %1828 = vmatprep.subr.bf16.mxu0 0
    %1829 = vmatpush1.bf16.msra.mxu0 0
    %1830 = vmatprep.subr.bf16.mxu0 0
    %1831 = vmatpush1.bf16.msra.mxu0 0
    %1832 = vmatprep.subr.bf16.mxu0 0
    %1833 = vmatpush1.bf16.msra.mxu0 0
    %1834 = vmatprep.subr.bf16.mxu0 0
    %1835 = vmatpush1.bf16.msra.mxu0 0
    %1836 = vmatprep.mubr.bf16.mxu0 0
    %1837 = vmatmul.mubr.bf16.gmra.mrb[0].mxu0 %v1762
    %v1838 = vpop.f32.mrb[0].mxu0
    %v1839 = vadd.f32 %v117, %v1838
    %v1840 = vpop.f32.mrb[0].mxu0
    %v1841 = vpop.f32.mrb[0].mxu0
    %v1842 = vpop.f32.mrb[0].mxu0
    %1843 = vdwg.mxu0
    %1844 = vmatprep.subr.bf16.mxu0 %v500
    %1845 = vmatpush1.bf16.msra.mxu0 %v499
    %1846 = vmatprep.subr.bf16.mxu0 %v503
    %1847 = vmatpush1.bf16.msra.mxu0 %v502
    %1848 = vmatprep.subr.bf16.mxu0 %v506
    %1849 = vmatpush1.bf16.msra.mxu0 %v505
    %1850 = vmatprep.subr.bf16.mxu0 %v509
    %1851 = vmatpush1.bf16.msra.mxu0 %v508
    %1852 = vmatprep.subr.bf16.mxu0 %v512
    %1853 = vmatpush1.bf16.msra.mxu0 %v511
    %1854 = vmatprep.subr.bf16.mxu0 %v515
    %1855 = vmatpush1.bf16.msra.mxu0 %v514
    %1856 = vmatprep.subr.bf16.mxu0 %v518
    %1857 = vmatpush1.bf16.msra.mxu0 %v517
    %1858 = vmatprep.subr.bf16.mxu0 %v521
    %1859 = vmatpush1.bf16.msra.mxu0 %v520
    %1860 = vmatprep.subr.bf16.mxu0 0
    %1861 = vmatpush1.bf16.msra.mxu0 0
    %1862 = vmatprep.subr.bf16.mxu0 0
    %1863 = vmatpush1.bf16.msra.mxu0 0
    %1864 = vmatprep.subr.bf16.mxu0 0
    %1865 = vmatpush1.bf16.msra.mxu0 0
    %1866 = vmatprep.subr.bf16.mxu0 0
    %1867 = vmatpush1.bf16.msra.mxu0 0
    %1868 = vmatprep.subr.bf16.mxu0 0
    %1869 = vmatpush1.bf16.msra.mxu0 0
    %1870 = vmatprep.subr.bf16.mxu0 0
    %1871 = vmatpush1.bf16.msra.mxu0 0
    %1872 = vmatprep.subr.bf16.mxu0 0
    %1873 = vmatpush1.bf16.msra.mxu0 0
    %1874 = vmatprep.subr.bf16.mxu0 0
    %1875 = vmatpush1.bf16.msra.mxu0 0
    %1876 = vmatprep.mubr.bf16.mxu0 0
    %1877 = vmatmul.mubr.bf16.gmra.mrb[0].mxu0 %v1374
    %v1878 = vpop.f32.mrb[0].mxu0
    %v1879 = vadd.f32 %v127, %v1878
    %v1880 = vpop.f32.mrb[0].mxu0
    %v1881 = vadd.f32 %v131, %v1880
    %v1882 = vpop.f32.mrb[0].mxu0
    %v1883 = vpop.f32.mrb[0].mxu0
    %1884 = vdwg.mxu0
    %1885 = vmatprep.subr.bf16.mxu0 0
    %1886 = vmatpush1.bf16.msra.mxu0 %v501
    %1887 = vmatprep.subr.bf16.mxu0 0
    %1888 = vmatpush1.bf16.msra.mxu0 %v504
    %1889 = vmatprep.subr.bf16.mxu0 0
    %1890 = vmatpush1.bf16.msra.mxu0 %v507
    %1891 = vmatprep.subr.bf16.mxu0 0
    %1892 = vmatpush1.bf16.msra.mxu0 %v510
    %1893 = vmatprep.subr.bf16.mxu0 0
    %1894 = vmatpush1.bf16.msra.mxu0 %v513
    %1895 = vmatprep.subr.bf16.mxu0 0
    %1896 = vmatpush1.bf16.msra.mxu0 %v516
    %1897 = vmatprep.subr.bf16.mxu0 0
    %1898 = vmatpush1.bf16.msra.mxu0 %v519
    %1899 = vmatprep.subr.bf16.mxu0 0
    %1900 = vmatpush1.bf16.msra.mxu0 %v522
    %1901 = vmatprep.subr.bf16.mxu0 0
    %1902 = vmatpush1.bf16.msra.mxu0 0
    %1903 = vmatprep.subr.bf16.mxu0 0
    %1904 = vmatpush1.bf16.msra.mxu0 0
    %1905 = vmatprep.subr.bf16.mxu0 0
    %1906 = vmatpush1.bf16.msra.mxu0 0
    %1907 = vmatprep.subr.bf16.mxu0 0
    %1908 = vmatpush1.bf16.msra.mxu0 0
    %1909 = vmatprep.subr.bf16.mxu0 0
    %1910 = vmatpush1.bf16.msra.mxu0 0
    %1911 = vmatprep.subr.bf16.mxu0 0
    %1912 = vmatpush1.bf16.msra.mxu0 0
    %1913 = vmatprep.subr.bf16.mxu0 0
    %1914 = vmatpush1.bf16.msra.mxu0 0
    %1915 = vmatprep.subr.bf16.mxu0 0
    %1916 = vmatpush1.bf16.msra.mxu0 0
    %1917 = vmatprep.mubr.bf16.mxu0 0
    %1918 = vmatmul.mubr.bf16.gmra.mrb[0].mxu0 %v1374
    %v1919 = vpop.f32.mrb[0].mxu0
    %v1920 = vadd.f32 %v135, %v1919
    %v1921 = vpop.f32.mrb[0].mxu0
    %v1922 = vpop.f32.mrb[0].mxu0
    %v1923 = vpop.f32.mrb[0].mxu0
    %1924 = vdwg.mxu0
    %v1925 = vadd.f32 %v1798, %v1879
    %v1926 = vxor.u32 %v1925, 2147483648
    %v1927 = vmul.f32 %v1926, 1.442695
    %v1928 = vpow.pop %v1927
    %v1929 = vadd.f32 %v1928, 1.0
    %v1930 = vrcp.pop %v1929
    %v1931 = vmul.f32 1.0, %v1930
    %v1932 = vadd.f32 %v1800, %v1881
    %v1933 = vxor.u32 %v1932, 2147483648
    %v1934 = vmul.f32 %v1933, 1.442695
    %v1935 = vpow.pop %v1934
    %v1936 = vadd.f32 %v1935, 1.0
    %v1937 = vrcp.pop %v1936
    %v1938 = vmul.f32 1.0, %v1937
    %v1939 = vmul.f32 %v1931, %v1920
    %v1940 = vadd.f32 %v1839, %v1939
    %v1941 = vtanh.pop %v1940
    %v1942 = vsub.f32 1.0, %v1938
    %v1943 = vmul.f32 %v1942, %v1941
    %v1944 = vmul.f32 %v1938, %v1373
    %v1945 = vadd.f32 %v1943, %v1944
    %v1946 = vpack.c.bf16 %v1945, %v1945
    %v1949 = vunpack.c.l.s4 1966171168
    %v1950 = vunpack.c.0.s8 %v1949
    %v1951 = vlaneseq
    %v1952 = vshrl.u32 %v1951, 7
    %v1953 = vsub.s32 %v1950, %v1952
    %v1954 = vrot.slane %v1946, %v1953
    %v1956 = vunpack.c.l.s4 1966171168
    %v1957 = vunpack.c.0.s8 %v1956
    %v1958 = vlaneseq
    %v1959 = vshrl.u32 %v1958, 7
    %v1960 = vsub.s32 %v1957, %v1959
    %v1961 = vrot.slane %v1954, %v1960
    %v1962 = vunpack.i.l.s16 %v1961
    %v1963 = vunpack.i.h.s16 %v1961
    %v1964 = vpack.i.b16 %v1962, %v1962
    %v1965 = vlaneseq
    %v1966 = vshrl.u32 %v1965, 7
    %v1967 = vsub.s32 0, %v1966
    %v1968 = vrot.slane %v1964, %v1967
    %1970 = vmatprep.subr.bf16.mxu0 0
    %1971 = vmatpush1.bf16.xpose.msra.mxu0 %v202
    %1972 = vmatprep.subr.bf16.mxu0 0
    %1973 = vmatpush1.bf16.xpose.msra.mxu0 0
    %1974 = vmatprep.subr.bf16.mxu0 0
    %1975 = vmatpush1.bf16.xpose.msra.mxu0 0
    %1976 = vmatprep.subr.bf16.mxu0 0
    %1977 = vmatpush1.bf16.xpose.msra.mxu0 0
    %1978 = vmatprep.subr.bf16.mxu0 0
    %1979 = vmatpush1.bf16.xpose.msra.mxu0 0
    %1980 = vmatprep.subr.bf16.mxu0 0
    %1981 = vmatpush1.bf16.xpose.msra.mxu0 0
    %1982 = vmatprep.subr.bf16.mxu0 0
    %1983 = vmatpush1.bf16.xpose.msra.mxu0 0
    %1984 = vmatprep.subr.bf16.mxu0 0
    %1985 = vmatpush1.bf16.xpose.msra.mxu0 0
    %1986 = vmatprep.subr.bf16.mxu0 0
    %1987 = vmatpush1.bf16.xpose.msra.mxu0 0
    %1988 = vmatprep.subr.bf16.mxu0 0
    %1989 = vmatpush1.bf16.xpose.msra.mxu0 0
    %1990 = vmatprep.subr.bf16.mxu0 0
    %1991 = vmatpush1.bf16.xpose.msra.mxu0 0
    %1992 = vmatprep.subr.bf16.mxu0 0
    %1993 = vmatpush1.bf16.xpose.msra.mxu0 0
    %1994 = vmatprep.subr.bf16.mxu0 0
    %1995 = vmatpush1.bf16.xpose.msra.mxu0 0
    %1996 = vmatprep.subr.bf16.mxu0 0
    %1997 = vmatpush1.bf16.xpose.msra.mxu0 0
    %1998 = vmatprep.subr.bf16.mxu0 0
    %1999 = vmatpush1.bf16.xpose.msra.mxu0 0
    %2000 = vmatprep.subr.bf16.mxu0 0
    %2001 = vmatpush1.bf16.xpose.msra.mxu0 0
    %2002 = vmatprep.mubr.bf16.mxu0 0
    %2003 = vmatmul.mubr.bf16.gmra.mrb[0].mxu0 %v1968
    %v2004 = vpop.f32.mrb[0].mxu0
    %v2005 = vadd.f32 0.0, %v2004
    %v2006 = vpop.f32.mrb[0].mxu0
    %v2007 = vpop.f32.mrb[0].mxu0
    %v2008 = vpop.f32.mrb[0].mxu0
    %2009 = vdwg.mxu0
    %v2010 = vpack.i.b16 %v1963, %v1963
    %v2011 = vlaneseq
    %v2012 = vshrl.u32 %v2011, 7
    %v2013 = vsub.s32 0, %v2012
    %v2014 = vrot.slane %v2010, %v2013
    %2016 = vmatprep.subr.bf16.mxu0 0
    %2017 = vmatpush1.bf16.xpose.msra.mxu0 %v203
    %2018 = vmatprep.subr.bf16.mxu0 0
    %2019 = vmatpush1.bf16.xpose.msra.mxu0 0
    %2020 = vmatprep.subr.bf16.mxu0 0
    %2021 = vmatpush1.bf16.xpose.msra.mxu0 0
    %2022 = vmatprep.subr.bf16.mxu0 0
    %2023 = vmatpush1.bf16.xpose.msra.mxu0 0
    %2024 = vmatprep.subr.bf16.mxu0 0
    %2025 = vmatpush1.bf16.xpose.msra.mxu0 0
    %2026 = vmatprep.subr.bf16.mxu0 0
    %2027 = vmatpush1.bf16.xpose.msra.mxu0 0
    %2028 = vmatprep.subr.bf16.mxu0 0
    %2029 = vmatpush1.bf16.xpose.msra.mxu0 0
    %2030 = vmatprep.subr.bf16.mxu0 0
    %2031 = vmatpush1.bf16.xpose.msra.mxu0 0
    %2032 = vmatprep.subr.bf16.mxu0 0
    %2033 = vmatpush1.bf16.xpose.msra.mxu0 0
    %2034 = vmatprep.subr.bf16.mxu0 0
    %2035 = vmatpush1.bf16.xpose.msra.mxu0 0
    %2036 = vmatprep.subr.bf16.mxu0 0
    %2037 = vmatpush1.bf16.xpose.msra.mxu0 0
    %2038 = vmatprep.subr.bf16.mxu0 0
    %2039 = vmatpush1.bf16.xpose.msra.mxu0 0
    %2040 = vmatprep.subr.bf16.mxu0 0
    %2041 = vmatpush1.bf16.xpose.msra.mxu0 0
    %2042 = vmatprep.subr.bf16.mxu0 0
    %2043 = vmatpush1.bf16.xpose.msra.mxu0 0
    %2044 = vmatprep.subr.bf16.mxu0 0
    %2045 = vmatpush1.bf16.xpose.msra.mxu0 0
    %2046 = vmatprep.subr.bf16.mxu0 0
    %2047 = vmatpush1.bf16.xpose.msra.mxu0 0
    %2048 = vmatprep.mubr.bf16.mxu0 0
    %2049 = vmatmul.mubr.bf16.gmra.mrb[0].mxu0 %v2014
    %v2050 = vpop.f32.mrb[0].mxu0
    %v2051 = vadd.f32 0.0, %v2050
    %v2052 = vpop.f32.mrb[0].mxu0
    %v2053 = vpop.f32.mrb[0].mxu0
    %v2054 = vpop.f32.mrb[0].mxu0
    %2055 = vdwg.mxu0
    %v2058 = vrot.slane %v2051, 7
    %v2059 = vsel %vm762, %v2058, %v2005
    %v2061 = vsel %vm765, %v2059, -inf
    %2062 = vmax.xlane.f32.xlu0 %v2061
    %v2063 = vpop.xlane.xlu0 %2062
    %v2065 = vrot.slane %v2063, 1
    %v2068 = vsub.f32 %v2005, %v2063
    %v2069 = vsub.f32 %v2051, %v2065
    %v2070 = vmul.f32 %v2068, 1.442695
    %v2071 = vpow.pop %v2070
    %v2072 = vmul.f32 %v2069, 1.442695
    %v2073 = vpow.pop %v2072
    %v2076 = vrot.slane %v2073, 7
    %v2077 = vsel %vm762, %v2076, %v2071
    %v2079 = vsel %vm765, %v2077, 0.0
    %2080 = vadd.xlane.f32.xlu0 %v2079
    %v2081 = vpop.xlane.xlu0 %2080
    %v2082 = vrcp.pop %v2081
    %v2084 = vrot.slane %v2082, 1
    %v2087 = vmul.f32 %v2071, %v2082
    %v2088 = vmul.f32 %v2073, %v2084
    %v2089 = vpack.c.bf16 %v2087, %v2087
    %v2090 = vpack.c.bf16 %v2088, %v2088
    %v2092 = vsel %vm796, %v2089, 0
    %2094 = vmatprep.subr.bf16.mxu0 0
    %2095 = vmatpush1.bf16.msra.mxu0 %v802
    %2096 = vmatprep.subr.bf16.mxu0 0
    %2097 = vmatpush1.bf16.msra.mxu0 0
    %2098 = vmatprep.subr.bf16.mxu0 0
    %2099 = vmatpush1.bf16.msra.mxu0 0
    %2100 = vmatprep.subr.bf16.mxu0 0
    %2101 = vmatpush1.bf16.msra.mxu0 0
    %2102 = vmatprep.subr.bf16.mxu0 0
    %2103 = vmatpush1.bf16.msra.mxu0 0
    %2104 = vmatprep.subr.bf16.mxu0 0
    %2105 = vmatpush1.bf16.msra.mxu0 0
    %2106 = vmatprep.subr.bf16.mxu0 0
    %2107 = vmatpush1.bf16.msra.mxu0 0
    %2108 = vmatprep.subr.bf16.mxu0 0
    %2109 = vmatpush1.bf16.msra.mxu0 0
    %2110 = vmatprep.subr.bf16.mxu0 0
    %2111 = vmatpush1.bf16.msra.mxu0 0
    %2112 = vmatprep.subr.bf16.mxu0 0
    %2113 = vmatpush1.bf16.msra.mxu0 0
    %2114 = vmatprep.subr.bf16.mxu0 0
    %2115 = vmatpush1.bf16.msra.mxu0 0
    %2116 = vmatprep.subr.bf16.mxu0 0
    %2117 = vmatpush1.bf16.msra.mxu0 0
    %2118 = vmatprep.subr.bf16.mxu0 0
    %2119 = vmatpush1.bf16.msra.mxu0 0
    %2120 = vmatprep.subr.bf16.mxu0 0
    %2121 = vmatpush1.bf16.msra.mxu0 0
    %2122 = vmatprep.subr.bf16.mxu0 0
    %2123 = vmatpush1.bf16.msra.mxu0 0
    %2124 = vmatprep.subr.bf16.mxu0 0
    %2125 = vmatpush1.bf16.msra.mxu0 0
    %2126 = vmatprep.mubr.bf16.mxu0 0
    %2127 = vmatmul.mubr.bf16.gmra.mrb[0].mxu0 %v2092
    %v2128 = vpop.f32.mrb[0].mxu0
    %v2129 = vadd.f32 0.0, %v2128
    %v2130 = vpop.f32.mrb[0].mxu0
    %v2131 = vpop.f32.mrb[0].mxu0
    %v2132 = vpop.f32.mrb[0].mxu0
    %2133 = vdwg.mxu0
    %v2135 = vsel %vm796, %v2090, 0
    %2137 = vmatprep.subr.bf16.mxu0 0
    %2138 = vmatpush1.bf16.msra.mxu0 %v848
    %2139 = vmatprep.subr.bf16.mxu0 0
    %2140 = vmatpush1.bf16.msra.mxu0 0
    %2141 = vmatprep.subr.bf16.mxu0 0
    %2142 = vmatpush1.bf16.msra.mxu0 0
    %2143 = vmatprep.subr.bf16.mxu0 0
    %2144 = vmatpush1.bf16.msra.mxu0 0
    %2145 = vmatprep.subr.bf16.mxu0 0
    %2146 = vmatpush1.bf16.msra.mxu0 0
    %2147 = vmatprep.subr.bf16.mxu0 0
    %2148 = vmatpush1.bf16.msra.mxu0 0
    %2149 = vmatprep.subr.bf16.mxu0 0
    %2150 = vmatpush1.bf16.msra.mxu0 0
    %2151 = vmatprep.subr.bf16.mxu0 0
    %2152 = vmatpush1.bf16.msra.mxu0 0
    %2153 = vmatprep.subr.bf16.mxu0 0
    %2154 = vmatpush1.bf16.msra.mxu0 0
    %2155 = vmatprep.subr.bf16.mxu0 0
    %2156 = vmatpush1.bf16.msra.mxu0 0
    %2157 = vmatprep.subr.bf16.mxu0 0
    %2158 = vmatpush1.bf16.msra.mxu0 0
    %2159 = vmatprep.subr.bf16.mxu0 0
    %2160 = vmatpush1.bf16.msra.mxu0 0
    %2161 = vmatprep.subr.bf16.mxu0 0
    %2162 = vmatpush1.bf16.msra.mxu0 0
    %2163 = vmatprep.subr.bf16.mxu0 0
    %2164 = vmatpush1.bf16.msra.mxu0 0
    %2165 = vmatprep.subr.bf16.mxu0 0
    %2166 = vmatpush1.bf16.msra.mxu0 0
    %2167 = vmatprep.subr.bf16.mxu0 0
    %2168 = vmatpush1.bf16.msra.mxu0 0
    %2169 = vmatprep.mubr.bf16.mxu0 0
    %2170 = vmatmul.mubr.bf16.gmra.mrb[0].mxu0 %v2135
    %v2171 = vpop.f32.mrb[0].mxu0
    %v2172 = vadd.f32 0.0, %v2171
    %v2173 = vpop.f32.mrb[0].mxu0
    %v2174 = vpop.f32.mrb[0].mxu0
    %v2175 = vpop.f32.mrb[0].mxu0
    %2176 = vdwg.mxu0
    %v2177 = vpack.c.bf16 %v2129, %v2129
    %v2178 = vpack.c.bf16 %v2172, %v2172
    %2179 = vmatprep.subr.bf16.mxu0 0
    %2180 = vmatpush1.bf16.msra.mxu0 %v924
    %2181 = vmatprep.subr.bf16.mxu0 0
    %2182 = vmatpush1.bf16.msra.mxu0 %v925
    %2183 = vmatprep.subr.bf16.mxu0 0
    %2184 = vmatpush1.bf16.msra.mxu0 %v926
    %2185 = vmatprep.subr.bf16.mxu0 0
    %2186 = vmatpush1.bf16.msra.mxu0 %v927
    %2187 = vmatprep.subr.bf16.mxu0 0
    %2188 = vmatpush1.bf16.msra.mxu0 %v928
    %2189 = vmatprep.subr.bf16.mxu0 0
    %2190 = vmatpush1.bf16.msra.mxu0 %v929
    %2191 = vmatprep.subr.bf16.mxu0 0
    %2192 = vmatpush1.bf16.msra.mxu0 %v930
    %2193 = vmatprep.subr.bf16.mxu0 0
    %2194 = vmatpush1.bf16.msra.mxu0 %v931
    %2195 = vmatprep.subr.bf16.mxu0 0
    %2196 = vmatpush1.bf16.msra.mxu0 0
    %2197 = vmatprep.subr.bf16.mxu0 0
    %2198 = vmatpush1.bf16.msra.mxu0 0
    %2199 = vmatprep.subr.bf16.mxu0 0
    %2200 = vmatpush1.bf16.msra.mxu0 0
    %2201 = vmatprep.subr.bf16.mxu0 0
    %2202 = vmatpush1.bf16.msra.mxu0 0
    %2203 = vmatprep.subr.bf16.mxu0 0
    %2204 = vmatpush1.bf16.msra.mxu0 0
    %2205 = vmatprep.subr.bf16.mxu0 0
    %2206 = vmatpush1.bf16.msra.mxu0 0
    %2207 = vmatprep.subr.bf16.mxu0 0
    %2208 = vmatpush1.bf16.msra.mxu0 0
    %2209 = vmatprep.subr.bf16.mxu0 0
    %2210 = vmatpush1.bf16.msra.mxu0 0
    %2211 = vmatprep.mubr.bf16.mxu0 0
    %2212 = vmatmul.mubr.bf16.gmra.mrb[0].mxu0 %v1946
    %v2213 = vpop.f32.mrb[0].mxu0
    %v2214 = vadd.f32 0.0, %v2213
    %v2215 = vpop.f32.mrb[0].mxu0
    %v2216 = vpop.f32.mrb[0].mxu0
    %v2217 = vpop.f32.mrb[0].mxu0
    %2218 = vdwg.mxu0
    %v2221 = vunpack.c.l.b16 %v2177
    %v2222 = vunpack.c.l.b16 %v2178
    %v2223 = vrot.slane %v2222, 7
    %v2224 = vsel %vm762, %v2223, %v2221
    %v2225 = vpack.c.b16 %v2224, %v2224
    %2227 = vmatprep.subr.bf16.mxu0 0
    %2228 = vmatpush1.bf16.msra.mxu0 %v1020
    %2229 = vmatprep.subr.bf16.mxu0 0
    %2230 = vmatpush1.bf16.msra.mxu0 %v1021
    %2231 = vmatprep.subr.bf16.mxu0 0
    %2232 = vmatpush1.bf16.msra.mxu0 %v1022
    %2233 = vmatprep.subr.bf16.mxu0 0
    %2234 = vmatpush1.bf16.msra.mxu0 %v1023
    %2235 = vmatprep.subr.bf16.mxu0 0
    %2236 = vmatpush1.bf16.msra.mxu0 %v1024
    %2237 = vmatprep.subr.bf16.mxu0 0
    %2238 = vmatpush1.bf16.msra.mxu0 %v1025
    %2239 = vmatprep.subr.bf16.mxu0 0
    %2240 = vmatpush1.bf16.msra.mxu0 %v1026
    %2241 = vmatprep.subr.bf16.mxu0 0
    %2242 = vmatpush1.bf16.msra.mxu0 %v1027
    %2243 = vmatprep.subr.bf16.mxu0 0
    %2244 = vmatpush1.bf16.msra.mxu0 0
    %2245 = vmatprep.subr.bf16.mxu0 0
    %2246 = vmatpush1.bf16.msra.mxu0 0
    %2247 = vmatprep.subr.bf16.mxu0 0
    %2248 = vmatpush1.bf16.msra.mxu0 0
    %2249 = vmatprep.subr.bf16.mxu0 0
    %2250 = vmatpush1.bf16.msra.mxu0 0
    %2251 = vmatprep.subr.bf16.mxu0 0
    %2252 = vmatpush1.bf16.msra.mxu0 0
    %2253 = vmatprep.subr.bf16.mxu0 0
    %2254 = vmatpush1.bf16.msra.mxu0 0
    %2255 = vmatprep.subr.bf16.mxu0 0
    %2256 = vmatpush1.bf16.msra.mxu0 0
    %2257 = vmatprep.subr.bf16.mxu0 0
    %2258 = vmatpush1.bf16.msra.mxu0 0
    %2259 = vmatprep.mubr.bf16.mxu0 0
    %2260 = vmatmul.mubr.bf16.gmra.mrb[0].mxu0 %v2225
    %v2261 = vpop.f32.mrb[0].mxu0
    %v2262 = vadd.f32 %v2214, %v2261
    %v2263 = vpop.f32.mrb[0].mxu0
    %v2264 = vpop.f32.mrb[0].mxu0
    %v2265 = vpop.f32.mrb[0].mxu0
    %2266 = vdwg.mxu0
    %v2267 = vadd.f32 %v2262, %v177
    %v2268 = vtanh.pop %v2267
    %v2269 = vpack.c.bf16 %v2268, %v2268
    %2270 = vmatprep.subr.bf16.mxu0 0
    %2271 = vmatpush1.bf16.msra.mxu0 %v1111
    %2272 = vmatprep.subr.bf16.mxu0 0
    %2273 = vmatpush1.bf16.msra.mxu0 %v1112
    %2274 = vmatprep.subr.bf16.mxu0 0
    %2275 = vmatpush1.bf16.msra.mxu0 %v1113
    %2276 = vmatprep.subr.bf16.mxu0 0
    %2277 = vmatpush1.bf16.msra.mxu0 %v1114
    %2278 = vmatprep.subr.bf16.mxu0 0
    %2279 = vmatpush1.bf16.msra.mxu0 %v1115
    %2280 = vmatprep.subr.bf16.mxu0 0
    %2281 = vmatpush1.bf16.msra.mxu0 %v1116
    %2282 = vmatprep.subr.bf16.mxu0 0
    %2283 = vmatpush1.bf16.msra.mxu0 %v1117
    %2284 = vmatprep.subr.bf16.mxu0 0
    %2285 = vmatpush1.bf16.msra.mxu0 %v1118
    %2286 = vmatprep.subr.bf16.mxu0 0
    %2287 = vmatpush1.bf16.msra.mxu0 0
    %2288 = vmatprep.subr.bf16.mxu0 0
    %2289 = vmatpush1.bf16.msra.mxu0 0
    %2290 = vmatprep.subr.bf16.mxu0 0
    %2291 = vmatpush1.bf16.msra.mxu0 0
    %2292 = vmatprep.subr.bf16.mxu0 0
    %2293 = vmatpush1.bf16.msra.mxu0 0
    %2294 = vmatprep.subr.bf16.mxu0 0
    %2295 = vmatpush1.bf16.msra.mxu0 0
    %2296 = vmatprep.subr.bf16.mxu0 0
    %2297 = vmatpush1.bf16.msra.mxu0 0
    %2298 = vmatprep.subr.bf16.mxu0 0
    %2299 = vmatpush1.bf16.msra.mxu0 0
    %2300 = vmatprep.subr.bf16.mxu0 0
    %2301 = vmatpush1.bf16.msra.mxu0 0
    %2302 = vmatprep.mubr.bf16.mxu0 0
    %2303 = vmatmul.mubr.bf16.gmra.mrb[0].mxu0 %v2269
    %v2304 = vpop.f32.mrb[0].mxu0
    %v2305 = vadd.f32 %v200, %v2304
    %v2306 = vpop.f32.mrb[0].mxu0
    %v2307 = vpop.f32.mrb[0].mxu0
    %v2308 = vpop.f32.mrb[0].mxu0
    %2309 = vdwg.mxu0
    %v2310 = vsel %vm206, %v2305, -1e+30
    %v2311 = vsel %vm1168, %v2310, -inf
    %2312 = vmax.xlane.f32.xlu0 %v2311
    %v2313 = vpop.xlane.xlu0 %2312
    %v2314 = vsub.f32 %v2310, %v2313
    %v2315 = vmul.f32 %v2314, 1.442695
    %v2316 = vpow.pop %v2315
    %v2317 = vsel %vm1168, %v2316, 0.0
    %2318 = vadd.xlane.f32.xlu0 %v2317
    %v2319 = vpop.xlane.xlu0 %2318
    %v2320 = vlog2.pop %v2319
    %v2321 = vmul.f32 %v2320, 0.6931472
    %v2322 = vadd.f32 %v2321, %v2313
    %v2323 = vsub.f32 %v2310, %v2322
    %s2324 = scalar_lea.vmem %s10, 4
    %2325 = vst [vmem:[%s2324] sm:$0x3] %v2323
    %v2328 = vrot.slane %v2088, 7
    %v2329 = vsel %vm762, %v2328, %v2087
    %s2331 = scalar_lea.vmem [#allocation2], 4
    %2332 = vst.msk [vmem:[%s2331] sm:$0x3] %vm765, %v2329
    %s2333 = scalar_lea.vmem %s0, 3
    %v2334 = vld [vmem:[%s2333] sm:$0x1]
    %2335 = vmatprep.subr.bf16.mxu0 %v290
    %2336 = vmatpush1.bf16.msra.mxu0 %v289
    %2337 = vmatprep.subr.bf16.mxu0 %v293
    %2338 = vmatpush1.bf16.msra.mxu0 %v292
    %2339 = vmatprep.subr.bf16.mxu0 %v296
    %2340 = vmatpush1.bf16.msra.mxu0 %v295
    %2341 = vmatprep.subr.bf16.mxu0 %v299
    %2342 = vmatpush1.bf16.msra.mxu0 %v298
    %2343 = vmatprep.subr.bf16.mxu0 %v302
    %2344 = vmatpush1.bf16.msra.mxu0 %v301
    %2345 = vmatprep.subr.bf16.mxu0 %v305
    %2346 = vmatpush1.bf16.msra.mxu0 %v304
    %2347 = vmatprep.subr.bf16.mxu0 %v308
    %2348 = vmatpush1.bf16.msra.mxu0 %v307
    %2349 = vmatprep.subr.bf16.mxu0 %v311
    %2350 = vmatpush1.bf16.msra.mxu0 %v310
    %2351 = vmatprep.subr.bf16.mxu0 0
    %2352 = vmatpush1.bf16.msra.mxu0 0
    %2353 = vmatprep.subr.bf16.mxu0 0
    %2354 = vmatpush1.bf16.msra.mxu0 0
    %2355 = vmatprep.subr.bf16.mxu0 0
    %2356 = vmatpush1.bf16.msra.mxu0 0
    %2357 = vmatprep.subr.bf16.mxu0 0
    %2358 = vmatpush1.bf16.msra.mxu0 0
    %2359 = vmatprep.subr.bf16.mxu0 0
    %2360 = vmatpush1.bf16.msra.mxu0 0
    %2361 = vmatprep.subr.bf16.mxu0 0
    %2362 = vmatpush1.bf16.msra.mxu0 0
    %2363 = vmatprep.subr.bf16.mxu0 0
    %2364 = vmatpush1.bf16.msra.mxu0 0
    %2365 = vmatprep.subr.bf16.mxu0 0
    %2366 = vmatpush1.bf16.msra.mxu0 0
    %2367 = vmatprep.mubr.bf16.mxu0 0
    %2368 = vmatmul.mubr.bf16.gmra.mrb[0].mxu0 %v2334
    %v2369 = vpop.f32.mrb[0].mxu0
    %v2370 = vadd.f32 %v109, %v2369
    %v2371 = vpop.f32.mrb[0].mxu0
    %v2372 = vadd.f32 %v113, %v2371
    %v2373 = vpop.f32.mrb[0].mxu0
    %v2374 = vpop.f32.mrb[0].mxu0
    %2375 = vdwg.mxu0
    %2376 = vmatprep.subr.bf16.mxu0 0
    %2377 = vmatpush1.bf16.msra.mxu0 %v291
    %2378 = vmatprep.subr.bf16.mxu0 0
    %2379 = vmatpush1.bf16.msra.mxu0 %v294
    %2380 = vmatprep.subr.bf16.mxu0 0
    %2381 = vmatpush1.bf16.msra.mxu0 %v297
    %2382 = vmatprep.subr.bf16.mxu0 0
    %2383 = vmatpush1.bf16.msra.mxu0 %v300
    %2384 = vmatprep.subr.bf16.mxu0 0
    %2385 = vmatpush1.bf16.msra.mxu0 %v303
    %2386 = vmatprep.subr.bf16.mxu0 0
    %2387 = vmatpush1.bf16.msra.mxu0 %v306
    %2388 = vmatprep.subr.bf16.mxu0 0
    %2389 = vmatpush1.bf16.msra.mxu0 %v309
    %2390 = vmatprep.subr.bf16.mxu0 0
    %2391 = vmatpush1.bf16.msra.mxu0 %v312
    %2392 = vmatprep.subr.bf16.mxu0 0
    %2393 = vmatpush1.bf16.msra.mxu0 0
    %2394 = vmatprep.subr.bf16.mxu0 0
    %2395 = vmatpush1.bf16.msra.mxu0 0
    %2396 = vmatprep.subr.bf16.mxu0 0
    %2397 = vmatpush1.bf16.msra.mxu0 0
    %2398 = vmatprep.subr.bf16.mxu0 0
    %2399 = vmatpush1.bf16.msra.mxu0 0
    %2400 = vmatprep.subr.bf16.mxu0 0
    %2401 = vmatpush1.bf16.msra.mxu0 0
    %2402 = vmatprep.subr.bf16.mxu0 0
    %2403 = vmatpush1.bf16.msra.mxu0 0
    %2404 = vmatprep.subr.bf16.mxu0 0
    %2405 = vmatpush1.bf16.msra.mxu0 0
    %2406 = vmatprep.subr.bf16.mxu0 0
    %2407 = vmatpush1.bf16.msra.mxu0 0
    %2408 = vmatprep.mubr.bf16.mxu0 0
    %2409 = vmatmul.mubr.bf16.gmra.mrb[0].mxu0 %v2334
    %v2410 = vpop.f32.mrb[0].mxu0
    %v2411 = vadd.f32 %v117, %v2410
    %v2412 = vpop.f32.mrb[0].mxu0
    %v2413 = vpop.f32.mrb[0].mxu0
    %v2414 = vpop.f32.mrb[0].mxu0
    %2415 = vdwg.mxu0
    %2416 = vmatprep.subr.bf16.mxu0 %v500
    %2417 = vmatpush1.bf16.msra.mxu0 %v499
    %2418 = vmatprep.subr.bf16.mxu0 %v503
    %2419 = vmatpush1.bf16.msra.mxu0 %v502
    %2420 = vmatprep.subr.bf16.mxu0 %v506
    %2421 = vmatpush1.bf16.msra.mxu0 %v505
    %2422 = vmatprep.subr.bf16.mxu0 %v509
    %2423 = vmatpush1.bf16.msra.mxu0 %v508
    %2424 = vmatprep.subr.bf16.mxu0 %v512
    %2425 = vmatpush1.bf16.msra.mxu0 %v511
    %2426 = vmatprep.subr.bf16.mxu0 %v515
    %2427 = vmatpush1.bf16.msra.mxu0 %v514
    %2428 = vmatprep.subr.bf16.mxu0 %v518
    %2429 = vmatpush1.bf16.msra.mxu0 %v517
    %2430 = vmatprep.subr.bf16.mxu0 %v521
    %2431 = vmatpush1.bf16.msra.mxu0 %v520
    %2432 = vmatprep.subr.bf16.mxu0 0
    %2433 = vmatpush1.bf16.msra.mxu0 0
    %2434 = vmatprep.subr.bf16.mxu0 0
    %2435 = vmatpush1.bf16.msra.mxu0 0
    %2436 = vmatprep.subr.bf16.mxu0 0
    %2437 = vmatpush1.bf16.msra.mxu0 0
    %2438 = vmatprep.subr.bf16.mxu0 0
    %2439 = vmatpush1.bf16.msra.mxu0 0
    %2440 = vmatprep.subr.bf16.mxu0 0
    %2441 = vmatpush1.bf16.msra.mxu0 0
    %2442 = vmatprep.subr.bf16.mxu0 0
    %2443 = vmatpush1.bf16.msra.mxu0 0
    %2444 = vmatprep.subr.bf16.mxu0 0
    %2445 = vmatpush1.bf16.msra.mxu0 0
    %2446 = vmatprep.subr.bf16.mxu0 0
    %2447 = vmatpush1.bf16.msra.mxu0 0
    %2448 = vmatprep.mubr.bf16.mxu0 0
    %2449 = vmatmul.mubr.bf16.gmra.mrb[0].mxu0 %v1946
    %v2450 = vpop.f32.mrb[0].mxu0
    %v2451 = vadd.f32 %v127, %v2450
    %v2452 = vpop.f32.mrb[0].mxu0
    %v2453 = vadd.f32 %v131, %v2452
    %v2454 = vpop.f32.mrb[0].mxu0
    %v2455 = vpop.f32.mrb[0].mxu0
    %2456 = vdwg.mxu0
    %2457 = vmatprep.subr.bf16.mxu0 0
    %2458 = vmatpush1.bf16.msra.mxu0 %v501
    %2459 = vmatprep.subr.bf16.mxu0 0
    %2460 = vmatpush1.bf16.msra.mxu0 %v504
    %2461 = vmatprep.subr.bf16.mxu0 0
    %2462 = vmatpush1.bf16.msra.mxu0 %v507
    %2463 = vmatprep.subr.bf16.mxu0 0
    %2464 = vmatpush1.bf16.msra.mxu0 %v510
    %2465 = vmatprep.subr.bf16.mxu0 0
    %2466 = vmatpush1.bf16.msra.mxu0 %v513
    %2467 = vmatprep.subr.bf16.mxu0 0
    %2468 = vmatpush1.bf16.msra.mxu0 %v516
    %2469 = vmatprep.subr.bf16.mxu0 0
    %2470 = vmatpush1.bf16.msra.mxu0 %v519
    %2471 = vmatprep.subr.bf16.mxu0 0
    %2472 = vmatpush1.bf16.msra.mxu0 %v522
    %2473 = vmatprep.subr.bf16.mxu0 0
    %2474 = vmatpush1.bf16.msra.mxu0 0
    %2475 = vmatprep.subr.bf16.mxu0 0
    %2476 = vmatpush1.bf16.msra.mxu0 0
    %2477 = vmatprep.subr.bf16.mxu0 0
    %2478 = vmatpush1.bf16.msra.mxu0 0
    %2479 = vmatprep.subr.bf16.mxu0 0
    %2480 = vmatpush1.bf16.msra.mxu0 0
    %2481 = vmatprep.subr.bf16.mxu0 0
    %2482 = vmatpush1.bf16.msra.mxu0 0
    %2483 = vmatprep.subr.bf16.mxu0 0
    %2484 = vmatpush1.bf16.msra.mxu0 0
    %2485 = vmatprep.subr.bf16.mxu0 0
    %2486 = vmatpush1.bf16.msra.mxu0 0
    %2487 = vmatprep.subr.bf16.mxu0 0
    %2488 = vmatpush1.bf16.msra.mxu0 0
    %2489 = vmatprep.mubr.bf16.mxu0 0
    %2490 = vmatmul.mubr.bf16.gmra.mrb[0].mxu0 %v1946
    %v2491 = vpop.f32.mrb[0].mxu0
    %v2492 = vadd.f32 %v135, %v2491
    %v2493 = vpop.f32.mrb[0].mxu0
    %v2494 = vpop.f32.mrb[0].mxu0
    %v2495 = vpop.f32.mrb[0].mxu0
    %2496 = vdwg.mxu0
    %v2497 = vadd.f32 %v2370, %v2451
    %v2498 = vxor.u32 %v2497, 2147483648
    %v2499 = vmul.f32 %v2498, 1.442695
    %v2500 = vpow.pop %v2499
    %v2501 = vadd.f32 %v2500, 1.0
    %v2502 = vrcp.pop %v2501
    %v2503 = vmul.f32 1.0, %v2502
    %v2504 = vadd.f32 %v2372, %v2453
    %v2505 = vxor.u32 %v2504, 2147483648
    %v2506 = vmul.f32 %v2505, 1.442695
    %v2507 = vpow.pop %v2506
    %v2508 = vadd.f32 %v2507, 1.0
    %v2509 = vrcp.pop %v2508
    %v2510 = vmul.f32 1.0, %v2509
    %v2511 = vmul.f32 %v2503, %v2492
    %v2512 = vadd.f32 %v2411, %v2511
    %v2513 = vtanh.pop %v2512
    %v2514 = vsub.f32 1.0, %v2510
    %v2515 = vmul.f32 %v2514, %v2513
    %v2516 = vmul.f32 %v2510, %v1945
    %v2517 = vadd.f32 %v2515, %v2516
    %v2518 = vpack.c.bf16 %v2517, %v2517
    %v2521 = vunpack.c.l.s4 1966171168
    %v2522 = vunpack.c.0.s8 %v2521
    %v2523 = vlaneseq
    %v2524 = vshrl.u32 %v2523, 7
    %v2525 = vsub.s32 %v2522, %v2524
    %v2526 = vrot.slane %v2518, %v2525
    %v2528 = vunpack.c.l.s4 1966171168
    %v2529 = vunpack.c.0.s8 %v2528
    %v2530 = vlaneseq
    %v2531 = vshrl.u32 %v2530, 7
    %v2532 = vsub.s32 %v2529, %v2531
    %v2533 = vrot.slane %v2526, %v2532
    %v2534 = vunpack.i.l.s16 %v2533
    %v2535 = vunpack.i.h.s16 %v2533
    %v2536 = vpack.i.b16 %v2534, %v2534
    %v2537 = vlaneseq
    %v2538 = vshrl.u32 %v2537, 7
    %v2539 = vsub.s32 0, %v2538
    %v2540 = vrot.slane %v2536, %v2539
    %2542 = vmatprep.subr.bf16.mxu0 0
    %2543 = vmatpush1.bf16.xpose.msra.mxu0 %v202
    %2544 = vmatprep.subr.bf16.mxu0 0
    %2545 = vmatpush1.bf16.xpose.msra.mxu0 0
    %2546 = vmatprep.subr.bf16.mxu0 0
    %2547 = vmatpush1.bf16.xpose.msra.mxu0 0
    %2548 = vmatprep.subr.bf16.mxu0 0
    %2549 = vmatpush1.bf16.xpose.msra.mxu0 0
    %2550 = vmatprep.subr.bf16.mxu0 0
    %2551 = vmatpush1.bf16.xpose.msra.mxu0 0
    %2552 = vmatprep.subr.bf16.mxu0 0
    %2553 = vmatpush1.bf16.xpose.msra.mxu0 0
    %2554 = vmatprep.subr.bf16.mxu0 0
    %2555 = vmatpush1.bf16.xpose.msra.mxu0 0
    %2556 = vmatprep.subr.bf16.mxu0 0
    %2557 = vmatpush1.bf16.xpose.msra.mxu0 0
    %2558 = vmatprep.subr.bf16.mxu0 0
    %2559 = vmatpush1.bf16.xpose.msra.mxu0 0
    %2560 = vmatprep.subr.bf16.mxu0 0
    %2561 = vmatpush1.bf16.xpose.msra.mxu0 0
    %2562 = vmatprep.subr.bf16.mxu0 0
    %2563 = vmatpush1.bf16.xpose.msra.mxu0 0
    %2564 = vmatprep.subr.bf16.mxu0 0
    %2565 = vmatpush1.bf16.xpose.msra.mxu0 0
    %2566 = vmatprep.subr.bf16.mxu0 0
    %2567 = vmatpush1.bf16.xpose.msra.mxu0 0
    %2568 = vmatprep.subr.bf16.mxu0 0
    %2569 = vmatpush1.bf16.xpose.msra.mxu0 0
    %2570 = vmatprep.subr.bf16.mxu0 0
    %2571 = vmatpush1.bf16.xpose.msra.mxu0 0
    %2572 = vmatprep.subr.bf16.mxu0 0
    %2573 = vmatpush1.bf16.xpose.msra.mxu0 0
    %2574 = vmatprep.mubr.bf16.mxu0 0
    %2575 = vmatmul.mubr.bf16.gmra.mrb[0].mxu0 %v2540
    %v2576 = vpop.f32.mrb[0].mxu0
    %v2577 = vadd.f32 0.0, %v2576
    %v2578 = vpop.f32.mrb[0].mxu0
    %v2579 = vpop.f32.mrb[0].mxu0
    %v2580 = vpop.f32.mrb[0].mxu0
    %2581 = vdwg.mxu0
    %v2582 = vpack.i.b16 %v2535, %v2535
    %v2583 = vlaneseq
    %v2584 = vshrl.u32 %v2583, 7
    %v2585 = vsub.s32 0, %v2584
    %v2586 = vrot.slane %v2582, %v2585
    %2588 = vmatprep.subr.bf16.mxu0 0
    %2589 = vmatpush1.bf16.xpose.msra.mxu0 %v203
    %2590 = vmatprep.subr.bf16.mxu0 0
    %2591 = vmatpush1.bf16.xpose.msra.mxu0 0
    %2592 = vmatprep.subr.bf16.mxu0 0
    %2593 = vmatpush1.bf16.xpose.msra.mxu0 0
    %2594 = vmatprep.subr.bf16.mxu0 0
    %2595 = vmatpush1.bf16.xpose.msra.mxu0 0
    %2596 = vmatprep.subr.bf16.mxu0 0
    %2597 = vmatpush1.bf16.xpose.msra.mxu0 0
    %2598 = vmatprep.subr.bf16.mxu0 0
    %2599 = vmatpush1.bf16.xpose.msra.mxu0 0
    %2600 = vmatprep.subr.bf16.mxu0 0
    %2601 = vmatpush1.bf16.xpose.msra.mxu0 0
    %2602 = vmatprep.subr.bf16.mxu0 0
    %2603 = vmatpush1.bf16.xpose.msra.mxu0 0
    %2604 = vmatprep.subr.bf16.mxu0 0
    %2605 = vmatpush1.bf16.xpose.msra.mxu0 0
    %2606 = vmatprep.subr.bf16.mxu0 0
    %2607 = vmatpush1.bf16.xpose.msra.mxu0 0
    %2608 = vmatprep.subr.bf16.mxu0 0
    %2609 = vmatpush1.bf16.xpose.msra.mxu0 0
    %2610 = vmatprep.subr.bf16.mxu0 0
    %2611 = vmatpush1.bf16.xpose.msra.mxu0 0
    %2612 = vmatprep.subr.bf16.mxu0 0
    %2613 = vmatpush1.bf16.xpose.msra.mxu0 0
    %2614 = vmatprep.subr.bf16.mxu0 0
    %2615 = vmatpush1.bf16.xpose.msra.mxu0 0
    %2616 = vmatprep.subr.bf16.mxu0 0
    %2617 = vmatpush1.bf16.xpose.msra.mxu0 0
    %2618 = vmatprep.subr.bf16.mxu0 0
    %2619 = vmatpush1.bf16.xpose.msra.mxu0 0
    %2620 = vmatprep.mubr.bf16.mxu0 0
    %2621 = vmatmul.mubr.bf16.gmra.mrb[0].mxu0 %v2586
    %v2622 = vpop.f32.mrb[0].mxu0
    %v2623 = vadd.f32 0.0, %v2622
    %v2624 = vpop.f32.mrb[0].mxu0
    %v2625 = vpop.f32.mrb[0].mxu0
    %v2626 = vpop.f32.mrb[0].mxu0
    %2627 = vdwg.mxu0
    %v2630 = vrot.slane %v2623, 7
    %v2631 = vsel %vm762, %v2630, %v2577
    %v2633 = vsel %vm765, %v2631, -inf
    %2634 = vmax.xlane.f32.xlu0 %v2633
    %v2635 = vpop.xlane.xlu0 %2634
    %v2637 = vrot.slane %v2635, 1
    %v2640 = vsub.f32 %v2577, %v2635
    %v2641 = vsub.f32 %v2623, %v2637
    %v2642 = vmul.f32 %v2640, 1.442695
    %v2643 = vpow.pop %v2642
    %v2644 = vmul.f32 %v2641, 1.442695
    %v2645 = vpow.pop %v2644
    %v2648 = vrot.slane %v2645, 7
    %v2649 = vsel %vm762, %v2648, %v2643
    %v2651 = vsel %vm765, %v2649, 0.0
    %2652 = vadd.xlane.f32.xlu0 %v2651
    %v2653 = vpop.xlane.xlu0 %2652
    %v2654 = vrcp.pop %v2653
    %v2656 = vrot.slane %v2654, 1
    %v2659 = vmul.f32 %v2643, %v2654
    %v2660 = vmul.f32 %v2645, %v2656
    %v2661 = vpack.c.bf16 %v2659, %v2659
    %v2662 = vpack.c.bf16 %v2660, %v2660
    %v2664 = vsel %vm796, %v2661, 0
    %2666 = vmatprep.subr.bf16.mxu0 0
    %2667 = vmatpush1.bf16.msra.mxu0 %v802
    %2668 = vmatprep.subr.bf16.mxu0 0
    %2669 = vmatpush1.bf16.msra.mxu0 0
    %2670 = vmatprep.subr.bf16.mxu0 0
    %2671 = vmatpush1.bf16.msra.mxu0 0
    %2672 = vmatprep.subr.bf16.mxu0 0
    %2673 = vmatpush1.bf16.msra.mxu0 0
    %2674 = vmatprep.subr.bf16.mxu0 0
    %2675 = vmatpush1.bf16.msra.mxu0 0
    %2676 = vmatprep.subr.bf16.mxu0 0
    %2677 = vmatpush1.bf16.msra.mxu0 0
    %2678 = vmatprep.subr.bf16.mxu0 0
    %2679 = vmatpush1.bf16.msra.mxu0 0
    %2680 = vmatprep.subr.bf16.mxu0 0
    %2681 = vmatpush1.bf16.msra.mxu0 0
    %2682 = vmatprep.subr.bf16.mxu0 0
    %2683 = vmatpush1.bf16.msra.mxu0 0
    %2684 = vmatprep.subr.bf16.mxu0 0
    %2685 = vmatpush1.bf16.msra.mxu0 0
    %2686 = vmatprep.subr.bf16.mxu0 0
    %2687 = vmatpush1.bf16.msra.mxu0 0
    %2688 = vmatprep.subr.bf16.mxu0 0
    %2689 = vmatpush1.bf16.msra.mxu0 0
    %2690 = vmatprep.subr.bf16.mxu0 0
    %2691 = vmatpush1.bf16.msra.mxu0 0
    %2692 = vmatprep.subr.bf16.mxu0 0
    %2693 = vmatpush1.bf16.msra.mxu0 0
    %2694 = vmatprep.subr.bf16.mxu0 0
    %2695 = vmatpush1.bf16.msra.mxu0 0
    %2696 = vmatprep.subr.bf16.mxu0 0
    %2697 = vmatpush1.bf16.msra.mxu0 0
    %2698 = vmatprep.mubr.bf16.mxu0 0
    %2699 = vmatmul.mubr.bf16.gmra.mrb[0].mxu0 %v2664
    %v2700 = vpop.f32.mrb[0].mxu0
    %v2701 = vadd.f32 0.0, %v2700
    %v2702 = vpop.f32.mrb[0].mxu0
    %v2703 = vpop.f32.mrb[0].mxu0
    %v2704 = vpop.f32.mrb[0].mxu0
    %2705 = vdwg.mxu0
    %v2707 = vsel %vm796, %v2662, 0
    %2709 = vmatprep.subr.bf16.mxu0 0
    %2710 = vmatpush1.bf16.msra.mxu0 %v848
    %2711 = vmatprep.subr.bf16.mxu0 0
    %2712 = vmatpush1.bf16.msra.mxu0 0
    %2713 = vmatprep.subr.bf16.mxu0 0
    %2714 = vmatpush1.bf16.msra.mxu0 0
    %2715 = vmatprep.subr.bf16.mxu0 0
    %2716 = vmatpush1.bf16.msra.mxu0 0
    %2717 = vmatprep.subr.bf16.mxu0 0
    %2718 = vmatpush1.bf16.msra.mxu0 0
    %2719 = vmatprep.subr.bf16.mxu0 0
    %2720 = vmatpush1.bf16.msra.mxu0 0
    %2721 = vmatprep.subr.bf16.mxu0 0
    %2722 = vmatpush1.bf16.msra.mxu0 0
    %2723 = vmatprep.subr.bf16.mxu0 0
    %2724 = vmatpush1.bf16.msra.mxu0 0
    %2725 = vmatprep.subr.bf16.mxu0 0
    %2726 = vmatpush1.bf16.msra.mxu0 0
    %2727 = vmatprep.subr.bf16.mxu0 0
    %2728 = vmatpush1.bf16.msra.mxu0 0
    %2729 = vmatprep.subr.bf16.mxu0 0
    %2730 = vmatpush1.bf16.msra.mxu0 0
    %2731 = vmatprep.subr.bf16.mxu0 0
    %2732 = vmatpush1.bf16.msra.mxu0 0
    %2733 = vmatprep.subr.bf16.mxu0 0
    %2734 = vmatpush1.bf16.msra.mxu0 0
    %2735 = vmatprep.subr.bf16.mxu0 0
    %2736 = vmatpush1.bf16.msra.mxu0 0
    %2737 = vmatprep.subr.bf16.mxu0 0
    %2738 = vmatpush1.bf16.msra.mxu0 0
    %2739 = vmatprep.subr.bf16.mxu0 0
    %2740 = vmatpush1.bf16.msra.mxu0 0
    %2741 = vmatprep.mubr.bf16.mxu0 0
    %2742 = vmatmul.mubr.bf16.gmra.mrb[0].mxu0 %v2707
    %v2743 = vpop.f32.mrb[0].mxu0
    %v2744 = vadd.f32 0.0, %v2743
    %v2745 = vpop.f32.mrb[0].mxu0
    %v2746 = vpop.f32.mrb[0].mxu0
    %v2747 = vpop.f32.mrb[0].mxu0
    %2748 = vdwg.mxu0
    %v2749 = vpack.c.bf16 %v2701, %v2701
    %v2750 = vpack.c.bf16 %v2744, %v2744
    %2751 = vmatprep.subr.bf16.mxu0 0
    %2752 = vmatpush1.bf16.msra.mxu0 %v924
    %2753 = vmatprep.subr.bf16.mxu0 0
    %2754 = vmatpush1.bf16.msra.mxu0 %v925
    %2755 = vmatprep.subr.bf16.mxu0 0
    %2756 = vmatpush1.bf16.msra.mxu0 %v926
    %2757 = vmatprep.subr.bf16.mxu0 0
    %2758 = vmatpush1.bf16.msra.mxu0 %v927
    %2759 = vmatprep.subr.bf16.mxu0 0
    %2760 = vmatpush1.bf16.msra.mxu0 %v928
    %2761 = vmatprep.subr.bf16.mxu0 0
    %2762 = vmatpush1.bf16.msra.mxu0 %v929
    %2763 = vmatprep.subr.bf16.mxu0 0
    %2764 = vmatpush1.bf16.msra.mxu0 %v930
    %2765 = vmatprep.subr.bf16.mxu0 0
    %2766 = vmatpush1.bf16.msra.mxu0 %v931
    %2767 = vmatprep.subr.bf16.mxu0 0
    %2768 = vmatpush1.bf16.msra.mxu0 0
    %2769 = vmatprep.subr.bf16.mxu0 0
    %2770 = vmatpush1.bf16.msra.mxu0 0
    %2771 = vmatprep.subr.bf16.mxu0 0
    %2772 = vmatpush1.bf16.msra.mxu0 0
    %2773 = vmatprep.subr.bf16.mxu0 0
    %2774 = vmatpush1.bf16.msra.mxu0 0
    %2775 = vmatprep.subr.bf16.mxu0 0
    %2776 = vmatpush1.bf16.msra.mxu0 0
    %2777 = vmatprep.subr.bf16.mxu0 0
    %2778 = vmatpush1.bf16.msra.mxu0 0
    %2779 = vmatprep.subr.bf16.mxu0 0
    %2780 = vmatpush1.bf16.msra.mxu0 0
    %2781 = vmatprep.subr.bf16.mxu0 0
    %2782 = vmatpush1.bf16.msra.mxu0 0
    %2783 = vmatprep.mubr.bf16.mxu0 0
    %2784 = vmatmul.mubr.bf16.gmra.mrb[0].mxu0 %v2518
    %v2785 = vpop.f32.mrb[0].mxu0
    %v2786 = vadd.f32 0.0, %v2785
    %v2787 = vpop.f32.mrb[0].mxu0
    %v2788 = vpop.f32.mrb[0].mxu0
    %v2789 = vpop.f32.mrb[0].mxu0
    %2790 = vdwg.mxu0
    %v2793 = vunpack.c.l.b16 %v2749
    %v2794 = vunpack.c.l.b16 %v2750
    %v2795 = vrot.slane %v2794, 7
    %v2796 = vsel %vm762, %v2795, %v2793
    %v2797 = vpack.c.b16 %v2796, %v2796
    %2799 = vmatprep.subr.bf16.mxu0 0
    %2800 = vmatpush1.bf16.msra.mxu0 %v1020
    %2801 = vmatprep.subr.bf16.mxu0 0
    %2802 = vmatpush1.bf16.msra.mxu0 %v1021
    %2803 = vmatprep.subr.bf16.mxu0 0
    %2804 = vmatpush1.bf16.msra.mxu0 %v1022
    %2805 = vmatprep.subr.bf16.mxu0 0
    %2806 = vmatpush1.bf16.msra.mxu0 %v1023
    %2807 = vmatprep.subr.bf16.mxu0 0
    %2808 = vmatpush1.bf16.msra.mxu0 %v1024
    %2809 = vmatprep.subr.bf16.mxu0 0
    %2810 = vmatpush1.bf16.msra.mxu0 %v1025
    %2811 = vmatprep.subr.bf16.mxu0 0
    %2812 = vmatpush1.bf16.msra.mxu0 %v1026
    %2813 = vmatprep.subr.bf16.mxu0 0
    %2814 = vmatpush1.bf16.msra.mxu0 %v1027
    %2815 = vmatprep.subr.bf16.mxu0 0
    %2816 = vmatpush1.bf16.msra.mxu0 0
    %2817 = vmatprep.subr.bf16.mxu0 0
    %2818 = vmatpush1.bf16.msra.mxu0 0
    %2819 = vmatprep.subr.bf16.mxu0 0
    %2820 = vmatpush1.bf16.msra.mxu0 0
    %2821 = vmatprep.subr.bf16.mxu0 0
    %2822 = vmatpush1.bf16.msra.mxu0 0
    %2823 = vmatprep.subr.bf16.mxu0 0
    %2824 = vmatpush1.bf16.msra.mxu0 0
    %2825 = vmatprep.subr.bf16.mxu0 0
    %2826 = vmatpush1.bf16.msra.mxu0 0
    %2827 = vmatprep.subr.bf16.mxu0 0
    %2828 = vmatpush1.bf16.msra.mxu0 0
    %2829 = vmatprep.subr.bf16.mxu0 0
    %2830 = vmatpush1.bf16.msra.mxu0 0
    %2831 = vmatprep.mubr.bf16.mxu0 0
    %2832 = vmatmul.mubr.bf16.gmra.mrb[0].mxu0 %v2797
    %v2833 = vpop.f32.mrb[0].mxu0
    %v2834 = vadd.f32 %v2786, %v2833
    %v2835 = vpop.f32.mrb[0].mxu0
    %v2836 = vpop.f32.mrb[0].mxu0
    %v2837 = vpop.f32.mrb[0].mxu0
    %2838 = vdwg.mxu0
    %v2839 = vadd.f32 %v2834, %v177
    %v2840 = vtanh.pop %v2839
    %v2841 = vpack.c.bf16 %v2840, %v2840
    %2842 = vmatprep.subr.bf16.mxu0 0
    %2843 = vmatpush1.bf16.msra.mxu0 %v1111
    %2844 = vmatprep.subr.bf16.mxu0 0
    %2845 = vmatpush1.bf16.msra.mxu0 %v1112
    %2846 = vmatprep.subr.bf16.mxu0 0
    %2847 = vmatpush1.bf16.msra.mxu0 %v1113
    %2848 = vmatprep.subr.bf16.mxu0 0
    %2849 = vmatpush1.bf16.msra.mxu0 %v1114
    %2850 = vmatprep.subr.bf16.mxu0 0
    %2851 = vmatpush1.bf16.msra.mxu0 %v1115
    %2852 = vmatprep.subr.bf16.mxu0 0
    %2853 = vmatpush1.bf16.msra.mxu0 %v1116
    %2854 = vmatprep.subr.bf16.mxu0 0
    %2855 = vmatpush1.bf16.msra.mxu0 %v1117
    %2856 = vmatprep.subr.bf16.mxu0 0
    %2857 = vmatpush1.bf16.msra.mxu0 %v1118
    %2858 = vmatprep.subr.bf16.mxu0 0
    %2859 = vmatpush1.bf16.msra.mxu0 0
    %2860 = vmatprep.subr.bf16.mxu0 0
    %2861 = vmatpush1.bf16.msra.mxu0 0
    %2862 = vmatprep.subr.bf16.mxu0 0
    %2863 = vmatpush1.bf16.msra.mxu0 0
    %2864 = vmatprep.subr.bf16.mxu0 0
    %2865 = vmatpush1.bf16.msra.mxu0 0
    %2866 = vmatprep.subr.bf16.mxu0 0
    %2867 = vmatpush1.bf16.msra.mxu0 0
    %2868 = vmatprep.subr.bf16.mxu0 0
    %2869 = vmatpush1.bf16.msra.mxu0 0
    %2870 = vmatprep.subr.bf16.mxu0 0
    %2871 = vmatpush1.bf16.msra.mxu0 0
    %2872 = vmatprep.subr.bf16.mxu0 0
    %2873 = vmatpush1.bf16.msra.mxu0 0
    %2874 = vmatprep.mubr.bf16.mxu0 0
    %2875 = vmatmul.mubr.bf16.gmra.mrb[0].mxu0 %v2841
    %v2876 = vpop.f32.mrb[0].mxu0
    %v2877 = vadd.f32 %v200, %v2876
    %v2878 = vpop.f32.mrb[0].mxu0
    %v2879 = vpop.f32.mrb[0].mxu0
    %v2880 = vpop.f32.mrb[0].mxu0
    %2881 = vdwg.mxu0
    %v2882 = vsel %vm206, %v2877, -1e+30
    %v2883 = vsel %vm1168, %v2882, -inf
    %2884 = vmax.xlane.f32.xlu0 %v2883
    %v2885 = vpop.xlane.xlu0 %2884
    %v2886 = vsub.f32 %v2882, %v2885
    %v2887 = vmul.f32 %v2886, 1.442695
    %v2888 = vpow.pop %v2887
    %v2889 = vsel %vm1168, %v2888, 0.0
    %2890 = vadd.xlane.f32.xlu0 %v2889
    %v2891 = vpop.xlane.xlu0 %2890
    %v2892 = vlog2.pop %v2891
    %v2893 = vmul.f32 %v2892, 0.6931472
    %v2894 = vadd.f32 %v2893, %v2885
    %v2895 = vsub.f32 %v2882, %v2894
    %s2896 = scalar_lea.vmem %s10, 6
    %2897 = vst [vmem:[%s2896] sm:$0x3] %v2895
    %v2900 = vrot.slane %v2660, 7
    %v2901 = vsel %vm762, %v2900, %v2659
    %s2903 = scalar_lea.vmem [#allocation2], 6
    %2904 = vst.msk [vmem:[%s2903] sm:$0x3] %vm765, %v2901
    %s2905 = scalar_lea.vmem %s0, 4
    %v2906 = vld [vmem:[%s2905] sm:$0x1]
    %2907 = vmatprep.subr.bf16.mxu0 %v290
    %2908 = vmatpush1.bf16.msra.mxu0 %v289
    %2909 = vmatprep.subr.bf16.mxu0 %v293
    %2910 = vmatpush1.bf16.msra.mxu0 %v292
    %2911 = vmatprep.subr.bf16.mxu0 %v296
    %2912 = vmatpush1.bf16.msra.mxu0 %v295
    %2913 = vmatprep.subr.bf16.mxu0 %v299
    %2914 = vmatpush1.bf16.msra.mxu0 %v298
    %2915 = vmatprep.subr.bf16.mxu0 %v302
    %2916 = vmatpush1.bf16.msra.mxu0 %v301
    %2917 = vmatprep.subr.bf16.mxu0 %v305
    %2918 = vmatpush1.bf16.msra.mxu0 %v304
    %2919 = vmatprep.subr.bf16.mxu0 %v308
    %2920 = vmatpush1.bf16.msra.mxu0 %v307
    %2921 = vmatprep.subr.bf16.mxu0 %v311
    %2922 = vmatpush1.bf16.msra.mxu0 %v310
    %2923 = vmatprep.subr.bf16.mxu0 0
    %2924 = vmatpush1.bf16.msra.mxu0 0
    %2925 = vmatprep.subr.bf16.mxu0 0
    %2926 = vmatpush1.bf16.msra.mxu0 0
    %2927 = vmatprep.subr.bf16.mxu0 0
    %2928 = vmatpush1.bf16.msra.mxu0 0
    %2929 = vmatprep.subr.bf16.mxu0 0
    %2930 = vmatpush1.bf16.msra.mxu0 0
    %2931 = vmatprep.subr.bf16.mxu0 0
    %2932 = vmatpush1.bf16.msra.mxu0 0
    %2933 = vmatprep.subr.bf16.mxu0 0
    %2934 = vmatpush1.bf16.msra.mxu0 0
    %2935 = vmatprep.subr.bf16.mxu0 0
    %2936 = vmatpush1.bf16.msra.mxu0 0
    %2937 = vmatprep.subr.bf16.mxu0 0
    %2938 = vmatpush1.bf16.msra.mxu0 0
    %2939 = vmatprep.mubr.bf16.mxu0 0
    %2940 = vmatmul.mubr.bf16.gmra.mrb[0].mxu0 %v2906
    %v2941 = vpop.f32.mrb[0].mxu0
    %v2942 = vadd.f32 %v109, %v2941
    %v2943 = vpop.f32.mrb[0].mxu0
    %v2944 = vadd.f32 %v113, %v2943
    %v2945 = vpop.f32.mrb[0].mxu0
    %v2946 = vpop.f32.mrb[0].mxu0
    %2947 = vdwg.mxu0
    %2948 = vmatprep.subr.bf16.mxu0 0
    %2949 = vmatpush1.bf16.msra.mxu0 %v291
    %2950 = vmatprep.subr.bf16.mxu0 0
    %2951 = vmatpush1.bf16.msra.mxu0 %v294
    %2952 = vmatprep.subr.bf16.mxu0 0
    %2953 = vmatpush1.bf16.msra.mxu0 %v297
    %2954 = vmatprep.subr.bf16.mxu0 0
    %2955 = vmatpush1.bf16.msra.mxu0 %v300
    %2956 = vmatprep.subr.bf16.mxu0 0
    %2957 = vmatpush1.bf16.msra.mxu0 %v303
    %2958 = vmatprep.subr.bf16.mxu0 0
    %2959 = vmatpush1.bf16.msra.mxu0 %v306
    %2960 = vmatprep.subr.bf16.mxu0 0
    %2961 = vmatpush1.bf16.msra.mxu0 %v309
    %2962 = vmatprep.subr.bf16.mxu0 0
    %2963 = vmatpush1.bf16.msra.mxu0 %v312
    %2964 = vmatprep.subr.bf16.mxu0 0
    %2965 = vmatpush1.bf16.msra.mxu0 0
    %2966 = vmatprep.subr.bf16.mxu0 0
    %2967 = vmatpush1.bf16.msra.mxu0 0
    %2968 = vmatprep.subr.bf16.mxu0 0
    %2969 = vmatpush1.bf16.msra.mxu0 0
    %2970 = vmatprep.subr.bf16.mxu0 0
    %2971 = vmatpush1.bf16.msra.mxu0 0
    %2972 = vmatprep.subr.bf16.mxu0 0
    %2973 = vmatpush1.bf16.msra.mxu0 0
    %2974 = vmatprep.subr.bf16.mxu0 0
    %2975 = vmatpush1.bf16.msra.mxu0 0
    %2976 = vmatprep.subr.bf16.mxu0 0
    %2977 = vmatpush1.bf16.msra.mxu0 0
    %2978 = vmatprep.subr.bf16.mxu0 0
    %2979 = vmatpush1.bf16.msra.mxu0 0
    %2980 = vmatprep.mubr.bf16.mxu0 0
    %2981 = vmatmul.mubr.bf16.gmra.mrb[0].mxu0 %v2906
    %v2982 = vpop.f32.mrb[0].mxu0
    %v2983 = vadd.f32 %v117, %v2982
    %v2984 = vpop.f32.mrb[0].mxu0
    %v2985 = vpop.f32.mrb[0].mxu0
    %v2986 = vpop.f32.mrb[0].mxu0
    %2987 = vdwg.mxu0
    %2988 = vmatprep.subr.bf16.mxu0 %v500
    %2989 = vmatpush1.bf16.msra.mxu0 %v499
    %2990 = vmatprep.subr.bf16.mxu0 %v503
    %2991 = vmatpush1.bf16.msra.mxu0 %v502
    %2992 = vmatprep.subr.bf16.mxu0 %v506
    %2993 = vmatpush1.bf16.msra.mxu0 %v505
    %2994 = vmatprep.subr.bf16.mxu0 %v509
    %2995 = vmatpush1.bf16.msra.mxu0 %v508
    %2996 = vmatprep.subr.bf16.mxu0 %v512
    %2997 = vmatpush1.bf16.msra.mxu0 %v511
    %2998 = vmatprep.subr.bf16.mxu0 %v515
    %2999 = vmatpush1.bf16.msra.mxu0 %v514
    %3000 = vmatprep.subr.bf16.mxu0 %v518
    %3001 = vmatpush1.bf16.msra.mxu0 %v517
    %3002 = vmatprep.subr.bf16.mxu0 %v521
    %3003 = vmatpush1.bf16.msra.mxu0 %v520
    %3004 = vmatprep.subr.bf16.mxu0 0
    %3005 = vmatpush1.bf16.msra.mxu0 0
    %3006 = vmatprep.subr.bf16.mxu0 0
    %3007 = vmatpush1.bf16.msra.mxu0 0
    %3008 = vmatprep.subr.bf16.mxu0 0
    %3009 = vmatpush1.bf16.msra.mxu0 0
    %3010 = vmatprep.subr.bf16.mxu0 0
    %3011 = vmatpush1.bf16.msra.mxu0 0
    %3012 = vmatprep.subr.bf16.mxu0 0
    %3013 = vmatpush1.bf16.msra.mxu0 0
    %3014 = vmatprep.subr.bf16.mxu0 0
    %3015 = vmatpush1.bf16.msra.mxu0 0
    %3016 = vmatprep.subr.bf16.mxu0 0
    %3017 = vmatpush1.bf16.msra.mxu0 0
    %3018 = vmatprep.subr.bf16.mxu0 0
    %3019 = vmatpush1.bf16.msra.mxu0 0
    %3020 = vmatprep.mubr.bf16.mxu0 0
    %3021 = vmatmul.mubr.bf16.gmra.mrb[0].mxu0 %v2518
    %v3022 = vpop.f32.mrb[0].mxu0
    %v3023 = vadd.f32 %v127, %v3022
    %v3024 = vpop.f32.mrb[0].mxu0
    %v3025 = vadd.f32 %v131, %v3024
    %v3026 = vpop.f32.mrb[0].mxu0
    %v3027 = vpop.f32.mrb[0].mxu0
    %3028 = vdwg.mxu0
    %3029 = vmatprep.subr.bf16.mxu0 0
    %3030 = vmatpush1.bf16.msra.mxu0 %v501
    %3031 = vmatprep.subr.bf16.mxu0 0
    %3032 = vmatpush1.bf16.msra.mxu0 %v504
    %3033 = vmatprep.subr.bf16.mxu0 0
    %3034 = vmatpush1.bf16.msra.mxu0 %v507
    %3035 = vmatprep.subr.bf16.mxu0 0
    %3036 = vmatpush1.bf16.msra.mxu0 %v510
    %3037 = vmatprep.subr.bf16.mxu0 0
    %3038 = vmatpush1.bf16.msra.mxu0 %v513
    %3039 = vmatprep.subr.bf16.mxu0 0
    %3040 = vmatpush1.bf16.msra.mxu0 %v516
    %3041 = vmatprep.subr.bf16.mxu0 0
    %3042 = vmatpush1.bf16.msra.mxu0 %v519
    %3043 = vmatprep.subr.bf16.mxu0 0
    %3044 = vmatpush1.bf16.msra.mxu0 %v522
    %3045 = vmatprep.subr.bf16.mxu0 0
    %3046 = vmatpush1.bf16.msra.mxu0 0
    %3047 = vmatprep.subr.bf16.mxu0 0
    %3048 = vmatpush1.bf16.msra.mxu0 0
    %3049 = vmatprep.subr.bf16.mxu0 0
    %3050 = vmatpush1.bf16.msra.mxu0 0
    %3051 = vmatprep.subr.bf16.mxu0 0
    %3052 = vmatpush1.bf16.msra.mxu0 0
    %3053 = vmatprep.subr.bf16.mxu0 0
    %3054 = vmatpush1.bf16.msra.mxu0 0
    %3055 = vmatprep.subr.bf16.mxu0 0
    %3056 = vmatpush1.bf16.msra.mxu0 0
    %3057 = vmatprep.subr.bf16.mxu0 0
    %3058 = vmatpush1.bf16.msra.mxu0 0
    %3059 = vmatprep.subr.bf16.mxu0 0
    %3060 = vmatpush1.bf16.msra.mxu0 0
    %3061 = vmatprep.mubr.bf16.mxu0 0
    %3062 = vmatmul.mubr.bf16.gmra.mrb[0].mxu0 %v2518
    %v3063 = vpop.f32.mrb[0].mxu0
    %v3064 = vadd.f32 %v135, %v3063
    %v3065 = vpop.f32.mrb[0].mxu0
    %v3066 = vpop.f32.mrb[0].mxu0
    %v3067 = vpop.f32.mrb[0].mxu0
    %3068 = vdwg.mxu0
    %v3069 = vadd.f32 %v2942, %v3023
    %v3070 = vxor.u32 %v3069, 2147483648
    %v3071 = vmul.f32 %v3070, 1.442695
    %v3072 = vpow.pop %v3071
    %v3073 = vadd.f32 %v3072, 1.0
    %v3074 = vrcp.pop %v3073
    %v3075 = vmul.f32 1.0, %v3074
    %v3076 = vadd.f32 %v2944, %v3025
    %v3077 = vxor.u32 %v3076, 2147483648
    %v3078 = vmul.f32 %v3077, 1.442695
    %v3079 = vpow.pop %v3078
    %v3080 = vadd.f32 %v3079, 1.0
    %v3081 = vrcp.pop %v3080
    %v3082 = vmul.f32 1.0, %v3081
    %v3083 = vmul.f32 %v3075, %v3064
    %v3084 = vadd.f32 %v2983, %v3083
    %v3085 = vtanh.pop %v3084
    %v3086 = vsub.f32 1.0, %v3082
    %v3087 = vmul.f32 %v3086, %v3085
    %v3088 = vmul.f32 %v3082, %v2517
    %v3089 = vadd.f32 %v3087, %v3088
    %v3090 = vpack.c.bf16 %v3089, %v3089
    %v3093 = vunpack.c.l.s4 1966171168
    %v3094 = vunpack.c.0.s8 %v3093
    %v3095 = vlaneseq
    %v3096 = vshrl.u32 %v3095, 7
    %v3097 = vsub.s32 %v3094, %v3096
    %v3098 = vrot.slane %v3090, %v3097
    %v3100 = vunpack.c.l.s4 1966171168
    %v3101 = vunpack.c.0.s8 %v3100
    %v3102 = vlaneseq
    %v3103 = vshrl.u32 %v3102, 7
    %v3104 = vsub.s32 %v3101, %v3103
    %v3105 = vrot.slane %v3098, %v3104
    %v3106 = vunpack.i.l.s16 %v3105
    %v3107 = vunpack.i.h.s16 %v3105
    %v3108 = vpack.i.b16 %v3106, %v3106
    %v3109 = vlaneseq
    %v3110 = vshrl.u32 %v3109, 7
    %v3111 = vsub.s32 0, %v3110
    %v3112 = vrot.slane %v3108, %v3111
    %3114 = vmatprep.subr.bf16.mxu0 0
    %3115 = vmatpush1.bf16.xpose.msra.mxu0 %v202
    %3116 = vmatprep.subr.bf16.mxu0 0
    %3117 = vmatpush1.bf16.xpose.msra.mxu0 0
    %3118 = vmatprep.subr.bf16.mxu0 0
    %3119 = vmatpush1.bf16.xpose.msra.mxu0 0
    %3120 = vmatprep.subr.bf16.mxu0 0
    %3121 = vmatpush1.bf16.xpose.msra.mxu0 0
    %3122 = vmatprep.subr.bf16.mxu0 0
    %3123 = vmatpush1.bf16.xpose.msra.mxu0 0
    %3124 = vmatprep.subr.bf16.mxu0 0
    %3125 = vmatpush1.bf16.xpose.msra.mxu0 0
    %3126 = vmatprep.subr.bf16.mxu0 0
    %3127 = vmatpush1.bf16.xpose.msra.mxu0 0
    %3128 = vmatprep.subr.bf16.mxu0 0
    %3129 = vmatpush1.bf16.xpose.msra.mxu0 0
    %3130 = vmatprep.subr.bf16.mxu0 0
    %3131 = vmatpush1.bf16.xpose.msra.mxu0 0
    %3132 = vmatprep.subr.bf16.mxu0 0
    %3133 = vmatpush1.bf16.xpose.msra.mxu0 0
    %3134 = vmatprep.subr.bf16.mxu0 0
    %3135 = vmatpush1.bf16.xpose.msra.mxu0 0
    %3136 = vmatprep.subr.bf16.mxu0 0
    %3137 = vmatpush1.bf16.xpose.msra.mxu0 0
    %3138 = vmatprep.subr.bf16.mxu0 0
    %3139 = vmatpush1.bf16.xpose.msra.mxu0 0
    %3140 = vmatprep.subr.bf16.mxu0 0
    %3141 = vmatpush1.bf16.xpose.msra.mxu0 0
    %3142 = vmatprep.subr.bf16.mxu0 0
    %3143 = vmatpush1.bf16.xpose.msra.mxu0 0
    %3144 = vmatprep.subr.bf16.mxu0 0
    %3145 = vmatpush1.bf16.xpose.msra.mxu0 0
    %3146 = vmatprep.mubr.bf16.mxu0 0
    %3147 = vmatmul.mubr.bf16.gmra.mrb[0].mxu0 %v3112
    %v3148 = vpop.f32.mrb[0].mxu0
    %v3149 = vadd.f32 0.0, %v3148
    %v3150 = vpop.f32.mrb[0].mxu0
    %v3151 = vpop.f32.mrb[0].mxu0
    %v3152 = vpop.f32.mrb[0].mxu0
    %3153 = vdwg.mxu0
    %v3154 = vpack.i.b16 %v3107, %v3107
    %v3155 = vlaneseq
    %v3156 = vshrl.u32 %v3155, 7
    %v3157 = vsub.s32 0, %v3156
    %v3158 = vrot.slane %v3154, %v3157
    %3160 = vmatprep.subr.bf16.mxu0 0
    %3161 = vmatpush1.bf16.xpose.msra.mxu0 %v203
    %3162 = vmatprep.subr.bf16.mxu0 0
    %3163 = vmatpush1.bf16.xpose.msra.mxu0 0
    %3164 = vmatprep.subr.bf16.mxu0 0
    %3165 = vmatpush1.bf16.xpose.msra.mxu0 0
    %3166 = vmatprep.subr.bf16.mxu0 0
    %3167 = vmatpush1.bf16.xpose.msra.mxu0 0
    %3168 = vmatprep.subr.bf16.mxu0 0
    %3169 = vmatpush1.bf16.xpose.msra.mxu0 0
    %3170 = vmatprep.subr.bf16.mxu0 0
    %3171 = vmatpush1.bf16.xpose.msra.mxu0 0
    %3172 = vmatprep.subr.bf16.mxu0 0
    %3173 = vmatpush1.bf16.xpose.msra.mxu0 0
    %3174 = vmatprep.subr.bf16.mxu0 0
    %3175 = vmatpush1.bf16.xpose.msra.mxu0 0
    %3176 = vmatprep.subr.bf16.mxu0 0
    %3177 = vmatpush1.bf16.xpose.msra.mxu0 0
    %3178 = vmatprep.subr.bf16.mxu0 0
    %3179 = vmatpush1.bf16.xpose.msra.mxu0 0
    %3180 = vmatprep.subr.bf16.mxu0 0
    %3181 = vmatpush1.bf16.xpose.msra.mxu0 0
    %3182 = vmatprep.subr.bf16.mxu0 0
    %3183 = vmatpush1.bf16.xpose.msra.mxu0 0
    %3184 = vmatprep.subr.bf16.mxu0 0
    %3185 = vmatpush1.bf16.xpose.msra.mxu0 0
    %3186 = vmatprep.subr.bf16.mxu0 0
    %3187 = vmatpush1.bf16.xpose.msra.mxu0 0
    %3188 = vmatprep.subr.bf16.mxu0 0
    %3189 = vmatpush1.bf16.xpose.msra.mxu0 0
    %3190 = vmatprep.subr.bf16.mxu0 0
    %3191 = vmatpush1.bf16.xpose.msra.mxu0 0
    %3192 = vmatprep.mubr.bf16.mxu0 0
    %3193 = vmatmul.mubr.bf16.gmra.mrb[0].mxu0 %v3158
    %v3194 = vpop.f32.mrb[0].mxu0
    %v3195 = vadd.f32 0.0, %v3194
    %v3196 = vpop.f32.mrb[0].mxu0
    %v3197 = vpop.f32.mrb[0].mxu0
    %v3198 = vpop.f32.mrb[0].mxu0
    %3199 = vdwg.mxu0
    %v3202 = vrot.slane %v3195, 7
    %v3203 = vsel %vm762, %v3202, %v3149
    %v3205 = vsel %vm765, %v3203, -inf
    %3206 = vmax.xlane.f32.xlu0 %v3205
    %v3207 = vpop.xlane.xlu0 %3206
    %v3209 = vrot.slane %v3207, 1
    %v3212 = vsub.f32 %v3149, %v3207
    %v3213 = vsub.f32 %v3195, %v3209
    %v3214 = vmul.f32 %v3212, 1.442695
    %v3215 = vpow.pop %v3214
    %v3216 = vmul.f32 %v3213, 1.442695
    %v3217 = vpow.pop %v3216
    %v3220 = vrot.slane %v3217, 7
    %v3221 = vsel %vm762, %v3220, %v3215
    %v3223 = vsel %vm765, %v3221, 0.0
    %3224 = vadd.xlane.f32.xlu0 %v3223
    %v3225 = vpop.xlane.xlu0 %3224
    %v3226 = vrcp.pop %v3225
    %v3228 = vrot.slane %v3226, 1
    %v3231 = vmul.f32 %v3215, %v3226
    %v3232 = vmul.f32 %v3217, %v3228
    %v3233 = vpack.c.bf16 %v3231, %v3231
    %v3234 = vpack.c.bf16 %v3232, %v3232
    %v3236 = vsel %vm796, %v3233, 0
    %3238 = vmatprep.subr.bf16.mxu0 0
    %3239 = vmatpush1.bf16.msra.mxu0 %v802
    %3240 = vmatprep.subr.bf16.mxu0 0
    %3241 = vmatpush1.bf16.msra.mxu0 0
    %3242 = vmatprep.subr.bf16.mxu0 0
    %3243 = vmatpush1.bf16.msra.mxu0 0
    %3244 = vmatprep.subr.bf16.mxu0 0
    %3245 = vmatpush1.bf16.msra.mxu0 0
    %3246 = vmatprep.subr.bf16.mxu0 0
    %3247 = vmatpush1.bf16.msra.mxu0 0
    %3248 = vmatprep.subr.bf16.mxu0 0
    %3249 = vmatpush1.bf16.msra.mxu0 0
    %3250 = vmatprep.subr.bf16.mxu0 0
    %3251 = vmatpush1.bf16.msra.mxu0 0
    %3252 = vmatprep.subr.bf16.mxu0 0
    %3253 = vmatpush1.bf16.msra.mxu0 0
    %3254 = vmatprep.subr.bf16.mxu0 0
    %3255 = vmatpush1.bf16.msra.mxu0 0
    %3256 = vmatprep.subr.bf16.mxu0 0
    %3257 = vmatpush1.bf16.msra.mxu0 0
    %3258 = vmatprep.subr.bf16.mxu0 0
    %3259 = vmatpush1.bf16.msra.mxu0 0
    %3260 = vmatprep.subr.bf16.mxu0 0
    %3261 = vmatpush1.bf16.msra.mxu0 0
    %3262 = vmatprep.subr.bf16.mxu0 0
    %3263 = vmatpush1.bf16.msra.mxu0 0
    %3264 = vmatprep.subr.bf16.mxu0 0
    %3265 = vmatpush1.bf16.msra.mxu0 0
    %3266 = vmatprep.subr.bf16.mxu0 0
    %3267 = vmatpush1.bf16.msra.mxu0 0
    %3268 = vmatprep.subr.bf16.mxu0 0
    %3269 = vmatpush1.bf16.msra.mxu0 0
    %3270 = vmatprep.mubr.bf16.mxu0 0
    %3271 = vmatmul.mubr.bf16.gmra.mrb[0].mxu0 %v3236
    %v3272 = vpop.f32.mrb[0].mxu0
    %v3273 = vadd.f32 0.0, %v3272
    %v3274 = vpop.f32.mrb[0].mxu0
    %v3275 = vpop.f32.mrb[0].mxu0
    %v3276 = vpop.f32.mrb[0].mxu0
    %3277 = vdwg.mxu0
    %v3279 = vsel %vm796, %v3234, 0
    %3281 = vmatprep.subr.bf16.mxu0 0
    %3282 = vmatpush1.bf16.msra.mxu0 %v848
    %3283 = vmatprep.subr.bf16.mxu0 0
    %3284 = vmatpush1.bf16.msra.mxu0 0
    %3285 = vmatprep.subr.bf16.mxu0 0
    %3286 = vmatpush1.bf16.msra.mxu0 0
    %3287 = vmatprep.subr.bf16.mxu0 0
    %3288 = vmatpush1.bf16.msra.mxu0 0
    %3289 = vmatprep.subr.bf16.mxu0 0
    %3290 = vmatpush1.bf16.msra.mxu0 0
    %3291 = vmatprep.subr.bf16.mxu0 0
    %3292 = vmatpush1.bf16.msra.mxu0 0
    %3293 = vmatprep.subr.bf16.mxu0 0
    %3294 = vmatpush1.bf16.msra.mxu0 0
    %3295 = vmatprep.subr.bf16.mxu0 0
    %3296 = vmatpush1.bf16.msra.mxu0 0
    %3297 = vmatprep.subr.bf16.mxu0 0
    %3298 = vmatpush1.bf16.msra.mxu0 0
    %3299 = vmatprep.subr.bf16.mxu0 0
    %3300 = vmatpush1.bf16.msra.mxu0 0
    %3301 = vmatprep.subr.bf16.mxu0 0
    %3302 = vmatpush1.bf16.msra.mxu0 0
    %3303 = vmatprep.subr.bf16.mxu0 0
    %3304 = vmatpush1.bf16.msra.mxu0 0
    %3305 = vmatprep.subr.bf16.mxu0 0
    %3306 = vmatpush1.bf16.msra.mxu0 0
    %3307 = vmatprep.subr.bf16.mxu0 0
    %3308 = vmatpush1.bf16.msra.mxu0 0
    %3309 = vmatprep.subr.bf16.mxu0 0
    %3310 = vmatpush1.bf16.msra.mxu0 0
    %3311 = vmatprep.subr.bf16.mxu0 0
    %3312 = vmatpush1.bf16.msra.mxu0 0
    %3313 = vmatprep.mubr.bf16.mxu0 0
    %3314 = vmatmul.mubr.bf16.gmra.mrb[0].mxu0 %v3279
    %v3315 = vpop.f32.mrb[0].mxu0
    %v3316 = vadd.f32 0.0, %v3315
    %v3317 = vpop.f32.mrb[0].mxu0
    %v3318 = vpop.f32.mrb[0].mxu0
    %v3319 = vpop.f32.mrb[0].mxu0
    %3320 = vdwg.mxu0
    %v3321 = vpack.c.bf16 %v3273, %v3273
    %v3322 = vpack.c.bf16 %v3316, %v3316
    %3323 = vmatprep.subr.bf16.mxu0 0
    %3324 = vmatpush1.bf16.msra.mxu0 %v924
    %3325 = vmatprep.subr.bf16.mxu0 0
    %3326 = vmatpush1.bf16.msra.mxu0 %v925
    %3327 = vmatprep.subr.bf16.mxu0 0
    %3328 = vmatpush1.bf16.msra.mxu0 %v926
    %3329 = vmatprep.subr.bf16.mxu0 0
    %3330 = vmatpush1.bf16.msra.mxu0 %v927
    %3331 = vmatprep.subr.bf16.mxu0 0
    %3332 = vmatpush1.bf16.msra.mxu0 %v928
    %3333 = vmatprep.subr.bf16.mxu0 0
    %3334 = vmatpush1.bf16.msra.mxu0 %v929
    %3335 = vmatprep.subr.bf16.mxu0 0
    %3336 = vmatpush1.bf16.msra.mxu0 %v930
    %3337 = vmatprep.subr.bf16.mxu0 0
    %3338 = vmatpush1.bf16.msra.mxu0 %v931
    %3339 = vmatprep.subr.bf16.mxu0 0
    %3340 = vmatpush1.bf16.msra.mxu0 0
    %3341 = vmatprep.subr.bf16.mxu0 0
    %3342 = vmatpush1.bf16.msra.mxu0 0
    %3343 = vmatprep.subr.bf16.mxu0 0
    %3344 = vmatpush1.bf16.msra.mxu0 0
    %3345 = vmatprep.subr.bf16.mxu0 0
    %3346 = vmatpush1.bf16.msra.mxu0 0
    %3347 = vmatprep.subr.bf16.mxu0 0
    %3348 = vmatpush1.bf16.msra.mxu0 0
    %3349 = vmatprep.subr.bf16.mxu0 0
    %3350 = vmatpush1.bf16.msra.mxu0 0
    %3351 = vmatprep.subr.bf16.mxu0 0
    %3352 = vmatpush1.bf16.msra.mxu0 0
    %3353 = vmatprep.subr.bf16.mxu0 0
    %3354 = vmatpush1.bf16.msra.mxu0 0
    %3355 = vmatprep.mubr.bf16.mxu0 0
    %3356 = vmatmul.mubr.bf16.gmra.mrb[0].mxu0 %v3090
    %v3357 = vpop.f32.mrb[0].mxu0
    %v3358 = vadd.f32 0.0, %v3357
    %v3359 = vpop.f32.mrb[0].mxu0
    %v3360 = vpop.f32.mrb[0].mxu0
    %v3361 = vpop.f32.mrb[0].mxu0
    %3362 = vdwg.mxu0
    %v3365 = vunpack.c.l.b16 %v3321
    %v3366 = vunpack.c.l.b16 %v3322
    %v3367 = vrot.slane %v3366, 7
    %v3368 = vsel %vm762, %v3367, %v3365
    %v3369 = vpack.c.b16 %v3368, %v3368
    %3371 = vmatprep.subr.bf16.mxu0 0
    %3372 = vmatpush1.bf16.msra.mxu0 %v1020
    %3373 = vmatprep.subr.bf16.mxu0 0
    %3374 = vmatpush1.bf16.msra.mxu0 %v1021
    %3375 = vmatprep.subr.bf16.mxu0 0
    %3376 = vmatpush1.bf16.msra.mxu0 %v1022
    %3377 = vmatprep.subr.bf16.mxu0 0
    %3378 = vmatpush1.bf16.msra.mxu0 %v1023
    %3379 = vmatprep.subr.bf16.mxu0 0
    %3380 = vmatpush1.bf16.msra.mxu0 %v1024
    %3381 = vmatprep.subr.bf16.mxu0 0
    %3382 = vmatpush1.bf16.msra.mxu0 %v1025
    %3383 = vmatprep.subr.bf16.mxu0 0
    %3384 = vmatpush1.bf16.msra.mxu0 %v1026
    %3385 = vmatprep.subr.bf16.mxu0 0
    %3386 = vmatpush1.bf16.msra.mxu0 %v1027
    %3387 = vmatprep.subr.bf16.mxu0 0
    %3388 = vmatpush1.bf16.msra.mxu0 0
    %3389 = vmatprep.subr.bf16.mxu0 0
    %3390 = vmatpush1.bf16.msra.mxu0 0
    %3391 = vmatprep.subr.bf16.mxu0 0
    %3392 = vmatpush1.bf16.msra.mxu0 0
    %3393 = vmatprep.subr.bf16.mxu0 0
    %3394 = vmatpush1.bf16.msra.mxu0 0
    %3395 = vmatprep.subr.bf16.mxu0 0
    %3396 = vmatpush1.bf16.msra.mxu0 0
    %3397 = vmatprep.subr.bf16.mxu0 0
    %3398 = vmatpush1.bf16.msra.mxu0 0
    %3399 = vmatprep.subr.bf16.mxu0 0
    %3400 = vmatpush1.bf16.msra.mxu0 0
    %3401 = vmatprep.subr.bf16.mxu0 0
    %3402 = vmatpush1.bf16.msra.mxu0 0
    %3403 = vmatprep.mubr.bf16.mxu0 0
    %3404 = vmatmul.mubr.bf16.gmra.mrb[0].mxu0 %v3369
    %v3405 = vpop.f32.mrb[0].mxu0
    %v3406 = vadd.f32 %v3358, %v3405
    %v3407 = vpop.f32.mrb[0].mxu0
    %v3408 = vpop.f32.mrb[0].mxu0
    %v3409 = vpop.f32.mrb[0].mxu0
    %3410 = vdwg.mxu0
    %v3411 = vadd.f32 %v3406, %v177
    %v3412 = vtanh.pop %v3411
    %v3413 = vpack.c.bf16 %v3412, %v3412
    %3414 = vmatprep.subr.bf16.mxu0 0
    %3415 = vmatpush1.bf16.msra.mxu0 %v1111
    %3416 = vmatprep.subr.bf16.mxu0 0
    %3417 = vmatpush1.bf16.msra.mxu0 %v1112
    %3418 = vmatprep.subr.bf16.mxu0 0
    %3419 = vmatpush1.bf16.msra.mxu0 %v1113
    %3420 = vmatprep.subr.bf16.mxu0 0
    %3421 = vmatpush1.bf16.msra.mxu0 %v1114
    %3422 = vmatprep.subr.bf16.mxu0 0
    %3423 = vmatpush1.bf16.msra.mxu0 %v1115
    %3424 = vmatprep.subr.bf16.mxu0 0
    %3425 = vmatpush1.bf16.msra.mxu0 %v1116
    %3426 = vmatprep.subr.bf16.mxu0 0
    %3427 = vmatpush1.bf16.msra.mxu0 %v1117
    %3428 = vmatprep.subr.bf16.mxu0 0
    %3429 = vmatpush1.bf16.msra.mxu0 %v1118
    %3430 = vmatprep.subr.bf16.mxu0 0
    %3431 = vmatpush1.bf16.msra.mxu0 0
    %3432 = vmatprep.subr.bf16.mxu0 0
    %3433 = vmatpush1.bf16.msra.mxu0 0
    %3434 = vmatprep.subr.bf16.mxu0 0
    %3435 = vmatpush1.bf16.msra.mxu0 0
    %3436 = vmatprep.subr.bf16.mxu0 0
    %3437 = vmatpush1.bf16.msra.mxu0 0
    %3438 = vmatprep.subr.bf16.mxu0 0
    %3439 = vmatpush1.bf16.msra.mxu0 0
    %3440 = vmatprep.subr.bf16.mxu0 0
    %3441 = vmatpush1.bf16.msra.mxu0 0
    %3442 = vmatprep.subr.bf16.mxu0 0
    %3443 = vmatpush1.bf16.msra.mxu0 0
    %3444 = vmatprep.subr.bf16.mxu0 0
    %3445 = vmatpush1.bf16.msra.mxu0 0
    %3446 = vmatprep.mubr.bf16.mxu0 0
    %3447 = vmatmul.mubr.bf16.gmra.mrb[0].mxu0 %v3413
    %v3448 = vpop.f32.mrb[0].mxu0
    %v3449 = vadd.f32 %v200, %v3448
    %v3450 = vpop.f32.mrb[0].mxu0
    %v3451 = vpop.f32.mrb[0].mxu0
    %v3452 = vpop.f32.mrb[0].mxu0
    %3453 = vdwg.mxu0
    %v3454 = vsel %vm206, %v3449, -1e+30
    %v3455 = vsel %vm1168, %v3454, -inf
    %3456 = vmax.xlane.f32.xlu0 %v3455
    %v3457 = vpop.xlane.xlu0 %3456
    %v3458 = vsub.f32 %v3454, %v3457
    %v3459 = vmul.f32 %v3458, 1.442695
    %v3460 = vpow.pop %v3459
    %v3461 = vsel %vm1168, %v3460, 0.0
    %3462 = vadd.xlane.f32.xlu0 %v3461
    %v3463 = vpop.xlane.xlu0 %3462
    %v3464 = vlog2.pop %v3463
    %v3465 = vmul.f32 %v3464, 0.6931472
    %v3466 = vadd.f32 %v3465, %v3457
    %v3467 = vsub.f32 %v3454, %v3466
    %s3468 = scalar_lea.vmem %s10, 8
    %3469 = vst [vmem:[%s3468] sm:$0x3] %v3467
    %v3472 = vrot.slane %v3232, 7
    %v3473 = vsel %vm762, %v3472, %v3231
    %s3475 = scalar_lea.vmem [#allocation2], 8
    %3476 = vst.msk [vmem:[%s3475] sm:$0x3] %vm765, %v3473
    %s3477 = scalar_lea.vmem %s0, 5
    %v3478 = vld [vmem:[%s3477] sm:$0x1]
    %3479 = vmatprep.subr.bf16.mxu0 %v290
    %3480 = vmatpush1.bf16.msra.mxu0 %v289
    %3481 = vmatprep.subr.bf16.mxu0 %v293
    %3482 = vmatpush1.bf16.msra.mxu0 %v292
    %3483 = vmatprep.subr.bf16.mxu0 %v296
    %3484 = vmatpush1.bf16.msra.mxu0 %v295
    %3485 = vmatprep.subr.bf16.mxu0 %v299
    %3486 = vmatpush1.bf16.msra.mxu0 %v298
    %3487 = vmatprep.subr.bf16.mxu0 %v302
    %3488 = vmatpush1.bf16.msra.mxu0 %v301
    %3489 = vmatprep.subr.bf16.mxu0 %v305
    %3490 = vmatpush1.bf16.msra.mxu0 %v304
    %3491 = vmatprep.subr.bf16.mxu0 %v308
    %3492 = vmatpush1.bf16.msra.mxu0 %v307
    %3493 = vmatprep.subr.bf16.mxu0 %v311
    %3494 = vmatpush1.bf16.msra.mxu0 %v310
    %3495 = vmatprep.subr.bf16.mxu0 0
    %3496 = vmatpush1.bf16.msra.mxu0 0
    %3497 = vmatprep.subr.bf16.mxu0 0
    %3498 = vmatpush1.bf16.msra.mxu0 0
    %3499 = vmatprep.subr.bf16.mxu0 0
    %3500 = vmatpush1.bf16.msra.mxu0 0
    %3501 = vmatprep.subr.bf16.mxu0 0
    %3502 = vmatpush1.bf16.msra.mxu0 0
    %3503 = vmatprep.subr.bf16.mxu0 0
    %3504 = vmatpush1.bf16.msra.mxu0 0
    %3505 = vmatprep.subr.bf16.mxu0 0
    %3506 = vmatpush1.bf16.msra.mxu0 0
    %3507 = vmatprep.subr.bf16.mxu0 0
    %3508 = vmatpush1.bf16.msra.mxu0 0
    %3509 = vmatprep.subr.bf16.mxu0 0
    %3510 = vmatpush1.bf16.msra.mxu0 0
    %3511 = vmatprep.mubr.bf16.mxu0 0
    %3512 = vmatmul.mubr.bf16.gmra.mrb[0].mxu0 %v3478
    %v3513 = vpop.f32.mrb[0].mxu0
    %v3514 = vadd.f32 %v109, %v3513
    %v3515 = vpop.f32.mrb[0].mxu0
    %v3516 = vadd.f32 %v113, %v3515
    %v3517 = vpop.f32.mrb[0].mxu0
    %v3518 = vpop.f32.mrb[0].mxu0
    %3519 = vdwg.mxu0
    %3520 = vmatprep.subr.bf16.mxu0 0
    %3521 = vmatpush1.bf16.msra.mxu0 %v291
    %3522 = vmatprep.subr.bf16.mxu0 0
    %3523 = vmatpush1.bf16.msra.mxu0 %v294
    %3524 = vmatprep.subr.bf16.mxu0 0
    %3525 = vmatpush1.bf16.msra.mxu0 %v297
    %3526 = vmatprep.subr.bf16.mxu0 0
    %3527 = vmatpush1.bf16.msra.mxu0 %v300
    %3528 = vmatprep.subr.bf16.mxu0 0
    %3529 = vmatpush1.bf16.msra.mxu0 %v303
    %3530 = vmatprep.subr.bf16.mxu0 0
    %3531 = vmatpush1.bf16.msra.mxu0 %v306
    %3532 = vmatprep.subr.bf16.mxu0 0
    %3533 = vmatpush1.bf16.msra.mxu0 %v309
    %3534 = vmatprep.subr.bf16.mxu0 0
    %3535 = vmatpush1.bf16.msra.mxu0 %v312
    %3536 = vmatprep.subr.bf16.mxu0 0
    %3537 = vmatpush1.bf16.msra.mxu0 0
    %3538 = vmatprep.subr.bf16.mxu0 0
    %3539 = vmatpush1.bf16.msra.mxu0 0
    %3540 = vmatprep.subr.bf16.mxu0 0
    %3541 = vmatpush1.bf16.msra.mxu0 0
    %3542 = vmatprep.subr.bf16.mxu0 0
    %3543 = vmatpush1.bf16.msra.mxu0 0
    %3544 = vmatprep.subr.bf16.mxu0 0
    %3545 = vmatpush1.bf16.msra.mxu0 0
    %3546 = vmatprep.subr.bf16.mxu0 0
    %3547 = vmatpush1.bf16.msra.mxu0 0
    %3548 = vmatprep.subr.bf16.mxu0 0
    %3549 = vmatpush1.bf16.msra.mxu0 0
    %3550 = vmatprep.subr.bf16.mxu0 0
    %3551 = vmatpush1.bf16.msra.mxu0 0
    %3552 = vmatprep.mubr.bf16.mxu0 0
    %3553 = vmatmul.mubr.bf16.gmra.mrb[0].mxu0 %v3478
    %v3554 = vpop.f32.mrb[0].mxu0
    %v3555 = vadd.f32 %v117, %v3554
    %v3556 = vpop.f32.mrb[0].mxu0
    %v3557 = vpop.f32.mrb[0].mxu0
    %v3558 = vpop.f32.mrb[0].mxu0
    %3559 = vdwg.mxu0
    %3560 = vmatprep.subr.bf16.mxu0 %v500
    %3561 = vmatpush1.bf16.msra.mxu0 %v499
    %3562 = vmatprep.subr.bf16.mxu0 %v503
    %3563 = vmatpush1.bf16.msra.mxu0 %v502
    %3564 = vmatprep.subr.bf16.mxu0 %v506
    %3565 = vmatpush1.bf16.msra.mxu0 %v505
    %3566 = vmatprep.subr.bf16.mxu0 %v509
    %3567 = vmatpush1.bf16.msra.mxu0 %v508
    %3568 = vmatprep.subr.bf16.mxu0 %v512
    %3569 = vmatpush1.bf16.msra.mxu0 %v511
    %3570 = vmatprep.subr.bf16.mxu0 %v515
    %3571 = vmatpush1.bf16.msra.mxu0 %v514
    %3572 = vmatprep.subr.bf16.mxu0 %v518
    %3573 = vmatpush1.bf16.msra.mxu0 %v517
    %3574 = vmatprep.subr.bf16.mxu0 %v521
    %3575 = vmatpush1.bf16.msra.mxu0 %v520
    %3576 = vmatprep.subr.bf16.mxu0 0
    %3577 = vmatpush1.bf16.msra.mxu0 0
    %3578 = vmatprep.subr.bf16.mxu0 0
    %3579 = vmatpush1.bf16.msra.mxu0 0
    %3580 = vmatprep.subr.bf16.mxu0 0
    %3581 = vmatpush1.bf16.msra.mxu0 0
    %3582 = vmatprep.subr.bf16.mxu0 0
    %3583 = vmatpush1.bf16.msra.mxu0 0
    %3584 = vmatprep.subr.bf16.mxu0 0
    %3585 = vmatpush1.bf16.msra.mxu0 0
    %3586 = vmatprep.subr.bf16.mxu0 0
    %3587 = vmatpush1.bf16.msra.mxu0 0
    %3588 = vmatprep.subr.bf16.mxu0 0
    %3589 = vmatpush1.bf16.msra.mxu0 0
    %3590 = vmatprep.subr.bf16.mxu0 0
    %3591 = vmatpush1.bf16.msra.mxu0 0
    %3592 = vmatprep.mubr.bf16.mxu0 0
    %3593 = vmatmul.mubr.bf16.gmra.mrb[0].mxu0 %v3090
    %v3594 = vpop.f32.mrb[0].mxu0
    %v3595 = vadd.f32 %v127, %v3594
    %v3596 = vpop.f32.mrb[0].mxu0
    %v3597 = vadd.f32 %v131, %v3596
    %v3598 = vpop.f32.mrb[0].mxu0
    %v3599 = vpop.f32.mrb[0].mxu0
    %3600 = vdwg.mxu0
    %3601 = vmatprep.subr.bf16.mxu0 0
    %3602 = vmatpush1.bf16.msra.mxu0 %v501
    %3603 = vmatprep.subr.bf16.mxu0 0
    %3604 = vmatpush1.bf16.msra.mxu0 %v504
    %3605 = vmatprep.subr.bf16.mxu0 0
    %3606 = vmatpush1.bf16.msra.mxu0 %v507
    %3607 = vmatprep.subr.bf16.mxu0 0
    %3608 = vmatpush1.bf16.msra.mxu0 %v510
    %3609 = vmatprep.subr.bf16.mxu0 0
    %3610 = vmatpush1.bf16.msra.mxu0 %v513
    %3611 = vmatprep.subr.bf16.mxu0 0
    %3612 = vmatpush1.bf16.msra.mxu0 %v516
    %3613 = vmatprep.subr.bf16.mxu0 0
    %3614 = vmatpush1.bf16.msra.mxu0 %v519
    %3615 = vmatprep.subr.bf16.mxu0 0
    %3616 = vmatpush1.bf16.msra.mxu0 %v522
    %3617 = vmatprep.subr.bf16.mxu0 0
    %3618 = vmatpush1.bf16.msra.mxu0 0
    %3619 = vmatprep.subr.bf16.mxu0 0
    %3620 = vmatpush1.bf16.msra.mxu0 0
    %3621 = vmatprep.subr.bf16.mxu0 0
    %3622 = vmatpush1.bf16.msra.mxu0 0
    %3623 = vmatprep.subr.bf16.mxu0 0
    %3624 = vmatpush1.bf16.msra.mxu0 0
    %3625 = vmatprep.subr.bf16.mxu0 0
    %3626 = vmatpush1.bf16.msra.mxu0 0
    %3627 = vmatprep.subr.bf16.mxu0 0
    %3628 = vmatpush1.bf16.msra.mxu0 0
    %3629 = vmatprep.subr.bf16.mxu0 0
    %3630 = vmatpush1.bf16.msra.mxu0 0
    %3631 = vmatprep.subr.bf16.mxu0 0
    %3632 = vmatpush1.bf16.msra.mxu0 0
    %3633 = vmatprep.mubr.bf16.mxu0 0
    %3634 = vmatmul.mubr.bf16.gmra.mrb[0].mxu0 %v3090
    %v3635 = vpop.f32.mrb[0].mxu0
    %v3636 = vadd.f32 %v135, %v3635
    %v3637 = vpop.f32.mrb[0].mxu0
    %v3638 = vpop.f32.mrb[0].mxu0
    %v3639 = vpop.f32.mrb[0].mxu0
    %3640 = vdwg.mxu0
    %v3641 = vadd.f32 %v3514, %v3595
    %v3642 = vxor.u32 %v3641, 2147483648
    %v3643 = vmul.f32 %v3642, 1.442695
    %v3644 = vpow.pop %v3643
    %v3645 = vadd.f32 %v3644, 1.0
    %v3646 = vrcp.pop %v3645
    %v3647 = vmul.f32 1.0, %v3646
    %v3648 = vadd.f32 %v3516, %v3597
    %v3649 = vxor.u32 %v3648, 2147483648
    %v3650 = vmul.f32 %v3649, 1.442695
    %v3651 = vpow.pop %v3650
    %v3652 = vadd.f32 %v3651, 1.0
    %v3653 = vrcp.pop %v3652
    %v3654 = vmul.f32 1.0, %v3653
    %v3655 = vmul.f32 %v3647, %v3636
    %v3656 = vadd.f32 %v3555, %v3655
    %v3657 = vtanh.pop %v3656
    %v3658 = vsub.f32 1.0, %v3654
    %v3659 = vmul.f32 %v3658, %v3657
    %v3660 = vmul.f32 %v3654, %v3089
    %v3661 = vadd.f32 %v3659, %v3660
    %v3662 = vpack.c.bf16 %v3661, %v3661
    %v3665 = vunpack.c.l.s4 1966171168
    %v3666 = vunpack.c.0.s8 %v3665
    %v3667 = vlaneseq
    %v3668 = vshrl.u32 %v3667, 7
    %v3669 = vsub.s32 %v3666, %v3668
    %v3670 = vrot.slane %v3662, %v3669
    %v3672 = vunpack.c.l.s4 1966171168
    %v3673 = vunpack.c.0.s8 %v3672
    %v3674 = vlaneseq
    %v3675 = vshrl.u32 %v3674, 7
    %v3676 = vsub.s32 %v3673, %v3675
    %v3677 = vrot.slane %v3670, %v3676
    %v3678 = vunpack.i.l.s16 %v3677
    %v3679 = vunpack.i.h.s16 %v3677
    %v3680 = vpack.i.b16 %v3678, %v3678
    %v3681 = vlaneseq
    %v3682 = vshrl.u32 %v3681, 7
    %v3683 = vsub.s32 0, %v3682
    %v3684 = vrot.slane %v3680, %v3683
    %3686 = vmatprep.subr.bf16.mxu0 0
    %3687 = vmatpush1.bf16.xpose.msra.mxu0 %v202
    %3688 = vmatprep.subr.bf16.mxu0 0
    %3689 = vmatpush1.bf16.xpose.msra.mxu0 0
    %3690 = vmatprep.subr.bf16.mxu0 0
    %3691 = vmatpush1.bf16.xpose.msra.mxu0 0
    %3692 = vmatprep.subr.bf16.mxu0 0
    %3693 = vmatpush1.bf16.xpose.msra.mxu0 0
    %3694 = vmatprep.subr.bf16.mxu0 0
    %3695 = vmatpush1.bf16.xpose.msra.mxu0 0
    %3696 = vmatprep.subr.bf16.mxu0 0
    %3697 = vmatpush1.bf16.xpose.msra.mxu0 0
    %3698 = vmatprep.subr.bf16.mxu0 0
    %3699 = vmatpush1.bf16.xpose.msra.mxu0 0
    %3700 = vmatprep.subr.bf16.mxu0 0
    %3701 = vmatpush1.bf16.xpose.msra.mxu0 0
    %3702 = vmatprep.subr.bf16.mxu0 0
    %3703 = vmatpush1.bf16.xpose.msra.mxu0 0
    %3704 = vmatprep.subr.bf16.mxu0 0
    %3705 = vmatpush1.bf16.xpose.msra.mxu0 0
    %3706 = vmatprep.subr.bf16.mxu0 0
    %3707 = vmatpush1.bf16.xpose.msra.mxu0 0
    %3708 = vmatprep.subr.bf16.mxu0 0
    %3709 = vmatpush1.bf16.xpose.msra.mxu0 0
    %3710 = vmatprep.subr.bf16.mxu0 0
    %3711 = vmatpush1.bf16.xpose.msra.mxu0 0
    %3712 = vmatprep.subr.bf16.mxu0 0
    %3713 = vmatpush1.bf16.xpose.msra.mxu0 0
    %3714 = vmatprep.subr.bf16.mxu0 0
    %3715 = vmatpush1.bf16.xpose.msra.mxu0 0
    %3716 = vmatprep.subr.bf16.mxu0 0
    %3717 = vmatpush1.bf16.xpose.msra.mxu0 0
    %3718 = vmatprep.mubr.bf16.mxu0 0
    %3719 = vmatmul.mubr.bf16.gmra.mrb[0].mxu0 %v3684
    %v3720 = vpop.f32.mrb[0].mxu0
    %v3721 = vadd.f32 0.0, %v3720
    %v3722 = vpop.f32.mrb[0].mxu0
    %v3723 = vpop.f32.mrb[0].mxu0
    %v3724 = vpop.f32.mrb[0].mxu0
    %3725 = vdwg.mxu0
    %v3726 = vpack.i.b16 %v3679, %v3679
    %v3727 = vlaneseq
    %v3728 = vshrl.u32 %v3727, 7
    %v3729 = vsub.s32 0, %v3728
    %v3730 = vrot.slane %v3726, %v3729
    %3732 = vmatprep.subr.bf16.mxu0 0
    %3733 = vmatpush1.bf16.xpose.msra.mxu0 %v203
    %3734 = vmatprep.subr.bf16.mxu0 0
    %3735 = vmatpush1.bf16.xpose.msra.mxu0 0
    %3736 = vmatprep.subr.bf16.mxu0 0
    %3737 = vmatpush1.bf16.xpose.msra.mxu0 0
    %3738 = vmatprep.subr.bf16.mxu0 0
    %3739 = vmatpush1.bf16.xpose.msra.mxu0 0
    %3740 = vmatprep.subr.bf16.mxu0 0
    %3741 = vmatpush1.bf16.xpose.msra.mxu0 0
    %3742 = vmatprep.subr.bf16.mxu0 0
    %3743 = vmatpush1.bf16.xpose.msra.mxu0 0
    %3744 = vmatprep.subr.bf16.mxu0 0
    %3745 = vmatpush1.bf16.xpose.msra.mxu0 0
    %3746 = vmatprep.subr.bf16.mxu0 0
    %3747 = vmatpush1.bf16.xpose.msra.mxu0 0
    %3748 = vmatprep.subr.bf16.mxu0 0
    %3749 = vmatpush1.bf16.xpose.msra.mxu0 0
    %3750 = vmatprep.subr.bf16.mxu0 0
    %3751 = vmatpush1.bf16.xpose.msra.mxu0 0
    %3752 = vmatprep.subr.bf16.mxu0 0
    %3753 = vmatpush1.bf16.xpose.msra.mxu0 0
    %3754 = vmatprep.subr.bf16.mxu0 0
    %3755 = vmatpush1.bf16.xpose.msra.mxu0 0
    %3756 = vmatprep.subr.bf16.mxu0 0
    %3757 = vmatpush1.bf16.xpose.msra.mxu0 0
    %3758 = vmatprep.subr.bf16.mxu0 0
    %3759 = vmatpush1.bf16.xpose.msra.mxu0 0
    %3760 = vmatprep.subr.bf16.mxu0 0
    %3761 = vmatpush1.bf16.xpose.msra.mxu0 0
    %3762 = vmatprep.subr.bf16.mxu0 0
    %3763 = vmatpush1.bf16.xpose.msra.mxu0 0
    %3764 = vmatprep.mubr.bf16.mxu0 0
    %3765 = vmatmul.mubr.bf16.gmra.mrb[0].mxu0 %v3730
    %v3766 = vpop.f32.mrb[0].mxu0
    %v3767 = vadd.f32 0.0, %v3766
    %v3768 = vpop.f32.mrb[0].mxu0
    %v3769 = vpop.f32.mrb[0].mxu0
    %v3770 = vpop.f32.mrb[0].mxu0
    %3771 = vdwg.mxu0
    %v3774 = vrot.slane %v3767, 7
    %v3775 = vsel %vm762, %v3774, %v3721
    %v3777 = vsel %vm765, %v3775, -inf
    %3778 = vmax.xlane.f32.xlu0 %v3777
    %v3779 = vpop.xlane.xlu0 %3778
    %v3781 = vrot.slane %v3779, 1
    %v3784 = vsub.f32 %v3721, %v3779
    %v3785 = vsub.f32 %v3767, %v3781
    %v3786 = vmul.f32 %v3784, 1.442695
    %v3787 = vpow.pop %v3786
    %v3788 = vmul.f32 %v3785, 1.442695
    %v3789 = vpow.pop %v3788
    %v3792 = vrot.slane %v3789, 7
    %v3793 = vsel %vm762, %v3792, %v3787
    %v3795 = vsel %vm765, %v3793, 0.0
    %3796 = vadd.xlane.f32.xlu0 %v3795
    %v3797 = vpop.xlane.xlu0 %3796
    %v3798 = vrcp.pop %v3797
    %v3800 = vrot.slane %v3798, 1
    %v3803 = vmul.f32 %v3787, %v3798
    %v3804 = vmul.f32 %v3789, %v3800
    %v3805 = vpack.c.bf16 %v3803, %v3803
    %v3806 = vpack.c.bf16 %v3804, %v3804
    %v3808 = vsel %vm796, %v3805, 0
    %3810 = vmatprep.subr.bf16.mxu0 0
    %3811 = vmatpush1.bf16.msra.mxu0 %v802
    %3812 = vmatprep.subr.bf16.mxu0 0
    %3813 = vmatpush1.bf16.msra.mxu0 0
    %3814 = vmatprep.subr.bf16.mxu0 0
    %3815 = vmatpush1.bf16.msra.mxu0 0
    %3816 = vmatprep.subr.bf16.mxu0 0
    %3817 = vmatpush1.bf16.msra.mxu0 0
    %3818 = vmatprep.subr.bf16.mxu0 0
    %3819 = vmatpush1.bf16.msra.mxu0 0
    %3820 = vmatprep.subr.bf16.mxu0 0
    %3821 = vmatpush1.bf16.msra.mxu0 0
    %3822 = vmatprep.subr.bf16.mxu0 0
    %3823 = vmatpush1.bf16.msra.mxu0 0
    %3824 = vmatprep.subr.bf16.mxu0 0
    %3825 = vmatpush1.bf16.msra.mxu0 0
    %3826 = vmatprep.subr.bf16.mxu0 0
    %3827 = vmatpush1.bf16.msra.mxu0 0
    %3828 = vmatprep.subr.bf16.mxu0 0
    %3829 = vmatpush1.bf16.msra.mxu0 0
    %3830 = vmatprep.subr.bf16.mxu0 0
    %3831 = vmatpush1.bf16.msra.mxu0 0
    %3832 = vmatprep.subr.bf16.mxu0 0
    %3833 = vmatpush1.bf16.msra.mxu0 0
    %3834 = vmatprep.subr.bf16.mxu0 0
    %3835 = vmatpush1.bf16.msra.mxu0 0
    %3836 = vmatprep.subr.bf16.mxu0 0
    %3837 = vmatpush1.bf16.msra.mxu0 0
    %3838 = vmatprep.subr.bf16.mxu0 0
    %3839 = vmatpush1.bf16.msra.mxu0 0
    %3840 = vmatprep.subr.bf16.mxu0 0
    %3841 = vmatpush1.bf16.msra.mxu0 0
    %3842 = vmatprep.mubr.bf16.mxu0 0
    %3843 = vmatmul.mubr.bf16.gmra.mrb[0].mxu0 %v3808
    %v3844 = vpop.f32.mrb[0].mxu0
    %v3845 = vadd.f32 0.0, %v3844
    %v3846 = vpop.f32.mrb[0].mxu0
    %v3847 = vpop.f32.mrb[0].mxu0
    %v3848 = vpop.f32.mrb[0].mxu0
    %3849 = vdwg.mxu0
    %v3851 = vsel %vm796, %v3806, 0
    %3853 = vmatprep.subr.bf16.mxu0 0
    %3854 = vmatpush1.bf16.msra.mxu0 %v848
    %3855 = vmatprep.subr.bf16.mxu0 0
    %3856 = vmatpush1.bf16.msra.mxu0 0
    %3857 = vmatprep.subr.bf16.mxu0 0
    %3858 = vmatpush1.bf16.msra.mxu0 0
    %3859 = vmatprep.subr.bf16.mxu0 0
    %3860 = vmatpush1.bf16.msra.mxu0 0
    %3861 = vmatprep.subr.bf16.mxu0 0
    %3862 = vmatpush1.bf16.msra.mxu0 0
    %3863 = vmatprep.subr.bf16.mxu0 0
    %3864 = vmatpush1.bf16.msra.mxu0 0
    %3865 = vmatprep.subr.bf16.mxu0 0
    %3866 = vmatpush1.bf16.msra.mxu0 0
    %3867 = vmatprep.subr.bf16.mxu0 0
    %3868 = vmatpush1.bf16.msra.mxu0 0
    %3869 = vmatprep.subr.bf16.mxu0 0
    %3870 = vmatpush1.bf16.msra.mxu0 0
    %3871 = vmatprep.subr.bf16.mxu0 0
    %3872 = vmatpush1.bf16.msra.mxu0 0
    %3873 = vmatprep.subr.bf16.mxu0 0
    %3874 = vmatpush1.bf16.msra.mxu0 0
    %3875 = vmatprep.subr.bf16.mxu0 0
    %3876 = vmatpush1.bf16.msra.mxu0 0
    %3877 = vmatprep.subr.bf16.mxu0 0
    %3878 = vmatpush1.bf16.msra.mxu0 0
    %3879 = vmatprep.subr.bf16.mxu0 0
    %3880 = vmatpush1.bf16.msra.mxu0 0
    %3881 = vmatprep.subr.bf16.mxu0 0
    %3882 = vmatpush1.bf16.msra.mxu0 0
    %3883 = vmatprep.subr.bf16.mxu0 0
    %3884 = vmatpush1.bf16.msra.mxu0 0
    %3885 = vmatprep.mubr.bf16.mxu0 0
    %3886 = vmatmul.mubr.bf16.gmra.mrb[0].mxu0 %v3851
    %v3887 = vpop.f32.mrb[0].mxu0
    %v3888 = vadd.f32 0.0, %v3887
    %v3889 = vpop.f32.mrb[0].mxu0
    %v3890 = vpop.f32.mrb[0].mxu0
    %v3891 = vpop.f32.mrb[0].mxu0
    %3892 = vdwg.mxu0
    %v3893 = vpack.c.bf16 %v3845, %v3845
    %v3894 = vpack.c.bf16 %v3888, %v3888
    %3895 = vmatprep.subr.bf16.mxu0 0
    %3896 = vmatpush1.bf16.msra.mxu0 %v924
    %3897 = vmatprep.subr.bf16.mxu0 0
    %3898 = vmatpush1.bf16.msra.mxu0 %v925
    %3899 = vmatprep.subr.bf16.mxu0 0
    %3900 = vmatpush1.bf16.msra.mxu0 %v926
    %3901 = vmatprep.subr.bf16.mxu0 0
    %3902 = vmatpush1.bf16.msra.mxu0 %v927
    %3903 = vmatprep.subr.bf16.mxu0 0
    %3904 = vmatpush1.bf16.msra.mxu0 %v928
    %3905 = vmatprep.subr.bf16.mxu0 0
    %3906 = vmatpush1.bf16.msra.mxu0 %v929
    %3907 = vmatprep.subr.bf16.mxu0 0
    %3908 = vmatpush1.bf16.msra.mxu0 %v930
    %3909 = vmatprep.subr.bf16.mxu0 0
    %3910 = vmatpush1.bf16.msra.mxu0 %v931
    %3911 = vmatprep.subr.bf16.mxu0 0
    %3912 = vmatpush1.bf16.msra.mxu0 0
    %3913 = vmatprep.subr.bf16.mxu0 0
    %3914 = vmatpush1.bf16.msra.mxu0 0
    %3915 = vmatprep.subr.bf16.mxu0 0
    %3916 = vmatpush1.bf16.msra.mxu0 0
    %3917 = vmatprep.subr.bf16.mxu0 0
    %3918 = vmatpush1.bf16.msra.mxu0 0
    %3919 = vmatprep.subr.bf16.mxu0 0
    %3920 = vmatpush1.bf16.msra.mxu0 0
    %3921 = vmatprep.subr.bf16.mxu0 0
    %3922 = vmatpush1.bf16.msra.mxu0 0
    %3923 = vmatprep.subr.bf16.mxu0 0
    %3924 = vmatpush1.bf16.msra.mxu0 0
    %3925 = vmatprep.subr.bf16.mxu0 0
    %3926 = vmatpush1.bf16.msra.mxu0 0
    %3927 = vmatprep.mubr.bf16.mxu0 0
    %3928 = vmatmul.mubr.bf16.gmra.mrb[0].mxu0 %v3662
    %v3929 = vpop.f32.mrb[0].mxu0
    %v3930 = vadd.f32 0.0, %v3929
    %v3931 = vpop.f32.mrb[0].mxu0
    %v3932 = vpop.f32.mrb[0].mxu0
    %v3933 = vpop.f32.mrb[0].mxu0
    %3934 = vdwg.mxu0
    %v3937 = vunpack.c.l.b16 %v3893
    %v3938 = vunpack.c.l.b16 %v3894
    %v3939 = vrot.slane %v3938, 7
    %v3940 = vsel %vm762, %v3939, %v3937
    %v3941 = vpack.c.b16 %v3940, %v3940
    %3943 = vmatprep.subr.bf16.mxu0 0
    %3944 = vmatpush1.bf16.msra.mxu0 %v1020
    %3945 = vmatprep.subr.bf16.mxu0 0
    %3946 = vmatpush1.bf16.msra.mxu0 %v1021
    %3947 = vmatprep.subr.bf16.mxu0 0
    %3948 = vmatpush1.bf16.msra.mxu0 %v1022
    %3949 = vmatprep.subr.bf16.mxu0 0
    %3950 = vmatpush1.bf16.msra.mxu0 %v1023
    %3951 = vmatprep.subr.bf16.mxu0 0
    %3952 = vmatpush1.bf16.msra.mxu0 %v1024
    %3953 = vmatprep.subr.bf16.mxu0 0
    %3954 = vmatpush1.bf16.msra.mxu0 %v1025
    %3955 = vmatprep.subr.bf16.mxu0 0
    %3956 = vmatpush1.bf16.msra.mxu0 %v1026
    %3957 = vmatprep.subr.bf16.mxu0 0
    %3958 = vmatpush1.bf16.msra.mxu0 %v1027
    %3959 = vmatprep.subr.bf16.mxu0 0
    %3960 = vmatpush1.bf16.msra.mxu0 0
    %3961 = vmatprep.subr.bf16.mxu0 0
    %3962 = vmatpush1.bf16.msra.mxu0 0
    %3963 = vmatprep.subr.bf16.mxu0 0
    %3964 = vmatpush1.bf16.msra.mxu0 0
    %3965 = vmatprep.subr.bf16.mxu0 0
    %3966 = vmatpush1.bf16.msra.mxu0 0
    %3967 = vmatprep.subr.bf16.mxu0 0
    %3968 = vmatpush1.bf16.msra.mxu0 0
    %3969 = vmatprep.subr.bf16.mxu0 0
    %3970 = vmatpush1.bf16.msra.mxu0 0
    %3971 = vmatprep.subr.bf16.mxu0 0
    %3972 = vmatpush1.bf16.msra.mxu0 0
    %3973 = vmatprep.subr.bf16.mxu0 0
    %3974 = vmatpush1.bf16.msra.mxu0 0
    %3975 = vmatprep.mubr.bf16.mxu0 0
    %3976 = vmatmul.mubr.bf16.gmra.mrb[0].mxu0 %v3941
    %v3977 = vpop.f32.mrb[0].mxu0
    %v3978 = vadd.f32 %v3930, %v3977
    %v3979 = vpop.f32.mrb[0].mxu0
    %v3980 = vpop.f32.mrb[0].mxu0
    %v3981 = vpop.f32.mrb[0].mxu0
    %3982 = vdwg.mxu0
    %v3983 = vadd.f32 %v3978, %v177
    %v3984 = vtanh.pop %v3983
    %v3985 = vpack.c.bf16 %v3984, %v3984
    %3986 = vmatprep.subr.bf16.mxu0 0
    %3987 = vmatpush1.bf16.msra.mxu0 %v1111
    %3988 = vmatprep.subr.bf16.mxu0 0
    %3989 = vmatpush1.bf16.msra.mxu0 %v1112
    %3990 = vmatprep.subr.bf16.mxu0 0
    %3991 = vmatpush1.bf16.msra.mxu0 %v1113
    %3992 = vmatprep.subr.bf16.mxu0 0
    %3993 = vmatpush1.bf16.msra.mxu0 %v1114
    %3994 = vmatprep.subr.bf16.mxu0 0
    %3995 = vmatpush1.bf16.msra.mxu0 %v1115
    %3996 = vmatprep.subr.bf16.mxu0 0
    %3997 = vmatpush1.bf16.msra.mxu0 %v1116
    %3998 = vmatprep.subr.bf16.mxu0 0
    %3999 = vmatpush1.bf16.msra.mxu0 %v1117
    %4000 = vmatprep.subr.bf16.mxu0 0
    %4001 = vmatpush1.bf16.msra.mxu0 %v1118
    %4002 = vmatprep.subr.bf16.mxu0 0
    %4003 = vmatpush1.bf16.msra.mxu0 0
    %4004 = vmatprep.subr.bf16.mxu0 0
    %4005 = vmatpush1.bf16.msra.mxu0 0
    %4006 = vmatprep.subr.bf16.mxu0 0
    %4007 = vmatpush1.bf16.msra.mxu0 0
    %4008 = vmatprep.subr.bf16.mxu0 0
    %4009 = vmatpush1.bf16.msra.mxu0 0
    %4010 = vmatprep.subr.bf16.mxu0 0
    %4011 = vmatpush1.bf16.msra.mxu0 0
    %4012 = vmatprep.subr.bf16.mxu0 0
    %4013 = vmatpush1.bf16.msra.mxu0 0
    %4014 = vmatprep.subr.bf16.mxu0 0
    %4015 = vmatpush1.bf16.msra.mxu0 0
    %4016 = vmatprep.subr.bf16.mxu0 0
    %4017 = vmatpush1.bf16.msra.mxu0 0
    %4018 = vmatprep.mubr.bf16.mxu0 0
    %4019 = vmatmul.mubr.bf16.gmra.mrb[0].mxu0 %v3985
    %v4020 = vpop.f32.mrb[0].mxu0
    %v4021 = vadd.f32 %v200, %v4020
    %v4022 = vpop.f32.mrb[0].mxu0
    %v4023 = vpop.f32.mrb[0].mxu0
    %v4024 = vpop.f32.mrb[0].mxu0
    %4025 = vdwg.mxu0
    %v4026 = vsel %vm206, %v4021, -1e+30
    %v4027 = vsel %vm1168, %v4026, -inf
    %4028 = vmax.xlane.f32.xlu0 %v4027
    %v4029 = vpop.xlane.xlu0 %4028
    %v4030 = vsub.f32 %v4026, %v4029
    %v4031 = vmul.f32 %v4030, 1.442695
    %v4032 = vpow.pop %v4031
    %v4033 = vsel %vm1168, %v4032, 0.0
    %4034 = vadd.xlane.f32.xlu0 %v4033
    %v4035 = vpop.xlane.xlu0 %4034
    %v4036 = vlog2.pop %v4035
    %v4037 = vmul.f32 %v4036, 0.6931472
    %v4038 = vadd.f32 %v4037, %v4029
    %v4039 = vsub.f32 %v4026, %v4038
    %s4040 = scalar_lea.vmem %s10, 10
    %4041 = vst [vmem:[%s4040] sm:$0x3] %v4039
    %v4044 = vrot.slane %v3804, 7
    %v4045 = vsel %vm762, %v4044, %v3803
    %s4047 = scalar_lea.vmem [#allocation2], 10
    %4048 = vst.msk [vmem:[%s4047] sm:$0x3] %vm765, %v4045
    %s4049 = scalar_lea.vmem %s0, 6
    %v4050 = vld [vmem:[%s4049] sm:$0x1]
    %4051 = vmatprep.subr.bf16.mxu0 %v290
    %4052 = vmatpush1.bf16.msra.mxu0 %v289
    %4053 = vmatprep.subr.bf16.mxu0 %v293
    %4054 = vmatpush1.bf16.msra.mxu0 %v292
    %4055 = vmatprep.subr.bf16.mxu0 %v296
    %4056 = vmatpush1.bf16.msra.mxu0 %v295
    %4057 = vmatprep.subr.bf16.mxu0 %v299
    %4058 = vmatpush1.bf16.msra.mxu0 %v298
    %4059 = vmatprep.subr.bf16.mxu0 %v302
    %4060 = vmatpush1.bf16.msra.mxu0 %v301
    %4061 = vmatprep.subr.bf16.mxu0 %v305
    %4062 = vmatpush1.bf16.msra.mxu0 %v304
    %4063 = vmatprep.subr.bf16.mxu0 %v308
    %4064 = vmatpush1.bf16.msra.mxu0 %v307
    %4065 = vmatprep.subr.bf16.mxu0 %v311
    %4066 = vmatpush1.bf16.msra.mxu0 %v310
    %4067 = vmatprep.subr.bf16.mxu0 0
    %4068 = vmatpush1.bf16.msra.mxu0 0
    %4069 = vmatprep.subr.bf16.mxu0 0
    %4070 = vmatpush1.bf16.msra.mxu0 0
    %4071 = vmatprep.subr.bf16.mxu0 0
    %4072 = vmatpush1.bf16.msra.mxu0 0
    %4073 = vmatprep.subr.bf16.mxu0 0
    %4074 = vmatpush1.bf16.msra.mxu0 0
    %4075 = vmatprep.subr.bf16.mxu0 0
    %4076 = vmatpush1.bf16.msra.mxu0 0
    %4077 = vmatprep.subr.bf16.mxu0 0
    %4078 = vmatpush1.bf16.msra.mxu0 0
    %4079 = vmatprep.subr.bf16.mxu0 0
    %4080 = vmatpush1.bf16.msra.mxu0 0
    %4081 = vmatprep.subr.bf16.mxu0 0
    %4082 = vmatpush1.bf16.msra.mxu0 0
    %4083 = vmatprep.mubr.bf16.mxu0 0
    %4084 = vmatmul.mubr.bf16.gmra.mrb[0].mxu0 %v4050
    %v4085 = vpop.f32.mrb[0].mxu0
    %v4086 = vadd.f32 %v109, %v4085
    %v4087 = vpop.f32.mrb[0].mxu0
    %v4088 = vadd.f32 %v113, %v4087
    %v4089 = vpop.f32.mrb[0].mxu0
    %v4090 = vpop.f32.mrb[0].mxu0
    %4091 = vdwg.mxu0
    %4092 = vmatprep.subr.bf16.mxu0 0
    %4093 = vmatpush1.bf16.msra.mxu0 %v291
    %4094 = vmatprep.subr.bf16.mxu0 0
    %4095 = vmatpush1.bf16.msra.mxu0 %v294
    %4096 = vmatprep.subr.bf16.mxu0 0
    %4097 = vmatpush1.bf16.msra.mxu0 %v297
    %4098 = vmatprep.subr.bf16.mxu0 0
    %4099 = vmatpush1.bf16.msra.mxu0 %v300
    %4100 = vmatprep.subr.bf16.mxu0 0
    %4101 = vmatpush1.bf16.msra.mxu0 %v303
    %4102 = vmatprep.subr.bf16.mxu0 0
    %4103 = vmatpush1.bf16.msra.mxu0 %v306
    %4104 = vmatprep.subr.bf16.mxu0 0
    %4105 = vmatpush1.bf16.msra.mxu0 %v309
    %4106 = vmatprep.subr.bf16.mxu0 0
    %4107 = vmatpush1.bf16.msra.mxu0 %v312
    %4108 = vmatprep.subr.bf16.mxu0 0
    %4109 = vmatpush1.bf16.msra.mxu0 0
    %4110 = vmatprep.subr.bf16.mxu0 0
    %4111 = vmatpush1.bf16.msra.mxu0 0
    %4112 = vmatprep.subr.bf16.mxu0 0
    %4113 = vmatpush1.bf16.msra.mxu0 0
    %4114 = vmatprep.subr.bf16.mxu0 0
    %4115 = vmatpush1.bf16.msra.mxu0 0
    %4116 = vmatprep.subr.bf16.mxu0 0
    %4117 = vmatpush1.bf16.msra.mxu0 0
    %4118 = vmatprep.subr.bf16.mxu0 0
    %4119 = vmatpush1.bf16.msra.mxu0 0
    %4120 = vmatprep.subr.bf16.mxu0 0
    %4121 = vmatpush1.bf16.msra.mxu0 0
    %4122 = vmatprep.subr.bf16.mxu0 0
    %4123 = vmatpush1.bf16.msra.mxu0 0
    %4124 = vmatprep.mubr.bf16.mxu0 0
    %4125 = vmatmul.mubr.bf16.gmra.mrb[0].mxu0 %v4050
    %v4126 = vpop.f32.mrb[0].mxu0
    %v4127 = vadd.f32 %v117, %v4126
    %v4128 = vpop.f32.mrb[0].mxu0
    %v4129 = vpop.f32.mrb[0].mxu0
    %v4130 = vpop.f32.mrb[0].mxu0
    %4131 = vdwg.mxu0
    %4132 = vmatprep.subr.bf16.mxu0 %v500
    %4133 = vmatpush1.bf16.msra.mxu0 %v499
    %4134 = vmatprep.subr.bf16.mxu0 %v503
    %4135 = vmatpush1.bf16.msra.mxu0 %v502
    %4136 = vmatprep.subr.bf16.mxu0 %v506
    %4137 = vmatpush1.bf16.msra.mxu0 %v505
    %4138 = vmatprep.subr.bf16.mxu0 %v509
    %4139 = vmatpush1.bf16.msra.mxu0 %v508
    %4140 = vmatprep.subr.bf16.mxu0 %v512
    %4141 = vmatpush1.bf16.msra.mxu0 %v511
    %4142 = vmatprep.subr.bf16.mxu0 %v515
    %4143 = vmatpush1.bf16.msra.mxu0 %v514
    %4144 = vmatprep.subr.bf16.mxu0 %v518
    %4145 = vmatpush1.bf16.msra.mxu0 %v517
    %4146 = vmatprep.subr.bf16.mxu0 %v521
    %4147 = vmatpush1.bf16.msra.mxu0 %v520
    %4148 = vmatprep.subr.bf16.mxu0 0
    %4149 = vmatpush1.bf16.msra.mxu0 0
    %4150 = vmatprep.subr.bf16.mxu0 0
    %4151 = vmatpush1.bf16.msra.mxu0 0
    %4152 = vmatprep.subr.bf16.mxu0 0
    %4153 = vmatpush1.bf16.msra.mxu0 0
    %4154 = vmatprep.subr.bf16.mxu0 0
    %4155 = vmatpush1.bf16.msra.mxu0 0
    %4156 = vmatprep.subr.bf16.mxu0 0
    %4157 = vmatpush1.bf16.msra.mxu0 0
    %4158 = vmatprep.subr.bf16.mxu0 0
    %4159 = vmatpush1.bf16.msra.mxu0 0
    %4160 = vmatprep.subr.bf16.mxu0 0
    %4161 = vmatpush1.bf16.msra.mxu0 0
    %4162 = vmatprep.subr.bf16.mxu0 0
    %4163 = vmatpush1.bf16.msra.mxu0 0
    %4164 = vmatprep.mubr.bf16.mxu0 0
    %4165 = vmatmul.mubr.bf16.gmra.mrb[0].mxu0 %v3662
    %v4166 = vpop.f32.mrb[0].mxu0
    %v4167 = vadd.f32 %v127, %v4166
    %v4168 = vpop.f32.mrb[0].mxu0
    %v4169 = vadd.f32 %v131, %v4168
    %v4170 = vpop.f32.mrb[0].mxu0
    %v4171 = vpop.f32.mrb[0].mxu0
    %4172 = vdwg.mxu0
    %4173 = vmatprep.subr.bf16.mxu0 0
    %4174 = vmatpush1.bf16.msra.mxu0 %v501
    %4175 = vmatprep.subr.bf16.mxu0 0
    %4176 = vmatpush1.bf16.msra.mxu0 %v504
    %4177 = vmatprep.subr.bf16.mxu0 0
    %4178 = vmatpush1.bf16.msra.mxu0 %v507
    %4179 = vmatprep.subr.bf16.mxu0 0
    %4180 = vmatpush1.bf16.msra.mxu0 %v510
    %4181 = vmatprep.subr.bf16.mxu0 0
    %4182 = vmatpush1.bf16.msra.mxu0 %v513
    %4183 = vmatprep.subr.bf16.mxu0 0
    %4184 = vmatpush1.bf16.msra.mxu0 %v516
    %4185 = vmatprep.subr.bf16.mxu0 0
    %4186 = vmatpush1.bf16.msra.mxu0 %v519
    %4187 = vmatprep.subr.bf16.mxu0 0
    %4188 = vmatpush1.bf16.msra.mxu0 %v522
    %4189 = vmatprep.subr.bf16.mxu0 0
    %4190 = vmatpush1.bf16.msra.mxu0 0
    %4191 = vmatprep.subr.bf16.mxu0 0
    %4192 = vmatpush1.bf16.msra.mxu0 0
    %4193 = vmatprep.subr.bf16.mxu0 0
    %4194 = vmatpush1.bf16.msra.mxu0 0
    %4195 = vmatprep.subr.bf16.mxu0 0
    %4196 = vmatpush1.bf16.msra.mxu0 0
    %4197 = vmatprep.subr.bf16.mxu0 0
    %4198 = vmatpush1.bf16.msra.mxu0 0
    %4199 = vmatprep.subr.bf16.mxu0 0
    %4200 = vmatpush1.bf16.msra.mxu0 0
    %4201 = vmatprep.subr.bf16.mxu0 0
    %4202 = vmatpush1.bf16.msra.mxu0 0
    %4203 = vmatprep.subr.bf16.mxu0 0
    %4204 = vmatpush1.bf16.msra.mxu0 0
    %4205 = vmatprep.mubr.bf16.mxu0 0
    %4206 = vmatmul.mubr.bf16.gmra.mrb[0].mxu0 %v3662
    %v4207 = vpop.f32.mrb[0].mxu0
    %v4208 = vadd.f32 %v135, %v4207
    %v4209 = vpop.f32.mrb[0].mxu0
    %v4210 = vpop.f32.mrb[0].mxu0
    %v4211 = vpop.f32.mrb[0].mxu0
    %4212 = vdwg.mxu0
    %v4213 = vadd.f32 %v4086, %v4167
    %v4214 = vxor.u32 %v4213, 2147483648
    %v4215 = vmul.f32 %v4214, 1.442695
    %v4216 = vpow.pop %v4215
    %v4217 = vadd.f32 %v4216, 1.0
    %v4218 = vrcp.pop %v4217
    %v4219 = vmul.f32 1.0, %v4218
    %v4220 = vadd.f32 %v4088, %v4169
    %v4221 = vxor.u32 %v4220, 2147483648
    %v4222 = vmul.f32 %v4221, 1.442695
    %v4223 = vpow.pop %v4222
    %v4224 = vadd.f32 %v4223, 1.0
    %v4225 = vrcp.pop %v4224
    %v4226 = vmul.f32 1.0, %v4225
    %v4227 = vmul.f32 %v4219, %v4208
    %v4228 = vadd.f32 %v4127, %v4227
    %v4229 = vtanh.pop %v4228
    %v4230 = vsub.f32 1.0, %v4226
    %v4231 = vmul.f32 %v4230, %v4229
    %v4232 = vmul.f32 %v4226, %v3661
    %v4233 = vadd.f32 %v4231, %v4232
    %v4234 = vpack.c.bf16 %v4233, %v4233
    %v4237 = vunpack.c.l.s4 1966171168
    %v4238 = vunpack.c.0.s8 %v4237
    %v4239 = vlaneseq
    %v4240 = vshrl.u32 %v4239, 7
    %v4241 = vsub.s32 %v4238, %v4240
    %v4242 = vrot.slane %v4234, %v4241
    %v4244 = vunpack.c.l.s4 1966171168
    %v4245 = vunpack.c.0.s8 %v4244
    %v4246 = vlaneseq
    %v4247 = vshrl.u32 %v4246, 7
    %v4248 = vsub.s32 %v4245, %v4247
    %v4249 = vrot.slane %v4242, %v4248
    %v4250 = vunpack.i.l.s16 %v4249
    %v4251 = vunpack.i.h.s16 %v4249
    %v4252 = vpack.i.b16 %v4250, %v4250
    %v4253 = vlaneseq
    %v4254 = vshrl.u32 %v4253, 7
    %v4255 = vsub.s32 0, %v4254
    %v4256 = vrot.slane %v4252, %v4255
    %4258 = vmatprep.subr.bf16.mxu0 0
    %4259 = vmatpush1.bf16.xpose.msra.mxu0 %v202
    %4260 = vmatprep.subr.bf16.mxu0 0
    %4261 = vmatpush1.bf16.xpose.msra.mxu0 0
    %4262 = vmatprep.subr.bf16.mxu0 0
    %4263 = vmatpush1.bf16.xpose.msra.mxu0 0
    %4264 = vmatprep.subr.bf16.mxu0 0
    %4265 = vmatpush1.bf16.xpose.msra.mxu0 0
    %4266 = vmatprep.subr.bf16.mxu0 0
    %4267 = vmatpush1.bf16.xpose.msra.mxu0 0
    %4268 = vmatprep.subr.bf16.mxu0 0
    %4269 = vmatpush1.bf16.xpose.msra.mxu0 0
    %4270 = vmatprep.subr.bf16.mxu0 0
    %4271 = vmatpush1.bf16.xpose.msra.mxu0 0
    %4272 = vmatprep.subr.bf16.mxu0 0
    %4273 = vmatpush1.bf16.xpose.msra.mxu0 0
    %4274 = vmatprep.subr.bf16.mxu0 0
    %4275 = vmatpush1.bf16.xpose.msra.mxu0 0
    %4276 = vmatprep.subr.bf16.mxu0 0
    %4277 = vmatpush1.bf16.xpose.msra.mxu0 0
    %4278 = vmatprep.subr.bf16.mxu0 0
    %4279 = vmatpush1.bf16.xpose.msra.mxu0 0
    %4280 = vmatprep.subr.bf16.mxu0 0
    %4281 = vmatpush1.bf16.xpose.msra.mxu0 0
    %4282 = vmatprep.subr.bf16.mxu0 0
    %4283 = vmatpush1.bf16.xpose.msra.mxu0 0
    %4284 = vmatprep.subr.bf16.mxu0 0
    %4285 = vmatpush1.bf16.xpose.msra.mxu0 0
    %4286 = vmatprep.subr.bf16.mxu0 0
    %4287 = vmatpush1.bf16.xpose.msra.mxu0 0
    %4288 = vmatprep.subr.bf16.mxu0 0
    %4289 = vmatpush1.bf16.xpose.msra.mxu0 0
    %4290 = vmatprep.mubr.bf16.mxu0 0
    %4291 = vmatmul.mubr.bf16.gmra.mrb[0].mxu0 %v4256
    %v4292 = vpop.f32.mrb[0].mxu0
    %v4293 = vadd.f32 0.0, %v4292
    %v4294 = vpop.f32.mrb[0].mxu0
    %v4295 = vpop.f32.mrb[0].mxu0
    %v4296 = vpop.f32.mrb[0].mxu0
    %4297 = vdwg.mxu0
    %v4298 = vpack.i.b16 %v4251, %v4251
    %v4299 = vlaneseq
    %v4300 = vshrl.u32 %v4299, 7
    %v4301 = vsub.s32 0, %v4300
    %v4302 = vrot.slane %v4298, %v4301
    %4304 = vmatprep.subr.bf16.mxu0 0
    %4305 = vmatpush1.bf16.xpose.msra.mxu0 %v203
    %4306 = vmatprep.subr.bf16.mxu0 0
    %4307 = vmatpush1.bf16.xpose.msra.mxu0 0
    %4308 = vmatprep.subr.bf16.mxu0 0
    %4309 = vmatpush1.bf16.xpose.msra.mxu0 0
    %4310 = vmatprep.subr.bf16.mxu0 0
    %4311 = vmatpush1.bf16.xpose.msra.mxu0 0
    %4312 = vmatprep.subr.bf16.mxu0 0
    %4313 = vmatpush1.bf16.xpose.msra.mxu0 0
    %4314 = vmatprep.subr.bf16.mxu0 0
    %4315 = vmatpush1.bf16.xpose.msra.mxu0 0
    %4316 = vmatprep.subr.bf16.mxu0 0
    %4317 = vmatpush1.bf16.xpose.msra.mxu0 0
    %4318 = vmatprep.subr.bf16.mxu0 0
    %4319 = vmatpush1.bf16.xpose.msra.mxu0 0
    %4320 = vmatprep.subr.bf16.mxu0 0
    %4321 = vmatpush1.bf16.xpose.msra.mxu0 0
    %4322 = vmatprep.subr.bf16.mxu0 0
    %4323 = vmatpush1.bf16.xpose.msra.mxu0 0
    %4324 = vmatprep.subr.bf16.mxu0 0
    %4325 = vmatpush1.bf16.xpose.msra.mxu0 0
    %4326 = vmatprep.subr.bf16.mxu0 0
    %4327 = vmatpush1.bf16.xpose.msra.mxu0 0
    %4328 = vmatprep.subr.bf16.mxu0 0
    %4329 = vmatpush1.bf16.xpose.msra.mxu0 0
    %4330 = vmatprep.subr.bf16.mxu0 0
    %4331 = vmatpush1.bf16.xpose.msra.mxu0 0
    %4332 = vmatprep.subr.bf16.mxu0 0
    %4333 = vmatpush1.bf16.xpose.msra.mxu0 0
    %4334 = vmatprep.subr.bf16.mxu0 0
    %4335 = vmatpush1.bf16.xpose.msra.mxu0 0
    %4336 = vmatprep.mubr.bf16.mxu0 0
    %4337 = vmatmul.mubr.bf16.gmra.mrb[0].mxu0 %v4302
    %v4338 = vpop.f32.mrb[0].mxu0
    %v4339 = vadd.f32 0.0, %v4338
    %v4340 = vpop.f32.mrb[0].mxu0
    %v4341 = vpop.f32.mrb[0].mxu0
    %v4342 = vpop.f32.mrb[0].mxu0
    %4343 = vdwg.mxu0
    %v4346 = vrot.slane %v4339, 7
    %v4347 = vsel %vm762, %v4346, %v4293
    %v4349 = vsel %vm765, %v4347, -inf
    %4350 = vmax.xlane.f32.xlu0 %v4349
    %v4351 = vpop.xlane.xlu0 %4350
    %v4353 = vrot.slane %v4351, 1
    %v4356 = vsub.f32 %v4293, %v4351
    %v4357 = vsub.f32 %v4339, %v4353
    %v4358 = vmul.f32 %v4356, 1.442695
    %v4359 = vpow.pop %v4358
    %v4360 = vmul.f32 %v4357, 1.442695
    %v4361 = vpow.pop %v4360
    %v4364 = vrot.slane %v4361, 7
    %v4365 = vsel %vm762, %v4364, %v4359
    %v4367 = vsel %vm765, %v4365, 0.0
    %4368 = vadd.xlane.f32.xlu0 %v4367
    %v4369 = vpop.xlane.xlu0 %4368
    %v4370 = vrcp.pop %v4369
    %v4372 = vrot.slane %v4370, 1
    %v4375 = vmul.f32 %v4359, %v4370
    %v4376 = vmul.f32 %v4361, %v4372
    %v4377 = vpack.c.bf16 %v4375, %v4375
    %v4378 = vpack.c.bf16 %v4376, %v4376
    %v4380 = vsel %vm796, %v4377, 0
    %4382 = vmatprep.subr.bf16.mxu0 0
    %4383 = vmatpush1.bf16.msra.mxu0 %v802
    %4384 = vmatprep.subr.bf16.mxu0 0
    %4385 = vmatpush1.bf16.msra.mxu0 0
    %4386 = vmatprep.subr.bf16.mxu0 0
    %4387 = vmatpush1.bf16.msra.mxu0 0
    %4388 = vmatprep.subr.bf16.mxu0 0
    %4389 = vmatpush1.bf16.msra.mxu0 0
    %4390 = vmatprep.subr.bf16.mxu0 0
    %4391 = vmatpush1.bf16.msra.mxu0 0
    %4392 = vmatprep.subr.bf16.mxu0 0
    %4393 = vmatpush1.bf16.msra.mxu0 0
    %4394 = vmatprep.subr.bf16.mxu0 0
    %4395 = vmatpush1.bf16.msra.mxu0 0
    %4396 = vmatprep.subr.bf16.mxu0 0
    %4397 = vmatpush1.bf16.msra.mxu0 0
    %4398 = vmatprep.subr.bf16.mxu0 0
    %4399 = vmatpush1.bf16.msra.mxu0 0
    %4400 = vmatprep.subr.bf16.mxu0 0
    %4401 = vmatpush1.bf16.msra.mxu0 0
    %4402 = vmatprep.subr.bf16.mxu0 0
    %4403 = vmatpush1.bf16.msra.mxu0 0
    %4404 = vmatprep.subr.bf16.mxu0 0
    %4405 = vmatpush1.bf16.msra.mxu0 0
    %4406 = vmatprep.subr.bf16.mxu0 0
    %4407 = vmatpush1.bf16.msra.mxu0 0
    %4408 = vmatprep.subr.bf16.mxu0 0
    %4409 = vmatpush1.bf16.msra.mxu0 0
    %4410 = vmatprep.subr.bf16.mxu0 0
    %4411 = vmatpush1.bf16.msra.mxu0 0
    %4412 = vmatprep.subr.bf16.mxu0 0
    %4413 = vmatpush1.bf16.msra.mxu0 0
    %4414 = vmatprep.mubr.bf16.mxu0 0
    %4415 = vmatmul.mubr.bf16.gmra.mrb[0].mxu0 %v4380
    %v4416 = vpop.f32.mrb[0].mxu0
    %v4417 = vadd.f32 0.0, %v4416
    %v4418 = vpop.f32.mrb[0].mxu0
    %v4419 = vpop.f32.mrb[0].mxu0
    %v4420 = vpop.f32.mrb[0].mxu0
    %4421 = vdwg.mxu0
    %v4423 = vsel %vm796, %v4378, 0
    %4425 = vmatprep.subr.bf16.mxu0 0
    %4426 = vmatpush1.bf16.msra.mxu0 %v848
    %4427 = vmatprep.subr.bf16.mxu0 0
    %4428 = vmatpush1.bf16.msra.mxu0 0
    %4429 = vmatprep.subr.bf16.mxu0 0
    %4430 = vmatpush1.bf16.msra.mxu0 0
    %4431 = vmatprep.subr.bf16.mxu0 0
    %4432 = vmatpush1.bf16.msra.mxu0 0
    %4433 = vmatprep.subr.bf16.mxu0 0
    %4434 = vmatpush1.bf16.msra.mxu0 0
    %4435 = vmatprep.subr.bf16.mxu0 0
    %4436 = vmatpush1.bf16.msra.mxu0 0
    %4437 = vmatprep.subr.bf16.mxu0 0
    %4438 = vmatpush1.bf16.msra.mxu0 0
    %4439 = vmatprep.subr.bf16.mxu0 0
    %4440 = vmatpush1.bf16.msra.mxu0 0
    %4441 = vmatprep.subr.bf16.mxu0 0
    %4442 = vmatpush1.bf16.msra.mxu0 0
    %4443 = vmatprep.subr.bf16.mxu0 0
    %4444 = vmatpush1.bf16.msra.mxu0 0
    %4445 = vmatprep.subr.bf16.mxu0 0
    %4446 = vmatpush1.bf16.msra.mxu0 0
    %4447 = vmatprep.subr.bf16.mxu0 0
    %4448 = vmatpush1.bf16.msra.mxu0 0
    %4449 = vmatprep.subr.bf16.mxu0 0
    %4450 = vmatpush1.bf16.msra.mxu0 0
    %4451 = vmatprep.subr.bf16.mxu0 0
    %4452 = vmatpush1.bf16.msra.mxu0 0
    %4453 = vmatprep.subr.bf16.mxu0 0
    %4454 = vmatpush1.bf16.msra.mxu0 0
    %4455 = vmatprep.subr.bf16.mxu0 0
    %4456 = vmatpush1.bf16.msra.mxu0 0
    %4457 = vmatprep.mubr.bf16.mxu0 0
    %4458 = vmatmul.mubr.bf16.gmra.mrb[0].mxu0 %v4423
    %v4459 = vpop.f32.mrb[0].mxu0
    %v4460 = vadd.f32 0.0, %v4459
    %v4461 = vpop.f32.mrb[0].mxu0
    %v4462 = vpop.f32.mrb[0].mxu0
    %v4463 = vpop.f32.mrb[0].mxu0
    %4464 = vdwg.mxu0
    %v4465 = vpack.c.bf16 %v4417, %v4417
    %v4466 = vpack.c.bf16 %v4460, %v4460
    %4467 = vmatprep.subr.bf16.mxu0 0
    %4468 = vmatpush1.bf16.msra.mxu0 %v924
    %4469 = vmatprep.subr.bf16.mxu0 0
    %4470 = vmatpush1.bf16.msra.mxu0 %v925
    %4471 = vmatprep.subr.bf16.mxu0 0
    %4472 = vmatpush1.bf16.msra.mxu0 %v926
    %4473 = vmatprep.subr.bf16.mxu0 0
    %4474 = vmatpush1.bf16.msra.mxu0 %v927
    %4475 = vmatprep.subr.bf16.mxu0 0
    %4476 = vmatpush1.bf16.msra.mxu0 %v928
    %4477 = vmatprep.subr.bf16.mxu0 0
    %4478 = vmatpush1.bf16.msra.mxu0 %v929
    %4479 = vmatprep.subr.bf16.mxu0 0
    %4480 = vmatpush1.bf16.msra.mxu0 %v930
    %4481 = vmatprep.subr.bf16.mxu0 0
    %4482 = vmatpush1.bf16.msra.mxu0 %v931
    %4483 = vmatprep.subr.bf16.mxu0 0
    %4484 = vmatpush1.bf16.msra.mxu0 0
    %4485 = vmatprep.subr.bf16.mxu0 0
    %4486 = vmatpush1.bf16.msra.mxu0 0
    %4487 = vmatprep.subr.bf16.mxu0 0
    %4488 = vmatpush1.bf16.msra.mxu0 0
    %4489 = vmatprep.subr.bf16.mxu0 0
    %4490 = vmatpush1.bf16.msra.mxu0 0
    %4491 = vmatprep.subr.bf16.mxu0 0
    %4492 = vmatpush1.bf16.msra.mxu0 0
    %4493 = vmatprep.subr.bf16.mxu0 0
    %4494 = vmatpush1.bf16.msra.mxu0 0
    %4495 = vmatprep.subr.bf16.mxu0 0
    %4496 = vmatpush1.bf16.msra.mxu0 0
    %4497 = vmatprep.subr.bf16.mxu0 0
    %4498 = vmatpush1.bf16.msra.mxu0 0
    %4499 = vmatprep.mubr.bf16.mxu0 0
    %4500 = vmatmul.mubr.bf16.gmra.mrb[0].mxu0 %v4234
    %v4501 = vpop.f32.mrb[0].mxu0
    %v4502 = vadd.f32 0.0, %v4501
    %v4503 = vpop.f32.mrb[0].mxu0
    %v4504 = vpop.f32.mrb[0].mxu0
    %v4505 = vpop.f32.mrb[0].mxu0
    %4506 = vdwg.mxu0
    %v4509 = vunpack.c.l.b16 %v4465
    %v4510 = vunpack.c.l.b16 %v4466
    %v4511 = vrot.slane %v4510, 7
    %v4512 = vsel %vm762, %v4511, %v4509
    %v4513 = vpack.c.b16 %v4512, %v4512
    %4515 = vmatprep.subr.bf16.mxu0 0
    %4516 = vmatpush1.bf16.msra.mxu0 %v1020
    %4517 = vmatprep.subr.bf16.mxu0 0
    %4518 = vmatpush1.bf16.msra.mxu0 %v1021
    %4519 = vmatprep.subr.bf16.mxu0 0
    %4520 = vmatpush1.bf16.msra.mxu0 %v1022
    %4521 = vmatprep.subr.bf16.mxu0 0
    %4522 = vmatpush1.bf16.msra.mxu0 %v1023
    %4523 = vmatprep.subr.bf16.mxu0 0
    %4524 = vmatpush1.bf16.msra.mxu0 %v1024
    %4525 = vmatprep.subr.bf16.mxu0 0
    %4526 = vmatpush1.bf16.msra.mxu0 %v1025
    %4527 = vmatprep.subr.bf16.mxu0 0
    %4528 = vmatpush1.bf16.msra.mxu0 %v1026
    %4529 = vmatprep.subr.bf16.mxu0 0
    %4530 = vmatpush1.bf16.msra.mxu0 %v1027
    %4531 = vmatprep.subr.bf16.mxu0 0
    %4532 = vmatpush1.bf16.msra.mxu0 0
    %4533 = vmatprep.subr.bf16.mxu0 0
    %4534 = vmatpush1.bf16.msra.mxu0 0
    %4535 = vmatprep.subr.bf16.mxu0 0
    %4536 = vmatpush1.bf16.msra.mxu0 0
    %4537 = vmatprep.subr.bf16.mxu0 0
    %4538 = vmatpush1.bf16.msra.mxu0 0
    %4539 = vmatprep.subr.bf16.mxu0 0
    %4540 = vmatpush1.bf16.msra.mxu0 0
    %4541 = vmatprep.subr.bf16.mxu0 0
    %4542 = vmatpush1.bf16.msra.mxu0 0
    %4543 = vmatprep.subr.bf16.mxu0 0
    %4544 = vmatpush1.bf16.msra.mxu0 0
    %4545 = vmatprep.subr.bf16.mxu0 0
    %4546 = vmatpush1.bf16.msra.mxu0 0
    %4547 = vmatprep.mubr.bf16.mxu0 0
    %4548 = vmatmul.mubr.bf16.gmra.mrb[0].mxu0 %v4513
    %v4549 = vpop.f32.mrb[0].mxu0
    %v4550 = vadd.f32 %v4502, %v4549
    %v4551 = vpop.f32.mrb[0].mxu0
    %v4552 = vpop.f32.mrb[0].mxu0
    %v4553 = vpop.f32.mrb[0].mxu0
    %4554 = vdwg.mxu0
    %v4555 = vadd.f32 %v4550, %v177
    %v4556 = vtanh.pop %v4555
    %v4557 = vpack.c.bf16 %v4556, %v4556
    %4558 = vmatprep.subr.bf16.mxu0 0
    %4559 = vmatpush1.bf16.msra.mxu0 %v1111
    %4560 = vmatprep.subr.bf16.mxu0 0
    %4561 = vmatpush1.bf16.msra.mxu0 %v1112
    %4562 = vmatprep.subr.bf16.mxu0 0
    %4563 = vmatpush1.bf16.msra.mxu0 %v1113
    %4564 = vmatprep.subr.bf16.mxu0 0
    %4565 = vmatpush1.bf16.msra.mxu0 %v1114
    %4566 = vmatprep.subr.bf16.mxu0 0
    %4567 = vmatpush1.bf16.msra.mxu0 %v1115
    %4568 = vmatprep.subr.bf16.mxu0 0
    %4569 = vmatpush1.bf16.msra.mxu0 %v1116
    %4570 = vmatprep.subr.bf16.mxu0 0
    %4571 = vmatpush1.bf16.msra.mxu0 %v1117
    %4572 = vmatprep.subr.bf16.mxu0 0
    %4573 = vmatpush1.bf16.msra.mxu0 %v1118
    %4574 = vmatprep.subr.bf16.mxu0 0
    %4575 = vmatpush1.bf16.msra.mxu0 0
    %4576 = vmatprep.subr.bf16.mxu0 0
    %4577 = vmatpush1.bf16.msra.mxu0 0
    %4578 = vmatprep.subr.bf16.mxu0 0
    %4579 = vmatpush1.bf16.msra.mxu0 0
    %4580 = vmatprep.subr.bf16.mxu0 0
    %4581 = vmatpush1.bf16.msra.mxu0 0
    %4582 = vmatprep.subr.bf16.mxu0 0
    %4583 = vmatpush1.bf16.msra.mxu0 0
    %4584 = vmatprep.subr.bf16.mxu0 0
    %4585 = vmatpush1.bf16.msra.mxu0 0
    %4586 = vmatprep.subr.bf16.mxu0 0
    %4587 = vmatpush1.bf16.msra.mxu0 0
    %4588 = vmatprep.subr.bf16.mxu0 0
    %4589 = vmatpush1.bf16.msra.mxu0 0
    %4590 = vmatprep.mubr.bf16.mxu0 0
    %4591 = vmatmul.mubr.bf16.gmra.mrb[0].mxu0 %v4557
    %v4592 = vpop.f32.mrb[0].mxu0
    %v4593 = vadd.f32 %v200, %v4592
    %v4594 = vpop.f32.mrb[0].mxu0
    %v4595 = vpop.f32.mrb[0].mxu0
    %v4596 = vpop.f32.mrb[0].mxu0
    %4597 = vdwg.mxu0
    %v4598 = vsel %vm206, %v4593, -1e+30
    %v4599 = vsel %vm1168, %v4598, -inf
    %4600 = vmax.xlane.f32.xlu0 %v4599
    %v4601 = vpop.xlane.xlu0 %4600
    %v4602 = vsub.f32 %v4598, %v4601
    %v4603 = vmul.f32 %v4602, 1.442695
    %v4604 = vpow.pop %v4603
    %v4605 = vsel %vm1168, %v4604, 0.0
    %4606 = vadd.xlane.f32.xlu0 %v4605
    %v4607 = vpop.xlane.xlu0 %4606
    %v4608 = vlog2.pop %v4607
    %v4609 = vmul.f32 %v4608, 0.6931472
    %v4610 = vadd.f32 %v4609, %v4601
    %v4611 = vsub.f32 %v4598, %v4610
    %s4612 = scalar_lea.vmem %s10, 12
    %4613 = vst [vmem:[%s4612] sm:$0x3] %v4611
    %v4616 = vrot.slane %v4376, 7
    %v4617 = vsel %vm762, %v4616, %v4375
    %s4619 = scalar_lea.vmem [#allocation2], 12
    %4620 = vst.msk [vmem:[%s4619] sm:$0x3] %vm765, %v4617
    %s4621 = scalar_lea.vmem %s0, 7
    %v4622 = vld [vmem:[%s4621] sm:$0x1]
    %4623 = vmatprep.subr.bf16.mxu0 %v290
    %4624 = vmatpush1.bf16.msra.mxu0 %v289
    %4625 = vmatprep.subr.bf16.mxu0 %v293
    %4626 = vmatpush1.bf16.msra.mxu0 %v292
    %4627 = vmatprep.subr.bf16.mxu0 %v296
    %4628 = vmatpush1.bf16.msra.mxu0 %v295
    %4629 = vmatprep.subr.bf16.mxu0 %v299
    %4630 = vmatpush1.bf16.msra.mxu0 %v298
    %4631 = vmatprep.subr.bf16.mxu0 %v302
    %4632 = vmatpush1.bf16.msra.mxu0 %v301
    %4633 = vmatprep.subr.bf16.mxu0 %v305
    %4634 = vmatpush1.bf16.msra.mxu0 %v304
    %4635 = vmatprep.subr.bf16.mxu0 %v308
    %4636 = vmatpush1.bf16.msra.mxu0 %v307
    %4637 = vmatprep.subr.bf16.mxu0 %v311
    %4638 = vmatpush1.bf16.msra.mxu0 %v310
    %4639 = vmatprep.subr.bf16.mxu0 0
    %4640 = vmatpush1.bf16.msra.mxu0 0
    %4641 = vmatprep.subr.bf16.mxu0 0
    %4642 = vmatpush1.bf16.msra.mxu0 0
    %4643 = vmatprep.subr.bf16.mxu0 0
    %4644 = vmatpush1.bf16.msra.mxu0 0
    %4645 = vmatprep.subr.bf16.mxu0 0
    %4646 = vmatpush1.bf16.msra.mxu0 0
    %4647 = vmatprep.subr.bf16.mxu0 0
    %4648 = vmatpush1.bf16.msra.mxu0 0
    %4649 = vmatprep.subr.bf16.mxu0 0
    %4650 = vmatpush1.bf16.msra.mxu0 0
    %4651 = vmatprep.subr.bf16.mxu0 0
    %4652 = vmatpush1.bf16.msra.mxu0 0
    %4653 = vmatprep.subr.bf16.mxu0 0
    %4654 = vmatpush1.bf16.msra.mxu0 0
    %4655 = vmatprep.mubr.bf16.mxu0 0
    %4656 = vmatmul.mubr.bf16.gmra.mrb[0].mxu0 %v4622
    %v4657 = vpop.f32.mrb[0].mxu0
    %v4658 = vadd.f32 %v109, %v4657
    %v4659 = vpop.f32.mrb[0].mxu0
    %v4660 = vadd.f32 %v113, %v4659
    %v4661 = vpop.f32.mrb[0].mxu0
    %v4662 = vpop.f32.mrb[0].mxu0
    %4663 = vdwg.mxu0
    %4664 = vmatprep.subr.bf16.mxu0 0
    %4665 = vmatpush1.bf16.msra.mxu0 %v291
    %4666 = vmatprep.subr.bf16.mxu0 0
    %4667 = vmatpush1.bf16.msra.mxu0 %v294
    %4668 = vmatprep.subr.bf16.mxu0 0
    %4669 = vmatpush1.bf16.msra.mxu0 %v297
    %4670 = vmatprep.subr.bf16.mxu0 0
    %4671 = vmatpush1.bf16.msra.mxu0 %v300
    %4672 = vmatprep.subr.bf16.mxu0 0
    %4673 = vmatpush1.bf16.msra.mxu0 %v303
    %4674 = vmatprep.subr.bf16.mxu0 0
    %4675 = vmatpush1.bf16.msra.mxu0 %v306
    %4676 = vmatprep.subr.bf16.mxu0 0
    %4677 = vmatpush1.bf16.msra.mxu0 %v309
    %4678 = vmatprep.subr.bf16.mxu0 0
    %4679 = vmatpush1.bf16.msra.mxu0 %v312
    %4680 = vmatprep.subr.bf16.mxu0 0
    %4681 = vmatpush1.bf16.msra.mxu0 0
    %4682 = vmatprep.subr.bf16.mxu0 0
    %4683 = vmatpush1.bf16.msra.mxu0 0
    %4684 = vmatprep.subr.bf16.mxu0 0
    %4685 = vmatpush1.bf16.msra.mxu0 0
    %4686 = vmatprep.subr.bf16.mxu0 0
    %4687 = vmatpush1.bf16.msra.mxu0 0
    %4688 = vmatprep.subr.bf16.mxu0 0
    %4689 = vmatpush1.bf16.msra.mxu0 0
    %4690 = vmatprep.subr.bf16.mxu0 0
    %4691 = vmatpush1.bf16.msra.mxu0 0
    %4692 = vmatprep.subr.bf16.mxu0 0
    %4693 = vmatpush1.bf16.msra.mxu0 0
    %4694 = vmatprep.subr.bf16.mxu0 0
    %4695 = vmatpush1.bf16.msra.mxu0 0
    %4696 = vmatprep.mubr.bf16.mxu0 0
    %4697 = vmatmul.mubr.bf16.gmra.mrb[0].mxu0 %v4622
    %v4698 = vpop.f32.mrb[0].mxu0
    %v4699 = vadd.f32 %v117, %v4698
    %v4700 = vpop.f32.mrb[0].mxu0
    %v4701 = vpop.f32.mrb[0].mxu0
    %v4702 = vpop.f32.mrb[0].mxu0
    %4703 = vdwg.mxu0
    %4704 = vmatprep.subr.bf16.mxu0 %v500
    %4705 = vmatpush1.bf16.msra.mxu0 %v499
    %4706 = vmatprep.subr.bf16.mxu0 %v503
    %4707 = vmatpush1.bf16.msra.mxu0 %v502
    %4708 = vmatprep.subr.bf16.mxu0 %v506
    %4709 = vmatpush1.bf16.msra.mxu0 %v505
    %4710 = vmatprep.subr.bf16.mxu0 %v509
    %4711 = vmatpush1.bf16.msra.mxu0 %v508
    %4712 = vmatprep.subr.bf16.mxu0 %v512
    %4713 = vmatpush1.bf16.msra.mxu0 %v511
    %4714 = vmatprep.subr.bf16.mxu0 %v515
    %4715 = vmatpush1.bf16.msra.mxu0 %v514
    %4716 = vmatprep.subr.bf16.mxu0 %v518
    %4717 = vmatpush1.bf16.msra.mxu0 %v517
    %4718 = vmatprep.subr.bf16.mxu0 %v521
    %4719 = vmatpush1.bf16.msra.mxu0 %v520
    %4720 = vmatprep.subr.bf16.mxu0 0
    %4721 = vmatpush1.bf16.msra.mxu0 0
    %4722 = vmatprep.subr.bf16.mxu0 0
    %4723 = vmatpush1.bf16.msra.mxu0 0
    %4724 = vmatprep.subr.bf16.mxu0 0
    %4725 = vmatpush1.bf16.msra.mxu0 0
    %4726 = vmatprep.subr.bf16.mxu0 0
    %4727 = vmatpush1.bf16.msra.mxu0 0
    %4728 = vmatprep.subr.bf16.mxu0 0
    %4729 = vmatpush1.bf16.msra.mxu0 0
    %4730 = vmatprep.subr.bf16.mxu0 0
    %4731 = vmatpush1.bf16.msra.mxu0 0
    %4732 = vmatprep.subr.bf16.mxu0 0
    %4733 = vmatpush1.bf16.msra.mxu0 0
    %4734 = vmatprep.subr.bf16.mxu0 0
    %4735 = vmatpush1.bf16.msra.mxu0 0
    %4736 = vmatprep.mubr.bf16.mxu0 0
    %4737 = vmatmul.mubr.bf16.gmra.mrb[0].mxu0 %v4234
    %v4738 = vpop.f32.mrb[0].mxu0
    %v4739 = vadd.f32 %v127, %v4738
    %v4740 = vpop.f32.mrb[0].mxu0
    %v4741 = vadd.f32 %v131, %v4740
    %v4742 = vpop.f32.mrb[0].mxu0
    %v4743 = vpop.f32.mrb[0].mxu0
    %4744 = vdwg.mxu0
    %4745 = vmatprep.subr.bf16.mxu0 0
    %4746 = vmatpush1.bf16.msra.mxu0 %v501
    %4747 = vmatprep.subr.bf16.mxu0 0
    %4748 = vmatpush1.bf16.msra.mxu0 %v504
    %4749 = vmatprep.subr.bf16.mxu0 0
    %4750 = vmatpush1.bf16.msra.mxu0 %v507
    %4751 = vmatprep.subr.bf16.mxu0 0
    %4752 = vmatpush1.bf16.msra.mxu0 %v510
    %4753 = vmatprep.subr.bf16.mxu0 0
    %4754 = vmatpush1.bf16.msra.mxu0 %v513
    %4755 = vmatprep.subr.bf16.mxu0 0
    %4756 = vmatpush1.bf16.msra.mxu0 %v516
    %4757 = vmatprep.subr.bf16.mxu0 0
    %4758 = vmatpush1.bf16.msra.mxu0 %v519
    %4759 = vmatprep.subr.bf16.mxu0 0
    %4760 = vmatpush1.bf16.msra.mxu0 %v522
    %4761 = vmatprep.subr.bf16.mxu0 0
    %4762 = vmatpush1.bf16.msra.mxu0 0
    %4763 = vmatprep.subr.bf16.mxu0 0
    %4764 = vmatpush1.bf16.msra.mxu0 0
    %4765 = vmatprep.subr.bf16.mxu0 0
    %4766 = vmatpush1.bf16.msra.mxu0 0
    %4767 = vmatprep.subr.bf16.mxu0 0
    %4768 = vmatpush1.bf16.msra.mxu0 0
    %4769 = vmatprep.subr.bf16.mxu0 0
    %4770 = vmatpush1.bf16.msra.mxu0 0
    %4771 = vmatprep.subr.bf16.mxu0 0
    %4772 = vmatpush1.bf16.msra.mxu0 0
    %4773 = vmatprep.subr.bf16.mxu0 0
    %4774 = vmatpush1.bf16.msra.mxu0 0
    %4775 = vmatprep.subr.bf16.mxu0 0
    %4776 = vmatpush1.bf16.msra.mxu0 0
    %4777 = vmatprep.mubr.bf16.mxu0 0
    %4778 = vmatmul.mubr.bf16.gmra.mrb[0].mxu0 %v4234
    %v4779 = vpop.f32.mrb[0].mxu0
    %v4780 = vadd.f32 %v135, %v4779
    %v4781 = vpop.f32.mrb[0].mxu0
    %v4782 = vpop.f32.mrb[0].mxu0
    %v4783 = vpop.f32.mrb[0].mxu0
    %4784 = vdwg.mxu0
    %v4785 = vadd.f32 %v4658, %v4739
    %v4786 = vxor.u32 %v4785, 2147483648
    %v4787 = vmul.f32 %v4786, 1.442695
    %v4788 = vpow.pop %v4787
    %v4789 = vadd.f32 %v4788, 1.0
    %v4790 = vrcp.pop %v4789
    %v4791 = vmul.f32 1.0, %v4790
    %v4792 = vadd.f32 %v4660, %v4741
    %v4793 = vxor.u32 %v4792, 2147483648
    %v4794 = vmul.f32 %v4793, 1.442695
    %v4795 = vpow.pop %v4794
    %v4796 = vadd.f32 %v4795, 1.0
    %v4797 = vrcp.pop %v4796
    %v4798 = vmul.f32 1.0, %v4797
    %v4799 = vmul.f32 %v4791, %v4780
    %v4800 = vadd.f32 %v4699, %v4799
    %v4801 = vtanh.pop %v4800
    %v4802 = vsub.f32 1.0, %v4798
    %v4803 = vmul.f32 %v4802, %v4801
    %v4804 = vmul.f32 %v4798, %v4233
    %v4805 = vadd.f32 %v4803, %v4804
    %v4806 = vpack.c.bf16 %v4805, %v4805
    %v4809 = vunpack.c.l.s4 1966171168
    %v4810 = vunpack.c.0.s8 %v4809
    %v4811 = vlaneseq
    %v4812 = vshrl.u32 %v4811, 7
    %v4813 = vsub.s32 %v4810, %v4812
    %v4814 = vrot.slane %v4806, %v4813
    %v4816 = vunpack.c.l.s4 1966171168
    %v4817 = vunpack.c.0.s8 %v4816
    %v4818 = vlaneseq
    %v4819 = vshrl.u32 %v4818, 7
    %v4820 = vsub.s32 %v4817, %v4819
    %v4821 = vrot.slane %v4814, %v4820
    %v4822 = vunpack.i.l.s16 %v4821
    %v4823 = vunpack.i.h.s16 %v4821
    %v4824 = vpack.i.b16 %v4822, %v4822
    %v4825 = vlaneseq
    %v4826 = vshrl.u32 %v4825, 7
    %v4827 = vsub.s32 0, %v4826
    %v4828 = vrot.slane %v4824, %v4827
    %4830 = vmatprep.subr.bf16.mxu0 0
    %4831 = vmatpush1.bf16.xpose.msra.mxu0 %v202
    %4832 = vmatprep.subr.bf16.mxu0 0
    %4833 = vmatpush1.bf16.xpose.msra.mxu0 0
    %4834 = vmatprep.subr.bf16.mxu0 0
    %4835 = vmatpush1.bf16.xpose.msra.mxu0 0
    %4836 = vmatprep.subr.bf16.mxu0 0
    %4837 = vmatpush1.bf16.xpose.msra.mxu0 0
    %4838 = vmatprep.subr.bf16.mxu0 0
    %4839 = vmatpush1.bf16.xpose.msra.mxu0 0
    %4840 = vmatprep.subr.bf16.mxu0 0
    %4841 = vmatpush1.bf16.xpose.msra.mxu0 0
    %4842 = vmatprep.subr.bf16.mxu0 0
    %4843 = vmatpush1.bf16.xpose.msra.mxu0 0
    %4844 = vmatprep.subr.bf16.mxu0 0
    %4845 = vmatpush1.bf16.xpose.msra.mxu0 0
    %4846 = vmatprep.subr.bf16.mxu0 0
    %4847 = vmatpush1.bf16.xpose.msra.mxu0 0
    %4848 = vmatprep.subr.bf16.mxu0 0
    %4849 = vmatpush1.bf16.xpose.msra.mxu0 0
    %4850 = vmatprep.subr.bf16.mxu0 0
    %4851 = vmatpush1.bf16.xpose.msra.mxu0 0
    %4852 = vmatprep.subr.bf16.mxu0 0
    %4853 = vmatpush1.bf16.xpose.msra.mxu0 0
    %4854 = vmatprep.subr.bf16.mxu0 0
    %4855 = vmatpush1.bf16.xpose.msra.mxu0 0
    %4856 = vmatprep.subr.bf16.mxu0 0
    %4857 = vmatpush1.bf16.xpose.msra.mxu0 0
    %4858 = vmatprep.subr.bf16.mxu0 0
    %4859 = vmatpush1.bf16.xpose.msra.mxu0 0
    %4860 = vmatprep.subr.bf16.mxu0 0
    %4861 = vmatpush1.bf16.xpose.msra.mxu0 0
    %4862 = vmatprep.mubr.bf16.mxu0 0
    %4863 = vmatmul.mubr.bf16.gmra.mrb[0].mxu0 %v4828
    %v4864 = vpop.f32.mrb[0].mxu0
    %v4865 = vadd.f32 0.0, %v4864
    %v4866 = vpop.f32.mrb[0].mxu0
    %v4867 = vpop.f32.mrb[0].mxu0
    %v4868 = vpop.f32.mrb[0].mxu0
    %4869 = vdwg.mxu0
    %v4870 = vpack.i.b16 %v4823, %v4823
    %v4871 = vlaneseq
    %v4872 = vshrl.u32 %v4871, 7
    %v4873 = vsub.s32 0, %v4872
    %v4874 = vrot.slane %v4870, %v4873
    %4876 = vmatprep.subr.bf16.mxu0 0
    %4877 = vmatpush1.bf16.xpose.msra.mxu0 %v203
    %4878 = vmatprep.subr.bf16.mxu0 0
    %4879 = vmatpush1.bf16.xpose.msra.mxu0 0
    %4880 = vmatprep.subr.bf16.mxu0 0
    %4881 = vmatpush1.bf16.xpose.msra.mxu0 0
    %4882 = vmatprep.subr.bf16.mxu0 0
    %4883 = vmatpush1.bf16.xpose.msra.mxu0 0
    %4884 = vmatprep.subr.bf16.mxu0 0
    %4885 = vmatpush1.bf16.xpose.msra.mxu0 0
    %4886 = vmatprep.subr.bf16.mxu0 0
    %4887 = vmatpush1.bf16.xpose.msra.mxu0 0
    %4888 = vmatprep.subr.bf16.mxu0 0
    %4889 = vmatpush1.bf16.xpose.msra.mxu0 0
    %4890 = vmatprep.subr.bf16.mxu0 0
    %4891 = vmatpush1.bf16.xpose.msra.mxu0 0
    %4892 = vmatprep.subr.bf16.mxu0 0
    %4893 = vmatpush1.bf16.xpose.msra.mxu0 0
    %4894 = vmatprep.subr.bf16.mxu0 0
    %4895 = vmatpush1.bf16.xpose.msra.mxu0 0
    %4896 = vmatprep.subr.bf16.mxu0 0
    %4897 = vmatpush1.bf16.xpose.msra.mxu0 0
    %4898 = vmatprep.subr.bf16.mxu0 0
    %4899 = vmatpush1.bf16.xpose.msra.mxu0 0
    %4900 = vmatprep.subr.bf16.mxu0 0
    %4901 = vmatpush1.bf16.xpose.msra.mxu0 0
    %4902 = vmatprep.subr.bf16.mxu0 0
    %4903 = vmatpush1.bf16.xpose.msra.mxu0 0
    %4904 = vmatprep.subr.bf16.mxu0 0
    %4905 = vmatpush1.bf16.xpose.msra.mxu0 0
    %4906 = vmatprep.subr.bf16.mxu0 0
    %4907 = vmatpush1.bf16.xpose.msra.mxu0 0
    %4908 = vmatprep.mubr.bf16.mxu0 0
    %4909 = vmatmul.mubr.bf16.gmra.mrb[0].mxu0 %v4874
    %v4910 = vpop.f32.mrb[0].mxu0
    %v4911 = vadd.f32 0.0, %v4910
    %v4912 = vpop.f32.mrb[0].mxu0
    %v4913 = vpop.f32.mrb[0].mxu0
    %v4914 = vpop.f32.mrb[0].mxu0
    %4915 = vdwg.mxu0
    %v4918 = vrot.slane %v4911, 7
    %v4919 = vsel %vm762, %v4918, %v4865
    %v4921 = vsel %vm765, %v4919, -inf
    %4922 = vmax.xlane.f32.xlu0 %v4921
    %v4923 = vpop.xlane.xlu0 %4922
    %v4925 = vrot.slane %v4923, 1
    %v4928 = vsub.f32 %v4865, %v4923
    %v4929 = vsub.f32 %v4911, %v4925
    %v4930 = vmul.f32 %v4928, 1.442695
    %v4931 = vpow.pop %v4930
    %v4932 = vmul.f32 %v4929, 1.442695
    %v4933 = vpow.pop %v4932
    %v4936 = vrot.slane %v4933, 7
    %v4937 = vsel %vm762, %v4936, %v4931
    %v4939 = vsel %vm765, %v4937, 0.0
    %4940 = vadd.xlane.f32.xlu0 %v4939
    %v4941 = vpop.xlane.xlu0 %4940
    %v4942 = vrcp.pop %v4941
    %v4944 = vrot.slane %v4942, 1
    %v4947 = vmul.f32 %v4931, %v4942
    %v4948 = vmul.f32 %v4933, %v4944
    %v4949 = vpack.c.bf16 %v4947, %v4947
    %v4950 = vpack.c.bf16 %v4948, %v4948
    %v4952 = vsel %vm796, %v4949, 0
    %4954 = vmatprep.subr.bf16.mxu0 0
    %4955 = vmatpush1.bf16.msra.mxu0 %v802
    %4956 = vmatprep.subr.bf16.mxu0 0
    %4957 = vmatpush1.bf16.msra.mxu0 0
    %4958 = vmatprep.subr.bf16.mxu0 0
    %4959 = vmatpush1.bf16.msra.mxu0 0
    %4960 = vmatprep.subr.bf16.mxu0 0
    %4961 = vmatpush1.bf16.msra.mxu0 0
    %4962 = vmatprep.subr.bf16.mxu0 0
    %4963 = vmatpush1.bf16.msra.mxu0 0
    %4964 = vmatprep.subr.bf16.mxu0 0
    %4965 = vmatpush1.bf16.msra.mxu0 0
    %4966 = vmatprep.subr.bf16.mxu0 0
    %4967 = vmatpush1.bf16.msra.mxu0 0
    %4968 = vmatprep.subr.bf16.mxu0 0
    %4969 = vmatpush1.bf16.msra.mxu0 0
    %4970 = vmatprep.subr.bf16.mxu0 0
    %4971 = vmatpush1.bf16.msra.mxu0 0
    %4972 = vmatprep.subr.bf16.mxu0 0
    %4973 = vmatpush1.bf16.msra.mxu0 0
    %4974 = vmatprep.subr.bf16.mxu0 0
    %4975 = vmatpush1.bf16.msra.mxu0 0
    %4976 = vmatprep.subr.bf16.mxu0 0
    %4977 = vmatpush1.bf16.msra.mxu0 0
    %4978 = vmatprep.subr.bf16.mxu0 0
    %4979 = vmatpush1.bf16.msra.mxu0 0
    %4980 = vmatprep.subr.bf16.mxu0 0
    %4981 = vmatpush1.bf16.msra.mxu0 0
    %4982 = vmatprep.subr.bf16.mxu0 0
    %4983 = vmatpush1.bf16.msra.mxu0 0
    %4984 = vmatprep.subr.bf16.mxu0 0
    %4985 = vmatpush1.bf16.msra.mxu0 0
    %4986 = vmatprep.mubr.bf16.mxu0 0
    %4987 = vmatmul.mubr.bf16.gmra.mrb[0].mxu0 %v4952
    %v4988 = vpop.f32.mrb[0].mxu0
    %v4989 = vadd.f32 0.0, %v4988
    %v4990 = vpop.f32.mrb[0].mxu0
    %v4991 = vpop.f32.mrb[0].mxu0
    %v4992 = vpop.f32.mrb[0].mxu0
    %4993 = vdwg.mxu0
    %v4995 = vsel %vm796, %v4950, 0
    %4997 = vmatprep.subr.bf16.mxu0 0
    %4998 = vmatpush1.bf16.msra.mxu0 %v848
    %4999 = vmatprep.subr.bf16.mxu0 0
    %5000 = vmatpush1.bf16.msra.mxu0 0
    %5001 = vmatprep.subr.bf16.mxu0 0
    %5002 = vmatpush1.bf16.msra.mxu0 0
    %5003 = vmatprep.subr.bf16.mxu0 0
    %5004 = vmatpush1.bf16.msra.mxu0 0
    %5005 = vmatprep.subr.bf16.mxu0 0
    %5006 = vmatpush1.bf16.msra.mxu0 0
    %5007 = vmatprep.subr.bf16.mxu0 0
    %5008 = vmatpush1.bf16.msra.mxu0 0
    %5009 = vmatprep.subr.bf16.mxu0 0
    %5010 = vmatpush1.bf16.msra.mxu0 0
    %5011 = vmatprep.subr.bf16.mxu0 0
    %5012 = vmatpush1.bf16.msra.mxu0 0
    %5013 = vmatprep.subr.bf16.mxu0 0
    %5014 = vmatpush1.bf16.msra.mxu0 0
    %5015 = vmatprep.subr.bf16.mxu0 0
    %5016 = vmatpush1.bf16.msra.mxu0 0
    %5017 = vmatprep.subr.bf16.mxu0 0
    %5018 = vmatpush1.bf16.msra.mxu0 0
    %5019 = vmatprep.subr.bf16.mxu0 0
    %5020 = vmatpush1.bf16.msra.mxu0 0
    %5021 = vmatprep.subr.bf16.mxu0 0
    %5022 = vmatpush1.bf16.msra.mxu0 0
    %5023 = vmatprep.subr.bf16.mxu0 0
    %5024 = vmatpush1.bf16.msra.mxu0 0
    %5025 = vmatprep.subr.bf16.mxu0 0
    %5026 = vmatpush1.bf16.msra.mxu0 0
    %5027 = vmatprep.subr.bf16.mxu0 0
    %5028 = vmatpush1.bf16.msra.mxu0 0
    %5029 = vmatprep.mubr.bf16.mxu0 0
    %5030 = vmatmul.mubr.bf16.gmra.mrb[0].mxu0 %v4995
    %v5031 = vpop.f32.mrb[0].mxu0
    %v5032 = vadd.f32 0.0, %v5031
    %v5033 = vpop.f32.mrb[0].mxu0
    %v5034 = vpop.f32.mrb[0].mxu0
    %v5035 = vpop.f32.mrb[0].mxu0
    %5036 = vdwg.mxu0
    %v5037 = vpack.c.bf16 %v4989, %v4989
    %v5038 = vpack.c.bf16 %v5032, %v5032
    %5039 = vmatprep.subr.bf16.mxu0 0
    %5040 = vmatpush1.bf16.msra.mxu0 %v924
    %5041 = vmatprep.subr.bf16.mxu0 0
    %5042 = vmatpush1.bf16.msra.mxu0 %v925
    %5043 = vmatprep.subr.bf16.mxu0 0
    %5044 = vmatpush1.bf16.msra.mxu0 %v926
    %5045 = vmatprep.subr.bf16.mxu0 0
    %5046 = vmatpush1.bf16.msra.mxu0 %v927
    %5047 = vmatprep.subr.bf16.mxu0 0
    %5048 = vmatpush1.bf16.msra.mxu0 %v928
    %5049 = vmatprep.subr.bf16.mxu0 0
    %5050 = vmatpush1.bf16.msra.mxu0 %v929
    %5051 = vmatprep.subr.bf16.mxu0 0
    %5052 = vmatpush1.bf16.msra.mxu0 %v930
    %5053 = vmatprep.subr.bf16.mxu0 0
    %5054 = vmatpush1.bf16.msra.mxu0 %v931
    %5055 = vmatprep.subr.bf16.mxu0 0
    %5056 = vmatpush1.bf16.msra.mxu0 0
    %5057 = vmatprep.subr.bf16.mxu0 0
    %5058 = vmatpush1.bf16.msra.mxu0 0
    %5059 = vmatprep.subr.bf16.mxu0 0
    %5060 = vmatpush1.bf16.msra.mxu0 0
    %5061 = vmatprep.subr.bf16.mxu0 0
    %5062 = vmatpush1.bf16.msra.mxu0 0
    %5063 = vmatprep.subr.bf16.mxu0 0
    %5064 = vmatpush1.bf16.msra.mxu0 0
    %5065 = vmatprep.subr.bf16.mxu0 0
    %5066 = vmatpush1.bf16.msra.mxu0 0
    %5067 = vmatprep.subr.bf16.mxu0 0
    %5068 = vmatpush1.bf16.msra.mxu0 0
    %5069 = vmatprep.subr.bf16.mxu0 0
    %5070 = vmatpush1.bf16.msra.mxu0 0
    %5071 = vmatprep.mubr.bf16.mxu0 0
    %5072 = vmatmul.mubr.bf16.gmra.mrb[0].mxu0 %v4806
    %v5073 = vpop.f32.mrb[0].mxu0
    %v5074 = vadd.f32 0.0, %v5073
    %v5075 = vpop.f32.mrb[0].mxu0
    %v5076 = vpop.f32.mrb[0].mxu0
    %v5077 = vpop.f32.mrb[0].mxu0
    %5078 = vdwg.mxu0
    %v5081 = vunpack.c.l.b16 %v5037
    %v5082 = vunpack.c.l.b16 %v5038
    %v5083 = vrot.slane %v5082, 7
    %v5084 = vsel %vm762, %v5083, %v5081
    %v5085 = vpack.c.b16 %v5084, %v5084
    %5087 = vmatprep.subr.bf16.mxu0 0
    %5088 = vmatpush1.bf16.msra.mxu0 %v1020
    %5089 = vmatprep.subr.bf16.mxu0 0
    %5090 = vmatpush1.bf16.msra.mxu0 %v1021
    %5091 = vmatprep.subr.bf16.mxu0 0
    %5092 = vmatpush1.bf16.msra.mxu0 %v1022
    %5093 = vmatprep.subr.bf16.mxu0 0
    %5094 = vmatpush1.bf16.msra.mxu0 %v1023
    %5095 = vmatprep.subr.bf16.mxu0 0
    %5096 = vmatpush1.bf16.msra.mxu0 %v1024
    %5097 = vmatprep.subr.bf16.mxu0 0
    %5098 = vmatpush1.bf16.msra.mxu0 %v1025
    %5099 = vmatprep.subr.bf16.mxu0 0
    %5100 = vmatpush1.bf16.msra.mxu0 %v1026
    %5101 = vmatprep.subr.bf16.mxu0 0
    %5102 = vmatpush1.bf16.msra.mxu0 %v1027
    %5103 = vmatprep.subr.bf16.mxu0 0
    %5104 = vmatpush1.bf16.msra.mxu0 0
    %5105 = vmatprep.subr.bf16.mxu0 0
    %5106 = vmatpush1.bf16.msra.mxu0 0
    %5107 = vmatprep.subr.bf16.mxu0 0
    %5108 = vmatpush1.bf16.msra.mxu0 0
    %5109 = vmatprep.subr.bf16.mxu0 0
    %5110 = vmatpush1.bf16.msra.mxu0 0
    %5111 = vmatprep.subr.bf16.mxu0 0
    %5112 = vmatpush1.bf16.msra.mxu0 0
    %5113 = vmatprep.subr.bf16.mxu0 0
    %5114 = vmatpush1.bf16.msra.mxu0 0
    %5115 = vmatprep.subr.bf16.mxu0 0
    %5116 = vmatpush1.bf16.msra.mxu0 0
    %5117 = vmatprep.subr.bf16.mxu0 0
    %5118 = vmatpush1.bf16.msra.mxu0 0
    %5119 = vmatprep.mubr.bf16.mxu0 0
    %5120 = vmatmul.mubr.bf16.gmra.mrb[0].mxu0 %v5085
    %v5121 = vpop.f32.mrb[0].mxu0
    %v5122 = vadd.f32 %v5074, %v5121
    %v5123 = vpop.f32.mrb[0].mxu0
    %v5124 = vpop.f32.mrb[0].mxu0
    %v5125 = vpop.f32.mrb[0].mxu0
    %5126 = vdwg.mxu0
    %v5127 = vadd.f32 %v5122, %v177
    %v5128 = vtanh.pop %v5127
    %v5129 = vpack.c.bf16 %v5128, %v5128
    %5130 = vmatprep.subr.bf16.mxu0 0
    %5131 = vmatpush1.bf16.msra.mxu0 %v1111
    %5132 = vmatprep.subr.bf16.mxu0 0
    %5133 = vmatpush1.bf16.msra.mxu0 %v1112
    %5134 = vmatprep.subr.bf16.mxu0 0
    %5135 = vmatpush1.bf16.msra.mxu0 %v1113
    %5136 = vmatprep.subr.bf16.mxu0 0
    %5137 = vmatpush1.bf16.msra.mxu0 %v1114
    %5138 = vmatprep.subr.bf16.mxu0 0
    %5139 = vmatpush1.bf16.msra.mxu0 %v1115
    %5140 = vmatprep.subr.bf16.mxu0 0
    %5141 = vmatpush1.bf16.msra.mxu0 %v1116
    %5142 = vmatprep.subr.bf16.mxu0 0
    %5143 = vmatpush1.bf16.msra.mxu0 %v1117
    %5144 = vmatprep.subr.bf16.mxu0 0
    %5145 = vmatpush1.bf16.msra.mxu0 %v1118
    %5146 = vmatprep.subr.bf16.mxu0 0
    %5147 = vmatpush1.bf16.msra.mxu0 0
    %5148 = vmatprep.subr.bf16.mxu0 0
    %5149 = vmatpush1.bf16.msra.mxu0 0
    %5150 = vmatprep.subr.bf16.mxu0 0
    %5151 = vmatpush1.bf16.msra.mxu0 0
    %5152 = vmatprep.subr.bf16.mxu0 0
    %5153 = vmatpush1.bf16.msra.mxu0 0
    %5154 = vmatprep.subr.bf16.mxu0 0
    %5155 = vmatpush1.bf16.msra.mxu0 0
    %5156 = vmatprep.subr.bf16.mxu0 0
    %5157 = vmatpush1.bf16.msra.mxu0 0
    %5158 = vmatprep.subr.bf16.mxu0 0
    %5159 = vmatpush1.bf16.msra.mxu0 0
    %5160 = vmatprep.subr.bf16.mxu0 0
    %5161 = vmatpush1.bf16.msra.mxu0 0
    %5162 = vmatprep.mubr.bf16.mxu0 0
    %5163 = vmatmul.mubr.bf16.gmra.mrb[0].mxu0 %v5129
    %v5164 = vpop.f32.mrb[0].mxu0
    %v5165 = vadd.f32 %v200, %v5164
    %v5166 = vpop.f32.mrb[0].mxu0
    %v5167 = vpop.f32.mrb[0].mxu0
    %v5168 = vpop.f32.mrb[0].mxu0
    %5169 = vdwg.mxu0
    %v5170 = vsel %vm206, %v5165, -1e+30
    %v5171 = vsel %vm1168, %v5170, -inf
    %5172 = vmax.xlane.f32.xlu0 %v5171
    %v5173 = vpop.xlane.xlu0 %5172
    %v5174 = vsub.f32 %v5170, %v5173
    %v5175 = vmul.f32 %v5174, 1.442695
    %v5176 = vpow.pop %v5175
    %v5177 = vsel %vm1168, %v5176, 0.0
    %5178 = vadd.xlane.f32.xlu0 %v5177
    %v5179 = vpop.xlane.xlu0 %5178
    %v5180 = vlog2.pop %v5179
    %v5181 = vmul.f32 %v5180, 0.6931472
    %v5182 = vadd.f32 %v5181, %v5173
    %v5183 = vsub.f32 %v5170, %v5182
    %s5184 = scalar_lea.vmem %s10, 14
    %5185 = vst [vmem:[%s5184] sm:$0x3] %v5183
    %v5188 = vrot.slane %v4948, 7
    %v5189 = vsel %vm762, %v5188, %v4947
    %s5191 = scalar_lea.vmem [#allocation2], 14
    %5192 = vst.msk [vmem:[%s5191] sm:$0x3] %vm765, %v5189
    %5193 = vst [vmem:[%s12] sm:$0x3] %v4805
    // Predicated region
    $region42: #{seq2seq_forward.3} parent=1 // pred_check
      _
    $region43: #{seq2seq_forward.3} parent=1 // pred_check_branch
      %5195 = sbr.rel (0) target = $region45
    $region44: #{seq2seq_forward.3} parent=1 // pred_region
      _
    $region45: #{seq2seq_forward.3} parent=1 // pred_fallthru
      _
    // Predicated region
    $region46: #{seq2seq_forward.3} parent=1 // pred_check
      _
    $region47: #{seq2seq_forward.3} parent=1 // pred_check_branch
      %5197 = sbr.rel (0) target = $region49
    $region48: #{seq2seq_forward.3} parent=1 // pred_region
      %s5199 = ssub.s32 256, 256
      %5200 = vsyncadd [#allocation3], %s5199
      %s5201 = sshll.u32 [#allocation2], 4
      %s5202 = int_to_ptr.vmem [resolvable:$true] %s5201
      %5207 = dma.vmem_to_hbm [thread:$0]  %s5202, 256, %s11, [#allocation3], 32, 32, 2
    $region49: #{seq2seq_forward.3} parent=1 // pred_fallthru
      _
    // Predicated region
    $region50: #{seq2seq_forward.3} parent=1 // pred_check
      _
    $region51: #{seq2seq_forward.3} parent=1 // pred_check_branch
      %5209 = sbr.rel (0) target = $region53
    $region52: #{seq2seq_forward.3} parent=1 // pred_region
      _
    $region53: #{seq2seq_forward.3} parent=1 // pred_fallthru
      _
    // Predicated region
    $region54: #{seq2seq_forward.3} parent=1 // pred_check
      _
    $region55: #{seq2seq_forward.3} parent=1 // pred_check_branch
      %5211 = sbr.rel (0) target = $region57
    $region56: #{seq2seq_forward.3} parent=1 // pred_region
      _
    $region57: #{seq2seq_forward.3} parent=1 // pred_fallthru
      _
    // Predicated region
    $region58: #{seq2seq_forward.3} parent=1 // pred_check
      _
    $region59: #{seq2seq_forward.3} parent=1 // pred_check_branch
      %5213 = sbr.rel (0) target = $region61
    $region60: #{seq2seq_forward.3} parent=1 // pred_region
      %5214 = dma.done [#allocation3], 256
    $region61: #{seq2seq_forward.3} parent=1 // pred_fallthru
      _
    // Predicated region
    $region62: #{seq2seq_forward.3} parent=1 // pred_check
      _
    $region63: #{seq2seq_forward.3} parent=1 // pred_check_branch
      %5216 = sbr.rel (0) target = $region65
    $region64: #{seq2seq_forward.3} parent=1 // pred_region
      _
    $region65: #{seq2seq_forward.3} parent=1 // pred_fallthru
      _
    %5217 = vsyncpa [#allocation3], 1

</llo_original>
